<compile_context>
chip_gen: v5e
topology: v5e:2x2
jax: 0.10.0
libtpu: 0.0.40
codegen_flags: <defaults>
</compile_context>

<pallas_src>
import functools

import jax
import jax.numpy as jnp
from jax import lax
from jax.experimental import pallas as pl
from jax.experimental.pallas import tpu as pltpu

LANES = 128
COL_CHUNK = 128            # packed output rows gathered per inner matmul
MAX_BLOCK_COLS = 512       # packed rows per grid step (512 * pack=4 -> 2048 embeddings)
ONE_HOT_MAX_VOCAB = 2048   # use the MXU one-hot gather up to this padded vocab size


def _round_up(x, m):
    return ((x + m - 1) // m) * m


def _gather_block_kernel(idx_ref, table_ref, out_ref, *, v_pad, emb, pack,
                         col_chunk, use_onehot):
    """Gather one lane-dense output block.

    idx_ref   : VMEM int32 [block_cols, pack]     packed ids (row p, slot k = flat id p*pack+k)
    table_ref : VMEM       [v_pad, emb]           full embedding table (fetched once)
    out_ref   : VMEM       [block_cols, pack*emb] lane-dense output slab (128-wide when E | 128)
    """
    table = table_ref[...]                       # resident; reused by every chunk
    block_cols = out_ref.shape[0]
    if use_onehot:
        # Hoisted once per grid step (JAX does not CSE broadcast_in_dim).
        iota_v = lax.broadcasted_iota(jnp.int32, (col_chunk, v_pad), 1)

    for c in range(block_cols // col_chunk):     # static unroll, <= 4 iterations
        lo, hi = c * col_chunk, (c + 1) * col_chunk
        parts = []
        for k in range(pack):
            if use_onehot:
                # Exact row extraction on the otherwise-idle MXU (HIGHEST keeps
                # f32 precision, so results match the reference gather).
                ids = jnp.clip(idx_ref[lo:hi, k:k + 1], 0, v_pad - 1)   # (chunk, 1)
                onehot = (ids == iota_v).astype(table.dtype)            # (chunk, v_pad)
                part = jnp.dot(onehot, table,
                               preferred_element_type=jnp.float32,
                               precision=jax.lax.Precision.HIGHEST)
            else:
                # Vectorized dynamic gather on the VMEM-resident table (larger
                # vocabularies; relies on Mosaic's gather lowering for jnp.take).
                ids = jnp.clip(idx_ref[lo:hi, k], 0, v_pad - 1)          # (chunk,)
                part = jnp.take(table, ids, axis=0, mode="clip")
            parts.append(part.astype(out_ref.dtype))
        packed = parts[0] if pack == 1 else jnp.concatenate(parts, axis=1)
        out_ref[lo:hi, :] = packed               # full-width, unmasked vector store


def embedding_gather(flat_idx, table):
    """flat_idx: int [N], table: [V, E]  ->  [N, E] = table[flat_idx]."""
    n = int(flat_idx.shape[0])
    v, emb = table.shape
    itemsize = jnp.dtype(table.dtype).itemsize

    # Pad the vocab axis to a multiple of 8 sublanes (padding rows are zeros).
    v_pad = max(_round_up(v, 8), 8)
    if v_pad != v:
        table = jnp.pad(table, ((0, v_pad - v), (0, 0)))

    # Capacity gate: the resident-table strategy must fit per-core VMEM
    # (64 MiB on v7x vs 128 MiB on v5e/v6e).
    try:
        vmem_cap = int(pltpu.get_tpu_info().vmem_capacity_bytes)
    except Exception:
        vmem_cap = 64 * 1024 * 1024              # conservative (v7x) default
    table_bytes = v_pad * emb * itemsize
    if 2 * table_bytes + (8 << 20) > int(0.9 * vmem_cap):
        # TODO(synk): add an HBM-resident double-buffered DMA row-gather kernel
        # (P4 pattern) for tables that do not fit in VMEM; plain-JAX gather for now.
        return jnp.take(table, jnp.clip(flat_idx, 0, v_pad - 1).astype(jnp.int32),
                        axis=0)[:n]

    # Lane-dense packing: pack = 128 // E consecutive embeddings per 128-lane row.
    pack = LANES // emb if (emb <= LANES and LANES % emb == 0) else 1
    out_cols = pack * emb

    n_cols_raw = max(-(-n // pack), 1)
    block_cols = min(MAX_BLOCK_COLS, _round_up(n_cols_raw, COL_CHUNK))
    n_cols = _round_up(n_cols_raw, block_cols)
    n_pad = n_cols * pack

    flat_idx = flat_idx.astype(jnp.int32)
    if n_pad != n:
        # Padded ids are 0 -> they gather row 0 and are sliced off below.
        flat_idx = jnp.concatenate([flat_idx, jnp.zeros((n_pad - n,), jnp.int32)])
    idx2d = flat_idx.reshape(n_cols, pack)

    use_onehot = v_pad <= ONE_HOT_MAX_VOCAB

    out_blk_bytes = block_cols * out_cols * itemsize
    idx_blk_bytes = block_cols * LANES * 4                    # int32 tile, lane-padded
    interm_bytes = 2 * COL_CHUNK * v_pad * 4 if use_onehot else 0
    vmem_needed = (2 * table_bytes + 2 * out_blk_bytes + 2 * idx_blk_bytes
                   + interm_bytes + (4 << 20))
    vmem_limit = int(min(max(vmem_needed, 16 << 20), int(0.9 * vmem_cap)))

    cost = pl.CostEstimate(
        flops=2 * n_pad * v_pad * emb if use_onehot else 0,
        transcendentals=0,
        bytes_accessed=table_bytes + n_pad * 4 + n_pad * emb * itemsize,
    )

    kernel = functools.partial(_gather_block_kernel, v_pad=v_pad, emb=emb,
                               pack=pack, col_chunk=COL_CHUNK, use_onehot=use_onehot)

    out = pl.pallas_call(
        kernel,
        out_shape=jax.ShapeDtypeStruct((n_cols, out_cols), table.dtype),
        grid=(n_cols // block_cols,),
        in_specs=[
            pl.BlockSpec((block_cols, pack), lambda i: (i, 0)),   # ids: blocked VMEM input
            pl.BlockSpec((v_pad, emb), lambda i: (0, 0)),         # table: constant block,
        ],                                                        #   fetched once
        out_specs=pl.BlockSpec((block_cols, out_cols), lambda i: (i, 0)),
        compiler_params=pltpu.CompilerParams(
            dimension_semantics=("parallel",),   # blocks independent -> v7x megacore OK
            vmem_limit_bytes=vmem_limit,
        ),
        cost_estimate=cost,
    )(idx2d, table)

    # Row-major (n_cols, pack*E) is byte-identical to (n_pad, E); reshape is free.
    return out.reshape(n_pad, emb)[:n]


def xavier_uniform(key, shape):
    fan_in, fan_out = shape
    bound = (6.0 / (fan_in + fan_out)) ** 0.5
    return jax.random.uniform(key, shape, jnp.float32, -bound, bound)


class EmbeddingPallas:
    """JAX/Pallas port of the PyTorch Embedding module.

    All per-feature tables are concatenated along the vocab axis and ids are
    shifted by per-feature offsets, so one gather kernel serves every feature.
    Feature order follows dict insertion order of `feature_stastic`, matching the
    nn.ModuleDict iteration order of the PyTorch module.
    On v5e, pass dtype=jnp.bfloat16 to halve the resident-table footprint and the
    writeback bytes (the lane-dense packed store keeps full-width vst lines).
    """

    def __init__(self, feature_stastic, embedding_size, key, dtype=jnp.float32):
        self.embedding_size = embedding_size
        self.features = [f for f in feature_stastic if f != "label"]
        tables, offsets, off = [], {}, 0
        keys = jax.random.split(key, len(self.features))
        for k, feat in zip(keys, self.features):
            numb = feature_stastic[feat]
            w = xavier_uniform(k, (numb + 1, embedding_size))   # nn.Embedding(numb+1, E)
            tables.append(w.astype(dtype))
            offsets[feat] = off
            off += numb + 1
        self.big_table = jnp.concatenate(tables, axis=0)        # [V_total, E]
        self.offsets = offsets

    def __call__(self, data):
        cols = [data[f].astype(jnp.int32) + self.offsets[f] for f in self.features]
        idx_bf = jnp.stack(cols, axis=1)                        # [B, F]
        b, f = idx_bf.shape
        gathered = embedding_gather(idx_bf.reshape(-1), self.big_table)   # [B*F, E]
        return gathered.reshape(b, f, self.embedding_size)      # [B, F, E]


if __name__ == "__main__":
    # Synthetic config: vocab sizes per feature + embedding size.
    feature_stastic = {"label": 2, "user": 50, "item": 100, "context": 20}
    embedding_size = 32
    batch = 8

    key = jax.random.PRNGKey(0)
    k_init, k_u, k_i, k_c, k_l = jax.random.split(key, 5)

    model = EmbeddingPallas(feature_stastic, embedding_size, k_init)

    data = {
        "user": jax.random.randint(k_u, (batch,), 0, feature_stastic["user"] + 1),
        "item": jax.random.randint(k_i, (batch,), 0, feature_stastic["item"] + 1),
        "context": jax.random.randint(k_c, (batch,), 0, feature_stastic["context"] + 1),
        "label": jax.random.randint(k_l, (batch,), 0, 2),
    }

    out = jax.block_until_ready(model(data))

    # Reference check against plain-JAX gather on the same concatenated table.
    ref_cols = []
    for feat in model.features:
        ids = data[feat].astype(jnp.int32) + model.offsets[feat]
        ref_cols.append(jnp.take(model.big_table, ids, axis=0)[:, None, :])
    ref = jnp.concatenate(ref_cols, axis=-2)

    assert out.shape == (batch, len(model.features), embedding_size), out.shape
    assert jnp.allclose(out, ref, rtol=1e-5, atol=1e-6), "mismatch vs reference gather"
    print("KERNEL_OK")
</pallas_src>

<mosaic_0001>
module attributes {stable_mosaic.version = 11 : i64} {
  func.func @_gather_block_kernel(%arg0: i32, %arg1: memref<128x4xi32, #tpu.memory_space<vmem>>, %arg2: memref<176x32xf32, #tpu.memory_space<vmem>>, %arg3: memref<128x128xf32, #tpu.memory_space<vmem>>) attributes {dimension_semantics = [#tpu.dimension_semantics<parallel>], iteration_bounds = array<i64: 1>, scalar_prefetch = 0 : i64, scratch_operands = 0 : i64, tpu.core_type = #tpu.core_type<tc>, window_params = [{transform_indices = @transform_0, window_bounds = array<i64: 128, 4>}, {pipeline_mode = #tpu.pipeline_mode<synchronous>, transform_indices = @transform_1, window_bounds = array<i64: 176, 32>}, {transform_indices = @transform_2, window_bounds = array<i64: 128, 128>}]} {
    %c0 = arith.constant 0 : index
    %c0_0 = arith.constant 0 : index
    %0 = vector.load %arg2[%c0, %c0_0] : memref<176x32xf32, #tpu.memory_space<vmem>>, vector<176x32xf32>
    %1 = tpu.iota {dimensions = array<i32: 1>} : vector<128x176xi32>
    %c0_1 = arith.constant 0 : index
    %c0_2 = arith.constant 0 : index
    %2 = vector.load %arg1[%c0_1, %c0_2] : memref<128x4xi32, #tpu.memory_space<vmem>>, vector<128x1xi32>
    %c0_i32 = arith.constant 0 : i32
    %c175_i32 = arith.constant 175 : i32
    %3 = vector.broadcast %c0_i32 : i32 to vector<128x1xi32>
    %4 = arith.maxsi %3, %2 : vector<128x1xi32>
    %5 = vector.broadcast %c175_i32 : i32 to vector<128x1xi32>
    %6 = arith.minsi %5, %4 : vector<128x1xi32>
    %7 = vector.broadcast %6 : vector<128x1xi32> to vector<128x176xi32>
    %8 = arith.cmpi eq, %7, %1 : vector<128x176xi32>
    %9 = arith.extui %8 : vector<128x176xi1> to vector<128x176xi32>
    %10 = arith.sitofp %9 : vector<128x176xi32> to vector<128x176xf32>
    %cst = arith.constant dense<0.000000e+00> : vector<128x32xf32>
    %11 = tpu.matmul %10, %0, %cst {dimension_numbers = #tpu.dot_dimension_numbers<[1], [0], [0], [1], [0, 0, 1, 1], [], []>, precision = #tpu.contract_precision<fp32>} : vector<128x176xf32>, vector<176x32xf32>, vector<128x32xf32> -> vector<128x32xf32>
    %c0_3 = arith.constant 0 : index
    %c1 = arith.constant 1 : index
    %12 = vector.load %arg1[%c0_3, %c1] : memref<128x4xi32, #tpu.memory_space<vmem>>, vector<128x1xi32>
    %c0_i32_4 = arith.constant 0 : i32
    %c175_i32_5 = arith.constant 175 : i32
    %13 = vector.broadcast %c0_i32_4 : i32 to vector<128x1xi32>
    %14 = arith.maxsi %13, %12 : vector<128x1xi32>
    %15 = vector.broadcast %c175_i32_5 : i32 to vector<128x1xi32>
    %16 = arith.minsi %15, %14 : vector<128x1xi32>
    %17 = vector.broadcast %16 : vector<128x1xi32> to vector<128x176xi32>
    %18 = arith.cmpi eq, %17, %1 : vector<128x176xi32>
    %19 = arith.extui %18 : vector<128x176xi1> to vector<128x176xi32>
    %20 = arith.sitofp %19 : vector<128x176xi32> to vector<128x176xf32>
    %cst_6 = arith.constant dense<0.000000e+00> : vector<128x32xf32>
    %21 = tpu.matmul %20, %0, %cst_6 {dimension_numbers = #tpu.dot_dimension_numbers<[1], [0], [0], [1], [0, 0, 1, 1], [], []>, precision = #tpu.contract_precision<fp32>} : vector<128x176xf32>, vector<176x32xf32>, vector<128x32xf32> -> vector<128x32xf32>
    %c0_7 = arith.constant 0 : index
    %c2 = arith.constant 2 : index
    %22 = vector.load %arg1[%c0_7, %c2] : memref<128x4xi32, #tpu.memory_space<vmem>>, vector<128x1xi32>
    %c0_i32_8 = arith.constant 0 : i32
    %c175_i32_9 = arith.constant 175 : i32
    %23 = vector.broadcast %c0_i32_8 : i32 to vector<128x1xi32>
    %24 = arith.maxsi %23, %22 : vector<128x1xi32>
    %25 = vector.broadcast %c175_i32_9 : i32 to vector<128x1xi32>
    %26 = arith.minsi %25, %24 : vector<128x1xi32>
    %27 = vector.broadcast %26 : vector<128x1xi32> to vector<128x176xi32>
    %28 = arith.cmpi eq, %27, %1 : vector<128x176xi32>
    %29 = arith.extui %28 : vector<128x176xi1> to vector<128x176xi32>
    %30 = arith.sitofp %29 : vector<128x176xi32> to vector<128x176xf32>
    %cst_10 = arith.constant dense<0.000000e+00> : vector<128x32xf32>
    %31 = tpu.matmul %30, %0, %cst_10 {dimension_numbers = #tpu.dot_dimension_numbers<[1], [0], [0], [1], [0, 0, 1, 1], [], []>, precision = #tpu.contract_precision<fp32>} : vector<128x176xf32>, vector<176x32xf32>, vector<128x32xf32> -> vector<128x32xf32>
    %c0_11 = arith.constant 0 : index
    %c3 = arith.constant 3 : index
    %32 = vector.load %arg1[%c0_11, %c3] : memref<128x4xi32, #tpu.memory_space<vmem>>, vector<128x1xi32>
    %c0_i32_12 = arith.constant 0 : i32
    %c175_i32_13 = arith.constant 175 : i32
    %33 = vector.broadcast %c0_i32_12 : i32 to vector<128x1xi32>
    %34 = arith.maxsi %33, %32 : vector<128x1xi32>
    %35 = vector.broadcast %c175_i32_13 : i32 to vector<128x1xi32>
    %36 = arith.minsi %35, %34 : vector<128x1xi32>
    %37 = vector.broadcast %36 : vector<128x1xi32> to vector<128x176xi32>
    %38 = arith.cmpi eq, %37, %1 : vector<128x176xi32>
    %39 = arith.extui %38 : vector<128x176xi1> to vector<128x176xi32>
    %40 = arith.sitofp %39 : vector<128x176xi32> to vector<128x176xf32>
    %cst_14 = arith.constant dense<0.000000e+00> : vector<128x32xf32>
    %41 = tpu.matmul %40, %0, %cst_14 {dimension_numbers = #tpu.dot_dimension_numbers<[1], [0], [0], [1], [0, 0, 1, 1], [], []>, precision = #tpu.contract_precision<fp32>} : vector<128x176xf32>, vector<176x32xf32>, vector<128x32xf32> -> vector<128x32xf32>
    %42 = tpu.concatenate %11, %21, %31, %41 in 1 : vector<128x32xf32>, vector<128x32xf32>, vector<128x32xf32>, vector<128x32xf32> -> vector<128x128xf32>
    %c0_15 = arith.constant 0 : index
    %c0_16 = arith.constant 0 : index
    %43 = vector.load %arg3[%c0_15, %c0_16] : memref<128x128xf32, #tpu.memory_space<vmem>>, vector<128x128xf32>
    tpu.vector_store %arg3[%c0_15, %c0_16], %42 {strides = array<i32>} : memref<128x128xf32, #tpu.memory_space<vmem>>, vector<128x128xf32>,
    return
  }
  func.func @transform_0(%arg0: i32) -> (i32, i32) {
    %c0_i32 = arith.constant 0 : i32
    %c0_i32_0 = arith.constant 0 : i32
    return %arg0, %c0_i32 : i32, i32
  }
  func.func @transform_1(%arg0: i32) -> (i32, i32) {
    %c0_i32 = arith.constant 0 : i32
    %c0_i32_0 = arith.constant 0 : i32
    %c0_i32_1 = arith.constant 0 : i32
    return %c0_i32, %c0_i32_0 : i32, i32
  }
  func.func @transform_2(%arg0: i32) -> (i32, i32) {
    %c0_i32 = arith.constant 0 : i32
    %c0_i32_0 = arith.constant 0 : i32
    return %arg0, %c0_i32 : i32, i32
  }
}

</mosaic_0001>

<llo_original>
// kernel: tpu_custom_call.1
$region0: #{tpu_custom_call.1}
  #allocation0 [shape = 'u32[]', space=smem, size = 0x4, offset = 0x4, fixed_abs, tag = 'smem constant byte address 0x4 - core index']
  #allocation1 [shape = 'u32[72,128]{1,0:T(1,128)}', space=vmem, size = 0x9000, scoped, tag = 'internal scratch']
  %s0 = inlined_call_operand.vmem [shape: s32[128,4], index: 0, kind: input, shape index: {}]
  %s1 = inlined_call_operand.vmem [shape: f32[176,32], index: 1, kind: input, shape index: {}]
  %s2 = inlined_call_operand.hbm [shape: f32[128,128], index: 2, kind: output, shape index: {}]
  %s3 = sld [smem:[#allocation0]]
  $region18: #{tpu_custom_call.1} parent=0
    _
  %s5 = ssub.s32 1, %s3
  %s6 = scalar_select 0, %s5, %s3
  $region1: #{tpu_custom_call.1} parent=0
    #allocation2 [shape = 'u8[65536]{0}', space=vmem, size = 0x10000, scoped, tag = 'output window, operand 0, single buffered']
    #allocation3 [shape = 's32[1]{0}', space=sflag, size = 0x4, scoped, tag = 'scoped memory for tpu_custom_call.1']
    %7 = vsyncpa [#allocation3], 0
    // Predicated region
    $region2: #{tpu_custom_call.1} parent=1 // pred_check
      _
    $region3: #{tpu_custom_call.1} parent=1 // pred_check_branch
      %9 = sbr.rel (0) target = $region5
    $region4: #{tpu_custom_call.1} parent=1 // pred_region
      _
    $region5: #{tpu_custom_call.1} parent=1 // pred_fallthru
      _
    // Predicated region
    $region6: #{tpu_custom_call.1} parent=1 // pred_check
      _
    $region7: #{tpu_custom_call.1} parent=1 // pred_check_branch
      %11 = sbr.rel (0) target = $region9
    $region8: #{tpu_custom_call.1} parent=1 // pred_region
      _
    $region9: #{tpu_custom_call.1} parent=1 // pred_fallthru
      _
    %v12 = vld [vmem:[%s1] sm:$0xff]
    %v13 = vld [vmem:[%s1 + $0x8] sm:$0xff]
    %v14 = vld [vmem:[%s1 + $0x10] sm:$0xff]
    %v15 = vld [vmem:[%s1 + $0x18] sm:$0xff]
    %v16 = vld [vmem:[%s1 + $0x20] sm:$0xff]
    %v17 = vld [vmem:[%s1 + $0x28] sm:$0xff]
    %v18 = vld [vmem:[%s1 + $0x30] sm:$0xff]
    %v19 = vld [vmem:[%s1 + $0x38] sm:$0xff]
    %v20 = vld [vmem:[%s1 + $0x40] sm:$0xff]
    %v21 = vld [vmem:[%s1 + $0x48] sm:$0xff]
    %v22 = vld [vmem:[%s1 + $0x50] sm:$0xff]
    %v23 = vld [vmem:[%s1 + $0x58] sm:$0xff]
    %v24 = vld [vmem:[%s1 + $0x60] sm:$0xff]
    %v25 = vld [vmem:[%s1 + $0x68] sm:$0xff]
    %v26 = vld [vmem:[%s1 + $0x70] sm:$0xff]
    %v27 = vld [vmem:[%s1 + $0x78] sm:$0xff]
    %v28 = vld [vmem:[%s1 + $0x80] sm:$0xff]
    %v29 = vld [vmem:[%s1 + $0x88] sm:$0xff]
    %v30 = vld [vmem:[%s1 + $0x90] sm:$0xff]
    %v31 = vld [vmem:[%s1 + $0x98] sm:$0xff]
    %v32 = vld [vmem:[%s1 + $0xa0] sm:$0xff]
    %v33 = vld [vmem:[%s1 + $0xa8] sm:$0xff]
    %v34 = vlaneseq
    %v35 = vand.u32 %v34, 127
    %v36 = vadd.s32 %v35, 128
    %v37 = vld [vmem:[%s0] sm:$0xff]
    %v38 = vld [vmem:[%s0 + $0x8] sm:$0xff]
    %v39 = vld [vmem:[%s0 + $0x10] sm:$0xff]
    %v40 = vld [vmem:[%s0 + $0x18] sm:$0xff]
    %v41 = vld [vmem:[%s0 + $0x20] sm:$0xff]
    %v42 = vld [vmem:[%s0 + $0x28] sm:$0xff]
    %v43 = vld [vmem:[%s0 + $0x30] sm:$0xff]
    %v44 = vld [vmem:[%s0 + $0x38] sm:$0xff]
    %v45 = vld [vmem:[%s0 + $0x40] sm:$0xff]
    %v46 = vld [vmem:[%s0 + $0x48] sm:$0xff]
    %v47 = vld [vmem:[%s0 + $0x50] sm:$0xff]
    %v48 = vld [vmem:[%s0 + $0x58] sm:$0xff]
    %v49 = vld [vmem:[%s0 + $0x60] sm:$0xff]
    %v50 = vld [vmem:[%s0 + $0x68] sm:$0xff]
    %v51 = vld [vmem:[%s0 + $0x70] sm:$0xff]
    %v52 = vld [vmem:[%s0 + $0x78] sm:$0xff]
    %vm53 = vcmp.gt.s32.totalorder %v37, 0
    %v54 = vsel %vm53, %v37, 0
    %vm55 = vcmp.gt.s32.totalorder %v38, 0
    %v56 = vsel %vm55, %v38, 0
    %vm57 = vcmp.gt.s32.totalorder %v39, 0
    %v58 = vsel %vm57, %v39, 0
    %vm59 = vcmp.gt.s32.totalorder %v40, 0
    %v60 = vsel %vm59, %v40, 0
    %vm61 = vcmp.gt.s32.totalorder %v41, 0
    %v62 = vsel %vm61, %v41, 0
    %vm63 = vcmp.gt.s32.totalorder %v42, 0
    %v64 = vsel %vm63, %v42, 0
    %vm65 = vcmp.gt.s32.totalorder %v43, 0
    %v66 = vsel %vm65, %v43, 0
    %vm67 = vcmp.gt.s32.totalorder %v44, 0
    %v68 = vsel %vm67, %v44, 0
    %vm69 = vcmp.gt.s32.totalorder %v45, 0
    %v70 = vsel %vm69, %v45, 0
    %vm71 = vcmp.gt.s32.totalorder %v46, 0
    %v72 = vsel %vm71, %v46, 0
    %vm73 = vcmp.gt.s32.totalorder %v47, 0
    %v74 = vsel %vm73, %v47, 0
    %vm75 = vcmp.gt.s32.totalorder %v48, 0
    %v76 = vsel %vm75, %v48, 0
    %vm77 = vcmp.gt.s32.totalorder %v49, 0
    %v78 = vsel %vm77, %v49, 0
    %vm79 = vcmp.gt.s32.totalorder %v50, 0
    %v80 = vsel %vm79, %v50, 0
    %vm81 = vcmp.gt.s32.totalorder %v51, 0
    %v82 = vsel %vm81, %v51, 0
    %vm83 = vcmp.gt.s32.totalorder %v52, 0
    %v84 = vsel %vm83, %v52, 0
    %vm85 = vcmp.lt.s32.totalorder %v54, 175
    %v86 = vsel %vm85, %v54, 175
    %vm87 = vcmp.lt.s32.totalorder %v56, 175
    %v88 = vsel %vm87, %v56, 175
    %vm89 = vcmp.lt.s32.totalorder %v58, 175
    %v90 = vsel %vm89, %v58, 175
    %vm91 = vcmp.lt.s32.totalorder %v60, 175
    %v92 = vsel %vm91, %v60, 175
    %vm93 = vcmp.lt.s32.totalorder %v62, 175
    %v94 = vsel %vm93, %v62, 175
    %vm95 = vcmp.lt.s32.totalorder %v64, 175
    %v96 = vsel %vm95, %v64, 175
    %vm97 = vcmp.lt.s32.totalorder %v66, 175
    %v98 = vsel %vm97, %v66, 175
    %vm99 = vcmp.lt.s32.totalorder %v68, 175
    %v100 = vsel %vm99, %v68, 175
    %vm101 = vcmp.lt.s32.totalorder %v70, 175
    %v102 = vsel %vm101, %v70, 175
    %vm103 = vcmp.lt.s32.totalorder %v72, 175
    %v104 = vsel %vm103, %v72, 175
    %vm105 = vcmp.lt.s32.totalorder %v74, 175
    %v106 = vsel %vm105, %v74, 175
    %vm107 = vcmp.lt.s32.totalorder %v76, 175
    %v108 = vsel %vm107, %v76, 175
    %vm109 = vcmp.lt.s32.totalorder %v78, 175
    %v110 = vsel %vm109, %v78, 175
    %vm111 = vcmp.lt.s32.totalorder %v80, 175
    %v112 = vsel %vm111, %v80, 175
    %vm113 = vcmp.lt.s32.totalorder %v82, 175
    %v114 = vsel %vm113, %v82, 175
    %vm115 = vcmp.lt.s32.totalorder %v84, 175
    %v116 = vsel %vm115, %v84, 175
    %117 = vset.pattern.permute.xlu0 0
    %118 = vperm.xlu0 %117, %v86
    %v119 = vpop.permute.xlu0 %118
    %120 = vset.pattern.permute.xlu0 0
    %121 = vperm.xlu0 %120, %v88
    %v122 = vpop.permute.xlu0 %121
    %123 = vset.pattern.permute.xlu0 0
    %124 = vperm.xlu0 %123, %v90
    %v125 = vpop.permute.xlu0 %124
    %126 = vset.pattern.permute.xlu0 0
    %127 = vperm.xlu0 %126, %v92
    %v128 = vpop.permute.xlu0 %127
    %129 = vset.pattern.permute.xlu0 0
    %130 = vperm.xlu0 %129, %v94
    %v131 = vpop.permute.xlu0 %130
    %132 = vset.pattern.permute.xlu0 0
    %133 = vperm.xlu0 %132, %v96
    %v134 = vpop.permute.xlu0 %133
    %135 = vset.pattern.permute.xlu0 0
    %136 = vperm.xlu0 %135, %v98
    %v137 = vpop.permute.xlu0 %136
    %138 = vset.pattern.permute.xlu0 0
    %139 = vperm.xlu0 %138, %v100
    %v140 = vpop.permute.xlu0 %139
    %141 = vset.pattern.permute.xlu0 0
    %142 = vperm.xlu0 %141, %v102
    %v143 = vpop.permute.xlu0 %142
    %144 = vset.pattern.permute.xlu0 0
    %145 = vperm.xlu0 %144, %v104
    %v146 = vpop.permute.xlu0 %145
    %147 = vset.pattern.permute.xlu0 0
    %148 = vperm.xlu0 %147, %v106
    %v149 = vpop.permute.xlu0 %148
    %150 = vset.pattern.permute.xlu0 0
    %151 = vperm.xlu0 %150, %v108
    %v152 = vpop.permute.xlu0 %151
    %153 = vset.pattern.permute.xlu0 0
    %154 = vperm.xlu0 %153, %v110
    %v155 = vpop.permute.xlu0 %154
    %156 = vset.pattern.permute.xlu0 0
    %157 = vperm.xlu0 %156, %v112
    %v158 = vpop.permute.xlu0 %157
    %159 = vset.pattern.permute.xlu0 0
    %160 = vperm.xlu0 %159, %v114
    %v161 = vpop.permute.xlu0 %160
    %162 = vset.pattern.permute.xlu0 0
    %163 = vperm.xlu0 %162, %v116
    %v164 = vpop.permute.xlu0 %163
    %vm165 = vcmp.eq.s32.totalorder %v119, %v35
    %vm166 = vcmp.eq.s32.totalorder %v119, %v36
    %vm167 = vcmp.eq.s32.totalorder %v122, %v35
    %vm168 = vcmp.eq.s32.totalorder %v122, %v36
    %vm169 = vcmp.eq.s32.totalorder %v125, %v35
    %vm170 = vcmp.eq.s32.totalorder %v125, %v36
    %vm171 = vcmp.eq.s32.totalorder %v128, %v35
    %vm172 = vcmp.eq.s32.totalorder %v128, %v36
    %vm173 = vcmp.eq.s32.totalorder %v131, %v35
    %vm174 = vcmp.eq.s32.totalorder %v131, %v36
    %vm175 = vcmp.eq.s32.totalorder %v134, %v35
    %vm176 = vcmp.eq.s32.totalorder %v134, %v36
    %vm177 = vcmp.eq.s32.totalorder %v137, %v35
    %vm178 = vcmp.eq.s32.totalorder %v137, %v36
    %vm179 = vcmp.eq.s32.totalorder %v140, %v35
    %vm180 = vcmp.eq.s32.totalorder %v140, %v36
    %vm181 = vcmp.eq.s32.totalorder %v143, %v35
    %vm182 = vcmp.eq.s32.totalorder %v143, %v36
    %vm183 = vcmp.eq.s32.totalorder %v146, %v35
    %vm184 = vcmp.eq.s32.totalorder %v146, %v36
    %vm185 = vcmp.eq.s32.totalorder %v149, %v35
    %vm186 = vcmp.eq.s32.totalorder %v149, %v36
    %vm187 = vcmp.eq.s32.totalorder %v152, %v35
    %vm188 = vcmp.eq.s32.totalorder %v152, %v36
    %vm189 = vcmp.eq.s32.totalorder %v155, %v35
    %vm190 = vcmp.eq.s32.totalorder %v155, %v36
    %vm191 = vcmp.eq.s32.totalorder %v158, %v35
    %vm192 = vcmp.eq.s32.totalorder %v158, %v36
    %vm193 = vcmp.eq.s32.totalorder %v161, %v35
    %vm194 = vcmp.eq.s32.totalorder %v161, %v36
    %vm195 = vcmp.eq.s32.totalorder %v164, %v35
    %vm196 = vcmp.eq.s32.totalorder %v164, %v36
    %v197 = vsel %vm165, 1, 0
    %v198 = vsel %vm166, 1, 0
    %v199 = vsel %vm167, 1, 0
    %v200 = vsel %vm168, 1, 0
    %v201 = vsel %vm169, 1, 0
    %v202 = vsel %vm170, 1, 0
    %v203 = vsel %vm171, 1, 0
    %v204 = vsel %vm172, 1, 0
    %v205 = vsel %vm173, 1, 0
    %v206 = vsel %vm174, 1, 0
    %v207 = vsel %vm175, 1, 0
    %v208 = vsel %vm176, 1, 0
    %v209 = vsel %vm177, 1, 0
    %v210 = vsel %vm178, 1, 0
    %v211 = vsel %vm179, 1, 0
    %v212 = vsel %vm180, 1, 0
    %v213 = vsel %vm181, 1, 0
    %v214 = vsel %vm182, 1, 0
    %v215 = vsel %vm183, 1, 0
    %v216 = vsel %vm184, 1, 0
    %v217 = vsel %vm185, 1, 0
    %v218 = vsel %vm186, 1, 0
    %v219 = vsel %vm187, 1, 0
    %v220 = vsel %vm188, 1, 0
    %v221 = vsel %vm189, 1, 0
    %v222 = vsel %vm190, 1, 0
    %v223 = vsel %vm191, 1, 0
    %v224 = vsel %vm192, 1, 0
    %v225 = vsel %vm193, 1, 0
    %v226 = vsel %vm194, 1, 0
    %v227 = vsel %vm195, 1, 0
    %v228 = vsel %vm196, 1, 0
    %v229 = vcvt.s32.f32 %v197
    %v230 = vcvt.s32.f32 %v198
    %v231 = vcvt.s32.f32 %v199
    %v232 = vcvt.s32.f32 %v200
    %v233 = vcvt.s32.f32 %v201
    %v234 = vcvt.s32.f32 %v202
    %v235 = vcvt.s32.f32 %v203
    %v236 = vcvt.s32.f32 %v204
    %v237 = vcvt.s32.f32 %v205
    %v238 = vcvt.s32.f32 %v206
    %v239 = vcvt.s32.f32 %v207
    %v240 = vcvt.s32.f32 %v208
    %v241 = vcvt.s32.f32 %v209
    %v242 = vcvt.s32.f32 %v210
    %v243 = vcvt.s32.f32 %v211
    %v244 = vcvt.s32.f32 %v212
    %v245 = vcvt.s32.f32 %v213
    %v246 = vcvt.s32.f32 %v214
    %v247 = vcvt.s32.f32 %v215
    %v248 = vcvt.s32.f32 %v216
    %v249 = vcvt.s32.f32 %v217
    %v250 = vcvt.s32.f32 %v218
    %v251 = vcvt.s32.f32 %v219
    %v252 = vcvt.s32.f32 %v220
    %v253 = vcvt.s32.f32 %v221
    %v254 = vcvt.s32.f32 %v222
    %v255 = vcvt.s32.f32 %v223
    %v256 = vcvt.s32.f32 %v224
    %v257 = vcvt.s32.f32 %v225
    %v258 = vcvt.s32.f32 %v226
    %v259 = vcvt.s32.f32 %v227
    %v260 = vcvt.s32.f32 %v228
    %vm261 = vcmask 392192
    %v263 = vsel %vm261, %v230, 0
    %v266 = vsel %vm261, %v232, 0
    %v269 = vsel %vm261, %v234, 0
    %v272 = vsel %vm261, %v236, 0
    %v275 = vsel %vm261, %v238, 0
    %v278 = vsel %vm261, %v240, 0
    %v281 = vsel %vm261, %v242, 0
    %v284 = vsel %vm261, %v244, 0
    %v287 = vsel %vm261, %v246, 0
    %v290 = vsel %vm261, %v248, 0
    %v293 = vsel %vm261, %v250, 0
    %v296 = vsel %vm261, %v252, 0
    %v299 = vsel %vm261, %v254, 0
    %v302 = vsel %vm261, %v256, 0
    %v305 = vsel %vm261, %v258, 0
    %v308 = vsel %vm261, %v260, 0
    %v310 = vand.u32 %v27, 4294901760
    %311 = vmatpush.msra.mxu0 %v310
    %v312 = vand.u32 %v26, 4294901760
    %313 = vmatpush.msra.mxu0 %v312
    %v314 = vand.u32 %v25, 4294901760
    %315 = vmatpush.msra.mxu0 %v314
    %v316 = vand.u32 %v24, 4294901760
    %317 = vmatpush.msra.mxu0 %v316
    %v318 = vand.u32 %v23, 4294901760
    %319 = vmatpush.msra.mxu0 %v318
    %v320 = vand.u32 %v22, 4294901760
    %321 = vmatpush.msra.mxu0 %v320
    %v322 = vand.u32 %v21, 4294901760
    %323 = vmatpush.msra.mxu0 %v322
    %v324 = vand.u32 %v20, 4294901760
    %325 = vmatpush.msra.mxu0 %v324
    %v326 = vand.u32 %v19, 4294901760
    %327 = vmatpush.msra.mxu0 %v326
    %v328 = vand.u32 %v18, 4294901760
    %329 = vmatpush.msra.mxu0 %v328
    %v330 = vand.u32 %v17, 4294901760
    %331 = vmatpush.msra.mxu0 %v330
    %v332 = vand.u32 %v16, 4294901760
    %333 = vmatpush.msra.mxu0 %v332
    %v334 = vand.u32 %v15, 4294901760
    %335 = vmatpush.msra.mxu0 %v334
    %v336 = vand.u32 %v14, 4294901760
    %337 = vmatpush.msra.mxu0 %v336
    %v338 = vand.u32 %v13, 4294901760
    %339 = vmatpush.msra.mxu0 %v338
    %v340 = vand.u32 %v12, 4294901760
    %341 = vmatpush.msra.mxu0 %v340
    %v342 = vand.u32 %v229, 4294901760
    %v343 = vsub.f32 %v229, %v342
    %v344 = vand.u32 %v343, 4294901760
    %v345 = vsub.f32 %v343, %v344
    %v346 = vand.u32 %v345, 4294901760
    %347 = vmatmul.f32.gmra.mxu0 %v346
    %v348 = vpop.f32.mrf.mxu0
    %v349 = vadd.f32 0.0, %v348
    %v350 = vand.u32 %v231, 4294901760
    %v351 = vsub.f32 %v231, %v350
    %v352 = vand.u32 %v351, 4294901760
    %v353 = vsub.f32 %v351, %v352
    %v354 = vand.u32 %v353, 4294901760
    %355 = vmatmul.f32.gmra.mxu0 %v354
    %v356 = vpop.f32.mrf.mxu0
    %v357 = vadd.f32 0.0, %v356
    %v358 = vand.u32 %v233, 4294901760
    %v359 = vsub.f32 %v233, %v358
    %v360 = vand.u32 %v359, 4294901760
    %v361 = vsub.f32 %v359, %v360
    %v362 = vand.u32 %v361, 4294901760
    %363 = vmatmul.f32.gmra.mxu0 %v362
    %v364 = vpop.f32.mrf.mxu0
    %v365 = vadd.f32 0.0, %v364
    %v366 = vand.u32 %v235, 4294901760
    %v367 = vsub.f32 %v235, %v366
    %v368 = vand.u32 %v367, 4294901760
    %v369 = vsub.f32 %v367, %v368
    %v370 = vand.u32 %v369, 4294901760
    %371 = vmatmul.f32.gmra.mxu0 %v370
    %v372 = vpop.f32.mrf.mxu0
    %v373 = vadd.f32 0.0, %v372
    %v374 = vand.u32 %v237, 4294901760
    %v375 = vsub.f32 %v237, %v374
    %v376 = vand.u32 %v375, 4294901760
    %v377 = vsub.f32 %v375, %v376
    %v378 = vand.u32 %v377, 4294901760
    %379 = vmatmul.f32.gmra.mxu0 %v378
    %v380 = vpop.f32.mrf.mxu0
    %v381 = vadd.f32 0.0, %v380
    %v382 = vand.u32 %v239, 4294901760
    %v383 = vsub.f32 %v239, %v382
    %v384 = vand.u32 %v383, 4294901760
    %v385 = vsub.f32 %v383, %v384
    %v386 = vand.u32 %v385, 4294901760
    %387 = vmatmul.f32.gmra.mxu0 %v386
    %v388 = vpop.f32.mrf.mxu0
    %v389 = vadd.f32 0.0, %v388
    %v390 = vand.u32 %v241, 4294901760
    %v391 = vsub.f32 %v241, %v390
    %v392 = vand.u32 %v391, 4294901760
    %v393 = vsub.f32 %v391, %v392
    %v394 = vand.u32 %v393, 4294901760
    %395 = vmatmul.f32.gmra.mxu0 %v394
    %v396 = vpop.f32.mrf.mxu0
    %v397 = vadd.f32 0.0, %v396
    %v398 = vand.u32 %v243, 4294901760
    %v399 = vsub.f32 %v243, %v398
    %v400 = vand.u32 %v399, 4294901760
    %v401 = vsub.f32 %v399, %v400
    %v402 = vand.u32 %v401, 4294901760
    %403 = vmatmul.f32.gmra.mxu0 %v402
    %v404 = vpop.f32.mrf.mxu0
    %v405 = vadd.f32 0.0, %v404
    %v406 = vand.u32 %v245, 4294901760
    %v407 = vsub.f32 %v245, %v406
    %v408 = vand.u32 %v407, 4294901760
    %v409 = vsub.f32 %v407, %v408
    %v410 = vand.u32 %v409, 4294901760
    %411 = vmatmul.f32.gmra.mxu0 %v410
    %v412 = vpop.f32.mrf.mxu0
    %v413 = vadd.f32 0.0, %v412
    %v414 = vand.u32 %v247, 4294901760
    %v415 = vsub.f32 %v247, %v414
    %v416 = vand.u32 %v415, 4294901760
    %v417 = vsub.f32 %v415, %v416
    %v418 = vand.u32 %v417, 4294901760
    %419 = vmatmul.f32.gmra.mxu0 %v418
    %v420 = vpop.f32.mrf.mxu0
    %v421 = vadd.f32 0.0, %v420
    %v422 = vand.u32 %v249, 4294901760
    %v423 = vsub.f32 %v249, %v422
    %v424 = vand.u32 %v423, 4294901760
    %v425 = vsub.f32 %v423, %v424
    %v426 = vand.u32 %v425, 4294901760
    %427 = vmatmul.f32.gmra.mxu0 %v426
    %v428 = vpop.f32.mrf.mxu0
    %v429 = vadd.f32 0.0, %v428
    %v430 = vand.u32 %v251, 4294901760
    %v431 = vsub.f32 %v251, %v430
    %v432 = vand.u32 %v431, 4294901760
    %v433 = vsub.f32 %v431, %v432
    %v434 = vand.u32 %v433, 4294901760
    %435 = vmatmul.f32.gmra.mxu0 %v434
    %v436 = vpop.f32.mrf.mxu0
    %v437 = vadd.f32 0.0, %v436
    %v438 = vand.u32 %v253, 4294901760
    %v439 = vsub.f32 %v253, %v438
    %v440 = vand.u32 %v439, 4294901760
    %v441 = vsub.f32 %v439, %v440
    %v442 = vand.u32 %v441, 4294901760
    %443 = vmatmul.f32.gmra.mxu0 %v442
    %v444 = vpop.f32.mrf.mxu0
    %v445 = vadd.f32 0.0, %v444
    %v446 = vand.u32 %v255, 4294901760
    %v447 = vsub.f32 %v255, %v446
    %v448 = vand.u32 %v447, 4294901760
    %v449 = vsub.f32 %v447, %v448
    %v450 = vand.u32 %v449, 4294901760
    %451 = vmatmul.f32.gmra.mxu0 %v450
    %v452 = vpop.f32.mrf.mxu0
    %v453 = vadd.f32 0.0, %v452
    %v454 = vand.u32 %v257, 4294901760
    %v455 = vsub.f32 %v257, %v454
    %v456 = vand.u32 %v455, 4294901760
    %v457 = vsub.f32 %v455, %v456
    %v458 = vand.u32 %v457, 4294901760
    %459 = vmatmul.f32.gmra.mxu0 %v458
    %v460 = vpop.f32.mrf.mxu0
    %v461 = vadd.f32 0.0, %v460
    %v462 = vand.u32 %v259, 4294901760
    %v463 = vsub.f32 %v259, %v462
    %v464 = vand.u32 %v463, 4294901760
    %v465 = vsub.f32 %v463, %v464
    %v466 = vand.u32 %v465, 4294901760
    %467 = vmatmul.f32.gmra.mxu0 %v466
    %v468 = vpop.f32.mrf.mxu0
    %v469 = vadd.f32 0.0, %v468
    %470 = vdwg.mxu0
    %v471 = vand.u32 %v27, 4294901760
    %v472 = vsub.f32 %v27, %v471
    %v473 = vand.u32 %v472, 4294901760
    %v474 = vsub.f32 %v472, %v473
    %v475 = vand.u32 %v474, 4294901760
    %476 = vmatpush.msra.mxu0 %v475
    %v477 = vand.u32 %v26, 4294901760
    %v478 = vsub.f32 %v26, %v477
    %v479 = vand.u32 %v478, 4294901760
    %v480 = vsub.f32 %v478, %v479
    %v481 = vand.u32 %v480, 4294901760
    %482 = vmatpush.msra.mxu0 %v481
    %v483 = vand.u32 %v25, 4294901760
    %v484 = vsub.f32 %v25, %v483
    %v485 = vand.u32 %v484, 4294901760
    %v486 = vsub.f32 %v484, %v485
    %v487 = vand.u32 %v486, 4294901760
    %488 = vmatpush.msra.mxu0 %v487
    %v489 = vand.u32 %v24, 4294901760
    %v490 = vsub.f32 %v24, %v489
    %v491 = vand.u32 %v490, 4294901760
    %v492 = vsub.f32 %v490, %v491
    %v493 = vand.u32 %v492, 4294901760
    %494 = vmatpush.msra.mxu0 %v493
    %v495 = vand.u32 %v23, 4294901760
    %v496 = vsub.f32 %v23, %v495
    %v497 = vand.u32 %v496, 4294901760
    %v498 = vsub.f32 %v496, %v497
    %v499 = vand.u32 %v498, 4294901760
    %500 = vmatpush.msra.mxu0 %v499
    %v501 = vand.u32 %v22, 4294901760
    %v502 = vsub.f32 %v22, %v501
    %v503 = vand.u32 %v502, 4294901760
    %v504 = vsub.f32 %v502, %v503
    %v505 = vand.u32 %v504, 4294901760
    %506 = vmatpush.msra.mxu0 %v505
    %v507 = vand.u32 %v21, 4294901760
    %v508 = vsub.f32 %v21, %v507
    %v509 = vand.u32 %v508, 4294901760
    %v510 = vsub.f32 %v508, %v509
    %v511 = vand.u32 %v510, 4294901760
    %512 = vmatpush.msra.mxu0 %v511
    %v513 = vand.u32 %v20, 4294901760
    %v514 = vsub.f32 %v20, %v513
    %v515 = vand.u32 %v514, 4294901760
    %v516 = vsub.f32 %v514, %v515
    %v517 = vand.u32 %v516, 4294901760
    %518 = vmatpush.msra.mxu0 %v517
    %v519 = vand.u32 %v19, 4294901760
    %v520 = vsub.f32 %v19, %v519
    %v521 = vand.u32 %v520, 4294901760
    %v522 = vsub.f32 %v520, %v521
    %v523 = vand.u32 %v522, 4294901760
    %524 = vmatpush.msra.mxu0 %v523
    %v525 = vand.u32 %v18, 4294901760
    %v526 = vsub.f32 %v18, %v525
    %v527 = vand.u32 %v526, 4294901760
    %v528 = vsub.f32 %v526, %v527
    %v529 = vand.u32 %v528, 4294901760
    %530 = vmatpush.msra.mxu0 %v529
    %v531 = vand.u32 %v17, 4294901760
    %v532 = vsub.f32 %v17, %v531
    %v533 = vand.u32 %v532, 4294901760
    %v534 = vsub.f32 %v532, %v533
    %v535 = vand.u32 %v534, 4294901760
    %536 = vmatpush.msra.mxu0 %v535
    %v537 = vand.u32 %v16, 4294901760
    %v538 = vsub.f32 %v16, %v537
    %v539 = vand.u32 %v538, 4294901760
    %v540 = vsub.f32 %v538, %v539
    %v541 = vand.u32 %v540, 4294901760
    %542 = vmatpush.msra.mxu0 %v541
    %v543 = vand.u32 %v15, 4294901760
    %v544 = vsub.f32 %v15, %v543
    %v545 = vand.u32 %v544, 4294901760
    %v546 = vsub.f32 %v544, %v545
    %v547 = vand.u32 %v546, 4294901760
    %548 = vmatpush.msra.mxu0 %v547
    %v549 = vand.u32 %v14, 4294901760
    %v550 = vsub.f32 %v14, %v549
    %v551 = vand.u32 %v550, 4294901760
    %v552 = vsub.f32 %v550, %v551
    %v553 = vand.u32 %v552, 4294901760
    %554 = vmatpush.msra.mxu0 %v553
    %v555 = vand.u32 %v13, 4294901760
    %v556 = vsub.f32 %v13, %v555
    %v557 = vand.u32 %v556, 4294901760
    %v558 = vsub.f32 %v556, %v557
    %v559 = vand.u32 %v558, 4294901760
    %560 = vmatpush.msra.mxu0 %v559
    %v561 = vand.u32 %v12, 4294901760
    %v562 = vsub.f32 %v12, %v561
    %v563 = vand.u32 %v562, 4294901760
    %v564 = vsub.f32 %v562, %v563
    %v565 = vand.u32 %v564, 4294901760
    %566 = vmatpush.msra.mxu0 %v565
    %v567 = vand.u32 %v229, 4294901760
    %568 = vmatmul.f32.gmra.mxu0 %v567
    %v569 = vpop.f32.mrf.mxu0
    %v570 = vadd.f32 %v349, %v569
    %v571 = vand.u32 %v231, 4294901760
    %572 = vmatmul.f32.gmra.mxu0 %v571
    %v573 = vpop.f32.mrf.mxu0
    %v574 = vadd.f32 %v357, %v573
    %v575 = vand.u32 %v233, 4294901760
    %576 = vmatmul.f32.gmra.mxu0 %v575
    %v577 = vpop.f32.mrf.mxu0
    %v578 = vadd.f32 %v365, %v577
    %v579 = vand.u32 %v235, 4294901760
    %580 = vmatmul.f32.gmra.mxu0 %v579
    %v581 = vpop.f32.mrf.mxu0
    %v582 = vadd.f32 %v373, %v581
    %v583 = vand.u32 %v237, 4294901760
    %584 = vmatmul.f32.gmra.mxu0 %v583
    %v585 = vpop.f32.mrf.mxu0
    %v586 = vadd.f32 %v381, %v585
    %v587 = vand.u32 %v239, 4294901760
    %588 = vmatmul.f32.gmra.mxu0 %v587
    %v589 = vpop.f32.mrf.mxu0
    %v590 = vadd.f32 %v389, %v589
    %v591 = vand.u32 %v241, 4294901760
    %592 = vmatmul.f32.gmra.mxu0 %v591
    %v593 = vpop.f32.mrf.mxu0
    %v594 = vadd.f32 %v397, %v593
    %v595 = vand.u32 %v243, 4294901760
    %596 = vmatmul.f32.gmra.mxu0 %v595
    %v597 = vpop.f32.mrf.mxu0
    %v598 = vadd.f32 %v405, %v597
    %v599 = vand.u32 %v245, 4294901760
    %600 = vmatmul.f32.gmra.mxu0 %v599
    %v601 = vpop.f32.mrf.mxu0
    %v602 = vadd.f32 %v413, %v601
    %v603 = vand.u32 %v247, 4294901760
    %604 = vmatmul.f32.gmra.mxu0 %v603
    %v605 = vpop.f32.mrf.mxu0
    %v606 = vadd.f32 %v421, %v605
    %v607 = vand.u32 %v249, 4294901760
    %608 = vmatmul.f32.gmra.mxu0 %v607
    %v609 = vpop.f32.mrf.mxu0
    %v610 = vadd.f32 %v429, %v609
    %v611 = vand.u32 %v251, 4294901760
    %612 = vmatmul.f32.gmra.mxu0 %v611
    %v613 = vpop.f32.mrf.mxu0
    %v614 = vadd.f32 %v437, %v613
    %v615 = vand.u32 %v253, 4294901760
    %616 = vmatmul.f32.gmra.mxu0 %v615
    %v617 = vpop.f32.mrf.mxu0
    %v618 = vadd.f32 %v445, %v617
    %v619 = vand.u32 %v255, 4294901760
    %620 = vmatmul.f32.gmra.mxu0 %v619
    %v621 = vpop.f32.mrf.mxu0
    %v622 = vadd.f32 %v453, %v621
    %v623 = vand.u32 %v257, 4294901760
    %624 = vmatmul.f32.gmra.mxu0 %v623
    %v625 = vpop.f32.mrf.mxu0
    %v626 = vadd.f32 %v461, %v625
    %v627 = vand.u32 %v259, 4294901760
    %628 = vmatmul.f32.gmra.mxu0 %v627
    %v629 = vpop.f32.mrf.mxu0
    %v630 = vadd.f32 %v469, %v629
    %631 = vdwg.mxu0
    %v632 = vand.u32 %v27, 4294901760
    %v633 = vsub.f32 %v27, %v632
    %634 = vmatpush.msra.mxu0 %v633
    %v635 = vand.u32 %v26, 4294901760
    %v636 = vsub.f32 %v26, %v635
    %637 = vmatpush.msra.mxu0 %v636
    %v638 = vand.u32 %v25, 4294901760
    %v639 = vsub.f32 %v25, %v638
    %640 = vmatpush.msra.mxu0 %v639
    %v641 = vand.u32 %v24, 4294901760
    %v642 = vsub.f32 %v24, %v641
    %643 = vmatpush.msra.mxu0 %v642
    %v644 = vand.u32 %v23, 4294901760
    %v645 = vsub.f32 %v23, %v644
    %646 = vmatpush.msra.mxu0 %v645
    %v647 = vand.u32 %v22, 4294901760
    %v648 = vsub.f32 %v22, %v647
    %649 = vmatpush.msra.mxu0 %v648
    %v650 = vand.u32 %v21, 4294901760
    %v651 = vsub.f32 %v21, %v650
    %652 = vmatpush.msra.mxu0 %v651
    %v653 = vand.u32 %v20, 4294901760
    %v654 = vsub.f32 %v20, %v653
    %655 = vmatpush.msra.mxu0 %v654
    %v656 = vand.u32 %v19, 4294901760
    %v657 = vsub.f32 %v19, %v656
    %658 = vmatpush.msra.mxu0 %v657
    %v659 = vand.u32 %v18, 4294901760
    %v660 = vsub.f32 %v18, %v659
    %661 = vmatpush.msra.mxu0 %v660
    %v662 = vand.u32 %v17, 4294901760
    %v663 = vsub.f32 %v17, %v662
    %664 = vmatpush.msra.mxu0 %v663
    %v665 = vand.u32 %v16, 4294901760
    %v666 = vsub.f32 %v16, %v665
    %667 = vmatpush.msra.mxu0 %v666
    %v668 = vand.u32 %v15, 4294901760
    %v669 = vsub.f32 %v15, %v668
    %670 = vmatpush.msra.mxu0 %v669
    %v671 = vand.u32 %v14, 4294901760
    %v672 = vsub.f32 %v14, %v671
    %673 = vmatpush.msra.mxu0 %v672
    %v674 = vand.u32 %v13, 4294901760
    %v675 = vsub.f32 %v13, %v674
    %676 = vmatpush.msra.mxu0 %v675
    %v677 = vand.u32 %v12, 4294901760
    %v678 = vsub.f32 %v12, %v677
    %679 = vmatpush.msra.mxu0 %v678
    %v680 = vand.u32 %v229, 4294901760
    %v681 = vsub.f32 %v229, %v680
    %682 = vmatmul.f32.gmra.mxu0 %v681
    %v683 = vpop.f32.mrf.mxu0
    %v684 = vadd.f32 %v570, %v683
    %v685 = vand.u32 %v231, 4294901760
    %v686 = vsub.f32 %v231, %v685
    %687 = vmatmul.f32.gmra.mxu0 %v686
    %v688 = vpop.f32.mrf.mxu0
    %v689 = vadd.f32 %v574, %v688
    %v690 = vand.u32 %v233, 4294901760
    %v691 = vsub.f32 %v233, %v690
    %692 = vmatmul.f32.gmra.mxu0 %v691
    %v693 = vpop.f32.mrf.mxu0
    %v694 = vadd.f32 %v578, %v693
    %v695 = vand.u32 %v235, 4294901760
    %v696 = vsub.f32 %v235, %v695
    %697 = vmatmul.f32.gmra.mxu0 %v696
    %v698 = vpop.f32.mrf.mxu0
    %v699 = vadd.f32 %v582, %v698
    %v700 = vand.u32 %v237, 4294901760
    %v701 = vsub.f32 %v237, %v700
    %702 = vmatmul.f32.gmra.mxu0 %v701
    %v703 = vpop.f32.mrf.mxu0
    %v704 = vadd.f32 %v586, %v703
    %v705 = vand.u32 %v239, 4294901760
    %v706 = vsub.f32 %v239, %v705
    %707 = vmatmul.f32.gmra.mxu0 %v706
    %v708 = vpop.f32.mrf.mxu0
    %v709 = vadd.f32 %v590, %v708
    %v710 = vand.u32 %v241, 4294901760
    %v711 = vsub.f32 %v241, %v710
    %712 = vmatmul.f32.gmra.mxu0 %v711
    %v713 = vpop.f32.mrf.mxu0
    %v714 = vadd.f32 %v594, %v713
    %v715 = vand.u32 %v243, 4294901760
    %v716 = vsub.f32 %v243, %v715
    %717 = vmatmul.f32.gmra.mxu0 %v716
    %v718 = vpop.f32.mrf.mxu0
    %v719 = vadd.f32 %v598, %v718
    %v720 = vand.u32 %v245, 4294901760
    %v721 = vsub.f32 %v245, %v720
    %722 = vmatmul.f32.gmra.mxu0 %v721
    %v723 = vpop.f32.mrf.mxu0
    %v724 = vadd.f32 %v602, %v723
    %v725 = vand.u32 %v247, 4294901760
    %v726 = vsub.f32 %v247, %v725
    %727 = vmatmul.f32.gmra.mxu0 %v726
    %v728 = vpop.f32.mrf.mxu0
    %v729 = vadd.f32 %v606, %v728
    %v730 = vand.u32 %v249, 4294901760
    %v731 = vsub.f32 %v249, %v730
    %732 = vmatmul.f32.gmra.mxu0 %v731
    %v733 = vpop.f32.mrf.mxu0
    %v734 = vadd.f32 %v610, %v733
    %v735 = vand.u32 %v251, 4294901760
    %v736 = vsub.f32 %v251, %v735
    %737 = vmatmul.f32.gmra.mxu0 %v736
    %v738 = vpop.f32.mrf.mxu0
    %v739 = vadd.f32 %v614, %v738
    %v740 = vand.u32 %v253, 4294901760
    %v741 = vsub.f32 %v253, %v740
    %742 = vmatmul.f32.gmra.mxu0 %v741
    %v743 = vpop.f32.mrf.mxu0
    %v744 = vadd.f32 %v618, %v743
    %v745 = vand.u32 %v255, 4294901760
    %v746 = vsub.f32 %v255, %v745
    %747 = vmatmul.f32.gmra.mxu0 %v746
    %v748 = vpop.f32.mrf.mxu0
    %v749 = vadd.f32 %v622, %v748
    %v750 = vand.u32 %v257, 4294901760
    %v751 = vsub.f32 %v257, %v750
    %752 = vmatmul.f32.gmra.mxu0 %v751
    %v753 = vpop.f32.mrf.mxu0
    %v754 = vadd.f32 %v626, %v753
    %v755 = vand.u32 %v259, 4294901760
    %v756 = vsub.f32 %v259, %v755
    %757 = vmatmul.f32.gmra.mxu0 %v756
    %v758 = vpop.f32.mrf.mxu0
    %v759 = vadd.f32 %v630, %v758
    %760 = vdwg.mxu0
    %v761 = vand.u32 %v27, 4294901760
    %762 = vmatpush.msra.mxu0 %v761
    %v763 = vand.u32 %v26, 4294901760
    %764 = vmatpush.msra.mxu0 %v763
    %v765 = vand.u32 %v25, 4294901760
    %766 = vmatpush.msra.mxu0 %v765
    %v767 = vand.u32 %v24, 4294901760
    %768 = vmatpush.msra.mxu0 %v767
    %v769 = vand.u32 %v23, 4294901760
    %770 = vmatpush.msra.mxu0 %v769
    %v771 = vand.u32 %v22, 4294901760
    %772 = vmatpush.msra.mxu0 %v771
    %v773 = vand.u32 %v21, 4294901760
    %774 = vmatpush.msra.mxu0 %v773
    %v775 = vand.u32 %v20, 4294901760
    %776 = vmatpush.msra.mxu0 %v775
    %v777 = vand.u32 %v19, 4294901760
    %778 = vmatpush.msra.mxu0 %v777
    %v779 = vand.u32 %v18, 4294901760
    %780 = vmatpush.msra.mxu0 %v779
    %v781 = vand.u32 %v17, 4294901760
    %782 = vmatpush.msra.mxu0 %v781
    %v783 = vand.u32 %v16, 4294901760
    %784 = vmatpush.msra.mxu0 %v783
    %v785 = vand.u32 %v15, 4294901760
    %786 = vmatpush.msra.mxu0 %v785
    %v787 = vand.u32 %v14, 4294901760
    %788 = vmatpush.msra.mxu0 %v787
    %v789 = vand.u32 %v13, 4294901760
    %790 = vmatpush.msra.mxu0 %v789
    %v791 = vand.u32 %v12, 4294901760
    %792 = vmatpush.msra.mxu0 %v791
    %v793 = vand.u32 %v229, 4294901760
    %v794 = vsub.f32 %v229, %v793
    %v795 = vand.u32 %v794, 4294901760
    %796 = vmatmul.f32.gmra.mxu0 %v795
    %v797 = vpop.f32.mrf.mxu0
    %v798 = vadd.f32 %v684, %v797
    %v799 = vand.u32 %v231, 4294901760
    %v800 = vsub.f32 %v231, %v799
    %v801 = vand.u32 %v800, 4294901760
    %802 = vmatmul.f32.gmra.mxu0 %v801
    %v803 = vpop.f32.mrf.mxu0
    %v804 = vadd.f32 %v689, %v803
    %v805 = vand.u32 %v233, 4294901760
    %v806 = vsub.f32 %v233, %v805
    %v807 = vand.u32 %v806, 4294901760
    %808 = vmatmul.f32.gmra.mxu0 %v807
    %v809 = vpop.f32.mrf.mxu0
    %v810 = vadd.f32 %v694, %v809
    %v811 = vand.u32 %v235, 4294901760
    %v812 = vsub.f32 %v235, %v811
    %v813 = vand.u32 %v812, 4294901760
    %814 = vmatmul.f32.gmra.mxu0 %v813
    %v815 = vpop.f32.mrf.mxu0
    %v816 = vadd.f32 %v699, %v815
    %v817 = vand.u32 %v237, 4294901760
    %v818 = vsub.f32 %v237, %v817
    %v819 = vand.u32 %v818, 4294901760
    %820 = vmatmul.f32.gmra.mxu0 %v819
    %v821 = vpop.f32.mrf.mxu0
    %v822 = vadd.f32 %v704, %v821
    %v823 = vand.u32 %v239, 4294901760
    %v824 = vsub.f32 %v239, %v823
    %v825 = vand.u32 %v824, 4294901760
    %826 = vmatmul.f32.gmra.mxu0 %v825
    %v827 = vpop.f32.mrf.mxu0
    %v828 = vadd.f32 %v709, %v827
    %v829 = vand.u32 %v241, 4294901760
    %v830 = vsub.f32 %v241, %v829
    %v831 = vand.u32 %v830, 4294901760
    %832 = vmatmul.f32.gmra.mxu0 %v831
    %v833 = vpop.f32.mrf.mxu0
    %v834 = vadd.f32 %v714, %v833
    %v835 = vand.u32 %v243, 4294901760
    %v836 = vsub.f32 %v243, %v835
    %v837 = vand.u32 %v836, 4294901760
    %838 = vmatmul.f32.gmra.mxu0 %v837
    %v839 = vpop.f32.mrf.mxu0
    %v840 = vadd.f32 %v719, %v839
    %v841 = vand.u32 %v245, 4294901760
    %v842 = vsub.f32 %v245, %v841
    %v843 = vand.u32 %v842, 4294901760
    %844 = vmatmul.f32.gmra.mxu0 %v843
    %v845 = vpop.f32.mrf.mxu0
    %v846 = vadd.f32 %v724, %v845
    %v847 = vand.u32 %v247, 4294901760
    %v848 = vsub.f32 %v247, %v847
    %v849 = vand.u32 %v848, 4294901760
    %850 = vmatmul.f32.gmra.mxu0 %v849
    %v851 = vpop.f32.mrf.mxu0
    %v852 = vadd.f32 %v729, %v851
    %v853 = vand.u32 %v249, 4294901760
    %v854 = vsub.f32 %v249, %v853
    %v855 = vand.u32 %v854, 4294901760
    %856 = vmatmul.f32.gmra.mxu0 %v855
    %v857 = vpop.f32.mrf.mxu0
    %v858 = vadd.f32 %v734, %v857
    %v859 = vand.u32 %v251, 4294901760
    %v860 = vsub.f32 %v251, %v859
    %v861 = vand.u32 %v860, 4294901760
    %862 = vmatmul.f32.gmra.mxu0 %v861
    %v863 = vpop.f32.mrf.mxu0
    %v864 = vadd.f32 %v739, %v863
    %v865 = vand.u32 %v253, 4294901760
    %v866 = vsub.f32 %v253, %v865
    %v867 = vand.u32 %v866, 4294901760
    %868 = vmatmul.f32.gmra.mxu0 %v867
    %v869 = vpop.f32.mrf.mxu0
    %v870 = vadd.f32 %v744, %v869
    %v871 = vand.u32 %v255, 4294901760
    %v872 = vsub.f32 %v255, %v871
    %v873 = vand.u32 %v872, 4294901760
    %874 = vmatmul.f32.gmra.mxu0 %v873
    %v875 = vpop.f32.mrf.mxu0
    %v876 = vadd.f32 %v749, %v875
    %v877 = vand.u32 %v257, 4294901760
    %v878 = vsub.f32 %v257, %v877
    %v879 = vand.u32 %v878, 4294901760
    %880 = vmatmul.f32.gmra.mxu0 %v879
    %v881 = vpop.f32.mrf.mxu0
    %v882 = vadd.f32 %v754, %v881
    %v883 = vand.u32 %v259, 4294901760
    %v884 = vsub.f32 %v259, %v883
    %v885 = vand.u32 %v884, 4294901760
    %886 = vmatmul.f32.gmra.mxu0 %v885
    %v887 = vpop.f32.mrf.mxu0
    %v888 = vadd.f32 %v759, %v887
    %889 = vdwg.mxu0
    %v890 = vand.u32 %v27, 4294901760
    %v891 = vsub.f32 %v27, %v890
    %v892 = vand.u32 %v891, 4294901760
    %893 = vmatpush.msra.mxu0 %v892
    %v894 = vand.u32 %v26, 4294901760
    %v895 = vsub.f32 %v26, %v894
    %v896 = vand.u32 %v895, 4294901760
    %897 = vmatpush.msra.mxu0 %v896
    %v898 = vand.u32 %v25, 4294901760
    %v899 = vsub.f32 %v25, %v898
    %v900 = vand.u32 %v899, 4294901760
    %901 = vmatpush.msra.mxu0 %v900
    %v902 = vand.u32 %v24, 4294901760
    %v903 = vsub.f32 %v24, %v902
    %v904 = vand.u32 %v903, 4294901760
    %905 = vmatpush.msra.mxu0 %v904
    %v906 = vand.u32 %v23, 4294901760
    %v907 = vsub.f32 %v23, %v906
    %v908 = vand.u32 %v907, 4294901760
    %909 = vmatpush.msra.mxu0 %v908
    %v910 = vand.u32 %v22, 4294901760
    %v911 = vsub.f32 %v22, %v910
    %v912 = vand.u32 %v911, 4294901760
    %913 = vmatpush.msra.mxu0 %v912
    %v914 = vand.u32 %v21, 4294901760
    %v915 = vsub.f32 %v21, %v914
    %v916 = vand.u32 %v915, 4294901760
    %917 = vmatpush.msra.mxu0 %v916
    %v918 = vand.u32 %v20, 4294901760
    %v919 = vsub.f32 %v20, %v918
    %v920 = vand.u32 %v919, 4294901760
    %921 = vmatpush.msra.mxu0 %v920
    %v922 = vand.u32 %v19, 4294901760
    %v923 = vsub.f32 %v19, %v922
    %v924 = vand.u32 %v923, 4294901760
    %925 = vmatpush.msra.mxu0 %v924
    %v926 = vand.u32 %v18, 4294901760
    %v927 = vsub.f32 %v18, %v926
    %v928 = vand.u32 %v927, 4294901760
    %929 = vmatpush.msra.mxu0 %v928
    %v930 = vand.u32 %v17, 4294901760
    %v931 = vsub.f32 %v17, %v930
    %v932 = vand.u32 %v931, 4294901760
    %933 = vmatpush.msra.mxu0 %v932
    %v934 = vand.u32 %v16, 4294901760
    %v935 = vsub.f32 %v16, %v934
    %v936 = vand.u32 %v935, 4294901760
    %937 = vmatpush.msra.mxu0 %v936
    %v938 = vand.u32 %v15, 4294901760
    %v939 = vsub.f32 %v15, %v938
    %v940 = vand.u32 %v939, 4294901760
    %941 = vmatpush.msra.mxu0 %v940
    %v942 = vand.u32 %v14, 4294901760
    %v943 = vsub.f32 %v14, %v942
    %v944 = vand.u32 %v943, 4294901760
    %945 = vmatpush.msra.mxu0 %v944
    %v946 = vand.u32 %v13, 4294901760
    %v947 = vsub.f32 %v13, %v946
    %v948 = vand.u32 %v947, 4294901760
    %949 = vmatpush.msra.mxu0 %v948
    %v950 = vand.u32 %v12, 4294901760
    %v951 = vsub.f32 %v12, %v950
    %v952 = vand.u32 %v951, 4294901760
    %953 = vmatpush.msra.mxu0 %v952
    %v954 = vand.u32 %v229, 4294901760
    %955 = vmatmul.f32.gmra.mxu0 %v954
    %v956 = vpop.f32.mrf.mxu0
    %v957 = vadd.f32 %v798, %v956
    %v958 = vand.u32 %v231, 4294901760
    %959 = vmatmul.f32.gmra.mxu0 %v958
    %v960 = vpop.f32.mrf.mxu0
    %v961 = vadd.f32 %v804, %v960
    %v962 = vand.u32 %v233, 4294901760
    %963 = vmatmul.f32.gmra.mxu0 %v962
    %v964 = vpop.f32.mrf.mxu0
    %v965 = vadd.f32 %v810, %v964
    %v966 = vand.u32 %v235, 4294901760
    %967 = vmatmul.f32.gmra.mxu0 %v966
    %v968 = vpop.f32.mrf.mxu0
    %v969 = vadd.f32 %v816, %v968
    %v970 = vand.u32 %v237, 4294901760
    %971 = vmatmul.f32.gmra.mxu0 %v970
    %v972 = vpop.f32.mrf.mxu0
    %v973 = vadd.f32 %v822, %v972
    %v974 = vand.u32 %v239, 4294901760
    %975 = vmatmul.f32.gmra.mxu0 %v974
    %v976 = vpop.f32.mrf.mxu0
    %v977 = vadd.f32 %v828, %v976
    %v978 = vand.u32 %v241, 4294901760
    %979 = vmatmul.f32.gmra.mxu0 %v978
    %v980 = vpop.f32.mrf.mxu0
    %v981 = vadd.f32 %v834, %v980
    %v982 = vand.u32 %v243, 4294901760
    %983 = vmatmul.f32.gmra.mxu0 %v982
    %v984 = vpop.f32.mrf.mxu0
    %v985 = vadd.f32 %v840, %v984
    %v986 = vand.u32 %v245, 4294901760
    %987 = vmatmul.f32.gmra.mxu0 %v986
    %v988 = vpop.f32.mrf.mxu0
    %v989 = vadd.f32 %v846, %v988
    %v990 = vand.u32 %v247, 4294901760
    %991 = vmatmul.f32.gmra.mxu0 %v990
    %v992 = vpop.f32.mrf.mxu0
    %v993 = vadd.f32 %v852, %v992
    %v994 = vand.u32 %v249, 4294901760
    %995 = vmatmul.f32.gmra.mxu0 %v994
    %v996 = vpop.f32.mrf.mxu0
    %v997 = vadd.f32 %v858, %v996
    %v998 = vand.u32 %v251, 4294901760
    %999 = vmatmul.f32.gmra.mxu0 %v998
    %v1000 = vpop.f32.mrf.mxu0
    %v1001 = vadd.f32 %v864, %v1000
    %v1002 = vand.u32 %v253, 4294901760
    %1003 = vmatmul.f32.gmra.mxu0 %v1002
    %v1004 = vpop.f32.mrf.mxu0
    %v1005 = vadd.f32 %v870, %v1004
    %v1006 = vand.u32 %v255, 4294901760
    %1007 = vmatmul.f32.gmra.mxu0 %v1006
    %v1008 = vpop.f32.mrf.mxu0
    %v1009 = vadd.f32 %v876, %v1008
    %v1010 = vand.u32 %v257, 4294901760
    %1011 = vmatmul.f32.gmra.mxu0 %v1010
    %v1012 = vpop.f32.mrf.mxu0
    %v1013 = vadd.f32 %v882, %v1012
    %v1014 = vand.u32 %v259, 4294901760
    %1015 = vmatmul.f32.gmra.mxu0 %v1014
    %v1016 = vpop.f32.mrf.mxu0
    %v1017 = vadd.f32 %v888, %v1016
    %1018 = vdwg.mxu0
    %v1019 = vand.u32 %v27, 4294901760
    %1020 = vmatpush.msra.mxu0 %v1019
    %v1021 = vand.u32 %v26, 4294901760
    %1022 = vmatpush.msra.mxu0 %v1021
    %v1023 = vand.u32 %v25, 4294901760
    %1024 = vmatpush.msra.mxu0 %v1023
    %v1025 = vand.u32 %v24, 4294901760
    %1026 = vmatpush.msra.mxu0 %v1025
    %v1027 = vand.u32 %v23, 4294901760
    %1028 = vmatpush.msra.mxu0 %v1027
    %v1029 = vand.u32 %v22, 4294901760
    %1030 = vmatpush.msra.mxu0 %v1029
    %v1031 = vand.u32 %v21, 4294901760
    %1032 = vmatpush.msra.mxu0 %v1031
    %v1033 = vand.u32 %v20, 4294901760
    %1034 = vmatpush.msra.mxu0 %v1033
    %v1035 = vand.u32 %v19, 4294901760
    %1036 = vmatpush.msra.mxu0 %v1035
    %v1037 = vand.u32 %v18, 4294901760
    %1038 = vmatpush.msra.mxu0 %v1037
    %v1039 = vand.u32 %v17, 4294901760
    %1040 = vmatpush.msra.mxu0 %v1039
    %v1041 = vand.u32 %v16, 4294901760
    %1042 = vmatpush.msra.mxu0 %v1041
    %v1043 = vand.u32 %v15, 4294901760
    %1044 = vmatpush.msra.mxu0 %v1043
    %v1045 = vand.u32 %v14, 4294901760
    %1046 = vmatpush.msra.mxu0 %v1045
    %v1047 = vand.u32 %v13, 4294901760
    %1048 = vmatpush.msra.mxu0 %v1047
    %v1049 = vand.u32 %v12, 4294901760
    %1050 = vmatpush.msra.mxu0 %v1049
    %v1051 = vand.u32 %v229, 4294901760
    %1052 = vmatmul.f32.gmra.mxu0 %v1051
    %v1053 = vpop.f32.mrf.mxu0
    %v1054 = vadd.f32 %v957, %v1053
    %v1055 = vand.u32 %v231, 4294901760
    %1056 = vmatmul.f32.gmra.mxu0 %v1055
    %v1057 = vpop.f32.mrf.mxu0
    %v1058 = vadd.f32 %v961, %v1057
    %v1059 = vand.u32 %v233, 4294901760
    %1060 = vmatmul.f32.gmra.mxu0 %v1059
    %v1061 = vpop.f32.mrf.mxu0
    %v1062 = vadd.f32 %v965, %v1061
    %v1063 = vand.u32 %v235, 4294901760
    %1064 = vmatmul.f32.gmra.mxu0 %v1063
    %v1065 = vpop.f32.mrf.mxu0
    %v1066 = vadd.f32 %v969, %v1065
    %v1067 = vand.u32 %v237, 4294901760
    %1068 = vmatmul.f32.gmra.mxu0 %v1067
    %v1069 = vpop.f32.mrf.mxu0
    %v1070 = vadd.f32 %v973, %v1069
    %v1071 = vand.u32 %v239, 4294901760
    %1072 = vmatmul.f32.gmra.mxu0 %v1071
    %v1073 = vpop.f32.mrf.mxu0
    %v1074 = vadd.f32 %v977, %v1073
    %v1075 = vand.u32 %v241, 4294901760
    %1076 = vmatmul.f32.gmra.mxu0 %v1075
    %v1077 = vpop.f32.mrf.mxu0
    %v1078 = vadd.f32 %v981, %v1077
    %v1079 = vand.u32 %v243, 4294901760
    %1080 = vmatmul.f32.gmra.mxu0 %v1079
    %v1081 = vpop.f32.mrf.mxu0
    %v1082 = vadd.f32 %v985, %v1081
    %v1083 = vand.u32 %v245, 4294901760
    %1084 = vmatmul.f32.gmra.mxu0 %v1083
    %v1085 = vpop.f32.mrf.mxu0
    %v1086 = vadd.f32 %v989, %v1085
    %v1087 = vand.u32 %v247, 4294901760
    %1088 = vmatmul.f32.gmra.mxu0 %v1087
    %v1089 = vpop.f32.mrf.mxu0
    %v1090 = vadd.f32 %v993, %v1089
    %v1091 = vand.u32 %v249, 4294901760
    %1092 = vmatmul.f32.gmra.mxu0 %v1091
    %v1093 = vpop.f32.mrf.mxu0
    %v1094 = vadd.f32 %v997, %v1093
    %v1095 = vand.u32 %v251, 4294901760
    %1096 = vmatmul.f32.gmra.mxu0 %v1095
    %v1097 = vpop.f32.mrf.mxu0
    %v1098 = vadd.f32 %v1001, %v1097
    %v1099 = vand.u32 %v253, 4294901760
    %1100 = vmatmul.f32.gmra.mxu0 %v1099
    %v1101 = vpop.f32.mrf.mxu0
    %v1102 = vadd.f32 %v1005, %v1101
    %v1103 = vand.u32 %v255, 4294901760
    %1104 = vmatmul.f32.gmra.mxu0 %v1103
    %v1105 = vpop.f32.mrf.mxu0
    %v1106 = vadd.f32 %v1009, %v1105
    %v1107 = vand.u32 %v257, 4294901760
    %1108 = vmatmul.f32.gmra.mxu0 %v1107
    %v1109 = vpop.f32.mrf.mxu0
    %v1110 = vadd.f32 %v1013, %v1109
    %v1111 = vand.u32 %v259, 4294901760
    %1112 = vmatmul.f32.gmra.mxu0 %v1111
    %v1113 = vpop.f32.mrf.mxu0
    %v1114 = vadd.f32 %v1017, %v1113
    %1115 = vdwg.mxu0
    %1116 = vmatpush.msra.mxu0 0.0
    %1117 = vmatpush.msra.mxu0 0.0
    %1118 = vmatpush.msra.mxu0 0.0
    %1119 = vmatpush.msra.mxu0 0.0
    %1120 = vmatpush.msra.mxu0 0.0
    %1121 = vmatpush.msra.mxu0 0.0
    %1122 = vmatpush.msra.mxu0 0.0
    %1123 = vmatpush.msra.mxu0 0.0
    %1124 = vmatpush.msra.mxu0 0.0
    %1125 = vmatpush.msra.mxu0 0.0
    %v1126 = vand.u32 %v33, 4294901760
    %1127 = vmatpush.msra.mxu0 %v1126
    %v1128 = vand.u32 %v32, 4294901760
    %1129 = vmatpush.msra.mxu0 %v1128
    %v1130 = vand.u32 %v31, 4294901760
    %1131 = vmatpush.msra.mxu0 %v1130
    %v1132 = vand.u32 %v30, 4294901760
    %1133 = vmatpush.msra.mxu0 %v1132
    %v1134 = vand.u32 %v29, 4294901760
    %1135 = vmatpush.msra.mxu0 %v1134
    %v1136 = vand.u32 %v28, 4294901760
    %1137 = vmatpush.msra.mxu0 %v1136
    %v1138 = vand.u32 %v263, 4294901760
    %v1139 = vsub.f32 %v263, %v1138
    %v1140 = vand.u32 %v1139, 4294901760
    %v1141 = vsub.f32 %v1139, %v1140
    %v1142 = vand.u32 %v1141, 4294901760
    %1143 = vmatmul.f32.gmra.mxu0 %v1142
    %v1144 = vpop.f32.mrf.mxu0
    %v1145 = vadd.f32 %v1054, %v1144
    %v1146 = vand.u32 %v266, 4294901760
    %v1147 = vsub.f32 %v266, %v1146
    %v1148 = vand.u32 %v1147, 4294901760
    %v1149 = vsub.f32 %v1147, %v1148
    %v1150 = vand.u32 %v1149, 4294901760
    %1151 = vmatmul.f32.gmra.mxu0 %v1150
    %v1152 = vpop.f32.mrf.mxu0
    %v1153 = vadd.f32 %v1058, %v1152
    %v1154 = vand.u32 %v269, 4294901760
    %v1155 = vsub.f32 %v269, %v1154
    %v1156 = vand.u32 %v1155, 4294901760
    %v1157 = vsub.f32 %v1155, %v1156
    %v1158 = vand.u32 %v1157, 4294901760
    %1159 = vmatmul.f32.gmra.mxu0 %v1158
    %v1160 = vpop.f32.mrf.mxu0
    %v1161 = vadd.f32 %v1062, %v1160
    %v1162 = vand.u32 %v272, 4294901760
    %v1163 = vsub.f32 %v272, %v1162
    %v1164 = vand.u32 %v1163, 4294901760
    %v1165 = vsub.f32 %v1163, %v1164
    %v1166 = vand.u32 %v1165, 4294901760
    %1167 = vmatmul.f32.gmra.mxu0 %v1166
    %v1168 = vpop.f32.mrf.mxu0
    %v1169 = vadd.f32 %v1066, %v1168
    %v1170 = vand.u32 %v275, 4294901760
    %v1171 = vsub.f32 %v275, %v1170
    %v1172 = vand.u32 %v1171, 4294901760
    %v1173 = vsub.f32 %v1171, %v1172
    %v1174 = vand.u32 %v1173, 4294901760
    %1175 = vmatmul.f32.gmra.mxu0 %v1174
    %v1176 = vpop.f32.mrf.mxu0
    %v1177 = vadd.f32 %v1070, %v1176
    %v1178 = vand.u32 %v278, 4294901760
    %v1179 = vsub.f32 %v278, %v1178
    %v1180 = vand.u32 %v1179, 4294901760
    %v1181 = vsub.f32 %v1179, %v1180
    %v1182 = vand.u32 %v1181, 4294901760
    %1183 = vmatmul.f32.gmra.mxu0 %v1182
    %v1184 = vpop.f32.mrf.mxu0
    %v1185 = vadd.f32 %v1074, %v1184
    %v1186 = vand.u32 %v281, 4294901760
    %v1187 = vsub.f32 %v281, %v1186
    %v1188 = vand.u32 %v1187, 4294901760
    %v1189 = vsub.f32 %v1187, %v1188
    %v1190 = vand.u32 %v1189, 4294901760
    %1191 = vmatmul.f32.gmra.mxu0 %v1190
    %v1192 = vpop.f32.mrf.mxu0
    %v1193 = vadd.f32 %v1078, %v1192
    %v1194 = vand.u32 %v284, 4294901760
    %v1195 = vsub.f32 %v284, %v1194
    %v1196 = vand.u32 %v1195, 4294901760
    %v1197 = vsub.f32 %v1195, %v1196
    %v1198 = vand.u32 %v1197, 4294901760
    %1199 = vmatmul.f32.gmra.mxu0 %v1198
    %v1200 = vpop.f32.mrf.mxu0
    %v1201 = vadd.f32 %v1082, %v1200
    %v1202 = vand.u32 %v287, 4294901760
    %v1203 = vsub.f32 %v287, %v1202
    %v1204 = vand.u32 %v1203, 4294901760
    %v1205 = vsub.f32 %v1203, %v1204
    %v1206 = vand.u32 %v1205, 4294901760
    %1207 = vmatmul.f32.gmra.mxu0 %v1206
    %v1208 = vpop.f32.mrf.mxu0
    %v1209 = vadd.f32 %v1086, %v1208
    %v1210 = vand.u32 %v290, 4294901760
    %v1211 = vsub.f32 %v290, %v1210
    %v1212 = vand.u32 %v1211, 4294901760
    %v1213 = vsub.f32 %v1211, %v1212
    %v1214 = vand.u32 %v1213, 4294901760
    %1215 = vmatmul.f32.gmra.mxu0 %v1214
    %v1216 = vpop.f32.mrf.mxu0
    %v1217 = vadd.f32 %v1090, %v1216
    %v1218 = vand.u32 %v293, 4294901760
    %v1219 = vsub.f32 %v293, %v1218
    %v1220 = vand.u32 %v1219, 4294901760
    %v1221 = vsub.f32 %v1219, %v1220
    %v1222 = vand.u32 %v1221, 4294901760
    %1223 = vmatmul.f32.gmra.mxu0 %v1222
    %v1224 = vpop.f32.mrf.mxu0
    %v1225 = vadd.f32 %v1094, %v1224
    %v1226 = vand.u32 %v296, 4294901760
    %v1227 = vsub.f32 %v296, %v1226
    %v1228 = vand.u32 %v1227, 4294901760
    %v1229 = vsub.f32 %v1227, %v1228
    %v1230 = vand.u32 %v1229, 4294901760
    %1231 = vmatmul.f32.gmra.mxu0 %v1230
    %v1232 = vpop.f32.mrf.mxu0
    %v1233 = vadd.f32 %v1098, %v1232
    %v1234 = vand.u32 %v299, 4294901760
    %v1235 = vsub.f32 %v299, %v1234
    %v1236 = vand.u32 %v1235, 4294901760
    %v1237 = vsub.f32 %v1235, %v1236
    %v1238 = vand.u32 %v1237, 4294901760
    %1239 = vmatmul.f32.gmra.mxu0 %v1238
    %v1240 = vpop.f32.mrf.mxu0
    %v1241 = vadd.f32 %v1102, %v1240
    %v1242 = vand.u32 %v302, 4294901760
    %v1243 = vsub.f32 %v302, %v1242
    %v1244 = vand.u32 %v1243, 4294901760
    %v1245 = vsub.f32 %v1243, %v1244
    %v1246 = vand.u32 %v1245, 4294901760
    %1247 = vmatmul.f32.gmra.mxu0 %v1246
    %v1248 = vpop.f32.mrf.mxu0
    %v1249 = vadd.f32 %v1106, %v1248
    %v1250 = vand.u32 %v305, 4294901760
    %v1251 = vsub.f32 %v305, %v1250
    %v1252 = vand.u32 %v1251, 4294901760
    %v1253 = vsub.f32 %v1251, %v1252
    %v1254 = vand.u32 %v1253, 4294901760
    %1255 = vmatmul.f32.gmra.mxu0 %v1254
    %v1256 = vpop.f32.mrf.mxu0
    %v1257 = vadd.f32 %v1110, %v1256
    %v1258 = vand.u32 %v308, 4294901760
    %v1259 = vsub.f32 %v308, %v1258
    %v1260 = vand.u32 %v1259, 4294901760
    %v1261 = vsub.f32 %v1259, %v1260
    %v1262 = vand.u32 %v1261, 4294901760
    %1263 = vmatmul.f32.gmra.mxu0 %v1262
    %v1264 = vpop.f32.mrf.mxu0
    %v1265 = vadd.f32 %v1114, %v1264
    %1266 = vdwg.mxu0
    %1267 = vmatpush.msra.mxu0 0.0
    %1268 = vmatpush.msra.mxu0 0.0
    %1269 = vmatpush.msra.mxu0 0.0
    %1270 = vmatpush.msra.mxu0 0.0
    %1271 = vmatpush.msra.mxu0 0.0
    %1272 = vmatpush.msra.mxu0 0.0
    %1273 = vmatpush.msra.mxu0 0.0
    %1274 = vmatpush.msra.mxu0 0.0
    %1275 = vmatpush.msra.mxu0 0.0
    %1276 = vmatpush.msra.mxu0 0.0
    %v1277 = vand.u32 %v33, 4294901760
    %v1278 = vsub.f32 %v33, %v1277
    %v1279 = vand.u32 %v1278, 4294901760
    %v1280 = vsub.f32 %v1278, %v1279
    %v1281 = vand.u32 %v1280, 4294901760
    %1282 = vmatpush.msra.mxu0 %v1281
    %v1283 = vand.u32 %v32, 4294901760
    %v1284 = vsub.f32 %v32, %v1283
    %v1285 = vand.u32 %v1284, 4294901760
    %v1286 = vsub.f32 %v1284, %v1285
    %v1287 = vand.u32 %v1286, 4294901760
    %1288 = vmatpush.msra.mxu0 %v1287
    %v1289 = vand.u32 %v31, 4294901760
    %v1290 = vsub.f32 %v31, %v1289
    %v1291 = vand.u32 %v1290, 4294901760
    %v1292 = vsub.f32 %v1290, %v1291
    %v1293 = vand.u32 %v1292, 4294901760
    %1294 = vmatpush.msra.mxu0 %v1293
    %v1295 = vand.u32 %v30, 4294901760
    %v1296 = vsub.f32 %v30, %v1295
    %v1297 = vand.u32 %v1296, 4294901760
    %v1298 = vsub.f32 %v1296, %v1297
    %v1299 = vand.u32 %v1298, 4294901760
    %1300 = vmatpush.msra.mxu0 %v1299
    %v1301 = vand.u32 %v29, 4294901760
    %v1302 = vsub.f32 %v29, %v1301
    %v1303 = vand.u32 %v1302, 4294901760
    %v1304 = vsub.f32 %v1302, %v1303
    %v1305 = vand.u32 %v1304, 4294901760
    %1306 = vmatpush.msra.mxu0 %v1305
    %v1307 = vand.u32 %v28, 4294901760
    %v1308 = vsub.f32 %v28, %v1307
    %v1309 = vand.u32 %v1308, 4294901760
    %v1310 = vsub.f32 %v1308, %v1309
    %v1311 = vand.u32 %v1310, 4294901760
    %1312 = vmatpush.msra.mxu0 %v1311
    %v1313 = vand.u32 %v263, 4294901760
    %1314 = vmatmul.f32.gmra.mxu0 %v1313
    %v1315 = vpop.f32.mrf.mxu0
    %v1316 = vadd.f32 %v1145, %v1315
    %v1317 = vand.u32 %v266, 4294901760
    %1318 = vmatmul.f32.gmra.mxu0 %v1317
    %v1319 = vpop.f32.mrf.mxu0
    %v1320 = vadd.f32 %v1153, %v1319
    %v1321 = vand.u32 %v269, 4294901760
    %1322 = vmatmul.f32.gmra.mxu0 %v1321
    %v1323 = vpop.f32.mrf.mxu0
    %v1324 = vadd.f32 %v1161, %v1323
    %v1325 = vand.u32 %v272, 4294901760
    %1326 = vmatmul.f32.gmra.mxu0 %v1325
    %v1327 = vpop.f32.mrf.mxu0
    %v1328 = vadd.f32 %v1169, %v1327
    %v1329 = vand.u32 %v275, 4294901760
    %1330 = vmatmul.f32.gmra.mxu0 %v1329
    %v1331 = vpop.f32.mrf.mxu0
    %v1332 = vadd.f32 %v1177, %v1331
    %v1333 = vand.u32 %v278, 4294901760
    %1334 = vmatmul.f32.gmra.mxu0 %v1333
    %v1335 = vpop.f32.mrf.mxu0
    %v1336 = vadd.f32 %v1185, %v1335
    %v1337 = vand.u32 %v281, 4294901760
    %1338 = vmatmul.f32.gmra.mxu0 %v1337
    %v1339 = vpop.f32.mrf.mxu0
    %v1340 = vadd.f32 %v1193, %v1339
    %v1341 = vand.u32 %v284, 4294901760
    %1342 = vmatmul.f32.gmra.mxu0 %v1341
    %v1343 = vpop.f32.mrf.mxu0
    %v1344 = vadd.f32 %v1201, %v1343
    %v1345 = vand.u32 %v287, 4294901760
    %1346 = vmatmul.f32.gmra.mxu0 %v1345
    %v1347 = vpop.f32.mrf.mxu0
    %v1348 = vadd.f32 %v1209, %v1347
    %v1349 = vand.u32 %v290, 4294901760
    %1350 = vmatmul.f32.gmra.mxu0 %v1349
    %v1351 = vpop.f32.mrf.mxu0
    %v1352 = vadd.f32 %v1217, %v1351
    %v1353 = vand.u32 %v293, 4294901760
    %1354 = vmatmul.f32.gmra.mxu0 %v1353
    %v1355 = vpop.f32.mrf.mxu0
    %v1356 = vadd.f32 %v1225, %v1355
    %v1357 = vand.u32 %v296, 4294901760
    %1358 = vmatmul.f32.gmra.mxu0 %v1357
    %v1359 = vpop.f32.mrf.mxu0
    %v1360 = vadd.f32 %v1233, %v1359
    %v1361 = vand.u32 %v299, 4294901760
    %1362 = vmatmul.f32.gmra.mxu0 %v1361
    %v1363 = vpop.f32.mrf.mxu0
    %v1364 = vadd.f32 %v1241, %v1363
    %v1365 = vand.u32 %v302, 4294901760
    %1366 = vmatmul.f32.gmra.mxu0 %v1365
    %v1367 = vpop.f32.mrf.mxu0
    %v1368 = vadd.f32 %v1249, %v1367
    %v1369 = vand.u32 %v305, 4294901760
    %1370 = vmatmul.f32.gmra.mxu0 %v1369
    %v1371 = vpop.f32.mrf.mxu0
    %v1372 = vadd.f32 %v1257, %v1371
    %v1373 = vand.u32 %v308, 4294901760
    %1374 = vmatmul.f32.gmra.mxu0 %v1373
    %v1375 = vpop.f32.mrf.mxu0
    %v1376 = vadd.f32 %v1265, %v1375
    %1377 = vdwg.mxu0
    %1378 = vmatpush.msra.mxu0 0.0
    %1379 = vmatpush.msra.mxu0 0.0
    %1380 = vmatpush.msra.mxu0 0.0
    %1381 = vmatpush.msra.mxu0 0.0
    %1382 = vmatpush.msra.mxu0 0.0
    %1383 = vmatpush.msra.mxu0 0.0
    %1384 = vmatpush.msra.mxu0 0.0
    %1385 = vmatpush.msra.mxu0 0.0
    %1386 = vmatpush.msra.mxu0 0.0
    %1387 = vmatpush.msra.mxu0 0.0
    %v1388 = vand.u32 %v33, 4294901760
    %v1389 = vsub.f32 %v33, %v1388
    %1390 = vmatpush.msra.mxu0 %v1389
    %v1391 = vand.u32 %v32, 4294901760
    %v1392 = vsub.f32 %v32, %v1391
    %1393 = vmatpush.msra.mxu0 %v1392
    %v1394 = vand.u32 %v31, 4294901760
    %v1395 = vsub.f32 %v31, %v1394
    %1396 = vmatpush.msra.mxu0 %v1395
    %v1397 = vand.u32 %v30, 4294901760
    %v1398 = vsub.f32 %v30, %v1397
    %1399 = vmatpush.msra.mxu0 %v1398
    %v1400 = vand.u32 %v29, 4294901760
    %v1401 = vsub.f32 %v29, %v1400
    %1402 = vmatpush.msra.mxu0 %v1401
    %v1403 = vand.u32 %v28, 4294901760
    %v1404 = vsub.f32 %v28, %v1403
    %1405 = vmatpush.msra.mxu0 %v1404
    %v1406 = vand.u32 %v263, 4294901760
    %v1407 = vsub.f32 %v263, %v1406
    %1408 = vmatmul.f32.gmra.mxu0 %v1407
    %v1409 = vpop.f32.mrf.mxu0
    %v1410 = vadd.f32 %v1316, %v1409
    %v1411 = vand.u32 %v266, 4294901760
    %v1412 = vsub.f32 %v266, %v1411
    %1413 = vmatmul.f32.gmra.mxu0 %v1412
    %v1414 = vpop.f32.mrf.mxu0
    %v1415 = vadd.f32 %v1320, %v1414
    %v1416 = vand.u32 %v269, 4294901760
    %v1417 = vsub.f32 %v269, %v1416
    %1418 = vmatmul.f32.gmra.mxu0 %v1417
    %v1419 = vpop.f32.mrf.mxu0
    %v1420 = vadd.f32 %v1324, %v1419
    %v1421 = vand.u32 %v272, 4294901760
    %v1422 = vsub.f32 %v272, %v1421
    %1423 = vmatmul.f32.gmra.mxu0 %v1422
    %v1424 = vpop.f32.mrf.mxu0
    %v1425 = vadd.f32 %v1328, %v1424
    %v1426 = vand.u32 %v275, 4294901760
    %v1427 = vsub.f32 %v275, %v1426
    %1428 = vmatmul.f32.gmra.mxu0 %v1427
    %v1429 = vpop.f32.mrf.mxu0
    %v1430 = vadd.f32 %v1332, %v1429
    %v1431 = vand.u32 %v278, 4294901760
    %v1432 = vsub.f32 %v278, %v1431
    %1433 = vmatmul.f32.gmra.mxu0 %v1432
    %v1434 = vpop.f32.mrf.mxu0
    %v1435 = vadd.f32 %v1336, %v1434
    %v1436 = vand.u32 %v281, 4294901760
    %v1437 = vsub.f32 %v281, %v1436
    %1438 = vmatmul.f32.gmra.mxu0 %v1437
    %v1439 = vpop.f32.mrf.mxu0
    %v1440 = vadd.f32 %v1340, %v1439
    %v1441 = vand.u32 %v284, 4294901760
    %v1442 = vsub.f32 %v284, %v1441
    %1443 = vmatmul.f32.gmra.mxu0 %v1442
    %v1444 = vpop.f32.mrf.mxu0
    %v1445 = vadd.f32 %v1344, %v1444
    %v1446 = vand.u32 %v287, 4294901760
    %v1447 = vsub.f32 %v287, %v1446
    %1448 = vmatmul.f32.gmra.mxu0 %v1447
    %v1449 = vpop.f32.mrf.mxu0
    %v1450 = vadd.f32 %v1348, %v1449
    %v1451 = vand.u32 %v290, 4294901760
    %v1452 = vsub.f32 %v290, %v1451
    %1453 = vmatmul.f32.gmra.mxu0 %v1452
    %v1454 = vpop.f32.mrf.mxu0
    %v1455 = vadd.f32 %v1352, %v1454
    %v1456 = vand.u32 %v293, 4294901760
    %v1457 = vsub.f32 %v293, %v1456
    %1458 = vmatmul.f32.gmra.mxu0 %v1457
    %v1459 = vpop.f32.mrf.mxu0
    %v1460 = vadd.f32 %v1356, %v1459
    %v1461 = vand.u32 %v296, 4294901760
    %v1462 = vsub.f32 %v296, %v1461
    %1463 = vmatmul.f32.gmra.mxu0 %v1462
    %v1464 = vpop.f32.mrf.mxu0
    %v1465 = vadd.f32 %v1360, %v1464
    %v1466 = vand.u32 %v299, 4294901760
    %v1467 = vsub.f32 %v299, %v1466
    %1468 = vmatmul.f32.gmra.mxu0 %v1467
    %v1469 = vpop.f32.mrf.mxu0
    %v1470 = vadd.f32 %v1364, %v1469
    %v1471 = vand.u32 %v302, 4294901760
    %v1472 = vsub.f32 %v302, %v1471
    %1473 = vmatmul.f32.gmra.mxu0 %v1472
    %v1474 = vpop.f32.mrf.mxu0
    %v1475 = vadd.f32 %v1368, %v1474
    %v1476 = vand.u32 %v305, 4294901760
    %v1477 = vsub.f32 %v305, %v1476
    %1478 = vmatmul.f32.gmra.mxu0 %v1477
    %v1479 = vpop.f32.mrf.mxu0
    %v1480 = vadd.f32 %v1372, %v1479
    %v1481 = vand.u32 %v308, 4294901760
    %v1482 = vsub.f32 %v308, %v1481
    %1483 = vmatmul.f32.gmra.mxu0 %v1482
    %v1484 = vpop.f32.mrf.mxu0
    %v1485 = vadd.f32 %v1376, %v1484
    %1486 = vdwg.mxu0
    %1487 = vmatpush.msra.mxu0 0.0
    %1488 = vmatpush.msra.mxu0 0.0
    %1489 = vmatpush.msra.mxu0 0.0
    %1490 = vmatpush.msra.mxu0 0.0
    %1491 = vmatpush.msra.mxu0 0.0
    %1492 = vmatpush.msra.mxu0 0.0
    %1493 = vmatpush.msra.mxu0 0.0
    %1494 = vmatpush.msra.mxu0 0.0
    %1495 = vmatpush.msra.mxu0 0.0
    %1496 = vmatpush.msra.mxu0 0.0
    %v1497 = vand.u32 %v33, 4294901760
    %1498 = vmatpush.msra.mxu0 %v1497
    %v1499 = vand.u32 %v32, 4294901760
    %1500 = vmatpush.msra.mxu0 %v1499
    %v1501 = vand.u32 %v31, 4294901760
    %1502 = vmatpush.msra.mxu0 %v1501
    %v1503 = vand.u32 %v30, 4294901760
    %1504 = vmatpush.msra.mxu0 %v1503
    %v1505 = vand.u32 %v29, 4294901760
    %1506 = vmatpush.msra.mxu0 %v1505
    %v1507 = vand.u32 %v28, 4294901760
    %1508 = vmatpush.msra.mxu0 %v1507
    %v1509 = vand.u32 %v263, 4294901760
    %v1510 = vsub.f32 %v263, %v1509
    %v1511 = vand.u32 %v1510, 4294901760
    %1512 = vmatmul.f32.gmra.mxu0 %v1511
    %v1513 = vpop.f32.mrf.mxu0
    %v1514 = vadd.f32 %v1410, %v1513
    %v1515 = vand.u32 %v266, 4294901760
    %v1516 = vsub.f32 %v266, %v1515
    %v1517 = vand.u32 %v1516, 4294901760
    %1518 = vmatmul.f32.gmra.mxu0 %v1517
    %v1519 = vpop.f32.mrf.mxu0
    %v1520 = vadd.f32 %v1415, %v1519
    %v1521 = vand.u32 %v269, 4294901760
    %v1522 = vsub.f32 %v269, %v1521
    %v1523 = vand.u32 %v1522, 4294901760
    %1524 = vmatmul.f32.gmra.mxu0 %v1523
    %v1525 = vpop.f32.mrf.mxu0
    %v1526 = vadd.f32 %v1420, %v1525
    %v1527 = vand.u32 %v272, 4294901760
    %v1528 = vsub.f32 %v272, %v1527
    %v1529 = vand.u32 %v1528, 4294901760
    %1530 = vmatmul.f32.gmra.mxu0 %v1529
    %v1531 = vpop.f32.mrf.mxu0
    %v1532 = vadd.f32 %v1425, %v1531
    %v1533 = vand.u32 %v275, 4294901760
    %v1534 = vsub.f32 %v275, %v1533
    %v1535 = vand.u32 %v1534, 4294901760
    %1536 = vmatmul.f32.gmra.mxu0 %v1535
    %v1537 = vpop.f32.mrf.mxu0
    %v1538 = vadd.f32 %v1430, %v1537
    %v1539 = vand.u32 %v278, 4294901760
    %v1540 = vsub.f32 %v278, %v1539
    %v1541 = vand.u32 %v1540, 4294901760
    %1542 = vmatmul.f32.gmra.mxu0 %v1541
    %v1543 = vpop.f32.mrf.mxu0
    %v1544 = vadd.f32 %v1435, %v1543
    %v1545 = vand.u32 %v281, 4294901760
    %v1546 = vsub.f32 %v281, %v1545
    %v1547 = vand.u32 %v1546, 4294901760
    %1548 = vmatmul.f32.gmra.mxu0 %v1547
    %v1549 = vpop.f32.mrf.mxu0
    %v1550 = vadd.f32 %v1440, %v1549
    %v1551 = vand.u32 %v284, 4294901760
    %v1552 = vsub.f32 %v284, %v1551
    %v1553 = vand.u32 %v1552, 4294901760
    %1554 = vmatmul.f32.gmra.mxu0 %v1553
    %v1555 = vpop.f32.mrf.mxu0
    %v1556 = vadd.f32 %v1445, %v1555
    %v1557 = vand.u32 %v287, 4294901760
    %v1558 = vsub.f32 %v287, %v1557
    %v1559 = vand.u32 %v1558, 4294901760
    %1560 = vmatmul.f32.gmra.mxu0 %v1559
    %v1561 = vpop.f32.mrf.mxu0
    %v1562 = vadd.f32 %v1450, %v1561
    %v1563 = vand.u32 %v290, 4294901760
    %v1564 = vsub.f32 %v290, %v1563
    %v1565 = vand.u32 %v1564, 4294901760
    %1566 = vmatmul.f32.gmra.mxu0 %v1565
    %v1567 = vpop.f32.mrf.mxu0
    %v1568 = vadd.f32 %v1455, %v1567
    %v1569 = vand.u32 %v293, 4294901760
    %v1570 = vsub.f32 %v293, %v1569
    %v1571 = vand.u32 %v1570, 4294901760
    %1572 = vmatmul.f32.gmra.mxu0 %v1571
    %v1573 = vpop.f32.mrf.mxu0
    %v1574 = vadd.f32 %v1460, %v1573
    %v1575 = vand.u32 %v296, 4294901760
    %v1576 = vsub.f32 %v296, %v1575
    %v1577 = vand.u32 %v1576, 4294901760
    %1578 = vmatmul.f32.gmra.mxu0 %v1577
    %v1579 = vpop.f32.mrf.mxu0
    %v1580 = vadd.f32 %v1465, %v1579
    %v1581 = vand.u32 %v299, 4294901760
    %v1582 = vsub.f32 %v299, %v1581
    %v1583 = vand.u32 %v1582, 4294901760
    %1584 = vmatmul.f32.gmra.mxu0 %v1583
    %v1585 = vpop.f32.mrf.mxu0
    %v1586 = vadd.f32 %v1470, %v1585
    %v1587 = vand.u32 %v302, 4294901760
    %v1588 = vsub.f32 %v302, %v1587
    %v1589 = vand.u32 %v1588, 4294901760
    %1590 = vmatmul.f32.gmra.mxu0 %v1589
    %v1591 = vpop.f32.mrf.mxu0
    %v1592 = vadd.f32 %v1475, %v1591
    %v1593 = vand.u32 %v305, 4294901760
    %v1594 = vsub.f32 %v305, %v1593
    %v1595 = vand.u32 %v1594, 4294901760
    %1596 = vmatmul.f32.gmra.mxu0 %v1595
    %v1597 = vpop.f32.mrf.mxu0
    %v1598 = vadd.f32 %v1480, %v1597
    %v1599 = vand.u32 %v308, 4294901760
    %v1600 = vsub.f32 %v308, %v1599
    %v1601 = vand.u32 %v1600, 4294901760
    %1602 = vmatmul.f32.gmra.mxu0 %v1601
    %v1603 = vpop.f32.mrf.mxu0
    %v1604 = vadd.f32 %v1485, %v1603
    %1605 = vdwg.mxu0
    %1606 = vmatpush.msra.mxu0 0.0
    %1607 = vmatpush.msra.mxu0 0.0
    %1608 = vmatpush.msra.mxu0 0.0
    %1609 = vmatpush.msra.mxu0 0.0
    %1610 = vmatpush.msra.mxu0 0.0
    %1611 = vmatpush.msra.mxu0 0.0
    %1612 = vmatpush.msra.mxu0 0.0
    %1613 = vmatpush.msra.mxu0 0.0
    %1614 = vmatpush.msra.mxu0 0.0
    %1615 = vmatpush.msra.mxu0 0.0
    %v1616 = vand.u32 %v33, 4294901760
    %v1617 = vsub.f32 %v33, %v1616
    %v1618 = vand.u32 %v1617, 4294901760
    %1619 = vmatpush.msra.mxu0 %v1618
    %v1620 = vand.u32 %v32, 4294901760
    %v1621 = vsub.f32 %v32, %v1620
    %v1622 = vand.u32 %v1621, 4294901760
    %1623 = vmatpush.msra.mxu0 %v1622
    %v1624 = vand.u32 %v31, 4294901760
    %v1625 = vsub.f32 %v31, %v1624
    %v1626 = vand.u32 %v1625, 4294901760
    %1627 = vmatpush.msra.mxu0 %v1626
    %v1628 = vand.u32 %v30, 4294901760
    %v1629 = vsub.f32 %v30, %v1628
    %v1630 = vand.u32 %v1629, 4294901760
    %1631 = vmatpush.msra.mxu0 %v1630
    %v1632 = vand.u32 %v29, 4294901760
    %v1633 = vsub.f32 %v29, %v1632
    %v1634 = vand.u32 %v1633, 4294901760
    %1635 = vmatpush.msra.mxu0 %v1634
    %v1636 = vand.u32 %v28, 4294901760
    %v1637 = vsub.f32 %v28, %v1636
    %v1638 = vand.u32 %v1637, 4294901760
    %1639 = vmatpush.msra.mxu0 %v1638
    %v1640 = vand.u32 %v263, 4294901760
    %1641 = vmatmul.f32.gmra.mxu0 %v1640
    %v1642 = vpop.f32.mrf.mxu0
    %v1643 = vadd.f32 %v1514, %v1642
    %v1644 = vand.u32 %v266, 4294901760
    %1645 = vmatmul.f32.gmra.mxu0 %v1644
    %v1646 = vpop.f32.mrf.mxu0
    %v1647 = vadd.f32 %v1520, %v1646
    %v1648 = vand.u32 %v269, 4294901760
    %1649 = vmatmul.f32.gmra.mxu0 %v1648
    %v1650 = vpop.f32.mrf.mxu0
    %v1651 = vadd.f32 %v1526, %v1650
    %v1652 = vand.u32 %v272, 4294901760
    %1653 = vmatmul.f32.gmra.mxu0 %v1652
    %v1654 = vpop.f32.mrf.mxu0
    %v1655 = vadd.f32 %v1532, %v1654
    %v1656 = vand.u32 %v275, 4294901760
    %1657 = vmatmul.f32.gmra.mxu0 %v1656
    %v1658 = vpop.f32.mrf.mxu0
    %v1659 = vadd.f32 %v1538, %v1658
    %v1660 = vand.u32 %v278, 4294901760
    %1661 = vmatmul.f32.gmra.mxu0 %v1660
    %v1662 = vpop.f32.mrf.mxu0
    %v1663 = vadd.f32 %v1544, %v1662
    %v1664 = vand.u32 %v281, 4294901760
    %1665 = vmatmul.f32.gmra.mxu0 %v1664
    %v1666 = vpop.f32.mrf.mxu0
    %v1667 = vadd.f32 %v1550, %v1666
    %v1668 = vand.u32 %v284, 4294901760
    %1669 = vmatmul.f32.gmra.mxu0 %v1668
    %v1670 = vpop.f32.mrf.mxu0
    %v1671 = vadd.f32 %v1556, %v1670
    %v1672 = vand.u32 %v287, 4294901760
    %1673 = vmatmul.f32.gmra.mxu0 %v1672
    %v1674 = vpop.f32.mrf.mxu0
    %v1675 = vadd.f32 %v1562, %v1674
    %v1676 = vand.u32 %v290, 4294901760
    %1677 = vmatmul.f32.gmra.mxu0 %v1676
    %v1678 = vpop.f32.mrf.mxu0
    %v1679 = vadd.f32 %v1568, %v1678
    %v1680 = vand.u32 %v293, 4294901760
    %1681 = vmatmul.f32.gmra.mxu0 %v1680
    %v1682 = vpop.f32.mrf.mxu0
    %v1683 = vadd.f32 %v1574, %v1682
    %v1684 = vand.u32 %v296, 4294901760
    %1685 = vmatmul.f32.gmra.mxu0 %v1684
    %v1686 = vpop.f32.mrf.mxu0
    %v1687 = vadd.f32 %v1580, %v1686
    %v1688 = vand.u32 %v299, 4294901760
    %1689 = vmatmul.f32.gmra.mxu0 %v1688
    %v1690 = vpop.f32.mrf.mxu0
    %v1691 = vadd.f32 %v1586, %v1690
    %v1692 = vand.u32 %v302, 4294901760
    %1693 = vmatmul.f32.gmra.mxu0 %v1692
    %v1694 = vpop.f32.mrf.mxu0
    %v1695 = vadd.f32 %v1592, %v1694
    %v1696 = vand.u32 %v305, 4294901760
    %1697 = vmatmul.f32.gmra.mxu0 %v1696
    %v1698 = vpop.f32.mrf.mxu0
    %v1699 = vadd.f32 %v1598, %v1698
    %v1700 = vand.u32 %v308, 4294901760
    %1701 = vmatmul.f32.gmra.mxu0 %v1700
    %v1702 = vpop.f32.mrf.mxu0
    %v1703 = vadd.f32 %v1604, %v1702
    %1704 = vdwg.mxu0
    %1705 = vmatpush.msra.mxu0 0.0
    %1706 = vmatpush.msra.mxu0 0.0
    %1707 = vmatpush.msra.mxu0 0.0
    %1708 = vmatpush.msra.mxu0 0.0
    %1709 = vmatpush.msra.mxu0 0.0
    %1710 = vmatpush.msra.mxu0 0.0
    %1711 = vmatpush.msra.mxu0 0.0
    %1712 = vmatpush.msra.mxu0 0.0
    %1713 = vmatpush.msra.mxu0 0.0
    %1714 = vmatpush.msra.mxu0 0.0
    %v1715 = vand.u32 %v33, 4294901760
    %1716 = vmatpush.msra.mxu0 %v1715
    %v1717 = vand.u32 %v32, 4294901760
    %1718 = vmatpush.msra.mxu0 %v1717
    %v1719 = vand.u32 %v31, 4294901760
    %1720 = vmatpush.msra.mxu0 %v1719
    %v1721 = vand.u32 %v30, 4294901760
    %1722 = vmatpush.msra.mxu0 %v1721
    %v1723 = vand.u32 %v29, 4294901760
    %1724 = vmatpush.msra.mxu0 %v1723
    %v1725 = vand.u32 %v28, 4294901760
    %1726 = vmatpush.msra.mxu0 %v1725
    %v1727 = vand.u32 %v263, 4294901760
    %1728 = vmatmul.f32.gmra.mxu0 %v1727
    %v1729 = vpop.f32.mrf.mxu0
    %v1730 = vadd.f32 %v1643, %v1729
    %v1731 = vand.u32 %v266, 4294901760
    %1732 = vmatmul.f32.gmra.mxu0 %v1731
    %v1733 = vpop.f32.mrf.mxu0
    %v1734 = vadd.f32 %v1647, %v1733
    %v1735 = vand.u32 %v269, 4294901760
    %1736 = vmatmul.f32.gmra.mxu0 %v1735
    %v1737 = vpop.f32.mrf.mxu0
    %v1738 = vadd.f32 %v1651, %v1737
    %v1739 = vand.u32 %v272, 4294901760
    %1740 = vmatmul.f32.gmra.mxu0 %v1739
    %v1741 = vpop.f32.mrf.mxu0
    %v1742 = vadd.f32 %v1655, %v1741
    %v1743 = vand.u32 %v275, 4294901760
    %1744 = vmatmul.f32.gmra.mxu0 %v1743
    %v1745 = vpop.f32.mrf.mxu0
    %v1746 = vadd.f32 %v1659, %v1745
    %v1747 = vand.u32 %v278, 4294901760
    %1748 = vmatmul.f32.gmra.mxu0 %v1747
    %v1749 = vpop.f32.mrf.mxu0
    %v1750 = vadd.f32 %v1663, %v1749
    %v1751 = vand.u32 %v281, 4294901760
    %1752 = vmatmul.f32.gmra.mxu0 %v1751
    %v1753 = vpop.f32.mrf.mxu0
    %v1754 = vadd.f32 %v1667, %v1753
    %v1755 = vand.u32 %v284, 4294901760
    %1756 = vmatmul.f32.gmra.mxu0 %v1755
    %v1757 = vpop.f32.mrf.mxu0
    %v1758 = vadd.f32 %v1671, %v1757
    %v1759 = vand.u32 %v287, 4294901760
    %1760 = vmatmul.f32.gmra.mxu0 %v1759
    %v1761 = vpop.f32.mrf.mxu0
    %v1762 = vadd.f32 %v1675, %v1761
    %v1763 = vand.u32 %v290, 4294901760
    %1764 = vmatmul.f32.gmra.mxu0 %v1763
    %v1765 = vpop.f32.mrf.mxu0
    %v1766 = vadd.f32 %v1679, %v1765
    %v1767 = vand.u32 %v293, 4294901760
    %1768 = vmatmul.f32.gmra.mxu0 %v1767
    %v1769 = vpop.f32.mrf.mxu0
    %v1770 = vadd.f32 %v1683, %v1769
    %v1771 = vand.u32 %v296, 4294901760
    %1772 = vmatmul.f32.gmra.mxu0 %v1771
    %v1773 = vpop.f32.mrf.mxu0
    %v1774 = vadd.f32 %v1687, %v1773
    %v1775 = vand.u32 %v299, 4294901760
    %1776 = vmatmul.f32.gmra.mxu0 %v1775
    %v1777 = vpop.f32.mrf.mxu0
    %v1778 = vadd.f32 %v1691, %v1777
    %v1779 = vand.u32 %v302, 4294901760
    %1780 = vmatmul.f32.gmra.mxu0 %v1779
    %v1781 = vpop.f32.mrf.mxu0
    %v1782 = vadd.f32 %v1695, %v1781
    %v1783 = vand.u32 %v305, 4294901760
    %1784 = vmatmul.f32.gmra.mxu0 %v1783
    %v1785 = vpop.f32.mrf.mxu0
    %v1786 = vadd.f32 %v1699, %v1785
    %v1787 = vand.u32 %v308, 4294901760
    %1788 = vmatmul.f32.gmra.mxu0 %v1787
    %v1789 = vpop.f32.mrf.mxu0
    %v1790 = vadd.f32 %v1703, %v1789
    %1791 = vdwg.mxu0
    %1792 = vset.pattern.permute.xlu0 1
    %1793 = vperm.xlu0 %1792, %v86
    %v1794 = vpop.permute.xlu0 %1793
    %1795 = vset.pattern.permute.xlu0 1
    %1796 = vperm.xlu0 %1795, %v88
    %v1797 = vpop.permute.xlu0 %1796
    %1798 = vset.pattern.permute.xlu0 1
    %1799 = vperm.xlu0 %1798, %v90
    %v1800 = vpop.permute.xlu0 %1799
    %1801 = vset.pattern.permute.xlu0 1
    %1802 = vperm.xlu0 %1801, %v92
    %v1803 = vpop.permute.xlu0 %1802
    %1804 = vset.pattern.permute.xlu0 1
    %1805 = vperm.xlu0 %1804, %v94
    %v1806 = vpop.permute.xlu0 %1805
    %1807 = vset.pattern.permute.xlu0 1
    %1808 = vperm.xlu0 %1807, %v96
    %v1809 = vpop.permute.xlu0 %1808
    %1810 = vset.pattern.permute.xlu0 1
    %1811 = vperm.xlu0 %1810, %v98
    %v1812 = vpop.permute.xlu0 %1811
    %1813 = vset.pattern.permute.xlu0 1
    %1814 = vperm.xlu0 %1813, %v100
    %v1815 = vpop.permute.xlu0 %1814
    %1816 = vset.pattern.permute.xlu0 1
    %1817 = vperm.xlu0 %1816, %v102
    %v1818 = vpop.permute.xlu0 %1817
    %1819 = vset.pattern.permute.xlu0 1
    %1820 = vperm.xlu0 %1819, %v104
    %v1821 = vpop.permute.xlu0 %1820
    %1822 = vset.pattern.permute.xlu0 1
    %1823 = vperm.xlu0 %1822, %v106
    %v1824 = vpop.permute.xlu0 %1823
    %1825 = vset.pattern.permute.xlu0 1
    %1826 = vperm.xlu0 %1825, %v108
    %v1827 = vpop.permute.xlu0 %1826
    %1828 = vset.pattern.permute.xlu0 1
    %1829 = vperm.xlu0 %1828, %v110
    %v1830 = vpop.permute.xlu0 %1829
    %1831 = vset.pattern.permute.xlu0 1
    %1832 = vperm.xlu0 %1831, %v112
    %v1833 = vpop.permute.xlu0 %1832
    %1834 = vset.pattern.permute.xlu0 1
    %1835 = vperm.xlu0 %1834, %v114
    %v1836 = vpop.permute.xlu0 %1835
    %1837 = vset.pattern.permute.xlu0 1
    %1838 = vperm.xlu0 %1837, %v116
    %v1839 = vpop.permute.xlu0 %1838
    %vm1840 = vcmp.eq.s32.totalorder %v1794, %v35
    %vm1841 = vcmp.eq.s32.totalorder %v1794, %v36
    %vm1842 = vcmp.eq.s32.totalorder %v1797, %v35
    %vm1843 = vcmp.eq.s32.totalorder %v1797, %v36
    %vm1844 = vcmp.eq.s32.totalorder %v1800, %v35
    %vm1845 = vcmp.eq.s32.totalorder %v1800, %v36
    %vm1846 = vcmp.eq.s32.totalorder %v1803, %v35
    %vm1847 = vcmp.eq.s32.totalorder %v1803, %v36
    %vm1848 = vcmp.eq.s32.totalorder %v1806, %v35
    %vm1849 = vcmp.eq.s32.totalorder %v1806, %v36
    %vm1850 = vcmp.eq.s32.totalorder %v1809, %v35
    %vm1851 = vcmp.eq.s32.totalorder %v1809, %v36
    %vm1852 = vcmp.eq.s32.totalorder %v1812, %v35
    %vm1853 = vcmp.eq.s32.totalorder %v1812, %v36
    %vm1854 = vcmp.eq.s32.totalorder %v1815, %v35
    %vm1855 = vcmp.eq.s32.totalorder %v1815, %v36
    %vm1856 = vcmp.eq.s32.totalorder %v1818, %v35
    %vm1857 = vcmp.eq.s32.totalorder %v1818, %v36
    %vm1858 = vcmp.eq.s32.totalorder %v1821, %v35
    %vm1859 = vcmp.eq.s32.totalorder %v1821, %v36
    %vm1860 = vcmp.eq.s32.totalorder %v1824, %v35
    %vm1861 = vcmp.eq.s32.totalorder %v1824, %v36
    %vm1862 = vcmp.eq.s32.totalorder %v1827, %v35
    %vm1863 = vcmp.eq.s32.totalorder %v1827, %v36
    %vm1864 = vcmp.eq.s32.totalorder %v1830, %v35
    %vm1865 = vcmp.eq.s32.totalorder %v1830, %v36
    %vm1866 = vcmp.eq.s32.totalorder %v1833, %v35
    %vm1867 = vcmp.eq.s32.totalorder %v1833, %v36
    %vm1868 = vcmp.eq.s32.totalorder %v1836, %v35
    %vm1869 = vcmp.eq.s32.totalorder %v1836, %v36
    %vm1870 = vcmp.eq.s32.totalorder %v1839, %v35
    %vm1871 = vcmp.eq.s32.totalorder %v1839, %v36
    %v1872 = vsel %vm1840, 1, 0
    %v1873 = vsel %vm1841, 1, 0
    %v1874 = vsel %vm1842, 1, 0
    %v1875 = vsel %vm1843, 1, 0
    %v1876 = vsel %vm1844, 1, 0
    %v1877 = vsel %vm1845, 1, 0
    %v1878 = vsel %vm1846, 1, 0
    %v1879 = vsel %vm1847, 1, 0
    %v1880 = vsel %vm1848, 1, 0
    %v1881 = vsel %vm1849, 1, 0
    %v1882 = vsel %vm1850, 1, 0
    %v1883 = vsel %vm1851, 1, 0
    %v1884 = vsel %vm1852, 1, 0
    %v1885 = vsel %vm1853, 1, 0
    %v1886 = vsel %vm1854, 1, 0
    %v1887 = vsel %vm1855, 1, 0
    %v1888 = vsel %vm1856, 1, 0
    %v1889 = vsel %vm1857, 1, 0
    %v1890 = vsel %vm1858, 1, 0
    %v1891 = vsel %vm1859, 1, 0
    %v1892 = vsel %vm1860, 1, 0
    %v1893 = vsel %vm1861, 1, 0
    %v1894 = vsel %vm1862, 1, 0
    %v1895 = vsel %vm1863, 1, 0
    %v1896 = vsel %vm1864, 1, 0
    %v1897 = vsel %vm1865, 1, 0
    %v1898 = vsel %vm1866, 1, 0
    %v1899 = vsel %vm1867, 1, 0
    %v1900 = vsel %vm1868, 1, 0
    %v1901 = vsel %vm1869, 1, 0
    %v1902 = vsel %vm1870, 1, 0
    %v1903 = vsel %vm1871, 1, 0
    %v1904 = vcvt.s32.f32 %v1872
    %v1905 = vcvt.s32.f32 %v1873
    %v1906 = vcvt.s32.f32 %v1874
    %v1907 = vcvt.s32.f32 %v1875
    %v1908 = vcvt.s32.f32 %v1876
    %v1909 = vcvt.s32.f32 %v1877
    %v1910 = vcvt.s32.f32 %v1878
    %v1911 = vcvt.s32.f32 %v1879
    %v1912 = vcvt.s32.f32 %v1880
    %v1913 = vcvt.s32.f32 %v1881
    %v1914 = vcvt.s32.f32 %v1882
    %v1915 = vcvt.s32.f32 %v1883
    %v1916 = vcvt.s32.f32 %v1884
    %v1917 = vcvt.s32.f32 %v1885
    %v1918 = vcvt.s32.f32 %v1886
    %v1919 = vcvt.s32.f32 %v1887
    %v1920 = vcvt.s32.f32 %v1888
    %v1921 = vcvt.s32.f32 %v1889
    %v1922 = vcvt.s32.f32 %v1890
    %v1923 = vcvt.s32.f32 %v1891
    %v1924 = vcvt.s32.f32 %v1892
    %v1925 = vcvt.s32.f32 %v1893
    %v1926 = vcvt.s32.f32 %v1894
    %v1927 = vcvt.s32.f32 %v1895
    %v1928 = vcvt.s32.f32 %v1896
    %v1929 = vcvt.s32.f32 %v1897
    %v1930 = vcvt.s32.f32 %v1898
    %v1931 = vcvt.s32.f32 %v1899
    %v1932 = vcvt.s32.f32 %v1900
    %v1933 = vcvt.s32.f32 %v1901
    %v1934 = vcvt.s32.f32 %v1902
    %v1935 = vcvt.s32.f32 %v1903
    %v1937 = vsel %vm261, %v1905, 0
    %v1940 = vsel %vm261, %v1907, 0
    %v1943 = vsel %vm261, %v1909, 0
    %v1946 = vsel %vm261, %v1911, 0
    %v1949 = vsel %vm261, %v1913, 0
    %v1952 = vsel %vm261, %v1915, 0
    %v1955 = vsel %vm261, %v1917, 0
    %v1958 = vsel %vm261, %v1919, 0
    %v1961 = vsel %vm261, %v1921, 0
    %v1964 = vsel %vm261, %v1923, 0
    %v1967 = vsel %vm261, %v1925, 0
    %v1970 = vsel %vm261, %v1927, 0
    %v1973 = vsel %vm261, %v1929, 0
    %v1976 = vsel %vm261, %v1931, 0
    %v1979 = vsel %vm261, %v1933, 0
    %v1982 = vsel %vm261, %v1935, 0
    %v1984 = vand.u32 %v27, 4294901760
    %1985 = vmatpush.msra.mxu0 %v1984
    %v1986 = vand.u32 %v26, 4294901760
    %1987 = vmatpush.msra.mxu0 %v1986
    %v1988 = vand.u32 %v25, 4294901760
    %1989 = vmatpush.msra.mxu0 %v1988
    %v1990 = vand.u32 %v24, 4294901760
    %1991 = vmatpush.msra.mxu0 %v1990
    %v1992 = vand.u32 %v23, 4294901760
    %1993 = vmatpush.msra.mxu0 %v1992
    %v1994 = vand.u32 %v22, 4294901760
    %1995 = vmatpush.msra.mxu0 %v1994
    %v1996 = vand.u32 %v21, 4294901760
    %1997 = vmatpush.msra.mxu0 %v1996
    %v1998 = vand.u32 %v20, 4294901760
    %1999 = vmatpush.msra.mxu0 %v1998
    %v2000 = vand.u32 %v19, 4294901760
    %2001 = vmatpush.msra.mxu0 %v2000
    %v2002 = vand.u32 %v18, 4294901760
    %2003 = vmatpush.msra.mxu0 %v2002
    %v2004 = vand.u32 %v17, 4294901760
    %2005 = vmatpush.msra.mxu0 %v2004
    %v2006 = vand.u32 %v16, 4294901760
    %2007 = vmatpush.msra.mxu0 %v2006
    %v2008 = vand.u32 %v15, 4294901760
    %2009 = vmatpush.msra.mxu0 %v2008
    %v2010 = vand.u32 %v14, 4294901760
    %2011 = vmatpush.msra.mxu0 %v2010
    %v2012 = vand.u32 %v13, 4294901760
    %2013 = vmatpush.msra.mxu0 %v2012
    %v2014 = vand.u32 %v12, 4294901760
    %2015 = vmatpush.msra.mxu0 %v2014
    %v2016 = vand.u32 %v1904, 4294901760
    %v2017 = vsub.f32 %v1904, %v2016
    %v2018 = vand.u32 %v2017, 4294901760
    %v2019 = vsub.f32 %v2017, %v2018
    %v2020 = vand.u32 %v2019, 4294901760
    %2021 = vmatmul.f32.gmra.mxu0 %v2020
    %v2022 = vpop.f32.mrf.mxu0
    %v2023 = vadd.f32 0.0, %v2022
    %v2024 = vand.u32 %v1906, 4294901760
    %v2025 = vsub.f32 %v1906, %v2024
    %v2026 = vand.u32 %v2025, 4294901760
    %v2027 = vsub.f32 %v2025, %v2026
    %v2028 = vand.u32 %v2027, 4294901760
    %2029 = vmatmul.f32.gmra.mxu0 %v2028
    %v2030 = vpop.f32.mrf.mxu0
    %v2031 = vadd.f32 0.0, %v2030
    %v2032 = vand.u32 %v1908, 4294901760
    %v2033 = vsub.f32 %v1908, %v2032
    %v2034 = vand.u32 %v2033, 4294901760
    %v2035 = vsub.f32 %v2033, %v2034
    %v2036 = vand.u32 %v2035, 4294901760
    %2037 = vmatmul.f32.gmra.mxu0 %v2036
    %v2038 = vpop.f32.mrf.mxu0
    %v2039 = vadd.f32 0.0, %v2038
    %v2040 = vand.u32 %v1910, 4294901760
    %v2041 = vsub.f32 %v1910, %v2040
    %v2042 = vand.u32 %v2041, 4294901760
    %v2043 = vsub.f32 %v2041, %v2042
    %v2044 = vand.u32 %v2043, 4294901760
    %2045 = vmatmul.f32.gmra.mxu0 %v2044
    %v2046 = vpop.f32.mrf.mxu0
    %v2047 = vadd.f32 0.0, %v2046
    %v2048 = vand.u32 %v1912, 4294901760
    %v2049 = vsub.f32 %v1912, %v2048
    %v2050 = vand.u32 %v2049, 4294901760
    %v2051 = vsub.f32 %v2049, %v2050
    %v2052 = vand.u32 %v2051, 4294901760
    %2053 = vmatmul.f32.gmra.mxu0 %v2052
    %v2054 = vpop.f32.mrf.mxu0
    %v2055 = vadd.f32 0.0, %v2054
    %v2056 = vand.u32 %v1914, 4294901760
    %v2057 = vsub.f32 %v1914, %v2056
    %v2058 = vand.u32 %v2057, 4294901760
    %v2059 = vsub.f32 %v2057, %v2058
    %v2060 = vand.u32 %v2059, 4294901760
    %2061 = vmatmul.f32.gmra.mxu0 %v2060
    %v2062 = vpop.f32.mrf.mxu0
    %v2063 = vadd.f32 0.0, %v2062
    %v2064 = vand.u32 %v1916, 4294901760
    %v2065 = vsub.f32 %v1916, %v2064
    %v2066 = vand.u32 %v2065, 4294901760
    %v2067 = vsub.f32 %v2065, %v2066
    %v2068 = vand.u32 %v2067, 4294901760
    %2069 = vmatmul.f32.gmra.mxu0 %v2068
    %v2070 = vpop.f32.mrf.mxu0
    %v2071 = vadd.f32 0.0, %v2070
    %v2072 = vand.u32 %v1918, 4294901760
    %v2073 = vsub.f32 %v1918, %v2072
    %v2074 = vand.u32 %v2073, 4294901760
    %v2075 = vsub.f32 %v2073, %v2074
    %v2076 = vand.u32 %v2075, 4294901760
    %2077 = vmatmul.f32.gmra.mxu0 %v2076
    %v2078 = vpop.f32.mrf.mxu0
    %v2079 = vadd.f32 0.0, %v2078
    %v2080 = vand.u32 %v1920, 4294901760
    %v2081 = vsub.f32 %v1920, %v2080
    %v2082 = vand.u32 %v2081, 4294901760
    %v2083 = vsub.f32 %v2081, %v2082
    %v2084 = vand.u32 %v2083, 4294901760
    %2085 = vmatmul.f32.gmra.mxu0 %v2084
    %v2086 = vpop.f32.mrf.mxu0
    %v2087 = vadd.f32 0.0, %v2086
    %v2088 = vand.u32 %v1922, 4294901760
    %v2089 = vsub.f32 %v1922, %v2088
    %v2090 = vand.u32 %v2089, 4294901760
    %v2091 = vsub.f32 %v2089, %v2090
    %v2092 = vand.u32 %v2091, 4294901760
    %2093 = vmatmul.f32.gmra.mxu0 %v2092
    %v2094 = vpop.f32.mrf.mxu0
    %v2095 = vadd.f32 0.0, %v2094
    %v2096 = vand.u32 %v1924, 4294901760
    %v2097 = vsub.f32 %v1924, %v2096
    %v2098 = vand.u32 %v2097, 4294901760
    %v2099 = vsub.f32 %v2097, %v2098
    %v2100 = vand.u32 %v2099, 4294901760
    %2101 = vmatmul.f32.gmra.mxu0 %v2100
    %v2102 = vpop.f32.mrf.mxu0
    %v2103 = vadd.f32 0.0, %v2102
    %v2104 = vand.u32 %v1926, 4294901760
    %v2105 = vsub.f32 %v1926, %v2104
    %v2106 = vand.u32 %v2105, 4294901760
    %v2107 = vsub.f32 %v2105, %v2106
    %v2108 = vand.u32 %v2107, 4294901760
    %2109 = vmatmul.f32.gmra.mxu0 %v2108
    %v2110 = vpop.f32.mrf.mxu0
    %v2111 = vadd.f32 0.0, %v2110
    %v2112 = vand.u32 %v1928, 4294901760
    %v2113 = vsub.f32 %v1928, %v2112
    %v2114 = vand.u32 %v2113, 4294901760
    %v2115 = vsub.f32 %v2113, %v2114
    %v2116 = vand.u32 %v2115, 4294901760
    %2117 = vmatmul.f32.gmra.mxu0 %v2116
    %v2118 = vpop.f32.mrf.mxu0
    %v2119 = vadd.f32 0.0, %v2118
    %v2120 = vand.u32 %v1930, 4294901760
    %v2121 = vsub.f32 %v1930, %v2120
    %v2122 = vand.u32 %v2121, 4294901760
    %v2123 = vsub.f32 %v2121, %v2122
    %v2124 = vand.u32 %v2123, 4294901760
    %2125 = vmatmul.f32.gmra.mxu0 %v2124
    %v2126 = vpop.f32.mrf.mxu0
    %v2127 = vadd.f32 0.0, %v2126
    %v2128 = vand.u32 %v1932, 4294901760
    %v2129 = vsub.f32 %v1932, %v2128
    %v2130 = vand.u32 %v2129, 4294901760
    %v2131 = vsub.f32 %v2129, %v2130
    %v2132 = vand.u32 %v2131, 4294901760
    %2133 = vmatmul.f32.gmra.mxu0 %v2132
    %v2134 = vpop.f32.mrf.mxu0
    %v2135 = vadd.f32 0.0, %v2134
    %v2136 = vand.u32 %v1934, 4294901760
    %v2137 = vsub.f32 %v1934, %v2136
    %v2138 = vand.u32 %v2137, 4294901760
    %v2139 = vsub.f32 %v2137, %v2138
    %v2140 = vand.u32 %v2139, 4294901760
    %2141 = vmatmul.f32.gmra.mxu0 %v2140
    %v2142 = vpop.f32.mrf.mxu0
    %v2143 = vadd.f32 0.0, %v2142
    %2144 = vdwg.mxu0
    %v2145 = vand.u32 %v27, 4294901760
    %v2146 = vsub.f32 %v27, %v2145
    %v2147 = vand.u32 %v2146, 4294901760
    %v2148 = vsub.f32 %v2146, %v2147
    %v2149 = vand.u32 %v2148, 4294901760
    %2150 = vmatpush.msra.mxu0 %v2149
    %v2151 = vand.u32 %v26, 4294901760
    %v2152 = vsub.f32 %v26, %v2151
    %v2153 = vand.u32 %v2152, 4294901760
    %v2154 = vsub.f32 %v2152, %v2153
    %v2155 = vand.u32 %v2154, 4294901760
    %2156 = vmatpush.msra.mxu0 %v2155
    %v2157 = vand.u32 %v25, 4294901760
    %v2158 = vsub.f32 %v25, %v2157
    %v2159 = vand.u32 %v2158, 4294901760
    %v2160 = vsub.f32 %v2158, %v2159
    %v2161 = vand.u32 %v2160, 4294901760
    %2162 = vmatpush.msra.mxu0 %v2161
    %v2163 = vand.u32 %v24, 4294901760
    %v2164 = vsub.f32 %v24, %v2163
    %v2165 = vand.u32 %v2164, 4294901760
    %v2166 = vsub.f32 %v2164, %v2165
    %v2167 = vand.u32 %v2166, 4294901760
    %2168 = vmatpush.msra.mxu0 %v2167
    %v2169 = vand.u32 %v23, 4294901760
    %v2170 = vsub.f32 %v23, %v2169
    %v2171 = vand.u32 %v2170, 4294901760
    %v2172 = vsub.f32 %v2170, %v2171
    %v2173 = vand.u32 %v2172, 4294901760
    %2174 = vmatpush.msra.mxu0 %v2173
    %v2175 = vand.u32 %v22, 4294901760
    %v2176 = vsub.f32 %v22, %v2175
    %v2177 = vand.u32 %v2176, 4294901760
    %v2178 = vsub.f32 %v2176, %v2177
    %v2179 = vand.u32 %v2178, 4294901760
    %2180 = vmatpush.msra.mxu0 %v2179
    %v2181 = vand.u32 %v21, 4294901760
    %v2182 = vsub.f32 %v21, %v2181
    %v2183 = vand.u32 %v2182, 4294901760
    %v2184 = vsub.f32 %v2182, %v2183
    %v2185 = vand.u32 %v2184, 4294901760
    %2186 = vmatpush.msra.mxu0 %v2185
    %v2187 = vand.u32 %v20, 4294901760
    %v2188 = vsub.f32 %v20, %v2187
    %v2189 = vand.u32 %v2188, 4294901760
    %v2190 = vsub.f32 %v2188, %v2189
    %v2191 = vand.u32 %v2190, 4294901760
    %2192 = vmatpush.msra.mxu0 %v2191
    %v2193 = vand.u32 %v19, 4294901760
    %v2194 = vsub.f32 %v19, %v2193
    %v2195 = vand.u32 %v2194, 4294901760
    %v2196 = vsub.f32 %v2194, %v2195
    %v2197 = vand.u32 %v2196, 4294901760
    %2198 = vmatpush.msra.mxu0 %v2197
    %v2199 = vand.u32 %v18, 4294901760
    %v2200 = vsub.f32 %v18, %v2199
    %v2201 = vand.u32 %v2200, 4294901760
    %v2202 = vsub.f32 %v2200, %v2201
    %v2203 = vand.u32 %v2202, 4294901760
    %2204 = vmatpush.msra.mxu0 %v2203
    %v2205 = vand.u32 %v17, 4294901760
    %v2206 = vsub.f32 %v17, %v2205
    %v2207 = vand.u32 %v2206, 4294901760
    %v2208 = vsub.f32 %v2206, %v2207
    %v2209 = vand.u32 %v2208, 4294901760
    %2210 = vmatpush.msra.mxu0 %v2209
    %v2211 = vand.u32 %v16, 4294901760
    %v2212 = vsub.f32 %v16, %v2211
    %v2213 = vand.u32 %v2212, 4294901760
    %v2214 = vsub.f32 %v2212, %v2213
    %v2215 = vand.u32 %v2214, 4294901760
    %2216 = vmatpush.msra.mxu0 %v2215
    %v2217 = vand.u32 %v15, 4294901760
    %v2218 = vsub.f32 %v15, %v2217
    %v2219 = vand.u32 %v2218, 4294901760
    %v2220 = vsub.f32 %v2218, %v2219
    %v2221 = vand.u32 %v2220, 4294901760
    %2222 = vmatpush.msra.mxu0 %v2221
    %v2223 = vand.u32 %v14, 4294901760
    %v2224 = vsub.f32 %v14, %v2223
    %v2225 = vand.u32 %v2224, 4294901760
    %v2226 = vsub.f32 %v2224, %v2225
    %v2227 = vand.u32 %v2226, 4294901760
    %2228 = vmatpush.msra.mxu0 %v2227
    %v2229 = vand.u32 %v13, 4294901760
    %v2230 = vsub.f32 %v13, %v2229
    %v2231 = vand.u32 %v2230, 4294901760
    %v2232 = vsub.f32 %v2230, %v2231
    %v2233 = vand.u32 %v2232, 4294901760
    %2234 = vmatpush.msra.mxu0 %v2233
    %v2235 = vand.u32 %v12, 4294901760
    %v2236 = vsub.f32 %v12, %v2235
    %v2237 = vand.u32 %v2236, 4294901760
    %v2238 = vsub.f32 %v2236, %v2237
    %v2239 = vand.u32 %v2238, 4294901760
    %2240 = vmatpush.msra.mxu0 %v2239
    %v2241 = vand.u32 %v1904, 4294901760
    %2242 = vmatmul.f32.gmra.mxu0 %v2241
    %v2243 = vpop.f32.mrf.mxu0
    %v2244 = vadd.f32 %v2023, %v2243
    %v2245 = vand.u32 %v1906, 4294901760
    %2246 = vmatmul.f32.gmra.mxu0 %v2245
    %v2247 = vpop.f32.mrf.mxu0
    %v2248 = vadd.f32 %v2031, %v2247
    %v2249 = vand.u32 %v1908, 4294901760
    %2250 = vmatmul.f32.gmra.mxu0 %v2249
    %v2251 = vpop.f32.mrf.mxu0
    %v2252 = vadd.f32 %v2039, %v2251
    %v2253 = vand.u32 %v1910, 4294901760
    %2254 = vmatmul.f32.gmra.mxu0 %v2253
    %v2255 = vpop.f32.mrf.mxu0
    %v2256 = vadd.f32 %v2047, %v2255
    %v2257 = vand.u32 %v1912, 4294901760
    %2258 = vmatmul.f32.gmra.mxu0 %v2257
    %v2259 = vpop.f32.mrf.mxu0
    %v2260 = vadd.f32 %v2055, %v2259
    %v2261 = vand.u32 %v1914, 4294901760
    %2262 = vmatmul.f32.gmra.mxu0 %v2261
    %v2263 = vpop.f32.mrf.mxu0
    %v2264 = vadd.f32 %v2063, %v2263
    %v2265 = vand.u32 %v1916, 4294901760
    %2266 = vmatmul.f32.gmra.mxu0 %v2265
    %v2267 = vpop.f32.mrf.mxu0
    %v2268 = vadd.f32 %v2071, %v2267
    %v2269 = vand.u32 %v1918, 4294901760
    %2270 = vmatmul.f32.gmra.mxu0 %v2269
    %v2271 = vpop.f32.mrf.mxu0
    %v2272 = vadd.f32 %v2079, %v2271
    %v2273 = vand.u32 %v1920, 4294901760
    %2274 = vmatmul.f32.gmra.mxu0 %v2273
    %v2275 = vpop.f32.mrf.mxu0
    %v2276 = vadd.f32 %v2087, %v2275
    %v2277 = vand.u32 %v1922, 4294901760
    %2278 = vmatmul.f32.gmra.mxu0 %v2277
    %v2279 = vpop.f32.mrf.mxu0
    %v2280 = vadd.f32 %v2095, %v2279
    %v2281 = vand.u32 %v1924, 4294901760
    %2282 = vmatmul.f32.gmra.mxu0 %v2281
    %v2283 = vpop.f32.mrf.mxu0
    %v2284 = vadd.f32 %v2103, %v2283
    %v2285 = vand.u32 %v1926, 4294901760
    %2286 = vmatmul.f32.gmra.mxu0 %v2285
    %v2287 = vpop.f32.mrf.mxu0
    %v2288 = vadd.f32 %v2111, %v2287
    %v2289 = vand.u32 %v1928, 4294901760
    %2290 = vmatmul.f32.gmra.mxu0 %v2289
    %v2291 = vpop.f32.mrf.mxu0
    %v2292 = vadd.f32 %v2119, %v2291
    %v2293 = vand.u32 %v1930, 4294901760
    %2294 = vmatmul.f32.gmra.mxu0 %v2293
    %v2295 = vpop.f32.mrf.mxu0
    %v2296 = vadd.f32 %v2127, %v2295
    %v2297 = vand.u32 %v1932, 4294901760
    %2298 = vmatmul.f32.gmra.mxu0 %v2297
    %v2299 = vpop.f32.mrf.mxu0
    %v2300 = vadd.f32 %v2135, %v2299
    %v2301 = vand.u32 %v1934, 4294901760
    %2302 = vmatmul.f32.gmra.mxu0 %v2301
    %v2303 = vpop.f32.mrf.mxu0
    %v2304 = vadd.f32 %v2143, %v2303
    %2305 = vdwg.mxu0
    %v2306 = vand.u32 %v27, 4294901760
    %v2307 = vsub.f32 %v27, %v2306
    %2308 = vmatpush.msra.mxu0 %v2307
    %v2309 = vand.u32 %v26, 4294901760
    %v2310 = vsub.f32 %v26, %v2309
    %2311 = vmatpush.msra.mxu0 %v2310
    %v2312 = vand.u32 %v25, 4294901760
    %v2313 = vsub.f32 %v25, %v2312
    %2314 = vmatpush.msra.mxu0 %v2313
    %v2315 = vand.u32 %v24, 4294901760
    %v2316 = vsub.f32 %v24, %v2315
    %2317 = vmatpush.msra.mxu0 %v2316
    %v2318 = vand.u32 %v23, 4294901760
    %v2319 = vsub.f32 %v23, %v2318
    %2320 = vmatpush.msra.mxu0 %v2319
    %v2321 = vand.u32 %v22, 4294901760
    %v2322 = vsub.f32 %v22, %v2321
    %2323 = vmatpush.msra.mxu0 %v2322
    %v2324 = vand.u32 %v21, 4294901760
    %v2325 = vsub.f32 %v21, %v2324
    %2326 = vmatpush.msra.mxu0 %v2325
    %v2327 = vand.u32 %v20, 4294901760
    %v2328 = vsub.f32 %v20, %v2327
    %2329 = vmatpush.msra.mxu0 %v2328
    %v2330 = vand.u32 %v19, 4294901760
    %v2331 = vsub.f32 %v19, %v2330
    %2332 = vmatpush.msra.mxu0 %v2331
    %v2333 = vand.u32 %v18, 4294901760
    %v2334 = vsub.f32 %v18, %v2333
    %2335 = vmatpush.msra.mxu0 %v2334
    %v2336 = vand.u32 %v17, 4294901760
    %v2337 = vsub.f32 %v17, %v2336
    %2338 = vmatpush.msra.mxu0 %v2337
    %v2339 = vand.u32 %v16, 4294901760
    %v2340 = vsub.f32 %v16, %v2339
    %2341 = vmatpush.msra.mxu0 %v2340
    %v2342 = vand.u32 %v15, 4294901760
    %v2343 = vsub.f32 %v15, %v2342
    %2344 = vmatpush.msra.mxu0 %v2343
    %v2345 = vand.u32 %v14, 4294901760
    %v2346 = vsub.f32 %v14, %v2345
    %2347 = vmatpush.msra.mxu0 %v2346
    %v2348 = vand.u32 %v13, 4294901760
    %v2349 = vsub.f32 %v13, %v2348
    %2350 = vmatpush.msra.mxu0 %v2349
    %v2351 = vand.u32 %v12, 4294901760
    %v2352 = vsub.f32 %v12, %v2351
    %2353 = vmatpush.msra.mxu0 %v2352
    %v2354 = vand.u32 %v1904, 4294901760
    %v2355 = vsub.f32 %v1904, %v2354
    %2356 = vmatmul.f32.gmra.mxu0 %v2355
    %v2357 = vpop.f32.mrf.mxu0
    %v2358 = vadd.f32 %v2244, %v2357
    %v2359 = vand.u32 %v1906, 4294901760
    %v2360 = vsub.f32 %v1906, %v2359
    %2361 = vmatmul.f32.gmra.mxu0 %v2360
    %v2362 = vpop.f32.mrf.mxu0
    %v2363 = vadd.f32 %v2248, %v2362
    %v2364 = vand.u32 %v1908, 4294901760
    %v2365 = vsub.f32 %v1908, %v2364
    %2366 = vmatmul.f32.gmra.mxu0 %v2365
    %v2367 = vpop.f32.mrf.mxu0
    %v2368 = vadd.f32 %v2252, %v2367
    %v2369 = vand.u32 %v1910, 4294901760
    %v2370 = vsub.f32 %v1910, %v2369
    %2371 = vmatmul.f32.gmra.mxu0 %v2370
    %v2372 = vpop.f32.mrf.mxu0
    %v2373 = vadd.f32 %v2256, %v2372
    %v2374 = vand.u32 %v1912, 4294901760
    %v2375 = vsub.f32 %v1912, %v2374
    %2376 = vmatmul.f32.gmra.mxu0 %v2375
    %v2377 = vpop.f32.mrf.mxu0
    %v2378 = vadd.f32 %v2260, %v2377
    %v2379 = vand.u32 %v1914, 4294901760
    %v2380 = vsub.f32 %v1914, %v2379
    %2381 = vmatmul.f32.gmra.mxu0 %v2380
    %v2382 = vpop.f32.mrf.mxu0
    %v2383 = vadd.f32 %v2264, %v2382
    %v2384 = vand.u32 %v1916, 4294901760
    %v2385 = vsub.f32 %v1916, %v2384
    %2386 = vmatmul.f32.gmra.mxu0 %v2385
    %v2387 = vpop.f32.mrf.mxu0
    %v2388 = vadd.f32 %v2268, %v2387
    %v2389 = vand.u32 %v1918, 4294901760
    %v2390 = vsub.f32 %v1918, %v2389
    %2391 = vmatmul.f32.gmra.mxu0 %v2390
    %v2392 = vpop.f32.mrf.mxu0
    %v2393 = vadd.f32 %v2272, %v2392
    %v2394 = vand.u32 %v1920, 4294901760
    %v2395 = vsub.f32 %v1920, %v2394
    %2396 = vmatmul.f32.gmra.mxu0 %v2395
    %v2397 = vpop.f32.mrf.mxu0
    %v2398 = vadd.f32 %v2276, %v2397
    %v2399 = vand.u32 %v1922, 4294901760
    %v2400 = vsub.f32 %v1922, %v2399
    %2401 = vmatmul.f32.gmra.mxu0 %v2400
    %v2402 = vpop.f32.mrf.mxu0
    %v2403 = vadd.f32 %v2280, %v2402
    %v2404 = vand.u32 %v1924, 4294901760
    %v2405 = vsub.f32 %v1924, %v2404
    %2406 = vmatmul.f32.gmra.mxu0 %v2405
    %v2407 = vpop.f32.mrf.mxu0
    %v2408 = vadd.f32 %v2284, %v2407
    %v2409 = vand.u32 %v1926, 4294901760
    %v2410 = vsub.f32 %v1926, %v2409
    %2411 = vmatmul.f32.gmra.mxu0 %v2410
    %v2412 = vpop.f32.mrf.mxu0
    %v2413 = vadd.f32 %v2288, %v2412
    %v2414 = vand.u32 %v1928, 4294901760
    %v2415 = vsub.f32 %v1928, %v2414
    %2416 = vmatmul.f32.gmra.mxu0 %v2415
    %v2417 = vpop.f32.mrf.mxu0
    %v2418 = vadd.f32 %v2292, %v2417
    %v2419 = vand.u32 %v1930, 4294901760
    %v2420 = vsub.f32 %v1930, %v2419
    %2421 = vmatmul.f32.gmra.mxu0 %v2420
    %v2422 = vpop.f32.mrf.mxu0
    %v2423 = vadd.f32 %v2296, %v2422
    %v2424 = vand.u32 %v1932, 4294901760
    %v2425 = vsub.f32 %v1932, %v2424
    %2426 = vmatmul.f32.gmra.mxu0 %v2425
    %v2427 = vpop.f32.mrf.mxu0
    %v2428 = vadd.f32 %v2300, %v2427
    %v2429 = vand.u32 %v1934, 4294901760
    %v2430 = vsub.f32 %v1934, %v2429
    %2431 = vmatmul.f32.gmra.mxu0 %v2430
    %v2432 = vpop.f32.mrf.mxu0
    %v2433 = vadd.f32 %v2304, %v2432
    %2434 = vdwg.mxu0
    %v2435 = vand.u32 %v27, 4294901760
    %2436 = vmatpush.msra.mxu0 %v2435
    %v2437 = vand.u32 %v26, 4294901760
    %2438 = vmatpush.msra.mxu0 %v2437
    %v2439 = vand.u32 %v25, 4294901760
    %2440 = vmatpush.msra.mxu0 %v2439
    %v2441 = vand.u32 %v24, 4294901760
    %2442 = vmatpush.msra.mxu0 %v2441
    %v2443 = vand.u32 %v23, 4294901760
    %2444 = vmatpush.msra.mxu0 %v2443
    %v2445 = vand.u32 %v22, 4294901760
    %2446 = vmatpush.msra.mxu0 %v2445
    %v2447 = vand.u32 %v21, 4294901760
    %2448 = vmatpush.msra.mxu0 %v2447
    %v2449 = vand.u32 %v20, 4294901760
    %2450 = vmatpush.msra.mxu0 %v2449
    %v2451 = vand.u32 %v19, 4294901760
    %2452 = vmatpush.msra.mxu0 %v2451
    %v2453 = vand.u32 %v18, 4294901760
    %2454 = vmatpush.msra.mxu0 %v2453
    %v2455 = vand.u32 %v17, 4294901760
    %2456 = vmatpush.msra.mxu0 %v2455
    %v2457 = vand.u32 %v16, 4294901760
    %2458 = vmatpush.msra.mxu0 %v2457
    %v2459 = vand.u32 %v15, 4294901760
    %2460 = vmatpush.msra.mxu0 %v2459
    %v2461 = vand.u32 %v14, 4294901760
    %2462 = vmatpush.msra.mxu0 %v2461
    %v2463 = vand.u32 %v13, 4294901760
    %2464 = vmatpush.msra.mxu0 %v2463
    %v2465 = vand.u32 %v12, 4294901760
    %2466 = vmatpush.msra.mxu0 %v2465
    %v2467 = vand.u32 %v1904, 4294901760
    %v2468 = vsub.f32 %v1904, %v2467
    %v2469 = vand.u32 %v2468, 4294901760
    %2470 = vmatmul.f32.gmra.mxu0 %v2469
    %v2471 = vpop.f32.mrf.mxu0
    %v2472 = vadd.f32 %v2358, %v2471
    %v2473 = vand.u32 %v1906, 4294901760
    %v2474 = vsub.f32 %v1906, %v2473
    %v2475 = vand.u32 %v2474, 4294901760
    %2476 = vmatmul.f32.gmra.mxu0 %v2475
    %v2477 = vpop.f32.mrf.mxu0
    %v2478 = vadd.f32 %v2363, %v2477
    %v2479 = vand.u32 %v1908, 4294901760
    %v2480 = vsub.f32 %v1908, %v2479
    %v2481 = vand.u32 %v2480, 4294901760
    %2482 = vmatmul.f32.gmra.mxu0 %v2481
    %v2483 = vpop.f32.mrf.mxu0
    %v2484 = vadd.f32 %v2368, %v2483
    %v2485 = vand.u32 %v1910, 4294901760
    %v2486 = vsub.f32 %v1910, %v2485
    %v2487 = vand.u32 %v2486, 4294901760
    %2488 = vmatmul.f32.gmra.mxu0 %v2487
    %v2489 = vpop.f32.mrf.mxu0
    %v2490 = vadd.f32 %v2373, %v2489
    %v2491 = vand.u32 %v1912, 4294901760
    %v2492 = vsub.f32 %v1912, %v2491
    %v2493 = vand.u32 %v2492, 4294901760
    %2494 = vmatmul.f32.gmra.mxu0 %v2493
    %v2495 = vpop.f32.mrf.mxu0
    %v2496 = vadd.f32 %v2378, %v2495
    %v2497 = vand.u32 %v1914, 4294901760
    %v2498 = vsub.f32 %v1914, %v2497
    %v2499 = vand.u32 %v2498, 4294901760
    %2500 = vmatmul.f32.gmra.mxu0 %v2499
    %v2501 = vpop.f32.mrf.mxu0
    %v2502 = vadd.f32 %v2383, %v2501
    %v2503 = vand.u32 %v1916, 4294901760
    %v2504 = vsub.f32 %v1916, %v2503
    %v2505 = vand.u32 %v2504, 4294901760
    %2506 = vmatmul.f32.gmra.mxu0 %v2505
    %v2507 = vpop.f32.mrf.mxu0
    %v2508 = vadd.f32 %v2388, %v2507
    %v2509 = vand.u32 %v1918, 4294901760
    %v2510 = vsub.f32 %v1918, %v2509
    %v2511 = vand.u32 %v2510, 4294901760
    %2512 = vmatmul.f32.gmra.mxu0 %v2511
    %v2513 = vpop.f32.mrf.mxu0
    %v2514 = vadd.f32 %v2393, %v2513
    %v2515 = vand.u32 %v1920, 4294901760
    %v2516 = vsub.f32 %v1920, %v2515
    %v2517 = vand.u32 %v2516, 4294901760
    %2518 = vmatmul.f32.gmra.mxu0 %v2517
    %v2519 = vpop.f32.mrf.mxu0
    %v2520 = vadd.f32 %v2398, %v2519
    %v2521 = vand.u32 %v1922, 4294901760
    %v2522 = vsub.f32 %v1922, %v2521
    %v2523 = vand.u32 %v2522, 4294901760
    %2524 = vmatmul.f32.gmra.mxu0 %v2523
    %v2525 = vpop.f32.mrf.mxu0
    %v2526 = vadd.f32 %v2403, %v2525
    %v2527 = vand.u32 %v1924, 4294901760
    %v2528 = vsub.f32 %v1924, %v2527
    %v2529 = vand.u32 %v2528, 4294901760
    %2530 = vmatmul.f32.gmra.mxu0 %v2529
    %v2531 = vpop.f32.mrf.mxu0
    %v2532 = vadd.f32 %v2408, %v2531
    %v2533 = vand.u32 %v1926, 4294901760
    %v2534 = vsub.f32 %v1926, %v2533
    %v2535 = vand.u32 %v2534, 4294901760
    %2536 = vmatmul.f32.gmra.mxu0 %v2535
    %v2537 = vpop.f32.mrf.mxu0
    %v2538 = vadd.f32 %v2413, %v2537
    %v2539 = vand.u32 %v1928, 4294901760
    %v2540 = vsub.f32 %v1928, %v2539
    %v2541 = vand.u32 %v2540, 4294901760
    %2542 = vmatmul.f32.gmra.mxu0 %v2541
    %v2543 = vpop.f32.mrf.mxu0
    %v2544 = vadd.f32 %v2418, %v2543
    %v2545 = vand.u32 %v1930, 4294901760
    %v2546 = vsub.f32 %v1930, %v2545
    %v2547 = vand.u32 %v2546, 4294901760
    %2548 = vmatmul.f32.gmra.mxu0 %v2547
    %v2549 = vpop.f32.mrf.mxu0
    %v2550 = vadd.f32 %v2423, %v2549
    %v2551 = vand.u32 %v1932, 4294901760
    %v2552 = vsub.f32 %v1932, %v2551
    %v2553 = vand.u32 %v2552, 4294901760
    %2554 = vmatmul.f32.gmra.mxu0 %v2553
    %v2555 = vpop.f32.mrf.mxu0
    %v2556 = vadd.f32 %v2428, %v2555
    %v2557 = vand.u32 %v1934, 4294901760
    %v2558 = vsub.f32 %v1934, %v2557
    %v2559 = vand.u32 %v2558, 4294901760
    %2560 = vmatmul.f32.gmra.mxu0 %v2559
    %v2561 = vpop.f32.mrf.mxu0
    %v2562 = vadd.f32 %v2433, %v2561
    %2563 = vdwg.mxu0
    %v2564 = vand.u32 %v27, 4294901760
    %v2565 = vsub.f32 %v27, %v2564
    %v2566 = vand.u32 %v2565, 4294901760
    %2567 = vmatpush.msra.mxu0 %v2566
    %v2568 = vand.u32 %v26, 4294901760
    %v2569 = vsub.f32 %v26, %v2568
    %v2570 = vand.u32 %v2569, 4294901760
    %2571 = vmatpush.msra.mxu0 %v2570
    %v2572 = vand.u32 %v25, 4294901760
    %v2573 = vsub.f32 %v25, %v2572
    %v2574 = vand.u32 %v2573, 4294901760
    %2575 = vmatpush.msra.mxu0 %v2574
    %v2576 = vand.u32 %v24, 4294901760
    %v2577 = vsub.f32 %v24, %v2576
    %v2578 = vand.u32 %v2577, 4294901760
    %2579 = vmatpush.msra.mxu0 %v2578
    %v2580 = vand.u32 %v23, 4294901760
    %v2581 = vsub.f32 %v23, %v2580
    %v2582 = vand.u32 %v2581, 4294901760
    %2583 = vmatpush.msra.mxu0 %v2582
    %v2584 = vand.u32 %v22, 4294901760
    %v2585 = vsub.f32 %v22, %v2584
    %v2586 = vand.u32 %v2585, 4294901760
    %2587 = vmatpush.msra.mxu0 %v2586
    %v2588 = vand.u32 %v21, 4294901760
    %v2589 = vsub.f32 %v21, %v2588
    %v2590 = vand.u32 %v2589, 4294901760
    %2591 = vmatpush.msra.mxu0 %v2590
    %v2592 = vand.u32 %v20, 4294901760
    %v2593 = vsub.f32 %v20, %v2592
    %v2594 = vand.u32 %v2593, 4294901760
    %2595 = vmatpush.msra.mxu0 %v2594
    %v2596 = vand.u32 %v19, 4294901760
    %v2597 = vsub.f32 %v19, %v2596
    %v2598 = vand.u32 %v2597, 4294901760
    %2599 = vmatpush.msra.mxu0 %v2598
    %v2600 = vand.u32 %v18, 4294901760
    %v2601 = vsub.f32 %v18, %v2600
    %v2602 = vand.u32 %v2601, 4294901760
    %2603 = vmatpush.msra.mxu0 %v2602
    %v2604 = vand.u32 %v17, 4294901760
    %v2605 = vsub.f32 %v17, %v2604
    %v2606 = vand.u32 %v2605, 4294901760
    %2607 = vmatpush.msra.mxu0 %v2606
    %v2608 = vand.u32 %v16, 4294901760
    %v2609 = vsub.f32 %v16, %v2608
    %v2610 = vand.u32 %v2609, 4294901760
    %2611 = vmatpush.msra.mxu0 %v2610
    %v2612 = vand.u32 %v15, 4294901760
    %v2613 = vsub.f32 %v15, %v2612
    %v2614 = vand.u32 %v2613, 4294901760
    %2615 = vmatpush.msra.mxu0 %v2614
    %v2616 = vand.u32 %v14, 4294901760
    %v2617 = vsub.f32 %v14, %v2616
    %v2618 = vand.u32 %v2617, 4294901760
    %2619 = vmatpush.msra.mxu0 %v2618
    %v2620 = vand.u32 %v13, 4294901760
    %v2621 = vsub.f32 %v13, %v2620
    %v2622 = vand.u32 %v2621, 4294901760
    %2623 = vmatpush.msra.mxu0 %v2622
    %v2624 = vand.u32 %v12, 4294901760
    %v2625 = vsub.f32 %v12, %v2624
    %v2626 = vand.u32 %v2625, 4294901760
    %2627 = vmatpush.msra.mxu0 %v2626
    %v2628 = vand.u32 %v1904, 4294901760
    %2629 = vmatmul.f32.gmra.mxu0 %v2628
    %v2630 = vpop.f32.mrf.mxu0
    %v2631 = vadd.f32 %v2472, %v2630
    %v2632 = vand.u32 %v1906, 4294901760
    %2633 = vmatmul.f32.gmra.mxu0 %v2632
    %v2634 = vpop.f32.mrf.mxu0
    %v2635 = vadd.f32 %v2478, %v2634
    %v2636 = vand.u32 %v1908, 4294901760
    %2637 = vmatmul.f32.gmra.mxu0 %v2636
    %v2638 = vpop.f32.mrf.mxu0
    %v2639 = vadd.f32 %v2484, %v2638
    %v2640 = vand.u32 %v1910, 4294901760
    %2641 = vmatmul.f32.gmra.mxu0 %v2640
    %v2642 = vpop.f32.mrf.mxu0
    %v2643 = vadd.f32 %v2490, %v2642
    %v2644 = vand.u32 %v1912, 4294901760
    %2645 = vmatmul.f32.gmra.mxu0 %v2644
    %v2646 = vpop.f32.mrf.mxu0
    %v2647 = vadd.f32 %v2496, %v2646
    %v2648 = vand.u32 %v1914, 4294901760
    %2649 = vmatmul.f32.gmra.mxu0 %v2648
    %v2650 = vpop.f32.mrf.mxu0
    %v2651 = vadd.f32 %v2502, %v2650
    %v2652 = vand.u32 %v1916, 4294901760
    %2653 = vmatmul.f32.gmra.mxu0 %v2652
    %v2654 = vpop.f32.mrf.mxu0
    %v2655 = vadd.f32 %v2508, %v2654
    %v2656 = vand.u32 %v1918, 4294901760
    %2657 = vmatmul.f32.gmra.mxu0 %v2656
    %v2658 = vpop.f32.mrf.mxu0
    %v2659 = vadd.f32 %v2514, %v2658
    %v2660 = vand.u32 %v1920, 4294901760
    %2661 = vmatmul.f32.gmra.mxu0 %v2660
    %v2662 = vpop.f32.mrf.mxu0
    %v2663 = vadd.f32 %v2520, %v2662
    %v2664 = vand.u32 %v1922, 4294901760
    %2665 = vmatmul.f32.gmra.mxu0 %v2664
    %v2666 = vpop.f32.mrf.mxu0
    %v2667 = vadd.f32 %v2526, %v2666
    %v2668 = vand.u32 %v1924, 4294901760
    %2669 = vmatmul.f32.gmra.mxu0 %v2668
    %v2670 = vpop.f32.mrf.mxu0
    %v2671 = vadd.f32 %v2532, %v2670
    %v2672 = vand.u32 %v1926, 4294901760
    %2673 = vmatmul.f32.gmra.mxu0 %v2672
    %v2674 = vpop.f32.mrf.mxu0
    %v2675 = vadd.f32 %v2538, %v2674
    %v2676 = vand.u32 %v1928, 4294901760
    %2677 = vmatmul.f32.gmra.mxu0 %v2676
    %v2678 = vpop.f32.mrf.mxu0
    %v2679 = vadd.f32 %v2544, %v2678
    %v2680 = vand.u32 %v1930, 4294901760
    %2681 = vmatmul.f32.gmra.mxu0 %v2680
    %v2682 = vpop.f32.mrf.mxu0
    %v2683 = vadd.f32 %v2550, %v2682
    %v2684 = vand.u32 %v1932, 4294901760
    %2685 = vmatmul.f32.gmra.mxu0 %v2684
    %v2686 = vpop.f32.mrf.mxu0
    %v2687 = vadd.f32 %v2556, %v2686
    %v2688 = vand.u32 %v1934, 4294901760
    %2689 = vmatmul.f32.gmra.mxu0 %v2688
    %v2690 = vpop.f32.mrf.mxu0
    %v2691 = vadd.f32 %v2562, %v2690
    %2692 = vdwg.mxu0
    %v2693 = vand.u32 %v27, 4294901760
    %2694 = vmatpush.msra.mxu0 %v2693
    %v2695 = vand.u32 %v26, 4294901760
    %2696 = vmatpush.msra.mxu0 %v2695
    %v2697 = vand.u32 %v25, 4294901760
    %2698 = vmatpush.msra.mxu0 %v2697
    %v2699 = vand.u32 %v24, 4294901760
    %2700 = vmatpush.msra.mxu0 %v2699
    %v2701 = vand.u32 %v23, 4294901760
    %2702 = vmatpush.msra.mxu0 %v2701
    %v2703 = vand.u32 %v22, 4294901760
    %2704 = vmatpush.msra.mxu0 %v2703
    %v2705 = vand.u32 %v21, 4294901760
    %2706 = vmatpush.msra.mxu0 %v2705
    %v2707 = vand.u32 %v20, 4294901760
    %2708 = vmatpush.msra.mxu0 %v2707
    %v2709 = vand.u32 %v19, 4294901760
    %2710 = vmatpush.msra.mxu0 %v2709
    %v2711 = vand.u32 %v18, 4294901760
    %2712 = vmatpush.msra.mxu0 %v2711
    %v2713 = vand.u32 %v17, 4294901760
    %2714 = vmatpush.msra.mxu0 %v2713
    %v2715 = vand.u32 %v16, 4294901760
    %2716 = vmatpush.msra.mxu0 %v2715
    %v2717 = vand.u32 %v15, 4294901760
    %2718 = vmatpush.msra.mxu0 %v2717
    %v2719 = vand.u32 %v14, 4294901760
    %2720 = vmatpush.msra.mxu0 %v2719
    %v2721 = vand.u32 %v13, 4294901760
    %2722 = vmatpush.msra.mxu0 %v2721
    %v2723 = vand.u32 %v12, 4294901760
    %2724 = vmatpush.msra.mxu0 %v2723
    %v2725 = vand.u32 %v1904, 4294901760
    %2726 = vmatmul.f32.gmra.mxu0 %v2725
    %v2727 = vpop.f32.mrf.mxu0
    %v2728 = vadd.f32 %v2631, %v2727
    %v2729 = vand.u32 %v1906, 4294901760
    %2730 = vmatmul.f32.gmra.mxu0 %v2729
    %v2731 = vpop.f32.mrf.mxu0
    %v2732 = vadd.f32 %v2635, %v2731
    %v2733 = vand.u32 %v1908, 4294901760
    %2734 = vmatmul.f32.gmra.mxu0 %v2733
    %v2735 = vpop.f32.mrf.mxu0
    %v2736 = vadd.f32 %v2639, %v2735
    %v2737 = vand.u32 %v1910, 4294901760
    %2738 = vmatmul.f32.gmra.mxu0 %v2737
    %v2739 = vpop.f32.mrf.mxu0
    %v2740 = vadd.f32 %v2643, %v2739
    %v2741 = vand.u32 %v1912, 4294901760
    %2742 = vmatmul.f32.gmra.mxu0 %v2741
    %v2743 = vpop.f32.mrf.mxu0
    %v2744 = vadd.f32 %v2647, %v2743
    %v2745 = vand.u32 %v1914, 4294901760
    %2746 = vmatmul.f32.gmra.mxu0 %v2745
    %v2747 = vpop.f32.mrf.mxu0
    %v2748 = vadd.f32 %v2651, %v2747
    %v2749 = vand.u32 %v1916, 4294901760
    %2750 = vmatmul.f32.gmra.mxu0 %v2749
    %v2751 = vpop.f32.mrf.mxu0
    %v2752 = vadd.f32 %v2655, %v2751
    %v2753 = vand.u32 %v1918, 4294901760
    %2754 = vmatmul.f32.gmra.mxu0 %v2753
    %v2755 = vpop.f32.mrf.mxu0
    %v2756 = vadd.f32 %v2659, %v2755
    %v2757 = vand.u32 %v1920, 4294901760
    %2758 = vmatmul.f32.gmra.mxu0 %v2757
    %v2759 = vpop.f32.mrf.mxu0
    %v2760 = vadd.f32 %v2663, %v2759
    %v2761 = vand.u32 %v1922, 4294901760
    %2762 = vmatmul.f32.gmra.mxu0 %v2761
    %v2763 = vpop.f32.mrf.mxu0
    %v2764 = vadd.f32 %v2667, %v2763
    %v2765 = vand.u32 %v1924, 4294901760
    %2766 = vmatmul.f32.gmra.mxu0 %v2765
    %v2767 = vpop.f32.mrf.mxu0
    %v2768 = vadd.f32 %v2671, %v2767
    %v2769 = vand.u32 %v1926, 4294901760
    %2770 = vmatmul.f32.gmra.mxu0 %v2769
    %v2771 = vpop.f32.mrf.mxu0
    %v2772 = vadd.f32 %v2675, %v2771
    %v2773 = vand.u32 %v1928, 4294901760
    %2774 = vmatmul.f32.gmra.mxu0 %v2773
    %v2775 = vpop.f32.mrf.mxu0
    %v2776 = vadd.f32 %v2679, %v2775
    %v2777 = vand.u32 %v1930, 4294901760
    %2778 = vmatmul.f32.gmra.mxu0 %v2777
    %v2779 = vpop.f32.mrf.mxu0
    %v2780 = vadd.f32 %v2683, %v2779
    %v2781 = vand.u32 %v1932, 4294901760
    %2782 = vmatmul.f32.gmra.mxu0 %v2781
    %v2783 = vpop.f32.mrf.mxu0
    %v2784 = vadd.f32 %v2687, %v2783
    %v2785 = vand.u32 %v1934, 4294901760
    %2786 = vmatmul.f32.gmra.mxu0 %v2785
    %v2787 = vpop.f32.mrf.mxu0
    %v2788 = vadd.f32 %v2691, %v2787
    %2789 = vdwg.mxu0
    %2790 = vmatpush.msra.mxu0 0.0
    %2791 = vmatpush.msra.mxu0 0.0
    %2792 = vmatpush.msra.mxu0 0.0
    %2793 = vmatpush.msra.mxu0 0.0
    %2794 = vmatpush.msra.mxu0 0.0
    %2795 = vmatpush.msra.mxu0 0.0
    %2796 = vmatpush.msra.mxu0 0.0
    %2797 = vmatpush.msra.mxu0 0.0
    %2798 = vmatpush.msra.mxu0 0.0
    %2799 = vmatpush.msra.mxu0 0.0
    %v2800 = vand.u32 %v33, 4294901760
    %2801 = vmatpush.msra.mxu0 %v2800
    %v2802 = vand.u32 %v32, 4294901760
    %2803 = vmatpush.msra.mxu0 %v2802
    %v2804 = vand.u32 %v31, 4294901760
    %2805 = vmatpush.msra.mxu0 %v2804
    %v2806 = vand.u32 %v30, 4294901760
    %2807 = vmatpush.msra.mxu0 %v2806
    %v2808 = vand.u32 %v29, 4294901760
    %2809 = vmatpush.msra.mxu0 %v2808
    %v2810 = vand.u32 %v28, 4294901760
    %2811 = vmatpush.msra.mxu0 %v2810
    %v2812 = vand.u32 %v1937, 4294901760
    %v2813 = vsub.f32 %v1937, %v2812
    %v2814 = vand.u32 %v2813, 4294901760
    %v2815 = vsub.f32 %v2813, %v2814
    %v2816 = vand.u32 %v2815, 4294901760
    %2817 = vmatmul.f32.gmra.mxu0 %v2816
    %v2818 = vpop.f32.mrf.mxu0
    %v2819 = vadd.f32 %v2728, %v2818
    %v2820 = vand.u32 %v1940, 4294901760
    %v2821 = vsub.f32 %v1940, %v2820
    %v2822 = vand.u32 %v2821, 4294901760
    %v2823 = vsub.f32 %v2821, %v2822
    %v2824 = vand.u32 %v2823, 4294901760
    %2825 = vmatmul.f32.gmra.mxu0 %v2824
    %v2826 = vpop.f32.mrf.mxu0
    %v2827 = vadd.f32 %v2732, %v2826
    %v2828 = vand.u32 %v1943, 4294901760
    %v2829 = vsub.f32 %v1943, %v2828
    %v2830 = vand.u32 %v2829, 4294901760
    %v2831 = vsub.f32 %v2829, %v2830
    %v2832 = vand.u32 %v2831, 4294901760
    %2833 = vmatmul.f32.gmra.mxu0 %v2832
    %v2834 = vpop.f32.mrf.mxu0
    %v2835 = vadd.f32 %v2736, %v2834
    %v2836 = vand.u32 %v1946, 4294901760
    %v2837 = vsub.f32 %v1946, %v2836
    %v2838 = vand.u32 %v2837, 4294901760
    %v2839 = vsub.f32 %v2837, %v2838
    %v2840 = vand.u32 %v2839, 4294901760
    %2841 = vmatmul.f32.gmra.mxu0 %v2840
    %v2842 = vpop.f32.mrf.mxu0
    %v2843 = vadd.f32 %v2740, %v2842
    %v2844 = vand.u32 %v1949, 4294901760
    %v2845 = vsub.f32 %v1949, %v2844
    %v2846 = vand.u32 %v2845, 4294901760
    %v2847 = vsub.f32 %v2845, %v2846
    %v2848 = vand.u32 %v2847, 4294901760
    %2849 = vmatmul.f32.gmra.mxu0 %v2848
    %v2850 = vpop.f32.mrf.mxu0
    %v2851 = vadd.f32 %v2744, %v2850
    %v2852 = vand.u32 %v1952, 4294901760
    %v2853 = vsub.f32 %v1952, %v2852
    %v2854 = vand.u32 %v2853, 4294901760
    %v2855 = vsub.f32 %v2853, %v2854
    %v2856 = vand.u32 %v2855, 4294901760
    %2857 = vmatmul.f32.gmra.mxu0 %v2856
    %v2858 = vpop.f32.mrf.mxu0
    %v2859 = vadd.f32 %v2748, %v2858
    %v2860 = vand.u32 %v1955, 4294901760
    %v2861 = vsub.f32 %v1955, %v2860
    %v2862 = vand.u32 %v2861, 4294901760
    %v2863 = vsub.f32 %v2861, %v2862
    %v2864 = vand.u32 %v2863, 4294901760
    %2865 = vmatmul.f32.gmra.mxu0 %v2864
    %v2866 = vpop.f32.mrf.mxu0
    %v2867 = vadd.f32 %v2752, %v2866
    %v2868 = vand.u32 %v1958, 4294901760
    %v2869 = vsub.f32 %v1958, %v2868
    %v2870 = vand.u32 %v2869, 4294901760
    %v2871 = vsub.f32 %v2869, %v2870
    %v2872 = vand.u32 %v2871, 4294901760
    %2873 = vmatmul.f32.gmra.mxu0 %v2872
    %v2874 = vpop.f32.mrf.mxu0
    %v2875 = vadd.f32 %v2756, %v2874
    %v2876 = vand.u32 %v1961, 4294901760
    %v2877 = vsub.f32 %v1961, %v2876
    %v2878 = vand.u32 %v2877, 4294901760
    %v2879 = vsub.f32 %v2877, %v2878
    %v2880 = vand.u32 %v2879, 4294901760
    %2881 = vmatmul.f32.gmra.mxu0 %v2880
    %v2882 = vpop.f32.mrf.mxu0
    %v2883 = vadd.f32 %v2760, %v2882
    %v2884 = vand.u32 %v1964, 4294901760
    %v2885 = vsub.f32 %v1964, %v2884
    %v2886 = vand.u32 %v2885, 4294901760
    %v2887 = vsub.f32 %v2885, %v2886
    %v2888 = vand.u32 %v2887, 4294901760
    %2889 = vmatmul.f32.gmra.mxu0 %v2888
    %v2890 = vpop.f32.mrf.mxu0
    %v2891 = vadd.f32 %v2764, %v2890
    %v2892 = vand.u32 %v1967, 4294901760
    %v2893 = vsub.f32 %v1967, %v2892
    %v2894 = vand.u32 %v2893, 4294901760
    %v2895 = vsub.f32 %v2893, %v2894
    %v2896 = vand.u32 %v2895, 4294901760
    %2897 = vmatmul.f32.gmra.mxu0 %v2896
    %v2898 = vpop.f32.mrf.mxu0
    %v2899 = vadd.f32 %v2768, %v2898
    %v2900 = vand.u32 %v1970, 4294901760
    %v2901 = vsub.f32 %v1970, %v2900
    %v2902 = vand.u32 %v2901, 4294901760
    %v2903 = vsub.f32 %v2901, %v2902
    %v2904 = vand.u32 %v2903, 4294901760
    %2905 = vmatmul.f32.gmra.mxu0 %v2904
    %v2906 = vpop.f32.mrf.mxu0
    %v2907 = vadd.f32 %v2772, %v2906
    %v2908 = vand.u32 %v1973, 4294901760
    %v2909 = vsub.f32 %v1973, %v2908
    %v2910 = vand.u32 %v2909, 4294901760
    %v2911 = vsub.f32 %v2909, %v2910
    %v2912 = vand.u32 %v2911, 4294901760
    %2913 = vmatmul.f32.gmra.mxu0 %v2912
    %v2914 = vpop.f32.mrf.mxu0
    %v2915 = vadd.f32 %v2776, %v2914
    %v2916 = vand.u32 %v1976, 4294901760
    %v2917 = vsub.f32 %v1976, %v2916
    %v2918 = vand.u32 %v2917, 4294901760
    %v2919 = vsub.f32 %v2917, %v2918
    %v2920 = vand.u32 %v2919, 4294901760
    %2921 = vmatmul.f32.gmra.mxu0 %v2920
    %v2922 = vpop.f32.mrf.mxu0
    %v2923 = vadd.f32 %v2780, %v2922
    %v2924 = vand.u32 %v1979, 4294901760
    %v2925 = vsub.f32 %v1979, %v2924
    %v2926 = vand.u32 %v2925, 4294901760
    %v2927 = vsub.f32 %v2925, %v2926
    %v2928 = vand.u32 %v2927, 4294901760
    %2929 = vmatmul.f32.gmra.mxu0 %v2928
    %v2930 = vpop.f32.mrf.mxu0
    %v2931 = vadd.f32 %v2784, %v2930
    %v2932 = vand.u32 %v1982, 4294901760
    %v2933 = vsub.f32 %v1982, %v2932
    %v2934 = vand.u32 %v2933, 4294901760
    %v2935 = vsub.f32 %v2933, %v2934
    %v2936 = vand.u32 %v2935, 4294901760
    %2937 = vmatmul.f32.gmra.mxu0 %v2936
    %v2938 = vpop.f32.mrf.mxu0
    %v2939 = vadd.f32 %v2788, %v2938
    %2940 = vdwg.mxu0
    %2941 = vmatpush.msra.mxu0 0.0
    %2942 = vmatpush.msra.mxu0 0.0
    %2943 = vmatpush.msra.mxu0 0.0
    %2944 = vmatpush.msra.mxu0 0.0
    %2945 = vmatpush.msra.mxu0 0.0
    %2946 = vmatpush.msra.mxu0 0.0
    %2947 = vmatpush.msra.mxu0 0.0
    %2948 = vmatpush.msra.mxu0 0.0
    %2949 = vmatpush.msra.mxu0 0.0
    %2950 = vmatpush.msra.mxu0 0.0
    %v2951 = vand.u32 %v33, 4294901760
    %v2952 = vsub.f32 %v33, %v2951
    %v2953 = vand.u32 %v2952, 4294901760
    %v2954 = vsub.f32 %v2952, %v2953
    %v2955 = vand.u32 %v2954, 4294901760
    %2956 = vmatpush.msra.mxu0 %v2955
    %v2957 = vand.u32 %v32, 4294901760
    %v2958 = vsub.f32 %v32, %v2957
    %v2959 = vand.u32 %v2958, 4294901760
    %v2960 = vsub.f32 %v2958, %v2959
    %v2961 = vand.u32 %v2960, 4294901760
    %2962 = vmatpush.msra.mxu0 %v2961
    %v2963 = vand.u32 %v31, 4294901760
    %v2964 = vsub.f32 %v31, %v2963
    %v2965 = vand.u32 %v2964, 4294901760
    %v2966 = vsub.f32 %v2964, %v2965
    %v2967 = vand.u32 %v2966, 4294901760
    %2968 = vmatpush.msra.mxu0 %v2967
    %v2969 = vand.u32 %v30, 4294901760
    %v2970 = vsub.f32 %v30, %v2969
    %v2971 = vand.u32 %v2970, 4294901760
    %v2972 = vsub.f32 %v2970, %v2971
    %v2973 = vand.u32 %v2972, 4294901760
    %2974 = vmatpush.msra.mxu0 %v2973
    %v2975 = vand.u32 %v29, 4294901760
    %v2976 = vsub.f32 %v29, %v2975
    %v2977 = vand.u32 %v2976, 4294901760
    %v2978 = vsub.f32 %v2976, %v2977
    %v2979 = vand.u32 %v2978, 4294901760
    %2980 = vmatpush.msra.mxu0 %v2979
    %v2981 = vand.u32 %v28, 4294901760
    %v2982 = vsub.f32 %v28, %v2981
    %v2983 = vand.u32 %v2982, 4294901760
    %v2984 = vsub.f32 %v2982, %v2983
    %v2985 = vand.u32 %v2984, 4294901760
    %2986 = vmatpush.msra.mxu0 %v2985
    %v2987 = vand.u32 %v1937, 4294901760
    %2988 = vmatmul.f32.gmra.mxu0 %v2987
    %v2989 = vpop.f32.mrf.mxu0
    %v2990 = vadd.f32 %v2819, %v2989
    %v2991 = vand.u32 %v1940, 4294901760
    %2992 = vmatmul.f32.gmra.mxu0 %v2991
    %v2993 = vpop.f32.mrf.mxu0
    %v2994 = vadd.f32 %v2827, %v2993
    %v2995 = vand.u32 %v1943, 4294901760
    %2996 = vmatmul.f32.gmra.mxu0 %v2995
    %v2997 = vpop.f32.mrf.mxu0
    %v2998 = vadd.f32 %v2835, %v2997
    %v2999 = vand.u32 %v1946, 4294901760
    %3000 = vmatmul.f32.gmra.mxu0 %v2999
    %v3001 = vpop.f32.mrf.mxu0
    %v3002 = vadd.f32 %v2843, %v3001
    %v3003 = vand.u32 %v1949, 4294901760
    %3004 = vmatmul.f32.gmra.mxu0 %v3003
    %v3005 = vpop.f32.mrf.mxu0
    %v3006 = vadd.f32 %v2851, %v3005
    %v3007 = vand.u32 %v1952, 4294901760
    %3008 = vmatmul.f32.gmra.mxu0 %v3007
    %v3009 = vpop.f32.mrf.mxu0
    %v3010 = vadd.f32 %v2859, %v3009
    %v3011 = vand.u32 %v1955, 4294901760
    %3012 = vmatmul.f32.gmra.mxu0 %v3011
    %v3013 = vpop.f32.mrf.mxu0
    %v3014 = vadd.f32 %v2867, %v3013
    %v3015 = vand.u32 %v1958, 4294901760
    %3016 = vmatmul.f32.gmra.mxu0 %v3015
    %v3017 = vpop.f32.mrf.mxu0
    %v3018 = vadd.f32 %v2875, %v3017
    %v3019 = vand.u32 %v1961, 4294901760
    %3020 = vmatmul.f32.gmra.mxu0 %v3019
    %v3021 = vpop.f32.mrf.mxu0
    %v3022 = vadd.f32 %v2883, %v3021
    %v3023 = vand.u32 %v1964, 4294901760
    %3024 = vmatmul.f32.gmra.mxu0 %v3023
    %v3025 = vpop.f32.mrf.mxu0
    %v3026 = vadd.f32 %v2891, %v3025
    %v3027 = vand.u32 %v1967, 4294901760
    %3028 = vmatmul.f32.gmra.mxu0 %v3027
    %v3029 = vpop.f32.mrf.mxu0
    %v3030 = vadd.f32 %v2899, %v3029
    %v3031 = vand.u32 %v1970, 4294901760
    %3032 = vmatmul.f32.gmra.mxu0 %v3031
    %v3033 = vpop.f32.mrf.mxu0
    %v3034 = vadd.f32 %v2907, %v3033
    %v3035 = vand.u32 %v1973, 4294901760
    %3036 = vmatmul.f32.gmra.mxu0 %v3035
    %v3037 = vpop.f32.mrf.mxu0
    %v3038 = vadd.f32 %v2915, %v3037
    %v3039 = vand.u32 %v1976, 4294901760
    %3040 = vmatmul.f32.gmra.mxu0 %v3039
    %v3041 = vpop.f32.mrf.mxu0
    %v3042 = vadd.f32 %v2923, %v3041
    %v3043 = vand.u32 %v1979, 4294901760
    %3044 = vmatmul.f32.gmra.mxu0 %v3043
    %v3045 = vpop.f32.mrf.mxu0
    %v3046 = vadd.f32 %v2931, %v3045
    %v3047 = vand.u32 %v1982, 4294901760
    %3048 = vmatmul.f32.gmra.mxu0 %v3047
    %v3049 = vpop.f32.mrf.mxu0
    %v3050 = vadd.f32 %v2939, %v3049
    %3051 = vdwg.mxu0
    %3052 = vmatpush.msra.mxu0 0.0
    %3053 = vmatpush.msra.mxu0 0.0
    %3054 = vmatpush.msra.mxu0 0.0
    %3055 = vmatpush.msra.mxu0 0.0
    %3056 = vmatpush.msra.mxu0 0.0
    %3057 = vmatpush.msra.mxu0 0.0
    %3058 = vmatpush.msra.mxu0 0.0
    %3059 = vmatpush.msra.mxu0 0.0
    %3060 = vmatpush.msra.mxu0 0.0
    %3061 = vmatpush.msra.mxu0 0.0
    %v3062 = vand.u32 %v33, 4294901760
    %v3063 = vsub.f32 %v33, %v3062
    %3064 = vmatpush.msra.mxu0 %v3063
    %v3065 = vand.u32 %v32, 4294901760
    %v3066 = vsub.f32 %v32, %v3065
    %3067 = vmatpush.msra.mxu0 %v3066
    %v3068 = vand.u32 %v31, 4294901760
    %v3069 = vsub.f32 %v31, %v3068
    %3070 = vmatpush.msra.mxu0 %v3069
    %v3071 = vand.u32 %v30, 4294901760
    %v3072 = vsub.f32 %v30, %v3071
    %3073 = vmatpush.msra.mxu0 %v3072
    %v3074 = vand.u32 %v29, 4294901760
    %v3075 = vsub.f32 %v29, %v3074
    %3076 = vmatpush.msra.mxu0 %v3075
    %v3077 = vand.u32 %v28, 4294901760
    %v3078 = vsub.f32 %v28, %v3077
    %3079 = vmatpush.msra.mxu0 %v3078
    %v3080 = vand.u32 %v1937, 4294901760
    %v3081 = vsub.f32 %v1937, %v3080
    %3082 = vmatmul.f32.gmra.mxu0 %v3081
    %v3083 = vpop.f32.mrf.mxu0
    %v3084 = vadd.f32 %v2990, %v3083
    %v3085 = vand.u32 %v1940, 4294901760
    %v3086 = vsub.f32 %v1940, %v3085
    %3087 = vmatmul.f32.gmra.mxu0 %v3086
    %v3088 = vpop.f32.mrf.mxu0
    %v3089 = vadd.f32 %v2994, %v3088
    %v3090 = vand.u32 %v1943, 4294901760
    %v3091 = vsub.f32 %v1943, %v3090
    %3092 = vmatmul.f32.gmra.mxu0 %v3091
    %v3093 = vpop.f32.mrf.mxu0
    %v3094 = vadd.f32 %v2998, %v3093
    %v3095 = vand.u32 %v1946, 4294901760
    %v3096 = vsub.f32 %v1946, %v3095
    %3097 = vmatmul.f32.gmra.mxu0 %v3096
    %v3098 = vpop.f32.mrf.mxu0
    %v3099 = vadd.f32 %v3002, %v3098
    %v3100 = vand.u32 %v1949, 4294901760
    %v3101 = vsub.f32 %v1949, %v3100
    %3102 = vmatmul.f32.gmra.mxu0 %v3101
    %v3103 = vpop.f32.mrf.mxu0
    %v3104 = vadd.f32 %v3006, %v3103
    %v3105 = vand.u32 %v1952, 4294901760
    %v3106 = vsub.f32 %v1952, %v3105
    %3107 = vmatmul.f32.gmra.mxu0 %v3106
    %v3108 = vpop.f32.mrf.mxu0
    %v3109 = vadd.f32 %v3010, %v3108
    %v3110 = vand.u32 %v1955, 4294901760
    %v3111 = vsub.f32 %v1955, %v3110
    %3112 = vmatmul.f32.gmra.mxu0 %v3111
    %v3113 = vpop.f32.mrf.mxu0
    %v3114 = vadd.f32 %v3014, %v3113
    %v3115 = vand.u32 %v1958, 4294901760
    %v3116 = vsub.f32 %v1958, %v3115
    %3117 = vmatmul.f32.gmra.mxu0 %v3116
    %v3118 = vpop.f32.mrf.mxu0
    %v3119 = vadd.f32 %v3018, %v3118
    %v3120 = vand.u32 %v1961, 4294901760
    %v3121 = vsub.f32 %v1961, %v3120
    %3122 = vmatmul.f32.gmra.mxu0 %v3121
    %v3123 = vpop.f32.mrf.mxu0
    %v3124 = vadd.f32 %v3022, %v3123
    %v3125 = vand.u32 %v1964, 4294901760
    %v3126 = vsub.f32 %v1964, %v3125
    %3127 = vmatmul.f32.gmra.mxu0 %v3126
    %v3128 = vpop.f32.mrf.mxu0
    %v3129 = vadd.f32 %v3026, %v3128
    %v3130 = vand.u32 %v1967, 4294901760
    %v3131 = vsub.f32 %v1967, %v3130
    %3132 = vmatmul.f32.gmra.mxu0 %v3131
    %v3133 = vpop.f32.mrf.mxu0
    %v3134 = vadd.f32 %v3030, %v3133
    %v3135 = vand.u32 %v1970, 4294901760
    %v3136 = vsub.f32 %v1970, %v3135
    %3137 = vmatmul.f32.gmra.mxu0 %v3136
    %v3138 = vpop.f32.mrf.mxu0
    %v3139 = vadd.f32 %v3034, %v3138
    %v3140 = vand.u32 %v1973, 4294901760
    %v3141 = vsub.f32 %v1973, %v3140
    %3142 = vmatmul.f32.gmra.mxu0 %v3141
    %v3143 = vpop.f32.mrf.mxu0
    %v3144 = vadd.f32 %v3038, %v3143
    %v3145 = vand.u32 %v1976, 4294901760
    %v3146 = vsub.f32 %v1976, %v3145
    %3147 = vmatmul.f32.gmra.mxu0 %v3146
    %v3148 = vpop.f32.mrf.mxu0
    %v3149 = vadd.f32 %v3042, %v3148
    %v3150 = vand.u32 %v1979, 4294901760
    %v3151 = vsub.f32 %v1979, %v3150
    %3152 = vmatmul.f32.gmra.mxu0 %v3151
    %v3153 = vpop.f32.mrf.mxu0
    %v3154 = vadd.f32 %v3046, %v3153
    %v3155 = vand.u32 %v1982, 4294901760
    %v3156 = vsub.f32 %v1982, %v3155
    %3157 = vmatmul.f32.gmra.mxu0 %v3156
    %v3158 = vpop.f32.mrf.mxu0
    %v3159 = vadd.f32 %v3050, %v3158
    %3160 = vdwg.mxu0
    %3161 = vmatpush.msra.mxu0 0.0
    %3162 = vmatpush.msra.mxu0 0.0
    %3163 = vmatpush.msra.mxu0 0.0
    %3164 = vmatpush.msra.mxu0 0.0
    %3165 = vmatpush.msra.mxu0 0.0
    %3166 = vmatpush.msra.mxu0 0.0
    %3167 = vmatpush.msra.mxu0 0.0
    %3168 = vmatpush.msra.mxu0 0.0
    %3169 = vmatpush.msra.mxu0 0.0
    %3170 = vmatpush.msra.mxu0 0.0
    %v3171 = vand.u32 %v33, 4294901760
    %3172 = vmatpush.msra.mxu0 %v3171
    %v3173 = vand.u32 %v32, 4294901760
    %3174 = vmatpush.msra.mxu0 %v3173
    %v3175 = vand.u32 %v31, 4294901760
    %3176 = vmatpush.msra.mxu0 %v3175
    %v3177 = vand.u32 %v30, 4294901760
    %3178 = vmatpush.msra.mxu0 %v3177
    %v3179 = vand.u32 %v29, 4294901760
    %3180 = vmatpush.msra.mxu0 %v3179
    %v3181 = vand.u32 %v28, 4294901760
    %3182 = vmatpush.msra.mxu0 %v3181
    %v3183 = vand.u32 %v1937, 4294901760
    %v3184 = vsub.f32 %v1937, %v3183
    %v3185 = vand.u32 %v3184, 4294901760
    %3186 = vmatmul.f32.gmra.mxu0 %v3185
    %v3187 = vpop.f32.mrf.mxu0
    %v3188 = vadd.f32 %v3084, %v3187
    %v3189 = vand.u32 %v1940, 4294901760
    %v3190 = vsub.f32 %v1940, %v3189
    %v3191 = vand.u32 %v3190, 4294901760
    %3192 = vmatmul.f32.gmra.mxu0 %v3191
    %v3193 = vpop.f32.mrf.mxu0
    %v3194 = vadd.f32 %v3089, %v3193
    %v3195 = vand.u32 %v1943, 4294901760
    %v3196 = vsub.f32 %v1943, %v3195
    %v3197 = vand.u32 %v3196, 4294901760
    %3198 = vmatmul.f32.gmra.mxu0 %v3197
    %v3199 = vpop.f32.mrf.mxu0
    %v3200 = vadd.f32 %v3094, %v3199
    %v3201 = vand.u32 %v1946, 4294901760
    %v3202 = vsub.f32 %v1946, %v3201
    %v3203 = vand.u32 %v3202, 4294901760
    %3204 = vmatmul.f32.gmra.mxu0 %v3203
    %v3205 = vpop.f32.mrf.mxu0
    %v3206 = vadd.f32 %v3099, %v3205
    %v3207 = vand.u32 %v1949, 4294901760
    %v3208 = vsub.f32 %v1949, %v3207
    %v3209 = vand.u32 %v3208, 4294901760
    %3210 = vmatmul.f32.gmra.mxu0 %v3209
    %v3211 = vpop.f32.mrf.mxu0
    %v3212 = vadd.f32 %v3104, %v3211
    %v3213 = vand.u32 %v1952, 4294901760
    %v3214 = vsub.f32 %v1952, %v3213
    %v3215 = vand.u32 %v3214, 4294901760
    %3216 = vmatmul.f32.gmra.mxu0 %v3215
    %v3217 = vpop.f32.mrf.mxu0
    %v3218 = vadd.f32 %v3109, %v3217
    %v3219 = vand.u32 %v1955, 4294901760
    %v3220 = vsub.f32 %v1955, %v3219
    %v3221 = vand.u32 %v3220, 4294901760
    %3222 = vmatmul.f32.gmra.mxu0 %v3221
    %v3223 = vpop.f32.mrf.mxu0
    %v3224 = vadd.f32 %v3114, %v3223
    %v3225 = vand.u32 %v1958, 4294901760
    %v3226 = vsub.f32 %v1958, %v3225
    %v3227 = vand.u32 %v3226, 4294901760
    %3228 = vmatmul.f32.gmra.mxu0 %v3227
    %v3229 = vpop.f32.mrf.mxu0
    %v3230 = vadd.f32 %v3119, %v3229
    %v3231 = vand.u32 %v1961, 4294901760
    %v3232 = vsub.f32 %v1961, %v3231
    %v3233 = vand.u32 %v3232, 4294901760
    %3234 = vmatmul.f32.gmra.mxu0 %v3233
    %v3235 = vpop.f32.mrf.mxu0
    %v3236 = vadd.f32 %v3124, %v3235
    %v3237 = vand.u32 %v1964, 4294901760
    %v3238 = vsub.f32 %v1964, %v3237
    %v3239 = vand.u32 %v3238, 4294901760
    %3240 = vmatmul.f32.gmra.mxu0 %v3239
    %v3241 = vpop.f32.mrf.mxu0
    %v3242 = vadd.f32 %v3129, %v3241
    %v3243 = vand.u32 %v1967, 4294901760
    %v3244 = vsub.f32 %v1967, %v3243
    %v3245 = vand.u32 %v3244, 4294901760
    %3246 = vmatmul.f32.gmra.mxu0 %v3245
    %v3247 = vpop.f32.mrf.mxu0
    %v3248 = vadd.f32 %v3134, %v3247
    %v3249 = vand.u32 %v1970, 4294901760
    %v3250 = vsub.f32 %v1970, %v3249
    %v3251 = vand.u32 %v3250, 4294901760
    %3252 = vmatmul.f32.gmra.mxu0 %v3251
    %v3253 = vpop.f32.mrf.mxu0
    %v3254 = vadd.f32 %v3139, %v3253
    %v3255 = vand.u32 %v1973, 4294901760
    %v3256 = vsub.f32 %v1973, %v3255
    %v3257 = vand.u32 %v3256, 4294901760
    %3258 = vmatmul.f32.gmra.mxu0 %v3257
    %v3259 = vpop.f32.mrf.mxu0
    %v3260 = vadd.f32 %v3144, %v3259
    %v3261 = vand.u32 %v1976, 4294901760
    %v3262 = vsub.f32 %v1976, %v3261
    %v3263 = vand.u32 %v3262, 4294901760
    %3264 = vmatmul.f32.gmra.mxu0 %v3263
    %v3265 = vpop.f32.mrf.mxu0
    %v3266 = vadd.f32 %v3149, %v3265
    %v3267 = vand.u32 %v1979, 4294901760
    %v3268 = vsub.f32 %v1979, %v3267
    %v3269 = vand.u32 %v3268, 4294901760
    %3270 = vmatmul.f32.gmra.mxu0 %v3269
    %v3271 = vpop.f32.mrf.mxu0
    %v3272 = vadd.f32 %v3154, %v3271
    %v3273 = vand.u32 %v1982, 4294901760
    %v3274 = vsub.f32 %v1982, %v3273
    %v3275 = vand.u32 %v3274, 4294901760
    %3276 = vmatmul.f32.gmra.mxu0 %v3275
    %v3277 = vpop.f32.mrf.mxu0
    %v3278 = vadd.f32 %v3159, %v3277
    %3279 = vdwg.mxu0
    %3280 = vmatpush.msra.mxu0 0.0
    %3281 = vmatpush.msra.mxu0 0.0
    %3282 = vmatpush.msra.mxu0 0.0
    %3283 = vmatpush.msra.mxu0 0.0
    %3284 = vmatpush.msra.mxu0 0.0
    %3285 = vmatpush.msra.mxu0 0.0
    %3286 = vmatpush.msra.mxu0 0.0
    %3287 = vmatpush.msra.mxu0 0.0
    %3288 = vmatpush.msra.mxu0 0.0
    %3289 = vmatpush.msra.mxu0 0.0
    %v3290 = vand.u32 %v33, 4294901760
    %v3291 = vsub.f32 %v33, %v3290
    %v3292 = vand.u32 %v3291, 4294901760
    %3293 = vmatpush.msra.mxu0 %v3292
    %v3294 = vand.u32 %v32, 4294901760
    %v3295 = vsub.f32 %v32, %v3294
    %v3296 = vand.u32 %v3295, 4294901760
    %3297 = vmatpush.msra.mxu0 %v3296
    %v3298 = vand.u32 %v31, 4294901760
    %v3299 = vsub.f32 %v31, %v3298
    %v3300 = vand.u32 %v3299, 4294901760
    %3301 = vmatpush.msra.mxu0 %v3300
    %v3302 = vand.u32 %v30, 4294901760
    %v3303 = vsub.f32 %v30, %v3302
    %v3304 = vand.u32 %v3303, 4294901760
    %3305 = vmatpush.msra.mxu0 %v3304
    %v3306 = vand.u32 %v29, 4294901760
    %v3307 = vsub.f32 %v29, %v3306
    %v3308 = vand.u32 %v3307, 4294901760
    %3309 = vmatpush.msra.mxu0 %v3308
    %v3310 = vand.u32 %v28, 4294901760
    %v3311 = vsub.f32 %v28, %v3310
    %v3312 = vand.u32 %v3311, 4294901760
    %3313 = vmatpush.msra.mxu0 %v3312
    %v3314 = vand.u32 %v1937, 4294901760
    %3315 = vmatmul.f32.gmra.mxu0 %v3314
    %v3316 = vpop.f32.mrf.mxu0
    %v3317 = vadd.f32 %v3188, %v3316
    %v3318 = vand.u32 %v1940, 4294901760
    %3319 = vmatmul.f32.gmra.mxu0 %v3318
    %v3320 = vpop.f32.mrf.mxu0
    %v3321 = vadd.f32 %v3194, %v3320
    %v3322 = vand.u32 %v1943, 4294901760
    %3323 = vmatmul.f32.gmra.mxu0 %v3322
    %v3324 = vpop.f32.mrf.mxu0
    %v3325 = vadd.f32 %v3200, %v3324
    %v3326 = vand.u32 %v1946, 4294901760
    %3327 = vmatmul.f32.gmra.mxu0 %v3326
    %v3328 = vpop.f32.mrf.mxu0
    %v3329 = vadd.f32 %v3206, %v3328
    %v3330 = vand.u32 %v1949, 4294901760
    %3331 = vmatmul.f32.gmra.mxu0 %v3330
    %v3332 = vpop.f32.mrf.mxu0
    %v3333 = vadd.f32 %v3212, %v3332
    %v3334 = vand.u32 %v1952, 4294901760
    %3335 = vmatmul.f32.gmra.mxu0 %v3334
    %v3336 = vpop.f32.mrf.mxu0
    %v3337 = vadd.f32 %v3218, %v3336
    %v3338 = vand.u32 %v1955, 4294901760
    %3339 = vmatmul.f32.gmra.mxu0 %v3338
    %v3340 = vpop.f32.mrf.mxu0
    %v3341 = vadd.f32 %v3224, %v3340
    %v3342 = vand.u32 %v1958, 4294901760
    %3343 = vmatmul.f32.gmra.mxu0 %v3342
    %v3344 = vpop.f32.mrf.mxu0
    %v3345 = vadd.f32 %v3230, %v3344
    %v3346 = vand.u32 %v1961, 4294901760
    %3347 = vmatmul.f32.gmra.mxu0 %v3346
    %v3348 = vpop.f32.mrf.mxu0
    %v3349 = vadd.f32 %v3236, %v3348
    %v3350 = vand.u32 %v1964, 4294901760
    %3351 = vmatmul.f32.gmra.mxu0 %v3350
    %v3352 = vpop.f32.mrf.mxu0
    %v3353 = vadd.f32 %v3242, %v3352
    %v3354 = vand.u32 %v1967, 4294901760
    %3355 = vmatmul.f32.gmra.mxu0 %v3354
    %v3356 = vpop.f32.mrf.mxu0
    %v3357 = vadd.f32 %v3248, %v3356
    %v3358 = vand.u32 %v1970, 4294901760
    %3359 = vmatmul.f32.gmra.mxu0 %v3358
    %v3360 = vpop.f32.mrf.mxu0
    %v3361 = vadd.f32 %v3254, %v3360
    %v3362 = vand.u32 %v1973, 4294901760
    %3363 = vmatmul.f32.gmra.mxu0 %v3362
    %v3364 = vpop.f32.mrf.mxu0
    %v3365 = vadd.f32 %v3260, %v3364
    %v3366 = vand.u32 %v1976, 4294901760
    %3367 = vmatmul.f32.gmra.mxu0 %v3366
    %v3368 = vpop.f32.mrf.mxu0
    %v3369 = vadd.f32 %v3266, %v3368
    %v3370 = vand.u32 %v1979, 4294901760
    %3371 = vmatmul.f32.gmra.mxu0 %v3370
    %v3372 = vpop.f32.mrf.mxu0
    %v3373 = vadd.f32 %v3272, %v3372
    %v3374 = vand.u32 %v1982, 4294901760
    %3375 = vmatmul.f32.gmra.mxu0 %v3374
    %v3376 = vpop.f32.mrf.mxu0
    %v3377 = vadd.f32 %v3278, %v3376
    %3378 = vdwg.mxu0
    %3379 = vmatpush.msra.mxu0 0.0
    %3380 = vmatpush.msra.mxu0 0.0
    %3381 = vmatpush.msra.mxu0 0.0
    %3382 = vmatpush.msra.mxu0 0.0
    %3383 = vmatpush.msra.mxu0 0.0
    %3384 = vmatpush.msra.mxu0 0.0
    %3385 = vmatpush.msra.mxu0 0.0
    %3386 = vmatpush.msra.mxu0 0.0
    %3387 = vmatpush.msra.mxu0 0.0
    %3388 = vmatpush.msra.mxu0 0.0
    %v3389 = vand.u32 %v33, 4294901760
    %3390 = vmatpush.msra.mxu0 %v3389
    %v3391 = vand.u32 %v32, 4294901760
    %3392 = vmatpush.msra.mxu0 %v3391
    %v3393 = vand.u32 %v31, 4294901760
    %3394 = vmatpush.msra.mxu0 %v3393
    %v3395 = vand.u32 %v30, 4294901760
    %3396 = vmatpush.msra.mxu0 %v3395
    %v3397 = vand.u32 %v29, 4294901760
    %3398 = vmatpush.msra.mxu0 %v3397
    %v3399 = vand.u32 %v28, 4294901760
    %3400 = vmatpush.msra.mxu0 %v3399
    %v3401 = vand.u32 %v1937, 4294901760
    %3402 = vmatmul.f32.gmra.mxu0 %v3401
    %v3403 = vpop.f32.mrf.mxu0
    %v3404 = vadd.f32 %v3317, %v3403
    %v3405 = vand.u32 %v1940, 4294901760
    %3406 = vmatmul.f32.gmra.mxu0 %v3405
    %v3407 = vpop.f32.mrf.mxu0
    %v3408 = vadd.f32 %v3321, %v3407
    %v3409 = vand.u32 %v1943, 4294901760
    %3410 = vmatmul.f32.gmra.mxu0 %v3409
    %v3411 = vpop.f32.mrf.mxu0
    %v3412 = vadd.f32 %v3325, %v3411
    %v3413 = vand.u32 %v1946, 4294901760
    %3414 = vmatmul.f32.gmra.mxu0 %v3413
    %v3415 = vpop.f32.mrf.mxu0
    %v3416 = vadd.f32 %v3329, %v3415
    %v3417 = vand.u32 %v1949, 4294901760
    %3418 = vmatmul.f32.gmra.mxu0 %v3417
    %v3419 = vpop.f32.mrf.mxu0
    %v3420 = vadd.f32 %v3333, %v3419
    %v3421 = vand.u32 %v1952, 4294901760
    %3422 = vmatmul.f32.gmra.mxu0 %v3421
    %v3423 = vpop.f32.mrf.mxu0
    %v3424 = vadd.f32 %v3337, %v3423
    %v3425 = vand.u32 %v1955, 4294901760
    %3426 = vmatmul.f32.gmra.mxu0 %v3425
    %v3427 = vpop.f32.mrf.mxu0
    %v3428 = vadd.f32 %v3341, %v3427
    %v3429 = vand.u32 %v1958, 4294901760
    %3430 = vmatmul.f32.gmra.mxu0 %v3429
    %v3431 = vpop.f32.mrf.mxu0
    %v3432 = vadd.f32 %v3345, %v3431
    %v3433 = vand.u32 %v1961, 4294901760
    %3434 = vmatmul.f32.gmra.mxu0 %v3433
    %v3435 = vpop.f32.mrf.mxu0
    %v3436 = vadd.f32 %v3349, %v3435
    %v3437 = vand.u32 %v1964, 4294901760
    %3438 = vmatmul.f32.gmra.mxu0 %v3437
    %v3439 = vpop.f32.mrf.mxu0
    %v3440 = vadd.f32 %v3353, %v3439
    %v3441 = vand.u32 %v1967, 4294901760
    %3442 = vmatmul.f32.gmra.mxu0 %v3441
    %v3443 = vpop.f32.mrf.mxu0
    %v3444 = vadd.f32 %v3357, %v3443
    %v3445 = vand.u32 %v1970, 4294901760
    %3446 = vmatmul.f32.gmra.mxu0 %v3445
    %v3447 = vpop.f32.mrf.mxu0
    %v3448 = vadd.f32 %v3361, %v3447
    %v3449 = vand.u32 %v1973, 4294901760
    %3450 = vmatmul.f32.gmra.mxu0 %v3449
    %v3451 = vpop.f32.mrf.mxu0
    %v3452 = vadd.f32 %v3365, %v3451
    %v3453 = vand.u32 %v1976, 4294901760
    %3454 = vmatmul.f32.gmra.mxu0 %v3453
    %v3455 = vpop.f32.mrf.mxu0
    %v3456 = vadd.f32 %v3369, %v3455
    %v3457 = vand.u32 %v1979, 4294901760
    %3458 = vmatmul.f32.gmra.mxu0 %v3457
    %v3459 = vpop.f32.mrf.mxu0
    %v3460 = vadd.f32 %v3373, %v3459
    %v3461 = vand.u32 %v1982, 4294901760
    %3462 = vmatmul.f32.gmra.mxu0 %v3461
    %v3463 = vpop.f32.mrf.mxu0
    %v3464 = vadd.f32 %v3377, %v3463
    %3465 = vdwg.mxu0
    %3466 = vset.pattern.permute.xlu0 2
    %3467 = vperm.xlu0 %3466, %v86
    %v3468 = vpop.permute.xlu0 %3467
    %3469 = vset.pattern.permute.xlu0 2
    %3470 = vperm.xlu0 %3469, %v88
    %v3471 = vpop.permute.xlu0 %3470
    %3472 = vset.pattern.permute.xlu0 2
    %3473 = vperm.xlu0 %3472, %v90
    %v3474 = vpop.permute.xlu0 %3473
    %3475 = vset.pattern.permute.xlu0 2
    %3476 = vperm.xlu0 %3475, %v92
    %v3477 = vpop.permute.xlu0 %3476
    %3478 = vset.pattern.permute.xlu0 2
    %3479 = vperm.xlu0 %3478, %v94
    %v3480 = vpop.permute.xlu0 %3479
    %3481 = vset.pattern.permute.xlu0 2
    %3482 = vperm.xlu0 %3481, %v96
    %v3483 = vpop.permute.xlu0 %3482
    %3484 = vset.pattern.permute.xlu0 2
    %3485 = vperm.xlu0 %3484, %v98
    %v3486 = vpop.permute.xlu0 %3485
    %3487 = vset.pattern.permute.xlu0 2
    %3488 = vperm.xlu0 %3487, %v100
    %v3489 = vpop.permute.xlu0 %3488
    %3490 = vset.pattern.permute.xlu0 2
    %3491 = vperm.xlu0 %3490, %v102
    %v3492 = vpop.permute.xlu0 %3491
    %3493 = vset.pattern.permute.xlu0 2
    %3494 = vperm.xlu0 %3493, %v104
    %v3495 = vpop.permute.xlu0 %3494
    %3496 = vset.pattern.permute.xlu0 2
    %3497 = vperm.xlu0 %3496, %v106
    %v3498 = vpop.permute.xlu0 %3497
    %3499 = vset.pattern.permute.xlu0 2
    %3500 = vperm.xlu0 %3499, %v108
    %v3501 = vpop.permute.xlu0 %3500
    %3502 = vset.pattern.permute.xlu0 2
    %3503 = vperm.xlu0 %3502, %v110
    %v3504 = vpop.permute.xlu0 %3503
    %3505 = vset.pattern.permute.xlu0 2
    %3506 = vperm.xlu0 %3505, %v112
    %v3507 = vpop.permute.xlu0 %3506
    %3508 = vset.pattern.permute.xlu0 2
    %3509 = vperm.xlu0 %3508, %v114
    %v3510 = vpop.permute.xlu0 %3509
    %3511 = vset.pattern.permute.xlu0 2
    %3512 = vperm.xlu0 %3511, %v116
    %v3513 = vpop.permute.xlu0 %3512
    %vm3514 = vcmp.eq.s32.totalorder %v3468, %v35
    %vm3515 = vcmp.eq.s32.totalorder %v3468, %v36
    %vm3516 = vcmp.eq.s32.totalorder %v3471, %v35
    %vm3517 = vcmp.eq.s32.totalorder %v3471, %v36
    %vm3518 = vcmp.eq.s32.totalorder %v3474, %v35
    %vm3519 = vcmp.eq.s32.totalorder %v3474, %v36
    %vm3520 = vcmp.eq.s32.totalorder %v3477, %v35
    %vm3521 = vcmp.eq.s32.totalorder %v3477, %v36
    %vm3522 = vcmp.eq.s32.totalorder %v3480, %v35
    %vm3523 = vcmp.eq.s32.totalorder %v3480, %v36
    %vm3524 = vcmp.eq.s32.totalorder %v3483, %v35
    %vm3525 = vcmp.eq.s32.totalorder %v3483, %v36
    %vm3526 = vcmp.eq.s32.totalorder %v3486, %v35
    %vm3527 = vcmp.eq.s32.totalorder %v3486, %v36
    %vm3528 = vcmp.eq.s32.totalorder %v3489, %v35
    %vm3529 = vcmp.eq.s32.totalorder %v3489, %v36
    %vm3530 = vcmp.eq.s32.totalorder %v3492, %v35
    %vm3531 = vcmp.eq.s32.totalorder %v3492, %v36
    %vm3532 = vcmp.eq.s32.totalorder %v3495, %v35
    %vm3533 = vcmp.eq.s32.totalorder %v3495, %v36
    %vm3534 = vcmp.eq.s32.totalorder %v3498, %v35
    %vm3535 = vcmp.eq.s32.totalorder %v3498, %v36
    %vm3536 = vcmp.eq.s32.totalorder %v3501, %v35
    %vm3537 = vcmp.eq.s32.totalorder %v3501, %v36
    %vm3538 = vcmp.eq.s32.totalorder %v3504, %v35
    %vm3539 = vcmp.eq.s32.totalorder %v3504, %v36
    %vm3540 = vcmp.eq.s32.totalorder %v3507, %v35
    %vm3541 = vcmp.eq.s32.totalorder %v3507, %v36
    %vm3542 = vcmp.eq.s32.totalorder %v3510, %v35
    %vm3543 = vcmp.eq.s32.totalorder %v3510, %v36
    %vm3544 = vcmp.eq.s32.totalorder %v3513, %v35
    %vm3545 = vcmp.eq.s32.totalorder %v3513, %v36
    %v3546 = vsel %vm3514, 1, 0
    %v3547 = vsel %vm3515, 1, 0
    %v3548 = vsel %vm3516, 1, 0
    %v3549 = vsel %vm3517, 1, 0
    %v3550 = vsel %vm3518, 1, 0
    %v3551 = vsel %vm3519, 1, 0
    %v3552 = vsel %vm3520, 1, 0
    %v3553 = vsel %vm3521, 1, 0
    %v3554 = vsel %vm3522, 1, 0
    %v3555 = vsel %vm3523, 1, 0
    %v3556 = vsel %vm3524, 1, 0
    %v3557 = vsel %vm3525, 1, 0
    %v3558 = vsel %vm3526, 1, 0
    %v3559 = vsel %vm3527, 1, 0
    %v3560 = vsel %vm3528, 1, 0
    %v3561 = vsel %vm3529, 1, 0
    %v3562 = vsel %vm3530, 1, 0
    %v3563 = vsel %vm3531, 1, 0
    %v3564 = vsel %vm3532, 1, 0
    %v3565 = vsel %vm3533, 1, 0
    %v3566 = vsel %vm3534, 1, 0
    %v3567 = vsel %vm3535, 1, 0
    %v3568 = vsel %vm3536, 1, 0
    %v3569 = vsel %vm3537, 1, 0
    %v3570 = vsel %vm3538, 1, 0
    %v3571 = vsel %vm3539, 1, 0
    %v3572 = vsel %vm3540, 1, 0
    %v3573 = vsel %vm3541, 1, 0
    %v3574 = vsel %vm3542, 1, 0
    %v3575 = vsel %vm3543, 1, 0
    %v3576 = vsel %vm3544, 1, 0
    %v3577 = vsel %vm3545, 1, 0
    %v3578 = vcvt.s32.f32 %v3546
    %v3579 = vcvt.s32.f32 %v3547
    %v3580 = vcvt.s32.f32 %v3548
    %v3581 = vcvt.s32.f32 %v3549
    %v3582 = vcvt.s32.f32 %v3550
    %v3583 = vcvt.s32.f32 %v3551
    %v3584 = vcvt.s32.f32 %v3552
    %v3585 = vcvt.s32.f32 %v3553
    %v3586 = vcvt.s32.f32 %v3554
    %v3587 = vcvt.s32.f32 %v3555
    %v3588 = vcvt.s32.f32 %v3556
    %v3589 = vcvt.s32.f32 %v3557
    %v3590 = vcvt.s32.f32 %v3558
    %v3591 = vcvt.s32.f32 %v3559
    %v3592 = vcvt.s32.f32 %v3560
    %v3593 = vcvt.s32.f32 %v3561
    %v3594 = vcvt.s32.f32 %v3562
    %v3595 = vcvt.s32.f32 %v3563
    %v3596 = vcvt.s32.f32 %v3564
    %v3597 = vcvt.s32.f32 %v3565
    %v3598 = vcvt.s32.f32 %v3566
    %v3599 = vcvt.s32.f32 %v3567
    %v3600 = vcvt.s32.f32 %v3568
    %v3601 = vcvt.s32.f32 %v3569
    %v3602 = vcvt.s32.f32 %v3570
    %v3603 = vcvt.s32.f32 %v3571
    %v3604 = vcvt.s32.f32 %v3572
    %v3605 = vcvt.s32.f32 %v3573
    %v3606 = vcvt.s32.f32 %v3574
    %v3607 = vcvt.s32.f32 %v3575
    %v3608 = vcvt.s32.f32 %v3576
    %v3609 = vcvt.s32.f32 %v3577
    %v3611 = vsel %vm261, %v3579, 0
    %v3614 = vsel %vm261, %v3581, 0
    %v3617 = vsel %vm261, %v3583, 0
    %v3620 = vsel %vm261, %v3585, 0
    %v3623 = vsel %vm261, %v3587, 0
    %v3626 = vsel %vm261, %v3589, 0
    %v3629 = vsel %vm261, %v3591, 0
    %v3632 = vsel %vm261, %v3593, 0
    %v3635 = vsel %vm261, %v3595, 0
    %v3638 = vsel %vm261, %v3597, 0
    %v3641 = vsel %vm261, %v3599, 0
    %v3644 = vsel %vm261, %v3601, 0
    %v3647 = vsel %vm261, %v3603, 0
    %v3650 = vsel %vm261, %v3605, 0
    %v3653 = vsel %vm261, %v3607, 0
    %v3656 = vsel %vm261, %v3609, 0
    %v3658 = vand.u32 %v27, 4294901760
    %3659 = vmatpush.msra.mxu0 %v3658
    %v3660 = vand.u32 %v26, 4294901760
    %3661 = vmatpush.msra.mxu0 %v3660
    %v3662 = vand.u32 %v25, 4294901760
    %3663 = vmatpush.msra.mxu0 %v3662
    %v3664 = vand.u32 %v24, 4294901760
    %3665 = vmatpush.msra.mxu0 %v3664
    %v3666 = vand.u32 %v23, 4294901760
    %3667 = vmatpush.msra.mxu0 %v3666
    %v3668 = vand.u32 %v22, 4294901760
    %3669 = vmatpush.msra.mxu0 %v3668
    %v3670 = vand.u32 %v21, 4294901760
    %3671 = vmatpush.msra.mxu0 %v3670
    %v3672 = vand.u32 %v20, 4294901760
    %3673 = vmatpush.msra.mxu0 %v3672
    %v3674 = vand.u32 %v19, 4294901760
    %3675 = vmatpush.msra.mxu0 %v3674
    %v3676 = vand.u32 %v18, 4294901760
    %3677 = vmatpush.msra.mxu0 %v3676
    %v3678 = vand.u32 %v17, 4294901760
    %3679 = vmatpush.msra.mxu0 %v3678
    %v3680 = vand.u32 %v16, 4294901760
    %3681 = vmatpush.msra.mxu0 %v3680
    %v3682 = vand.u32 %v15, 4294901760
    %3683 = vmatpush.msra.mxu0 %v3682
    %v3684 = vand.u32 %v14, 4294901760
    %3685 = vmatpush.msra.mxu0 %v3684
    %v3686 = vand.u32 %v13, 4294901760
    %3687 = vmatpush.msra.mxu0 %v3686
    %v3688 = vand.u32 %v12, 4294901760
    %3689 = vmatpush.msra.mxu0 %v3688
    %v3690 = vand.u32 %v3578, 4294901760
    %v3691 = vsub.f32 %v3578, %v3690
    %v3692 = vand.u32 %v3691, 4294901760
    %v3693 = vsub.f32 %v3691, %v3692
    %v3694 = vand.u32 %v3693, 4294901760
    %3695 = vmatmul.f32.gmra.mxu0 %v3694
    %v3696 = vpop.f32.mrf.mxu0
    %v3697 = vadd.f32 0.0, %v3696
    %v3698 = vand.u32 %v3580, 4294901760
    %v3699 = vsub.f32 %v3580, %v3698
    %v3700 = vand.u32 %v3699, 4294901760
    %v3701 = vsub.f32 %v3699, %v3700
    %v3702 = vand.u32 %v3701, 4294901760
    %3703 = vmatmul.f32.gmra.mxu0 %v3702
    %v3704 = vpop.f32.mrf.mxu0
    %v3705 = vadd.f32 0.0, %v3704
    %v3706 = vand.u32 %v3582, 4294901760
    %v3707 = vsub.f32 %v3582, %v3706
    %v3708 = vand.u32 %v3707, 4294901760
    %v3709 = vsub.f32 %v3707, %v3708
    %v3710 = vand.u32 %v3709, 4294901760
    %3711 = vmatmul.f32.gmra.mxu0 %v3710
    %v3712 = vpop.f32.mrf.mxu0
    %v3713 = vadd.f32 0.0, %v3712
    %v3714 = vand.u32 %v3584, 4294901760
    %v3715 = vsub.f32 %v3584, %v3714
    %v3716 = vand.u32 %v3715, 4294901760
    %v3717 = vsub.f32 %v3715, %v3716
    %v3718 = vand.u32 %v3717, 4294901760
    %3719 = vmatmul.f32.gmra.mxu0 %v3718
    %v3720 = vpop.f32.mrf.mxu0
    %v3721 = vadd.f32 0.0, %v3720
    %v3722 = vand.u32 %v3586, 4294901760
    %v3723 = vsub.f32 %v3586, %v3722
    %v3724 = vand.u32 %v3723, 4294901760
    %v3725 = vsub.f32 %v3723, %v3724
    %v3726 = vand.u32 %v3725, 4294901760
    %3727 = vmatmul.f32.gmra.mxu0 %v3726
    %v3728 = vpop.f32.mrf.mxu0
    %v3729 = vadd.f32 0.0, %v3728
    %v3730 = vand.u32 %v3588, 4294901760
    %v3731 = vsub.f32 %v3588, %v3730
    %v3732 = vand.u32 %v3731, 4294901760
    %v3733 = vsub.f32 %v3731, %v3732
    %v3734 = vand.u32 %v3733, 4294901760
    %3735 = vmatmul.f32.gmra.mxu0 %v3734
    %v3736 = vpop.f32.mrf.mxu0
    %v3737 = vadd.f32 0.0, %v3736
    %v3738 = vand.u32 %v3590, 4294901760
    %v3739 = vsub.f32 %v3590, %v3738
    %v3740 = vand.u32 %v3739, 4294901760
    %v3741 = vsub.f32 %v3739, %v3740
    %v3742 = vand.u32 %v3741, 4294901760
    %3743 = vmatmul.f32.gmra.mxu0 %v3742
    %v3744 = vpop.f32.mrf.mxu0
    %v3745 = vadd.f32 0.0, %v3744
    %v3746 = vand.u32 %v3592, 4294901760
    %v3747 = vsub.f32 %v3592, %v3746
    %v3748 = vand.u32 %v3747, 4294901760
    %v3749 = vsub.f32 %v3747, %v3748
    %v3750 = vand.u32 %v3749, 4294901760
    %3751 = vmatmul.f32.gmra.mxu0 %v3750
    %v3752 = vpop.f32.mrf.mxu0
    %v3753 = vadd.f32 0.0, %v3752
    %v3754 = vand.u32 %v3594, 4294901760
    %v3755 = vsub.f32 %v3594, %v3754
    %v3756 = vand.u32 %v3755, 4294901760
    %v3757 = vsub.f32 %v3755, %v3756
    %v3758 = vand.u32 %v3757, 4294901760
    %3759 = vmatmul.f32.gmra.mxu0 %v3758
    %v3760 = vpop.f32.mrf.mxu0
    %v3761 = vadd.f32 0.0, %v3760
    %v3762 = vand.u32 %v3596, 4294901760
    %v3763 = vsub.f32 %v3596, %v3762
    %v3764 = vand.u32 %v3763, 4294901760
    %v3765 = vsub.f32 %v3763, %v3764
    %v3766 = vand.u32 %v3765, 4294901760
    %3767 = vmatmul.f32.gmra.mxu0 %v3766
    %v3768 = vpop.f32.mrf.mxu0
    %v3769 = vadd.f32 0.0, %v3768
    %v3770 = vand.u32 %v3598, 4294901760
    %v3771 = vsub.f32 %v3598, %v3770
    %v3772 = vand.u32 %v3771, 4294901760
    %v3773 = vsub.f32 %v3771, %v3772
    %v3774 = vand.u32 %v3773, 4294901760
    %3775 = vmatmul.f32.gmra.mxu0 %v3774
    %v3776 = vpop.f32.mrf.mxu0
    %v3777 = vadd.f32 0.0, %v3776
    %v3778 = vand.u32 %v3600, 4294901760
    %v3779 = vsub.f32 %v3600, %v3778
    %v3780 = vand.u32 %v3779, 4294901760
    %v3781 = vsub.f32 %v3779, %v3780
    %v3782 = vand.u32 %v3781, 4294901760
    %3783 = vmatmul.f32.gmra.mxu0 %v3782
    %v3784 = vpop.f32.mrf.mxu0
    %v3785 = vadd.f32 0.0, %v3784
    %v3786 = vand.u32 %v3602, 4294901760
    %v3787 = vsub.f32 %v3602, %v3786
    %v3788 = vand.u32 %v3787, 4294901760
    %v3789 = vsub.f32 %v3787, %v3788
    %v3790 = vand.u32 %v3789, 4294901760
    %3791 = vmatmul.f32.gmra.mxu0 %v3790
    %v3792 = vpop.f32.mrf.mxu0
    %v3793 = vadd.f32 0.0, %v3792
    %v3794 = vand.u32 %v3604, 4294901760
    %v3795 = vsub.f32 %v3604, %v3794
    %v3796 = vand.u32 %v3795, 4294901760
    %v3797 = vsub.f32 %v3795, %v3796
    %v3798 = vand.u32 %v3797, 4294901760
    %3799 = vmatmul.f32.gmra.mxu0 %v3798
    %v3800 = vpop.f32.mrf.mxu0
    %v3801 = vadd.f32 0.0, %v3800
    %v3802 = vand.u32 %v3606, 4294901760
    %v3803 = vsub.f32 %v3606, %v3802
    %v3804 = vand.u32 %v3803, 4294901760
    %v3805 = vsub.f32 %v3803, %v3804
    %v3806 = vand.u32 %v3805, 4294901760
    %3807 = vmatmul.f32.gmra.mxu0 %v3806
    %v3808 = vpop.f32.mrf.mxu0
    %v3809 = vadd.f32 0.0, %v3808
    %v3810 = vand.u32 %v3608, 4294901760
    %v3811 = vsub.f32 %v3608, %v3810
    %v3812 = vand.u32 %v3811, 4294901760
    %v3813 = vsub.f32 %v3811, %v3812
    %v3814 = vand.u32 %v3813, 4294901760
    %3815 = vmatmul.f32.gmra.mxu0 %v3814
    %v3816 = vpop.f32.mrf.mxu0
    %v3817 = vadd.f32 0.0, %v3816
    %3818 = vdwg.mxu0
    %v3819 = vand.u32 %v27, 4294901760
    %v3820 = vsub.f32 %v27, %v3819
    %v3821 = vand.u32 %v3820, 4294901760
    %v3822 = vsub.f32 %v3820, %v3821
    %v3823 = vand.u32 %v3822, 4294901760
    %3824 = vmatpush.msra.mxu0 %v3823
    %v3825 = vand.u32 %v26, 4294901760
    %v3826 = vsub.f32 %v26, %v3825
    %v3827 = vand.u32 %v3826, 4294901760
    %v3828 = vsub.f32 %v3826, %v3827
    %v3829 = vand.u32 %v3828, 4294901760
    %3830 = vmatpush.msra.mxu0 %v3829
    %v3831 = vand.u32 %v25, 4294901760
    %v3832 = vsub.f32 %v25, %v3831
    %v3833 = vand.u32 %v3832, 4294901760
    %v3834 = vsub.f32 %v3832, %v3833
    %v3835 = vand.u32 %v3834, 4294901760
    %3836 = vmatpush.msra.mxu0 %v3835
    %v3837 = vand.u32 %v24, 4294901760
    %v3838 = vsub.f32 %v24, %v3837
    %v3839 = vand.u32 %v3838, 4294901760
    %v3840 = vsub.f32 %v3838, %v3839
    %v3841 = vand.u32 %v3840, 4294901760
    %3842 = vmatpush.msra.mxu0 %v3841
    %v3843 = vand.u32 %v23, 4294901760
    %v3844 = vsub.f32 %v23, %v3843
    %v3845 = vand.u32 %v3844, 4294901760
    %v3846 = vsub.f32 %v3844, %v3845
    %v3847 = vand.u32 %v3846, 4294901760
    %3848 = vmatpush.msra.mxu0 %v3847
    %v3849 = vand.u32 %v22, 4294901760
    %v3850 = vsub.f32 %v22, %v3849
    %v3851 = vand.u32 %v3850, 4294901760
    %v3852 = vsub.f32 %v3850, %v3851
    %v3853 = vand.u32 %v3852, 4294901760
    %3854 = vmatpush.msra.mxu0 %v3853
    %v3855 = vand.u32 %v21, 4294901760
    %v3856 = vsub.f32 %v21, %v3855
    %v3857 = vand.u32 %v3856, 4294901760
    %v3858 = vsub.f32 %v3856, %v3857
    %v3859 = vand.u32 %v3858, 4294901760
    %3860 = vmatpush.msra.mxu0 %v3859
    %v3861 = vand.u32 %v20, 4294901760
    %v3862 = vsub.f32 %v20, %v3861
    %v3863 = vand.u32 %v3862, 4294901760
    %v3864 = vsub.f32 %v3862, %v3863
    %v3865 = vand.u32 %v3864, 4294901760
    %3866 = vmatpush.msra.mxu0 %v3865
    %v3867 = vand.u32 %v19, 4294901760
    %v3868 = vsub.f32 %v19, %v3867
    %v3869 = vand.u32 %v3868, 4294901760
    %v3870 = vsub.f32 %v3868, %v3869
    %v3871 = vand.u32 %v3870, 4294901760
    %3872 = vmatpush.msra.mxu0 %v3871
    %v3873 = vand.u32 %v18, 4294901760
    %v3874 = vsub.f32 %v18, %v3873
    %v3875 = vand.u32 %v3874, 4294901760
    %v3876 = vsub.f32 %v3874, %v3875
    %v3877 = vand.u32 %v3876, 4294901760
    %3878 = vmatpush.msra.mxu0 %v3877
    %v3879 = vand.u32 %v17, 4294901760
    %v3880 = vsub.f32 %v17, %v3879
    %v3881 = vand.u32 %v3880, 4294901760
    %v3882 = vsub.f32 %v3880, %v3881
    %v3883 = vand.u32 %v3882, 4294901760
    %3884 = vmatpush.msra.mxu0 %v3883
    %v3885 = vand.u32 %v16, 4294901760
    %v3886 = vsub.f32 %v16, %v3885
    %v3887 = vand.u32 %v3886, 4294901760
    %v3888 = vsub.f32 %v3886, %v3887
    %v3889 = vand.u32 %v3888, 4294901760
    %3890 = vmatpush.msra.mxu0 %v3889
    %v3891 = vand.u32 %v15, 4294901760
    %v3892 = vsub.f32 %v15, %v3891
    %v3893 = vand.u32 %v3892, 4294901760
    %v3894 = vsub.f32 %v3892, %v3893
    %v3895 = vand.u32 %v3894, 4294901760
    %3896 = vmatpush.msra.mxu0 %v3895
    %v3897 = vand.u32 %v14, 4294901760
    %v3898 = vsub.f32 %v14, %v3897
    %v3899 = vand.u32 %v3898, 4294901760
    %v3900 = vsub.f32 %v3898, %v3899
    %v3901 = vand.u32 %v3900, 4294901760
    %3902 = vmatpush.msra.mxu0 %v3901
    %v3903 = vand.u32 %v13, 4294901760
    %v3904 = vsub.f32 %v13, %v3903
    %v3905 = vand.u32 %v3904, 4294901760
    %v3906 = vsub.f32 %v3904, %v3905
    %v3907 = vand.u32 %v3906, 4294901760
    %3908 = vmatpush.msra.mxu0 %v3907
    %v3909 = vand.u32 %v12, 4294901760
    %v3910 = vsub.f32 %v12, %v3909
    %v3911 = vand.u32 %v3910, 4294901760
    %v3912 = vsub.f32 %v3910, %v3911
    %v3913 = vand.u32 %v3912, 4294901760
    %3914 = vmatpush.msra.mxu0 %v3913
    %v3915 = vand.u32 %v3578, 4294901760
    %3916 = vmatmul.f32.gmra.mxu0 %v3915
    %v3917 = vpop.f32.mrf.mxu0
    %v3918 = vadd.f32 %v3697, %v3917
    %v3919 = vand.u32 %v3580, 4294901760
    %3920 = vmatmul.f32.gmra.mxu0 %v3919
    %v3921 = vpop.f32.mrf.mxu0
    %v3922 = vadd.f32 %v3705, %v3921
    %v3923 = vand.u32 %v3582, 4294901760
    %3924 = vmatmul.f32.gmra.mxu0 %v3923
    %v3925 = vpop.f32.mrf.mxu0
    %v3926 = vadd.f32 %v3713, %v3925
    %v3927 = vand.u32 %v3584, 4294901760
    %3928 = vmatmul.f32.gmra.mxu0 %v3927
    %v3929 = vpop.f32.mrf.mxu0
    %v3930 = vadd.f32 %v3721, %v3929
    %v3931 = vand.u32 %v3586, 4294901760
    %3932 = vmatmul.f32.gmra.mxu0 %v3931
    %v3933 = vpop.f32.mrf.mxu0
    %v3934 = vadd.f32 %v3729, %v3933
    %v3935 = vand.u32 %v3588, 4294901760
    %3936 = vmatmul.f32.gmra.mxu0 %v3935
    %v3937 = vpop.f32.mrf.mxu0
    %v3938 = vadd.f32 %v3737, %v3937
    %v3939 = vand.u32 %v3590, 4294901760
    %3940 = vmatmul.f32.gmra.mxu0 %v3939
    %v3941 = vpop.f32.mrf.mxu0
    %v3942 = vadd.f32 %v3745, %v3941
    %v3943 = vand.u32 %v3592, 4294901760
    %3944 = vmatmul.f32.gmra.mxu0 %v3943
    %v3945 = vpop.f32.mrf.mxu0
    %v3946 = vadd.f32 %v3753, %v3945
    %v3947 = vand.u32 %v3594, 4294901760
    %3948 = vmatmul.f32.gmra.mxu0 %v3947
    %v3949 = vpop.f32.mrf.mxu0
    %v3950 = vadd.f32 %v3761, %v3949
    %v3951 = vand.u32 %v3596, 4294901760
    %3952 = vmatmul.f32.gmra.mxu0 %v3951
    %v3953 = vpop.f32.mrf.mxu0
    %v3954 = vadd.f32 %v3769, %v3953
    %v3955 = vand.u32 %v3598, 4294901760
    %3956 = vmatmul.f32.gmra.mxu0 %v3955
    %v3957 = vpop.f32.mrf.mxu0
    %v3958 = vadd.f32 %v3777, %v3957
    %v3959 = vand.u32 %v3600, 4294901760
    %3960 = vmatmul.f32.gmra.mxu0 %v3959
    %v3961 = vpop.f32.mrf.mxu0
    %v3962 = vadd.f32 %v3785, %v3961
    %v3963 = vand.u32 %v3602, 4294901760
    %3964 = vmatmul.f32.gmra.mxu0 %v3963
    %v3965 = vpop.f32.mrf.mxu0
    %v3966 = vadd.f32 %v3793, %v3965
    %v3967 = vand.u32 %v3604, 4294901760
    %3968 = vmatmul.f32.gmra.mxu0 %v3967
    %v3969 = vpop.f32.mrf.mxu0
    %v3970 = vadd.f32 %v3801, %v3969
    %v3971 = vand.u32 %v3606, 4294901760
    %3972 = vmatmul.f32.gmra.mxu0 %v3971
    %v3973 = vpop.f32.mrf.mxu0
    %v3974 = vadd.f32 %v3809, %v3973
    %v3975 = vand.u32 %v3608, 4294901760
    %3976 = vmatmul.f32.gmra.mxu0 %v3975
    %v3977 = vpop.f32.mrf.mxu0
    %v3978 = vadd.f32 %v3817, %v3977
    %3979 = vdwg.mxu0
    %v3980 = vand.u32 %v27, 4294901760
    %v3981 = vsub.f32 %v27, %v3980
    %3982 = vmatpush.msra.mxu0 %v3981
    %v3983 = vand.u32 %v26, 4294901760
    %v3984 = vsub.f32 %v26, %v3983
    %3985 = vmatpush.msra.mxu0 %v3984
    %v3986 = vand.u32 %v25, 4294901760
    %v3987 = vsub.f32 %v25, %v3986
    %3988 = vmatpush.msra.mxu0 %v3987
    %v3989 = vand.u32 %v24, 4294901760
    %v3990 = vsub.f32 %v24, %v3989
    %3991 = vmatpush.msra.mxu0 %v3990
    %v3992 = vand.u32 %v23, 4294901760
    %v3993 = vsub.f32 %v23, %v3992
    %3994 = vmatpush.msra.mxu0 %v3993
    %v3995 = vand.u32 %v22, 4294901760
    %v3996 = vsub.f32 %v22, %v3995
    %3997 = vmatpush.msra.mxu0 %v3996
    %v3998 = vand.u32 %v21, 4294901760
    %v3999 = vsub.f32 %v21, %v3998
    %4000 = vmatpush.msra.mxu0 %v3999
    %v4001 = vand.u32 %v20, 4294901760
    %v4002 = vsub.f32 %v20, %v4001
    %4003 = vmatpush.msra.mxu0 %v4002
    %v4004 = vand.u32 %v19, 4294901760
    %v4005 = vsub.f32 %v19, %v4004
    %4006 = vmatpush.msra.mxu0 %v4005
    %v4007 = vand.u32 %v18, 4294901760
    %v4008 = vsub.f32 %v18, %v4007
    %4009 = vmatpush.msra.mxu0 %v4008
    %v4010 = vand.u32 %v17, 4294901760
    %v4011 = vsub.f32 %v17, %v4010
    %4012 = vmatpush.msra.mxu0 %v4011
    %v4013 = vand.u32 %v16, 4294901760
    %v4014 = vsub.f32 %v16, %v4013
    %4015 = vmatpush.msra.mxu0 %v4014
    %v4016 = vand.u32 %v15, 4294901760
    %v4017 = vsub.f32 %v15, %v4016
    %4018 = vmatpush.msra.mxu0 %v4017
    %v4019 = vand.u32 %v14, 4294901760
    %v4020 = vsub.f32 %v14, %v4019
    %4021 = vmatpush.msra.mxu0 %v4020
    %v4022 = vand.u32 %v13, 4294901760
    %v4023 = vsub.f32 %v13, %v4022
    %4024 = vmatpush.msra.mxu0 %v4023
    %v4025 = vand.u32 %v12, 4294901760
    %v4026 = vsub.f32 %v12, %v4025
    %4027 = vmatpush.msra.mxu0 %v4026
    %v4028 = vand.u32 %v3578, 4294901760
    %v4029 = vsub.f32 %v3578, %v4028
    %4030 = vmatmul.f32.gmra.mxu0 %v4029
    %v4031 = vpop.f32.mrf.mxu0
    %v4032 = vadd.f32 %v3918, %v4031
    %v4033 = vand.u32 %v3580, 4294901760
    %v4034 = vsub.f32 %v3580, %v4033
    %4035 = vmatmul.f32.gmra.mxu0 %v4034
    %v4036 = vpop.f32.mrf.mxu0
    %v4037 = vadd.f32 %v3922, %v4036
    %v4038 = vand.u32 %v3582, 4294901760
    %v4039 = vsub.f32 %v3582, %v4038
    %4040 = vmatmul.f32.gmra.mxu0 %v4039
    %v4041 = vpop.f32.mrf.mxu0
    %v4042 = vadd.f32 %v3926, %v4041
    %v4043 = vand.u32 %v3584, 4294901760
    %v4044 = vsub.f32 %v3584, %v4043
    %4045 = vmatmul.f32.gmra.mxu0 %v4044
    %v4046 = vpop.f32.mrf.mxu0
    %v4047 = vadd.f32 %v3930, %v4046
    %v4048 = vand.u32 %v3586, 4294901760
    %v4049 = vsub.f32 %v3586, %v4048
    %4050 = vmatmul.f32.gmra.mxu0 %v4049
    %v4051 = vpop.f32.mrf.mxu0
    %v4052 = vadd.f32 %v3934, %v4051
    %v4053 = vand.u32 %v3588, 4294901760
    %v4054 = vsub.f32 %v3588, %v4053
    %4055 = vmatmul.f32.gmra.mxu0 %v4054
    %v4056 = vpop.f32.mrf.mxu0
    %v4057 = vadd.f32 %v3938, %v4056
    %v4058 = vand.u32 %v3590, 4294901760
    %v4059 = vsub.f32 %v3590, %v4058
    %4060 = vmatmul.f32.gmra.mxu0 %v4059
    %v4061 = vpop.f32.mrf.mxu0
    %v4062 = vadd.f32 %v3942, %v4061
    %v4063 = vand.u32 %v3592, 4294901760
    %v4064 = vsub.f32 %v3592, %v4063
    %4065 = vmatmul.f32.gmra.mxu0 %v4064
    %v4066 = vpop.f32.mrf.mxu0
    %v4067 = vadd.f32 %v3946, %v4066
    %v4068 = vand.u32 %v3594, 4294901760
    %v4069 = vsub.f32 %v3594, %v4068
    %4070 = vmatmul.f32.gmra.mxu0 %v4069
    %v4071 = vpop.f32.mrf.mxu0
    %v4072 = vadd.f32 %v3950, %v4071
    %v4073 = vand.u32 %v3596, 4294901760
    %v4074 = vsub.f32 %v3596, %v4073
    %4075 = vmatmul.f32.gmra.mxu0 %v4074
    %v4076 = vpop.f32.mrf.mxu0
    %v4077 = vadd.f32 %v3954, %v4076
    %v4078 = vand.u32 %v3598, 4294901760
    %v4079 = vsub.f32 %v3598, %v4078
    %4080 = vmatmul.f32.gmra.mxu0 %v4079
    %v4081 = vpop.f32.mrf.mxu0
    %v4082 = vadd.f32 %v3958, %v4081
    %v4083 = vand.u32 %v3600, 4294901760
    %v4084 = vsub.f32 %v3600, %v4083
    %4085 = vmatmul.f32.gmra.mxu0 %v4084
    %v4086 = vpop.f32.mrf.mxu0
    %v4087 = vadd.f32 %v3962, %v4086
    %v4088 = vand.u32 %v3602, 4294901760
    %v4089 = vsub.f32 %v3602, %v4088
    %4090 = vmatmul.f32.gmra.mxu0 %v4089
    %v4091 = vpop.f32.mrf.mxu0
    %v4092 = vadd.f32 %v3966, %v4091
    %v4093 = vand.u32 %v3604, 4294901760
    %v4094 = vsub.f32 %v3604, %v4093
    %4095 = vmatmul.f32.gmra.mxu0 %v4094
    %v4096 = vpop.f32.mrf.mxu0
    %v4097 = vadd.f32 %v3970, %v4096
    %v4098 = vand.u32 %v3606, 4294901760
    %v4099 = vsub.f32 %v3606, %v4098
    %4100 = vmatmul.f32.gmra.mxu0 %v4099
    %v4101 = vpop.f32.mrf.mxu0
    %v4102 = vadd.f32 %v3974, %v4101
    %v4103 = vand.u32 %v3608, 4294901760
    %v4104 = vsub.f32 %v3608, %v4103
    %4105 = vmatmul.f32.gmra.mxu0 %v4104
    %v4106 = vpop.f32.mrf.mxu0
    %v4107 = vadd.f32 %v3978, %v4106
    %4108 = vdwg.mxu0
    %v4109 = vand.u32 %v27, 4294901760
    %4110 = vmatpush.msra.mxu0 %v4109
    %v4111 = vand.u32 %v26, 4294901760
    %4112 = vmatpush.msra.mxu0 %v4111
    %v4113 = vand.u32 %v25, 4294901760
    %4114 = vmatpush.msra.mxu0 %v4113
    %v4115 = vand.u32 %v24, 4294901760
    %4116 = vmatpush.msra.mxu0 %v4115
    %v4117 = vand.u32 %v23, 4294901760
    %4118 = vmatpush.msra.mxu0 %v4117
    %v4119 = vand.u32 %v22, 4294901760
    %4120 = vmatpush.msra.mxu0 %v4119
    %v4121 = vand.u32 %v21, 4294901760
    %4122 = vmatpush.msra.mxu0 %v4121
    %v4123 = vand.u32 %v20, 4294901760
    %4124 = vmatpush.msra.mxu0 %v4123
    %v4125 = vand.u32 %v19, 4294901760
    %4126 = vmatpush.msra.mxu0 %v4125
    %v4127 = vand.u32 %v18, 4294901760
    %4128 = vmatpush.msra.mxu0 %v4127
    %v4129 = vand.u32 %v17, 4294901760
    %4130 = vmatpush.msra.mxu0 %v4129
    %v4131 = vand.u32 %v16, 4294901760
    %4132 = vmatpush.msra.mxu0 %v4131
    %v4133 = vand.u32 %v15, 4294901760
    %4134 = vmatpush.msra.mxu0 %v4133
    %v4135 = vand.u32 %v14, 4294901760
    %4136 = vmatpush.msra.mxu0 %v4135
    %v4137 = vand.u32 %v13, 4294901760
    %4138 = vmatpush.msra.mxu0 %v4137
    %v4139 = vand.u32 %v12, 4294901760
    %4140 = vmatpush.msra.mxu0 %v4139
    %v4141 = vand.u32 %v3578, 4294901760
    %v4142 = vsub.f32 %v3578, %v4141
    %v4143 = vand.u32 %v4142, 4294901760
    %4144 = vmatmul.f32.gmra.mxu0 %v4143
    %v4145 = vpop.f32.mrf.mxu0
    %v4146 = vadd.f32 %v4032, %v4145
    %v4147 = vand.u32 %v3580, 4294901760
    %v4148 = vsub.f32 %v3580, %v4147
    %v4149 = vand.u32 %v4148, 4294901760
    %4150 = vmatmul.f32.gmra.mxu0 %v4149
    %v4151 = vpop.f32.mrf.mxu0
    %v4152 = vadd.f32 %v4037, %v4151
    %v4153 = vand.u32 %v3582, 4294901760
    %v4154 = vsub.f32 %v3582, %v4153
    %v4155 = vand.u32 %v4154, 4294901760
    %4156 = vmatmul.f32.gmra.mxu0 %v4155
    %v4157 = vpop.f32.mrf.mxu0
    %v4158 = vadd.f32 %v4042, %v4157
    %v4159 = vand.u32 %v3584, 4294901760
    %v4160 = vsub.f32 %v3584, %v4159
    %v4161 = vand.u32 %v4160, 4294901760
    %4162 = vmatmul.f32.gmra.mxu0 %v4161
    %v4163 = vpop.f32.mrf.mxu0
    %v4164 = vadd.f32 %v4047, %v4163
    %v4165 = vand.u32 %v3586, 4294901760
    %v4166 = vsub.f32 %v3586, %v4165
    %v4167 = vand.u32 %v4166, 4294901760
    %4168 = vmatmul.f32.gmra.mxu0 %v4167
    %v4169 = vpop.f32.mrf.mxu0
    %v4170 = vadd.f32 %v4052, %v4169
    %v4171 = vand.u32 %v3588, 4294901760
    %v4172 = vsub.f32 %v3588, %v4171
    %v4173 = vand.u32 %v4172, 4294901760
    %4174 = vmatmul.f32.gmra.mxu0 %v4173
    %v4175 = vpop.f32.mrf.mxu0
    %v4176 = vadd.f32 %v4057, %v4175
    %v4177 = vand.u32 %v3590, 4294901760
    %v4178 = vsub.f32 %v3590, %v4177
    %v4179 = vand.u32 %v4178, 4294901760
    %4180 = vmatmul.f32.gmra.mxu0 %v4179
    %v4181 = vpop.f32.mrf.mxu0
    %v4182 = vadd.f32 %v4062, %v4181
    %v4183 = vand.u32 %v3592, 4294901760
    %v4184 = vsub.f32 %v3592, %v4183
    %v4185 = vand.u32 %v4184, 4294901760
    %4186 = vmatmul.f32.gmra.mxu0 %v4185
    %v4187 = vpop.f32.mrf.mxu0
    %v4188 = vadd.f32 %v4067, %v4187
    %v4189 = vand.u32 %v3594, 4294901760
    %v4190 = vsub.f32 %v3594, %v4189
    %v4191 = vand.u32 %v4190, 4294901760
    %4192 = vmatmul.f32.gmra.mxu0 %v4191
    %v4193 = vpop.f32.mrf.mxu0
    %v4194 = vadd.f32 %v4072, %v4193
    %v4195 = vand.u32 %v3596, 4294901760
    %v4196 = vsub.f32 %v3596, %v4195
    %v4197 = vand.u32 %v4196, 4294901760
    %4198 = vmatmul.f32.gmra.mxu0 %v4197
    %v4199 = vpop.f32.mrf.mxu0
    %v4200 = vadd.f32 %v4077, %v4199
    %v4201 = vand.u32 %v3598, 4294901760
    %v4202 = vsub.f32 %v3598, %v4201
    %v4203 = vand.u32 %v4202, 4294901760
    %4204 = vmatmul.f32.gmra.mxu0 %v4203
    %v4205 = vpop.f32.mrf.mxu0
    %v4206 = vadd.f32 %v4082, %v4205
    %v4207 = vand.u32 %v3600, 4294901760
    %v4208 = vsub.f32 %v3600, %v4207
    %v4209 = vand.u32 %v4208, 4294901760
    %4210 = vmatmul.f32.gmra.mxu0 %v4209
    %v4211 = vpop.f32.mrf.mxu0
    %v4212 = vadd.f32 %v4087, %v4211
    %v4213 = vand.u32 %v3602, 4294901760
    %v4214 = vsub.f32 %v3602, %v4213
    %v4215 = vand.u32 %v4214, 4294901760
    %4216 = vmatmul.f32.gmra.mxu0 %v4215
    %v4217 = vpop.f32.mrf.mxu0
    %v4218 = vadd.f32 %v4092, %v4217
    %v4219 = vand.u32 %v3604, 4294901760
    %v4220 = vsub.f32 %v3604, %v4219
    %v4221 = vand.u32 %v4220, 4294901760
    %4222 = vmatmul.f32.gmra.mxu0 %v4221
    %v4223 = vpop.f32.mrf.mxu0
    %v4224 = vadd.f32 %v4097, %v4223
    %v4225 = vand.u32 %v3606, 4294901760
    %v4226 = vsub.f32 %v3606, %v4225
    %v4227 = vand.u32 %v4226, 4294901760
    %4228 = vmatmul.f32.gmra.mxu0 %v4227
    %v4229 = vpop.f32.mrf.mxu0
    %v4230 = vadd.f32 %v4102, %v4229
    %v4231 = vand.u32 %v3608, 4294901760
    %v4232 = vsub.f32 %v3608, %v4231
    %v4233 = vand.u32 %v4232, 4294901760
    %4234 = vmatmul.f32.gmra.mxu0 %v4233
    %v4235 = vpop.f32.mrf.mxu0
    %v4236 = vadd.f32 %v4107, %v4235
    %4237 = vdwg.mxu0
    %v4238 = vand.u32 %v27, 4294901760
    %v4239 = vsub.f32 %v27, %v4238
    %v4240 = vand.u32 %v4239, 4294901760
    %4241 = vmatpush.msra.mxu0 %v4240
    %v4242 = vand.u32 %v26, 4294901760
    %v4243 = vsub.f32 %v26, %v4242
    %v4244 = vand.u32 %v4243, 4294901760
    %4245 = vmatpush.msra.mxu0 %v4244
    %v4246 = vand.u32 %v25, 4294901760
    %v4247 = vsub.f32 %v25, %v4246
    %v4248 = vand.u32 %v4247, 4294901760
    %4249 = vmatpush.msra.mxu0 %v4248
    %v4250 = vand.u32 %v24, 4294901760
    %v4251 = vsub.f32 %v24, %v4250
    %v4252 = vand.u32 %v4251, 4294901760
    %4253 = vmatpush.msra.mxu0 %v4252
    %v4254 = vand.u32 %v23, 4294901760
    %v4255 = vsub.f32 %v23, %v4254
    %v4256 = vand.u32 %v4255, 4294901760
    %4257 = vmatpush.msra.mxu0 %v4256
    %v4258 = vand.u32 %v22, 4294901760
    %v4259 = vsub.f32 %v22, %v4258
    %v4260 = vand.u32 %v4259, 4294901760
    %4261 = vmatpush.msra.mxu0 %v4260
    %v4262 = vand.u32 %v21, 4294901760
    %v4263 = vsub.f32 %v21, %v4262
    %v4264 = vand.u32 %v4263, 4294901760
    %4265 = vmatpush.msra.mxu0 %v4264
    %v4266 = vand.u32 %v20, 4294901760
    %v4267 = vsub.f32 %v20, %v4266
    %v4268 = vand.u32 %v4267, 4294901760
    %4269 = vmatpush.msra.mxu0 %v4268
    %v4270 = vand.u32 %v19, 4294901760
    %v4271 = vsub.f32 %v19, %v4270
    %v4272 = vand.u32 %v4271, 4294901760
    %4273 = vmatpush.msra.mxu0 %v4272
    %v4274 = vand.u32 %v18, 4294901760
    %v4275 = vsub.f32 %v18, %v4274
    %v4276 = vand.u32 %v4275, 4294901760
    %4277 = vmatpush.msra.mxu0 %v4276
    %v4278 = vand.u32 %v17, 4294901760
    %v4279 = vsub.f32 %v17, %v4278
    %v4280 = vand.u32 %v4279, 4294901760
    %4281 = vmatpush.msra.mxu0 %v4280
    %v4282 = vand.u32 %v16, 4294901760
    %v4283 = vsub.f32 %v16, %v4282
    %v4284 = vand.u32 %v4283, 4294901760
    %4285 = vmatpush.msra.mxu0 %v4284
    %v4286 = vand.u32 %v15, 4294901760
    %v4287 = vsub.f32 %v15, %v4286
    %v4288 = vand.u32 %v4287, 4294901760
    %4289 = vmatpush.msra.mxu0 %v4288
    %v4290 = vand.u32 %v14, 4294901760
    %v4291 = vsub.f32 %v14, %v4290
    %v4292 = vand.u32 %v4291, 4294901760
    %4293 = vmatpush.msra.mxu0 %v4292
    %v4294 = vand.u32 %v13, 4294901760
    %v4295 = vsub.f32 %v13, %v4294
    %v4296 = vand.u32 %v4295, 4294901760
    %4297 = vmatpush.msra.mxu0 %v4296
    %v4298 = vand.u32 %v12, 4294901760
    %v4299 = vsub.f32 %v12, %v4298
    %v4300 = vand.u32 %v4299, 4294901760
    %4301 = vmatpush.msra.mxu0 %v4300
    %v4302 = vand.u32 %v3578, 4294901760
    %4303 = vmatmul.f32.gmra.mxu0 %v4302
    %v4304 = vpop.f32.mrf.mxu0
    %v4305 = vadd.f32 %v4146, %v4304
    %v4306 = vand.u32 %v3580, 4294901760
    %4307 = vmatmul.f32.gmra.mxu0 %v4306
    %v4308 = vpop.f32.mrf.mxu0
    %v4309 = vadd.f32 %v4152, %v4308
    %v4310 = vand.u32 %v3582, 4294901760
    %4311 = vmatmul.f32.gmra.mxu0 %v4310
    %v4312 = vpop.f32.mrf.mxu0
    %v4313 = vadd.f32 %v4158, %v4312
    %v4314 = vand.u32 %v3584, 4294901760
    %4315 = vmatmul.f32.gmra.mxu0 %v4314
    %v4316 = vpop.f32.mrf.mxu0
    %v4317 = vadd.f32 %v4164, %v4316
    %v4318 = vand.u32 %v3586, 4294901760
    %4319 = vmatmul.f32.gmra.mxu0 %v4318
    %v4320 = vpop.f32.mrf.mxu0
    %v4321 = vadd.f32 %v4170, %v4320
    %v4322 = vand.u32 %v3588, 4294901760
    %4323 = vmatmul.f32.gmra.mxu0 %v4322
    %v4324 = vpop.f32.mrf.mxu0
    %v4325 = vadd.f32 %v4176, %v4324
    %v4326 = vand.u32 %v3590, 4294901760
    %4327 = vmatmul.f32.gmra.mxu0 %v4326
    %v4328 = vpop.f32.mrf.mxu0
    %v4329 = vadd.f32 %v4182, %v4328
    %v4330 = vand.u32 %v3592, 4294901760
    %4331 = vmatmul.f32.gmra.mxu0 %v4330
    %v4332 = vpop.f32.mrf.mxu0
    %v4333 = vadd.f32 %v4188, %v4332
    %v4334 = vand.u32 %v3594, 4294901760
    %4335 = vmatmul.f32.gmra.mxu0 %v4334
    %v4336 = vpop.f32.mrf.mxu0
    %v4337 = vadd.f32 %v4194, %v4336
    %v4338 = vand.u32 %v3596, 4294901760
    %4339 = vmatmul.f32.gmra.mxu0 %v4338
    %v4340 = vpop.f32.mrf.mxu0
    %v4341 = vadd.f32 %v4200, %v4340
    %v4342 = vand.u32 %v3598, 4294901760
    %4343 = vmatmul.f32.gmra.mxu0 %v4342
    %v4344 = vpop.f32.mrf.mxu0
    %v4345 = vadd.f32 %v4206, %v4344
    %v4346 = vand.u32 %v3600, 4294901760
    %4347 = vmatmul.f32.gmra.mxu0 %v4346
    %v4348 = vpop.f32.mrf.mxu0
    %v4349 = vadd.f32 %v4212, %v4348
    %v4350 = vand.u32 %v3602, 4294901760
    %4351 = vmatmul.f32.gmra.mxu0 %v4350
    %v4352 = vpop.f32.mrf.mxu0
    %v4353 = vadd.f32 %v4218, %v4352
    %v4354 = vand.u32 %v3604, 4294901760
    %4355 = vmatmul.f32.gmra.mxu0 %v4354
    %v4356 = vpop.f32.mrf.mxu0
    %v4357 = vadd.f32 %v4224, %v4356
    %v4358 = vand.u32 %v3606, 4294901760
    %4359 = vmatmul.f32.gmra.mxu0 %v4358
    %v4360 = vpop.f32.mrf.mxu0
    %v4361 = vadd.f32 %v4230, %v4360
    %v4362 = vand.u32 %v3608, 4294901760
    %4363 = vmatmul.f32.gmra.mxu0 %v4362
    %v4364 = vpop.f32.mrf.mxu0
    %v4365 = vadd.f32 %v4236, %v4364
    %4366 = vdwg.mxu0
    %v4367 = vand.u32 %v27, 4294901760
    %4368 = vmatpush.msra.mxu0 %v4367
    %v4369 = vand.u32 %v26, 4294901760
    %4370 = vmatpush.msra.mxu0 %v4369
    %v4371 = vand.u32 %v25, 4294901760
    %4372 = vmatpush.msra.mxu0 %v4371
    %v4373 = vand.u32 %v24, 4294901760
    %4374 = vmatpush.msra.mxu0 %v4373
    %v4375 = vand.u32 %v23, 4294901760
    %4376 = vmatpush.msra.mxu0 %v4375
    %v4377 = vand.u32 %v22, 4294901760
    %4378 = vmatpush.msra.mxu0 %v4377
    %v4379 = vand.u32 %v21, 4294901760
    %4380 = vmatpush.msra.mxu0 %v4379
    %v4381 = vand.u32 %v20, 4294901760
    %4382 = vmatpush.msra.mxu0 %v4381
    %v4383 = vand.u32 %v19, 4294901760
    %4384 = vmatpush.msra.mxu0 %v4383
    %v4385 = vand.u32 %v18, 4294901760
    %4386 = vmatpush.msra.mxu0 %v4385
    %v4387 = vand.u32 %v17, 4294901760
    %4388 = vmatpush.msra.mxu0 %v4387
    %v4389 = vand.u32 %v16, 4294901760
    %4390 = vmatpush.msra.mxu0 %v4389
    %v4391 = vand.u32 %v15, 4294901760
    %4392 = vmatpush.msra.mxu0 %v4391
    %v4393 = vand.u32 %v14, 4294901760
    %4394 = vmatpush.msra.mxu0 %v4393
    %v4395 = vand.u32 %v13, 4294901760
    %4396 = vmatpush.msra.mxu0 %v4395
    %v4397 = vand.u32 %v12, 4294901760
    %4398 = vmatpush.msra.mxu0 %v4397
    %v4399 = vand.u32 %v3578, 4294901760
    %4400 = vmatmul.f32.gmra.mxu0 %v4399
    %v4401 = vpop.f32.mrf.mxu0
    %v4402 = vadd.f32 %v4305, %v4401
    %v4403 = vand.u32 %v3580, 4294901760
    %4404 = vmatmul.f32.gmra.mxu0 %v4403
    %v4405 = vpop.f32.mrf.mxu0
    %v4406 = vadd.f32 %v4309, %v4405
    %v4407 = vand.u32 %v3582, 4294901760
    %4408 = vmatmul.f32.gmra.mxu0 %v4407
    %v4409 = vpop.f32.mrf.mxu0
    %v4410 = vadd.f32 %v4313, %v4409
    %v4411 = vand.u32 %v3584, 4294901760
    %4412 = vmatmul.f32.gmra.mxu0 %v4411
    %v4413 = vpop.f32.mrf.mxu0
    %v4414 = vadd.f32 %v4317, %v4413
    %v4415 = vand.u32 %v3586, 4294901760
    %4416 = vmatmul.f32.gmra.mxu0 %v4415
    %v4417 = vpop.f32.mrf.mxu0
    %v4418 = vadd.f32 %v4321, %v4417
    %v4419 = vand.u32 %v3588, 4294901760
    %4420 = vmatmul.f32.gmra.mxu0 %v4419
    %v4421 = vpop.f32.mrf.mxu0
    %v4422 = vadd.f32 %v4325, %v4421
    %v4423 = vand.u32 %v3590, 4294901760
    %4424 = vmatmul.f32.gmra.mxu0 %v4423
    %v4425 = vpop.f32.mrf.mxu0
    %v4426 = vadd.f32 %v4329, %v4425
    %v4427 = vand.u32 %v3592, 4294901760
    %4428 = vmatmul.f32.gmra.mxu0 %v4427
    %v4429 = vpop.f32.mrf.mxu0
    %v4430 = vadd.f32 %v4333, %v4429
    %v4431 = vand.u32 %v3594, 4294901760
    %4432 = vmatmul.f32.gmra.mxu0 %v4431
    %v4433 = vpop.f32.mrf.mxu0
    %v4434 = vadd.f32 %v4337, %v4433
    %v4435 = vand.u32 %v3596, 4294901760
    %4436 = vmatmul.f32.gmra.mxu0 %v4435
    %v4437 = vpop.f32.mrf.mxu0
    %v4438 = vadd.f32 %v4341, %v4437
    %v4439 = vand.u32 %v3598, 4294901760
    %4440 = vmatmul.f32.gmra.mxu0 %v4439
    %v4441 = vpop.f32.mrf.mxu0
    %v4442 = vadd.f32 %v4345, %v4441
    %v4443 = vand.u32 %v3600, 4294901760
    %4444 = vmatmul.f32.gmra.mxu0 %v4443
    %v4445 = vpop.f32.mrf.mxu0
    %v4446 = vadd.f32 %v4349, %v4445
    %v4447 = vand.u32 %v3602, 4294901760
    %4448 = vmatmul.f32.gmra.mxu0 %v4447
    %v4449 = vpop.f32.mrf.mxu0
    %v4450 = vadd.f32 %v4353, %v4449
    %v4451 = vand.u32 %v3604, 4294901760
    %4452 = vmatmul.f32.gmra.mxu0 %v4451
    %v4453 = vpop.f32.mrf.mxu0
    %v4454 = vadd.f32 %v4357, %v4453
    %v4455 = vand.u32 %v3606, 4294901760
    %4456 = vmatmul.f32.gmra.mxu0 %v4455
    %v4457 = vpop.f32.mrf.mxu0
    %v4458 = vadd.f32 %v4361, %v4457
    %v4459 = vand.u32 %v3608, 4294901760
    %4460 = vmatmul.f32.gmra.mxu0 %v4459
    %v4461 = vpop.f32.mrf.mxu0
    %v4462 = vadd.f32 %v4365, %v4461
    %4463 = vdwg.mxu0
    %4464 = vmatpush.msra.mxu0 0.0
    %4465 = vmatpush.msra.mxu0 0.0
    %4466 = vmatpush.msra.mxu0 0.0
    %4467 = vmatpush.msra.mxu0 0.0
    %4468 = vmatpush.msra.mxu0 0.0
    %4469 = vmatpush.msra.mxu0 0.0
    %4470 = vmatpush.msra.mxu0 0.0
    %4471 = vmatpush.msra.mxu0 0.0
    %4472 = vmatpush.msra.mxu0 0.0
    %4473 = vmatpush.msra.mxu0 0.0
    %v4474 = vand.u32 %v33, 4294901760
    %4475 = vmatpush.msra.mxu0 %v4474
    %v4476 = vand.u32 %v32, 4294901760
    %4477 = vmatpush.msra.mxu0 %v4476
    %v4478 = vand.u32 %v31, 4294901760
    %4479 = vmatpush.msra.mxu0 %v4478
    %v4480 = vand.u32 %v30, 4294901760
    %4481 = vmatpush.msra.mxu0 %v4480
    %v4482 = vand.u32 %v29, 4294901760
    %4483 = vmatpush.msra.mxu0 %v4482
    %v4484 = vand.u32 %v28, 4294901760
    %4485 = vmatpush.msra.mxu0 %v4484
    %v4486 = vand.u32 %v3611, 4294901760
    %v4487 = vsub.f32 %v3611, %v4486
    %v4488 = vand.u32 %v4487, 4294901760
    %v4489 = vsub.f32 %v4487, %v4488
    %v4490 = vand.u32 %v4489, 4294901760
    %4491 = vmatmul.f32.gmra.mxu0 %v4490
    %v4492 = vpop.f32.mrf.mxu0
    %v4493 = vadd.f32 %v4402, %v4492
    %v4494 = vand.u32 %v3614, 4294901760
    %v4495 = vsub.f32 %v3614, %v4494
    %v4496 = vand.u32 %v4495, 4294901760
    %v4497 = vsub.f32 %v4495, %v4496
    %v4498 = vand.u32 %v4497, 4294901760
    %4499 = vmatmul.f32.gmra.mxu0 %v4498
    %v4500 = vpop.f32.mrf.mxu0
    %v4501 = vadd.f32 %v4406, %v4500
    %v4502 = vand.u32 %v3617, 4294901760
    %v4503 = vsub.f32 %v3617, %v4502
    %v4504 = vand.u32 %v4503, 4294901760
    %v4505 = vsub.f32 %v4503, %v4504
    %v4506 = vand.u32 %v4505, 4294901760
    %4507 = vmatmul.f32.gmra.mxu0 %v4506
    %v4508 = vpop.f32.mrf.mxu0
    %v4509 = vadd.f32 %v4410, %v4508
    %v4510 = vand.u32 %v3620, 4294901760
    %v4511 = vsub.f32 %v3620, %v4510
    %v4512 = vand.u32 %v4511, 4294901760
    %v4513 = vsub.f32 %v4511, %v4512
    %v4514 = vand.u32 %v4513, 4294901760
    %4515 = vmatmul.f32.gmra.mxu0 %v4514
    %v4516 = vpop.f32.mrf.mxu0
    %v4517 = vadd.f32 %v4414, %v4516
    %v4518 = vand.u32 %v3623, 4294901760
    %v4519 = vsub.f32 %v3623, %v4518
    %v4520 = vand.u32 %v4519, 4294901760
    %v4521 = vsub.f32 %v4519, %v4520
    %v4522 = vand.u32 %v4521, 4294901760
    %4523 = vmatmul.f32.gmra.mxu0 %v4522
    %v4524 = vpop.f32.mrf.mxu0
    %v4525 = vadd.f32 %v4418, %v4524
    %v4526 = vand.u32 %v3626, 4294901760
    %v4527 = vsub.f32 %v3626, %v4526
    %v4528 = vand.u32 %v4527, 4294901760
    %v4529 = vsub.f32 %v4527, %v4528
    %v4530 = vand.u32 %v4529, 4294901760
    %4531 = vmatmul.f32.gmra.mxu0 %v4530
    %v4532 = vpop.f32.mrf.mxu0
    %v4533 = vadd.f32 %v4422, %v4532
    %v4534 = vand.u32 %v3629, 4294901760
    %v4535 = vsub.f32 %v3629, %v4534
    %v4536 = vand.u32 %v4535, 4294901760
    %v4537 = vsub.f32 %v4535, %v4536
    %v4538 = vand.u32 %v4537, 4294901760
    %4539 = vmatmul.f32.gmra.mxu0 %v4538
    %v4540 = vpop.f32.mrf.mxu0
    %v4541 = vadd.f32 %v4426, %v4540
    %v4542 = vand.u32 %v3632, 4294901760
    %v4543 = vsub.f32 %v3632, %v4542
    %v4544 = vand.u32 %v4543, 4294901760
    %v4545 = vsub.f32 %v4543, %v4544
    %v4546 = vand.u32 %v4545, 4294901760
    %4547 = vmatmul.f32.gmra.mxu0 %v4546
    %v4548 = vpop.f32.mrf.mxu0
    %v4549 = vadd.f32 %v4430, %v4548
    %v4550 = vand.u32 %v3635, 4294901760
    %v4551 = vsub.f32 %v3635, %v4550
    %v4552 = vand.u32 %v4551, 4294901760
    %v4553 = vsub.f32 %v4551, %v4552
    %v4554 = vand.u32 %v4553, 4294901760
    %4555 = vmatmul.f32.gmra.mxu0 %v4554
    %v4556 = vpop.f32.mrf.mxu0
    %v4557 = vadd.f32 %v4434, %v4556
    %v4558 = vand.u32 %v3638, 4294901760
    %v4559 = vsub.f32 %v3638, %v4558
    %v4560 = vand.u32 %v4559, 4294901760
    %v4561 = vsub.f32 %v4559, %v4560
    %v4562 = vand.u32 %v4561, 4294901760
    %4563 = vmatmul.f32.gmra.mxu0 %v4562
    %v4564 = vpop.f32.mrf.mxu0
    %v4565 = vadd.f32 %v4438, %v4564
    %v4566 = vand.u32 %v3641, 4294901760
    %v4567 = vsub.f32 %v3641, %v4566
    %v4568 = vand.u32 %v4567, 4294901760
    %v4569 = vsub.f32 %v4567, %v4568
    %v4570 = vand.u32 %v4569, 4294901760
    %4571 = vmatmul.f32.gmra.mxu0 %v4570
    %v4572 = vpop.f32.mrf.mxu0
    %v4573 = vadd.f32 %v4442, %v4572
    %v4574 = vand.u32 %v3644, 4294901760
    %v4575 = vsub.f32 %v3644, %v4574
    %v4576 = vand.u32 %v4575, 4294901760
    %v4577 = vsub.f32 %v4575, %v4576
    %v4578 = vand.u32 %v4577, 4294901760
    %4579 = vmatmul.f32.gmra.mxu0 %v4578
    %v4580 = vpop.f32.mrf.mxu0
    %v4581 = vadd.f32 %v4446, %v4580
    %v4582 = vand.u32 %v3647, 4294901760
    %v4583 = vsub.f32 %v3647, %v4582
    %v4584 = vand.u32 %v4583, 4294901760
    %v4585 = vsub.f32 %v4583, %v4584
    %v4586 = vand.u32 %v4585, 4294901760
    %4587 = vmatmul.f32.gmra.mxu0 %v4586
    %v4588 = vpop.f32.mrf.mxu0
    %v4589 = vadd.f32 %v4450, %v4588
    %v4590 = vand.u32 %v3650, 4294901760
    %v4591 = vsub.f32 %v3650, %v4590
    %v4592 = vand.u32 %v4591, 4294901760
    %v4593 = vsub.f32 %v4591, %v4592
    %v4594 = vand.u32 %v4593, 4294901760
    %4595 = vmatmul.f32.gmra.mxu0 %v4594
    %v4596 = vpop.f32.mrf.mxu0
    %v4597 = vadd.f32 %v4454, %v4596
    %v4598 = vand.u32 %v3653, 4294901760
    %v4599 = vsub.f32 %v3653, %v4598
    %v4600 = vand.u32 %v4599, 4294901760
    %v4601 = vsub.f32 %v4599, %v4600
    %v4602 = vand.u32 %v4601, 4294901760
    %4603 = vmatmul.f32.gmra.mxu0 %v4602
    %v4604 = vpop.f32.mrf.mxu0
    %v4605 = vadd.f32 %v4458, %v4604
    %v4606 = vand.u32 %v3656, 4294901760
    %v4607 = vsub.f32 %v3656, %v4606
    %v4608 = vand.u32 %v4607, 4294901760
    %v4609 = vsub.f32 %v4607, %v4608
    %v4610 = vand.u32 %v4609, 4294901760
    %4611 = vmatmul.f32.gmra.mxu0 %v4610
    %v4612 = vpop.f32.mrf.mxu0
    %v4613 = vadd.f32 %v4462, %v4612
    %4614 = vdwg.mxu0
    %4615 = vmatpush.msra.mxu0 0.0
    %4616 = vmatpush.msra.mxu0 0.0
    %4617 = vmatpush.msra.mxu0 0.0
    %4618 = vmatpush.msra.mxu0 0.0
    %4619 = vmatpush.msra.mxu0 0.0
    %4620 = vmatpush.msra.mxu0 0.0
    %4621 = vmatpush.msra.mxu0 0.0
    %4622 = vmatpush.msra.mxu0 0.0
    %4623 = vmatpush.msra.mxu0 0.0
    %4624 = vmatpush.msra.mxu0 0.0
    %v4625 = vand.u32 %v33, 4294901760
    %v4626 = vsub.f32 %v33, %v4625
    %v4627 = vand.u32 %v4626, 4294901760
    %v4628 = vsub.f32 %v4626, %v4627
    %v4629 = vand.u32 %v4628, 4294901760
    %4630 = vmatpush.msra.mxu0 %v4629
    %v4631 = vand.u32 %v32, 4294901760
    %v4632 = vsub.f32 %v32, %v4631
    %v4633 = vand.u32 %v4632, 4294901760
    %v4634 = vsub.f32 %v4632, %v4633
    %v4635 = vand.u32 %v4634, 4294901760
    %4636 = vmatpush.msra.mxu0 %v4635
    %v4637 = vand.u32 %v31, 4294901760
    %v4638 = vsub.f32 %v31, %v4637
    %v4639 = vand.u32 %v4638, 4294901760
    %v4640 = vsub.f32 %v4638, %v4639
    %v4641 = vand.u32 %v4640, 4294901760
    %4642 = vmatpush.msra.mxu0 %v4641
    %v4643 = vand.u32 %v30, 4294901760
    %v4644 = vsub.f32 %v30, %v4643
    %v4645 = vand.u32 %v4644, 4294901760
    %v4646 = vsub.f32 %v4644, %v4645
    %v4647 = vand.u32 %v4646, 4294901760
    %4648 = vmatpush.msra.mxu0 %v4647
    %v4649 = vand.u32 %v29, 4294901760
    %v4650 = vsub.f32 %v29, %v4649
    %v4651 = vand.u32 %v4650, 4294901760
    %v4652 = vsub.f32 %v4650, %v4651
    %v4653 = vand.u32 %v4652, 4294901760
    %4654 = vmatpush.msra.mxu0 %v4653
    %v4655 = vand.u32 %v28, 4294901760
    %v4656 = vsub.f32 %v28, %v4655
    %v4657 = vand.u32 %v4656, 4294901760
    %v4658 = vsub.f32 %v4656, %v4657
    %v4659 = vand.u32 %v4658, 4294901760
    %4660 = vmatpush.msra.mxu0 %v4659
    %v4661 = vand.u32 %v3611, 4294901760
    %4662 = vmatmul.f32.gmra.mxu0 %v4661
    %v4663 = vpop.f32.mrf.mxu0
    %v4664 = vadd.f32 %v4493, %v4663
    %v4665 = vand.u32 %v3614, 4294901760
    %4666 = vmatmul.f32.gmra.mxu0 %v4665
    %v4667 = vpop.f32.mrf.mxu0
    %v4668 = vadd.f32 %v4501, %v4667
    %v4669 = vand.u32 %v3617, 4294901760
    %4670 = vmatmul.f32.gmra.mxu0 %v4669
    %v4671 = vpop.f32.mrf.mxu0
    %v4672 = vadd.f32 %v4509, %v4671
    %v4673 = vand.u32 %v3620, 4294901760
    %4674 = vmatmul.f32.gmra.mxu0 %v4673
    %v4675 = vpop.f32.mrf.mxu0
    %v4676 = vadd.f32 %v4517, %v4675
    %v4677 = vand.u32 %v3623, 4294901760
    %4678 = vmatmul.f32.gmra.mxu0 %v4677
    %v4679 = vpop.f32.mrf.mxu0
    %v4680 = vadd.f32 %v4525, %v4679
    %v4681 = vand.u32 %v3626, 4294901760
    %4682 = vmatmul.f32.gmra.mxu0 %v4681
    %v4683 = vpop.f32.mrf.mxu0
    %v4684 = vadd.f32 %v4533, %v4683
    %v4685 = vand.u32 %v3629, 4294901760
    %4686 = vmatmul.f32.gmra.mxu0 %v4685
    %v4687 = vpop.f32.mrf.mxu0
    %v4688 = vadd.f32 %v4541, %v4687
    %v4689 = vand.u32 %v3632, 4294901760
    %4690 = vmatmul.f32.gmra.mxu0 %v4689
    %v4691 = vpop.f32.mrf.mxu0
    %v4692 = vadd.f32 %v4549, %v4691
    %v4693 = vand.u32 %v3635, 4294901760
    %4694 = vmatmul.f32.gmra.mxu0 %v4693
    %v4695 = vpop.f32.mrf.mxu0
    %v4696 = vadd.f32 %v4557, %v4695
    %v4697 = vand.u32 %v3638, 4294901760
    %4698 = vmatmul.f32.gmra.mxu0 %v4697
    %v4699 = vpop.f32.mrf.mxu0
    %v4700 = vadd.f32 %v4565, %v4699
    %v4701 = vand.u32 %v3641, 4294901760
    %4702 = vmatmul.f32.gmra.mxu0 %v4701
    %v4703 = vpop.f32.mrf.mxu0
    %v4704 = vadd.f32 %v4573, %v4703
    %v4705 = vand.u32 %v3644, 4294901760
    %4706 = vmatmul.f32.gmra.mxu0 %v4705
    %v4707 = vpop.f32.mrf.mxu0
    %v4708 = vadd.f32 %v4581, %v4707
    %v4709 = vand.u32 %v3647, 4294901760
    %4710 = vmatmul.f32.gmra.mxu0 %v4709
    %v4711 = vpop.f32.mrf.mxu0
    %v4712 = vadd.f32 %v4589, %v4711
    %v4713 = vand.u32 %v3650, 4294901760
    %4714 = vmatmul.f32.gmra.mxu0 %v4713
    %v4715 = vpop.f32.mrf.mxu0
    %v4716 = vadd.f32 %v4597, %v4715
    %v4717 = vand.u32 %v3653, 4294901760
    %4718 = vmatmul.f32.gmra.mxu0 %v4717
    %v4719 = vpop.f32.mrf.mxu0
    %v4720 = vadd.f32 %v4605, %v4719
    %v4721 = vand.u32 %v3656, 4294901760
    %4722 = vmatmul.f32.gmra.mxu0 %v4721
    %v4723 = vpop.f32.mrf.mxu0
    %v4724 = vadd.f32 %v4613, %v4723
    %4725 = vdwg.mxu0
    %4726 = vmatpush.msra.mxu0 0.0
    %4727 = vmatpush.msra.mxu0 0.0
    %4728 = vmatpush.msra.mxu0 0.0
    %4729 = vmatpush.msra.mxu0 0.0
    %4730 = vmatpush.msra.mxu0 0.0
    %4731 = vmatpush.msra.mxu0 0.0
    %4732 = vmatpush.msra.mxu0 0.0
    %4733 = vmatpush.msra.mxu0 0.0
    %4734 = vmatpush.msra.mxu0 0.0
    %4735 = vmatpush.msra.mxu0 0.0
    %v4736 = vand.u32 %v33, 4294901760
    %v4737 = vsub.f32 %v33, %v4736
    %4738 = vmatpush.msra.mxu0 %v4737
    %v4739 = vand.u32 %v32, 4294901760
    %v4740 = vsub.f32 %v32, %v4739
    %4741 = vmatpush.msra.mxu0 %v4740
    %v4742 = vand.u32 %v31, 4294901760
    %v4743 = vsub.f32 %v31, %v4742
    %4744 = vmatpush.msra.mxu0 %v4743
    %v4745 = vand.u32 %v30, 4294901760
    %v4746 = vsub.f32 %v30, %v4745
    %4747 = vmatpush.msra.mxu0 %v4746
    %v4748 = vand.u32 %v29, 4294901760
    %v4749 = vsub.f32 %v29, %v4748
    %4750 = vmatpush.msra.mxu0 %v4749
    %v4751 = vand.u32 %v28, 4294901760
    %v4752 = vsub.f32 %v28, %v4751
    %4753 = vmatpush.msra.mxu0 %v4752
    %v4754 = vand.u32 %v3611, 4294901760
    %v4755 = vsub.f32 %v3611, %v4754
    %4756 = vmatmul.f32.gmra.mxu0 %v4755
    %v4757 = vpop.f32.mrf.mxu0
    %v4758 = vadd.f32 %v4664, %v4757
    %v4759 = vand.u32 %v3614, 4294901760
    %v4760 = vsub.f32 %v3614, %v4759
    %4761 = vmatmul.f32.gmra.mxu0 %v4760
    %v4762 = vpop.f32.mrf.mxu0
    %v4763 = vadd.f32 %v4668, %v4762
    %v4764 = vand.u32 %v3617, 4294901760
    %v4765 = vsub.f32 %v3617, %v4764
    %4766 = vmatmul.f32.gmra.mxu0 %v4765
    %v4767 = vpop.f32.mrf.mxu0
    %v4768 = vadd.f32 %v4672, %v4767
    %v4769 = vand.u32 %v3620, 4294901760
    %v4770 = vsub.f32 %v3620, %v4769
    %4771 = vmatmul.f32.gmra.mxu0 %v4770
    %v4772 = vpop.f32.mrf.mxu0
    %v4773 = vadd.f32 %v4676, %v4772
    %v4774 = vand.u32 %v3623, 4294901760
    %v4775 = vsub.f32 %v3623, %v4774
    %4776 = vmatmul.f32.gmra.mxu0 %v4775
    %v4777 = vpop.f32.mrf.mxu0
    %v4778 = vadd.f32 %v4680, %v4777
    %v4779 = vand.u32 %v3626, 4294901760
    %v4780 = vsub.f32 %v3626, %v4779
    %4781 = vmatmul.f32.gmra.mxu0 %v4780
    %v4782 = vpop.f32.mrf.mxu0
    %v4783 = vadd.f32 %v4684, %v4782
    %v4784 = vand.u32 %v3629, 4294901760
    %v4785 = vsub.f32 %v3629, %v4784
    %4786 = vmatmul.f32.gmra.mxu0 %v4785
    %v4787 = vpop.f32.mrf.mxu0
    %v4788 = vadd.f32 %v4688, %v4787
    %v4789 = vand.u32 %v3632, 4294901760
    %v4790 = vsub.f32 %v3632, %v4789
    %4791 = vmatmul.f32.gmra.mxu0 %v4790
    %v4792 = vpop.f32.mrf.mxu0
    %v4793 = vadd.f32 %v4692, %v4792
    %v4794 = vand.u32 %v3635, 4294901760
    %v4795 = vsub.f32 %v3635, %v4794
    %4796 = vmatmul.f32.gmra.mxu0 %v4795
    %v4797 = vpop.f32.mrf.mxu0
    %v4798 = vadd.f32 %v4696, %v4797
    %v4799 = vand.u32 %v3638, 4294901760
    %v4800 = vsub.f32 %v3638, %v4799
    %4801 = vmatmul.f32.gmra.mxu0 %v4800
    %v4802 = vpop.f32.mrf.mxu0
    %v4803 = vadd.f32 %v4700, %v4802
    %v4804 = vand.u32 %v3641, 4294901760
    %v4805 = vsub.f32 %v3641, %v4804
    %4806 = vmatmul.f32.gmra.mxu0 %v4805
    %v4807 = vpop.f32.mrf.mxu0
    %v4808 = vadd.f32 %v4704, %v4807
    %v4809 = vand.u32 %v3644, 4294901760
    %v4810 = vsub.f32 %v3644, %v4809
    %4811 = vmatmul.f32.gmra.mxu0 %v4810
    %v4812 = vpop.f32.mrf.mxu0
    %v4813 = vadd.f32 %v4708, %v4812
    %v4814 = vand.u32 %v3647, 4294901760
    %v4815 = vsub.f32 %v3647, %v4814
    %4816 = vmatmul.f32.gmra.mxu0 %v4815
    %v4817 = vpop.f32.mrf.mxu0
    %v4818 = vadd.f32 %v4712, %v4817
    %v4819 = vand.u32 %v3650, 4294901760
    %v4820 = vsub.f32 %v3650, %v4819
    %4821 = vmatmul.f32.gmra.mxu0 %v4820
    %v4822 = vpop.f32.mrf.mxu0
    %v4823 = vadd.f32 %v4716, %v4822
    %v4824 = vand.u32 %v3653, 4294901760
    %v4825 = vsub.f32 %v3653, %v4824
    %4826 = vmatmul.f32.gmra.mxu0 %v4825
    %v4827 = vpop.f32.mrf.mxu0
    %v4828 = vadd.f32 %v4720, %v4827
    %v4829 = vand.u32 %v3656, 4294901760
    %v4830 = vsub.f32 %v3656, %v4829
    %4831 = vmatmul.f32.gmra.mxu0 %v4830
    %v4832 = vpop.f32.mrf.mxu0
    %v4833 = vadd.f32 %v4724, %v4832
    %4834 = vdwg.mxu0
    %4835 = vmatpush.msra.mxu0 0.0
    %4836 = vmatpush.msra.mxu0 0.0
    %4837 = vmatpush.msra.mxu0 0.0
    %4838 = vmatpush.msra.mxu0 0.0
    %4839 = vmatpush.msra.mxu0 0.0
    %4840 = vmatpush.msra.mxu0 0.0
    %4841 = vmatpush.msra.mxu0 0.0
    %4842 = vmatpush.msra.mxu0 0.0
    %4843 = vmatpush.msra.mxu0 0.0
    %4844 = vmatpush.msra.mxu0 0.0
    %v4845 = vand.u32 %v33, 4294901760
    %4846 = vmatpush.msra.mxu0 %v4845
    %v4847 = vand.u32 %v32, 4294901760
    %4848 = vmatpush.msra.mxu0 %v4847
    %v4849 = vand.u32 %v31, 4294901760
    %4850 = vmatpush.msra.mxu0 %v4849
    %v4851 = vand.u32 %v30, 4294901760
    %4852 = vmatpush.msra.mxu0 %v4851
    %v4853 = vand.u32 %v29, 4294901760
    %4854 = vmatpush.msra.mxu0 %v4853
    %v4855 = vand.u32 %v28, 4294901760
    %4856 = vmatpush.msra.mxu0 %v4855
    %v4857 = vand.u32 %v3611, 4294901760
    %v4858 = vsub.f32 %v3611, %v4857
    %v4859 = vand.u32 %v4858, 4294901760
    %4860 = vmatmul.f32.gmra.mxu0 %v4859
    %v4861 = vpop.f32.mrf.mxu0
    %v4862 = vadd.f32 %v4758, %v4861
    %v4863 = vand.u32 %v3614, 4294901760
    %v4864 = vsub.f32 %v3614, %v4863
    %v4865 = vand.u32 %v4864, 4294901760
    %4866 = vmatmul.f32.gmra.mxu0 %v4865
    %v4867 = vpop.f32.mrf.mxu0
    %v4868 = vadd.f32 %v4763, %v4867
    %v4869 = vand.u32 %v3617, 4294901760
    %v4870 = vsub.f32 %v3617, %v4869
    %v4871 = vand.u32 %v4870, 4294901760
    %4872 = vmatmul.f32.gmra.mxu0 %v4871
    %v4873 = vpop.f32.mrf.mxu0
    %v4874 = vadd.f32 %v4768, %v4873
    %v4875 = vand.u32 %v3620, 4294901760
    %v4876 = vsub.f32 %v3620, %v4875
    %v4877 = vand.u32 %v4876, 4294901760
    %4878 = vmatmul.f32.gmra.mxu0 %v4877
    %v4879 = vpop.f32.mrf.mxu0
    %v4880 = vadd.f32 %v4773, %v4879
    %v4881 = vand.u32 %v3623, 4294901760
    %v4882 = vsub.f32 %v3623, %v4881
    %v4883 = vand.u32 %v4882, 4294901760
    %4884 = vmatmul.f32.gmra.mxu0 %v4883
    %v4885 = vpop.f32.mrf.mxu0
    %v4886 = vadd.f32 %v4778, %v4885
    %v4887 = vand.u32 %v3626, 4294901760
    %v4888 = vsub.f32 %v3626, %v4887
    %v4889 = vand.u32 %v4888, 4294901760
    %4890 = vmatmul.f32.gmra.mxu0 %v4889
    %v4891 = vpop.f32.mrf.mxu0
    %v4892 = vadd.f32 %v4783, %v4891
    %v4893 = vand.u32 %v3629, 4294901760
    %v4894 = vsub.f32 %v3629, %v4893
    %v4895 = vand.u32 %v4894, 4294901760
    %4896 = vmatmul.f32.gmra.mxu0 %v4895
    %v4897 = vpop.f32.mrf.mxu0
    %v4898 = vadd.f32 %v4788, %v4897
    %v4899 = vand.u32 %v3632, 4294901760
    %v4900 = vsub.f32 %v3632, %v4899
    %v4901 = vand.u32 %v4900, 4294901760
    %4902 = vmatmul.f32.gmra.mxu0 %v4901
    %v4903 = vpop.f32.mrf.mxu0
    %v4904 = vadd.f32 %v4793, %v4903
    %v4905 = vand.u32 %v3635, 4294901760
    %v4906 = vsub.f32 %v3635, %v4905
    %v4907 = vand.u32 %v4906, 4294901760
    %4908 = vmatmul.f32.gmra.mxu0 %v4907
    %v4909 = vpop.f32.mrf.mxu0
    %v4910 = vadd.f32 %v4798, %v4909
    %v4911 = vand.u32 %v3638, 4294901760
    %v4912 = vsub.f32 %v3638, %v4911
    %v4913 = vand.u32 %v4912, 4294901760
    %4914 = vmatmul.f32.gmra.mxu0 %v4913
    %v4915 = vpop.f32.mrf.mxu0
    %v4916 = vadd.f32 %v4803, %v4915
    %v4917 = vand.u32 %v3641, 4294901760
    %v4918 = vsub.f32 %v3641, %v4917
    %v4919 = vand.u32 %v4918, 4294901760
    %4920 = vmatmul.f32.gmra.mxu0 %v4919
    %v4921 = vpop.f32.mrf.mxu0
    %v4922 = vadd.f32 %v4808, %v4921
    %v4923 = vand.u32 %v3644, 4294901760
    %v4924 = vsub.f32 %v3644, %v4923
    %v4925 = vand.u32 %v4924, 4294901760
    %4926 = vmatmul.f32.gmra.mxu0 %v4925
    %v4927 = vpop.f32.mrf.mxu0
    %v4928 = vadd.f32 %v4813, %v4927
    %v4929 = vand.u32 %v3647, 4294901760
    %v4930 = vsub.f32 %v3647, %v4929
    %v4931 = vand.u32 %v4930, 4294901760
    %4932 = vmatmul.f32.gmra.mxu0 %v4931
    %v4933 = vpop.f32.mrf.mxu0
    %v4934 = vadd.f32 %v4818, %v4933
    %v4935 = vand.u32 %v3650, 4294901760
    %v4936 = vsub.f32 %v3650, %v4935
    %v4937 = vand.u32 %v4936, 4294901760
    %4938 = vmatmul.f32.gmra.mxu0 %v4937
    %v4939 = vpop.f32.mrf.mxu0
    %v4940 = vadd.f32 %v4823, %v4939
    %v4941 = vand.u32 %v3653, 4294901760
    %v4942 = vsub.f32 %v3653, %v4941
    %v4943 = vand.u32 %v4942, 4294901760
    %4944 = vmatmul.f32.gmra.mxu0 %v4943
    %v4945 = vpop.f32.mrf.mxu0
    %v4946 = vadd.f32 %v4828, %v4945
    %v4947 = vand.u32 %v3656, 4294901760
    %v4948 = vsub.f32 %v3656, %v4947
    %v4949 = vand.u32 %v4948, 4294901760
    %4950 = vmatmul.f32.gmra.mxu0 %v4949
    %v4951 = vpop.f32.mrf.mxu0
    %v4952 = vadd.f32 %v4833, %v4951
    %4953 = vdwg.mxu0
    %4954 = vmatpush.msra.mxu0 0.0
    %4955 = vmatpush.msra.mxu0 0.0
    %4956 = vmatpush.msra.mxu0 0.0
    %4957 = vmatpush.msra.mxu0 0.0
    %4958 = vmatpush.msra.mxu0 0.0
    %4959 = vmatpush.msra.mxu0 0.0
    %4960 = vmatpush.msra.mxu0 0.0
    %4961 = vmatpush.msra.mxu0 0.0
    %4962 = vmatpush.msra.mxu0 0.0
    %4963 = vmatpush.msra.mxu0 0.0
    %v4964 = vand.u32 %v33, 4294901760
    %v4965 = vsub.f32 %v33, %v4964
    %v4966 = vand.u32 %v4965, 4294901760
    %4967 = vmatpush.msra.mxu0 %v4966
    %v4968 = vand.u32 %v32, 4294901760
    %v4969 = vsub.f32 %v32, %v4968
    %v4970 = vand.u32 %v4969, 4294901760
    %4971 = vmatpush.msra.mxu0 %v4970
    %v4972 = vand.u32 %v31, 4294901760
    %v4973 = vsub.f32 %v31, %v4972
    %v4974 = vand.u32 %v4973, 4294901760
    %4975 = vmatpush.msra.mxu0 %v4974
    %v4976 = vand.u32 %v30, 4294901760
    %v4977 = vsub.f32 %v30, %v4976
    %v4978 = vand.u32 %v4977, 4294901760
    %4979 = vmatpush.msra.mxu0 %v4978
    %v4980 = vand.u32 %v29, 4294901760
    %v4981 = vsub.f32 %v29, %v4980
    %v4982 = vand.u32 %v4981, 4294901760
    %4983 = vmatpush.msra.mxu0 %v4982
    %v4984 = vand.u32 %v28, 4294901760
    %v4985 = vsub.f32 %v28, %v4984
    %v4986 = vand.u32 %v4985, 4294901760
    %4987 = vmatpush.msra.mxu0 %v4986
    %v4988 = vand.u32 %v3611, 4294901760
    %4989 = vmatmul.f32.gmra.mxu0 %v4988
    %v4990 = vpop.f32.mrf.mxu0
    %v4991 = vadd.f32 %v4862, %v4990
    %v4992 = vand.u32 %v3614, 4294901760
    %4993 = vmatmul.f32.gmra.mxu0 %v4992
    %v4994 = vpop.f32.mrf.mxu0
    %v4995 = vadd.f32 %v4868, %v4994
    %v4996 = vand.u32 %v3617, 4294901760
    %4997 = vmatmul.f32.gmra.mxu0 %v4996
    %v4998 = vpop.f32.mrf.mxu0
    %v4999 = vadd.f32 %v4874, %v4998
    %v5000 = vand.u32 %v3620, 4294901760
    %5001 = vmatmul.f32.gmra.mxu0 %v5000
    %v5002 = vpop.f32.mrf.mxu0
    %v5003 = vadd.f32 %v4880, %v5002
    %v5004 = vand.u32 %v3623, 4294901760
    %5005 = vmatmul.f32.gmra.mxu0 %v5004
    %v5006 = vpop.f32.mrf.mxu0
    %v5007 = vadd.f32 %v4886, %v5006
    %v5008 = vand.u32 %v3626, 4294901760
    %5009 = vmatmul.f32.gmra.mxu0 %v5008
    %v5010 = vpop.f32.mrf.mxu0
    %v5011 = vadd.f32 %v4892, %v5010
    %v5012 = vand.u32 %v3629, 4294901760
    %5013 = vmatmul.f32.gmra.mxu0 %v5012
    %v5014 = vpop.f32.mrf.mxu0
    %v5015 = vadd.f32 %v4898, %v5014
    %v5016 = vand.u32 %v3632, 4294901760
    %5017 = vmatmul.f32.gmra.mxu0 %v5016
    %v5018 = vpop.f32.mrf.mxu0
    %v5019 = vadd.f32 %v4904, %v5018
    %v5020 = vand.u32 %v3635, 4294901760
    %5021 = vmatmul.f32.gmra.mxu0 %v5020
    %v5022 = vpop.f32.mrf.mxu0
    %v5023 = vadd.f32 %v4910, %v5022
    %v5024 = vand.u32 %v3638, 4294901760
    %5025 = vmatmul.f32.gmra.mxu0 %v5024
    %v5026 = vpop.f32.mrf.mxu0
    %v5027 = vadd.f32 %v4916, %v5026
    %v5028 = vand.u32 %v3641, 4294901760
    %5029 = vmatmul.f32.gmra.mxu0 %v5028
    %v5030 = vpop.f32.mrf.mxu0
    %v5031 = vadd.f32 %v4922, %v5030
    %v5032 = vand.u32 %v3644, 4294901760
    %5033 = vmatmul.f32.gmra.mxu0 %v5032
    %v5034 = vpop.f32.mrf.mxu0
    %v5035 = vadd.f32 %v4928, %v5034
    %v5036 = vand.u32 %v3647, 4294901760
    %5037 = vmatmul.f32.gmra.mxu0 %v5036
    %v5038 = vpop.f32.mrf.mxu0
    %v5039 = vadd.f32 %v4934, %v5038
    %v5040 = vand.u32 %v3650, 4294901760
    %5041 = vmatmul.f32.gmra.mxu0 %v5040
    %v5042 = vpop.f32.mrf.mxu0
    %v5043 = vadd.f32 %v4940, %v5042
    %v5044 = vand.u32 %v3653, 4294901760
    %5045 = vmatmul.f32.gmra.mxu0 %v5044
    %v5046 = vpop.f32.mrf.mxu0
    %v5047 = vadd.f32 %v4946, %v5046
    %v5048 = vand.u32 %v3656, 4294901760
    %5049 = vmatmul.f32.gmra.mxu0 %v5048
    %v5050 = vpop.f32.mrf.mxu0
    %v5051 = vadd.f32 %v4952, %v5050
    %5052 = vdwg.mxu0
    %5053 = vmatpush.msra.mxu0 0.0
    %5054 = vmatpush.msra.mxu0 0.0
    %5055 = vmatpush.msra.mxu0 0.0
    %5056 = vmatpush.msra.mxu0 0.0
    %5057 = vmatpush.msra.mxu0 0.0
    %5058 = vmatpush.msra.mxu0 0.0
    %5059 = vmatpush.msra.mxu0 0.0
    %5060 = vmatpush.msra.mxu0 0.0
    %5061 = vmatpush.msra.mxu0 0.0
    %5062 = vmatpush.msra.mxu0 0.0
    %v5063 = vand.u32 %v33, 4294901760
    %5064 = vmatpush.msra.mxu0 %v5063
    %v5065 = vand.u32 %v32, 4294901760
    %5066 = vmatpush.msra.mxu0 %v5065
    %v5067 = vand.u32 %v31, 4294901760
    %5068 = vmatpush.msra.mxu0 %v5067
    %v5069 = vand.u32 %v30, 4294901760
    %5070 = vmatpush.msra.mxu0 %v5069
    %v5071 = vand.u32 %v29, 4294901760
    %5072 = vmatpush.msra.mxu0 %v5071
    %v5073 = vand.u32 %v28, 4294901760
    %5074 = vmatpush.msra.mxu0 %v5073
    %v5075 = vand.u32 %v3611, 4294901760
    %5076 = vmatmul.f32.gmra.mxu0 %v5075
    %v5077 = vpop.f32.mrf.mxu0
    %v5078 = vadd.f32 %v4991, %v5077
    %v5079 = vand.u32 %v3614, 4294901760
    %5080 = vmatmul.f32.gmra.mxu0 %v5079
    %v5081 = vpop.f32.mrf.mxu0
    %v5082 = vadd.f32 %v4995, %v5081
    %v5083 = vand.u32 %v3617, 4294901760
    %5084 = vmatmul.f32.gmra.mxu0 %v5083
    %v5085 = vpop.f32.mrf.mxu0
    %v5086 = vadd.f32 %v4999, %v5085
    %v5087 = vand.u32 %v3620, 4294901760
    %5088 = vmatmul.f32.gmra.mxu0 %v5087
    %v5089 = vpop.f32.mrf.mxu0
    %v5090 = vadd.f32 %v5003, %v5089
    %v5091 = vand.u32 %v3623, 4294901760
    %5092 = vmatmul.f32.gmra.mxu0 %v5091
    %v5093 = vpop.f32.mrf.mxu0
    %v5094 = vadd.f32 %v5007, %v5093
    %v5095 = vand.u32 %v3626, 4294901760
    %5096 = vmatmul.f32.gmra.mxu0 %v5095
    %v5097 = vpop.f32.mrf.mxu0
    %v5098 = vadd.f32 %v5011, %v5097
    %v5099 = vand.u32 %v3629, 4294901760
    %5100 = vmatmul.f32.gmra.mxu0 %v5099
    %v5101 = vpop.f32.mrf.mxu0
    %v5102 = vadd.f32 %v5015, %v5101
    %v5103 = vand.u32 %v3632, 4294901760
    %5104 = vmatmul.f32.gmra.mxu0 %v5103
    %v5105 = vpop.f32.mrf.mxu0
    %v5106 = vadd.f32 %v5019, %v5105
    %v5107 = vand.u32 %v3635, 4294901760
    %5108 = vmatmul.f32.gmra.mxu0 %v5107
    %v5109 = vpop.f32.mrf.mxu0
    %v5110 = vadd.f32 %v5023, %v5109
    %v5111 = vand.u32 %v3638, 4294901760
    %5112 = vmatmul.f32.gmra.mxu0 %v5111
    %v5113 = vpop.f32.mrf.mxu0
    %v5114 = vadd.f32 %v5027, %v5113
    %v5115 = vand.u32 %v3641, 4294901760
    %5116 = vmatmul.f32.gmra.mxu0 %v5115
    %v5117 = vpop.f32.mrf.mxu0
    %v5118 = vadd.f32 %v5031, %v5117
    %v5119 = vand.u32 %v3644, 4294901760
    %5120 = vmatmul.f32.gmra.mxu0 %v5119
    %v5121 = vpop.f32.mrf.mxu0
    %v5122 = vadd.f32 %v5035, %v5121
    %v5123 = vand.u32 %v3647, 4294901760
    %5124 = vmatmul.f32.gmra.mxu0 %v5123
    %v5125 = vpop.f32.mrf.mxu0
    %v5126 = vadd.f32 %v5039, %v5125
    %v5127 = vand.u32 %v3650, 4294901760
    %5128 = vmatmul.f32.gmra.mxu0 %v5127
    %v5129 = vpop.f32.mrf.mxu0
    %v5130 = vadd.f32 %v5043, %v5129
    %v5131 = vand.u32 %v3653, 4294901760
    %5132 = vmatmul.f32.gmra.mxu0 %v5131
    %v5133 = vpop.f32.mrf.mxu0
    %v5134 = vadd.f32 %v5047, %v5133
    %v5135 = vand.u32 %v3656, 4294901760
    %5136 = vmatmul.f32.gmra.mxu0 %v5135
    %v5137 = vpop.f32.mrf.mxu0
    %v5138 = vadd.f32 %v5051, %v5137
    %5139 = vdwg.mxu0
    %5140 = vset.pattern.permute.xlu0 3
    %5141 = vperm.xlu0 %5140, %v86
    %v5142 = vpop.permute.xlu0 %5141
    %5143 = vset.pattern.permute.xlu0 3
    %5144 = vperm.xlu0 %5143, %v88
    %v5145 = vpop.permute.xlu0 %5144
    %5146 = vset.pattern.permute.xlu0 3
    %5147 = vperm.xlu0 %5146, %v90
    %v5148 = vpop.permute.xlu0 %5147
    %5149 = vset.pattern.permute.xlu0 3
    %5150 = vperm.xlu0 %5149, %v92
    %v5151 = vpop.permute.xlu0 %5150
    %5152 = vset.pattern.permute.xlu0 3
    %5153 = vperm.xlu0 %5152, %v94
    %v5154 = vpop.permute.xlu0 %5153
    %5155 = vset.pattern.permute.xlu0 3
    %5156 = vperm.xlu0 %5155, %v96
    %v5157 = vpop.permute.xlu0 %5156
    %5158 = vset.pattern.permute.xlu0 3
    %5159 = vperm.xlu0 %5158, %v98
    %v5160 = vpop.permute.xlu0 %5159
    %5161 = vset.pattern.permute.xlu0 3
    %5162 = vperm.xlu0 %5161, %v100
    %v5163 = vpop.permute.xlu0 %5162
    %5164 = vset.pattern.permute.xlu0 3
    %5165 = vperm.xlu0 %5164, %v102
    %v5166 = vpop.permute.xlu0 %5165
    %5167 = vset.pattern.permute.xlu0 3
    %5168 = vperm.xlu0 %5167, %v104
    %v5169 = vpop.permute.xlu0 %5168
    %5170 = vset.pattern.permute.xlu0 3
    %5171 = vperm.xlu0 %5170, %v106
    %v5172 = vpop.permute.xlu0 %5171
    %5173 = vset.pattern.permute.xlu0 3
    %5174 = vperm.xlu0 %5173, %v108
    %v5175 = vpop.permute.xlu0 %5174
    %5176 = vset.pattern.permute.xlu0 3
    %5177 = vperm.xlu0 %5176, %v110
    %v5178 = vpop.permute.xlu0 %5177
    %5179 = vset.pattern.permute.xlu0 3
    %5180 = vperm.xlu0 %5179, %v112
    %v5181 = vpop.permute.xlu0 %5180
    %5182 = vset.pattern.permute.xlu0 3
    %5183 = vperm.xlu0 %5182, %v114
    %v5184 = vpop.permute.xlu0 %5183
    %5185 = vset.pattern.permute.xlu0 3
    %5186 = vperm.xlu0 %5185, %v116
    %v5187 = vpop.permute.xlu0 %5186
    %vm5188 = vcmp.eq.s32.totalorder %v5142, %v35
    %vm5189 = vcmp.eq.s32.totalorder %v5142, %v36
    %vm5190 = vcmp.eq.s32.totalorder %v5145, %v35
    %vm5191 = vcmp.eq.s32.totalorder %v5145, %v36
    %vm5192 = vcmp.eq.s32.totalorder %v5148, %v35
    %vm5193 = vcmp.eq.s32.totalorder %v5148, %v36
    %vm5194 = vcmp.eq.s32.totalorder %v5151, %v35
    %vm5195 = vcmp.eq.s32.totalorder %v5151, %v36
    %vm5196 = vcmp.eq.s32.totalorder %v5154, %v35
    %vm5197 = vcmp.eq.s32.totalorder %v5154, %v36
    %vm5198 = vcmp.eq.s32.totalorder %v5157, %v35
    %vm5199 = vcmp.eq.s32.totalorder %v5157, %v36
    %vm5200 = vcmp.eq.s32.totalorder %v5160, %v35
    %vm5201 = vcmp.eq.s32.totalorder %v5160, %v36
    %vm5202 = vcmp.eq.s32.totalorder %v5163, %v35
    %vm5203 = vcmp.eq.s32.totalorder %v5163, %v36
    %vm5204 = vcmp.eq.s32.totalorder %v5166, %v35
    %vm5205 = vcmp.eq.s32.totalorder %v5166, %v36
    %vm5206 = vcmp.eq.s32.totalorder %v5169, %v35
    %vm5207 = vcmp.eq.s32.totalorder %v5169, %v36
    %vm5208 = vcmp.eq.s32.totalorder %v5172, %v35
    %vm5209 = vcmp.eq.s32.totalorder %v5172, %v36
    %vm5210 = vcmp.eq.s32.totalorder %v5175, %v35
    %vm5211 = vcmp.eq.s32.totalorder %v5175, %v36
    %vm5212 = vcmp.eq.s32.totalorder %v5178, %v35
    %vm5213 = vcmp.eq.s32.totalorder %v5178, %v36
    %vm5214 = vcmp.eq.s32.totalorder %v5181, %v35
    %vm5215 = vcmp.eq.s32.totalorder %v5181, %v36
    %vm5216 = vcmp.eq.s32.totalorder %v5184, %v35
    %vm5217 = vcmp.eq.s32.totalorder %v5184, %v36
    %vm5218 = vcmp.eq.s32.totalorder %v5187, %v35
    %vm5219 = vcmp.eq.s32.totalorder %v5187, %v36
    %v5220 = vsel %vm5188, 1, 0
    %v5221 = vsel %vm5189, 1, 0
    %v5222 = vsel %vm5190, 1, 0
    %v5223 = vsel %vm5191, 1, 0
    %v5224 = vsel %vm5192, 1, 0
    %v5225 = vsel %vm5193, 1, 0
    %v5226 = vsel %vm5194, 1, 0
    %v5227 = vsel %vm5195, 1, 0
    %v5228 = vsel %vm5196, 1, 0
    %v5229 = vsel %vm5197, 1, 0
    %v5230 = vsel %vm5198, 1, 0
    %v5231 = vsel %vm5199, 1, 0
    %v5232 = vsel %vm5200, 1, 0
    %v5233 = vsel %vm5201, 1, 0
    %v5234 = vsel %vm5202, 1, 0
    %v5235 = vsel %vm5203, 1, 0
    %v5236 = vsel %vm5204, 1, 0
    %v5237 = vsel %vm5205, 1, 0
    %v5238 = vsel %vm5206, 1, 0
    %v5239 = vsel %vm5207, 1, 0
    %v5240 = vsel %vm5208, 1, 0
    %v5241 = vsel %vm5209, 1, 0
    %v5242 = vsel %vm5210, 1, 0
    %v5243 = vsel %vm5211, 1, 0
    %v5244 = vsel %vm5212, 1, 0
    %v5245 = vsel %vm5213, 1, 0
    %v5246 = vsel %vm5214, 1, 0
    %v5247 = vsel %vm5215, 1, 0
    %v5248 = vsel %vm5216, 1, 0
    %v5249 = vsel %vm5217, 1, 0
    %v5250 = vsel %vm5218, 1, 0
    %v5251 = vsel %vm5219, 1, 0
    %v5252 = vcvt.s32.f32 %v5220
    %v5253 = vcvt.s32.f32 %v5221
    %v5254 = vcvt.s32.f32 %v5222
    %v5255 = vcvt.s32.f32 %v5223
    %v5256 = vcvt.s32.f32 %v5224
    %v5257 = vcvt.s32.f32 %v5225
    %v5258 = vcvt.s32.f32 %v5226
    %v5259 = vcvt.s32.f32 %v5227
    %v5260 = vcvt.s32.f32 %v5228
    %v5261 = vcvt.s32.f32 %v5229
    %v5262 = vcvt.s32.f32 %v5230
    %v5263 = vcvt.s32.f32 %v5231
    %v5264 = vcvt.s32.f32 %v5232
    %v5265 = vcvt.s32.f32 %v5233
    %v5266 = vcvt.s32.f32 %v5234
    %v5267 = vcvt.s32.f32 %v5235
    %v5268 = vcvt.s32.f32 %v5236
    %v5269 = vcvt.s32.f32 %v5237
    %v5270 = vcvt.s32.f32 %v5238
    %v5271 = vcvt.s32.f32 %v5239
    %v5272 = vcvt.s32.f32 %v5240
    %v5273 = vcvt.s32.f32 %v5241
    %v5274 = vcvt.s32.f32 %v5242
    %v5275 = vcvt.s32.f32 %v5243
    %v5276 = vcvt.s32.f32 %v5244
    %v5277 = vcvt.s32.f32 %v5245
    %v5278 = vcvt.s32.f32 %v5246
    %v5279 = vcvt.s32.f32 %v5247
    %v5280 = vcvt.s32.f32 %v5248
    %v5281 = vcvt.s32.f32 %v5249
    %v5282 = vcvt.s32.f32 %v5250
    %v5283 = vcvt.s32.f32 %v5251
    %v5285 = vsel %vm261, %v5253, 0
    %v5288 = vsel %vm261, %v5255, 0
    %v5291 = vsel %vm261, %v5257, 0
    %v5294 = vsel %vm261, %v5259, 0
    %v5297 = vsel %vm261, %v5261, 0
    %v5300 = vsel %vm261, %v5263, 0
    %v5303 = vsel %vm261, %v5265, 0
    %v5306 = vsel %vm261, %v5267, 0
    %v5309 = vsel %vm261, %v5269, 0
    %v5312 = vsel %vm261, %v5271, 0
    %v5315 = vsel %vm261, %v5273, 0
    %v5318 = vsel %vm261, %v5275, 0
    %v5321 = vsel %vm261, %v5277, 0
    %v5324 = vsel %vm261, %v5279, 0
    %v5327 = vsel %vm261, %v5281, 0
    %v5330 = vsel %vm261, %v5283, 0
    %v5332 = vand.u32 %v27, 4294901760
    %5333 = vmatpush.msra.mxu0 %v5332
    %v5334 = vand.u32 %v26, 4294901760
    %5335 = vmatpush.msra.mxu0 %v5334
    %v5336 = vand.u32 %v25, 4294901760
    %5337 = vmatpush.msra.mxu0 %v5336
    %v5338 = vand.u32 %v24, 4294901760
    %5339 = vmatpush.msra.mxu0 %v5338
    %v5340 = vand.u32 %v23, 4294901760
    %5341 = vmatpush.msra.mxu0 %v5340
    %v5342 = vand.u32 %v22, 4294901760
    %5343 = vmatpush.msra.mxu0 %v5342
    %v5344 = vand.u32 %v21, 4294901760
    %5345 = vmatpush.msra.mxu0 %v5344
    %v5346 = vand.u32 %v20, 4294901760
    %5347 = vmatpush.msra.mxu0 %v5346
    %v5348 = vand.u32 %v19, 4294901760
    %5349 = vmatpush.msra.mxu0 %v5348
    %v5350 = vand.u32 %v18, 4294901760
    %5351 = vmatpush.msra.mxu0 %v5350
    %v5352 = vand.u32 %v17, 4294901760
    %5353 = vmatpush.msra.mxu0 %v5352
    %v5354 = vand.u32 %v16, 4294901760
    %5355 = vmatpush.msra.mxu0 %v5354
    %v5356 = vand.u32 %v15, 4294901760
    %5357 = vmatpush.msra.mxu0 %v5356
    %v5358 = vand.u32 %v14, 4294901760
    %5359 = vmatpush.msra.mxu0 %v5358
    %v5360 = vand.u32 %v13, 4294901760
    %5361 = vmatpush.msra.mxu0 %v5360
    %v5362 = vand.u32 %v12, 4294901760
    %5363 = vmatpush.msra.mxu0 %v5362
    %v5364 = vand.u32 %v5252, 4294901760
    %v5365 = vsub.f32 %v5252, %v5364
    %v5366 = vand.u32 %v5365, 4294901760
    %v5367 = vsub.f32 %v5365, %v5366
    %v5368 = vand.u32 %v5367, 4294901760
    %5369 = vmatmul.f32.gmra.mxu0 %v5368
    %v5370 = vpop.f32.mrf.mxu0
    %v5371 = vadd.f32 0.0, %v5370
    %v5372 = vand.u32 %v5254, 4294901760
    %v5373 = vsub.f32 %v5254, %v5372
    %v5374 = vand.u32 %v5373, 4294901760
    %v5375 = vsub.f32 %v5373, %v5374
    %v5376 = vand.u32 %v5375, 4294901760
    %5377 = vmatmul.f32.gmra.mxu0 %v5376
    %v5378 = vpop.f32.mrf.mxu0
    %v5379 = vadd.f32 0.0, %v5378
    %v5380 = vand.u32 %v5256, 4294901760
    %v5381 = vsub.f32 %v5256, %v5380
    %v5382 = vand.u32 %v5381, 4294901760
    %v5383 = vsub.f32 %v5381, %v5382
    %v5384 = vand.u32 %v5383, 4294901760
    %5385 = vmatmul.f32.gmra.mxu0 %v5384
    %v5386 = vpop.f32.mrf.mxu0
    %v5387 = vadd.f32 0.0, %v5386
    %v5388 = vand.u32 %v5258, 4294901760
    %v5389 = vsub.f32 %v5258, %v5388
    %v5390 = vand.u32 %v5389, 4294901760
    %v5391 = vsub.f32 %v5389, %v5390
    %v5392 = vand.u32 %v5391, 4294901760
    %5393 = vmatmul.f32.gmra.mxu0 %v5392
    %v5394 = vpop.f32.mrf.mxu0
    %v5395 = vadd.f32 0.0, %v5394
    %v5396 = vand.u32 %v5260, 4294901760
    %v5397 = vsub.f32 %v5260, %v5396
    %v5398 = vand.u32 %v5397, 4294901760
    %v5399 = vsub.f32 %v5397, %v5398
    %v5400 = vand.u32 %v5399, 4294901760
    %5401 = vmatmul.f32.gmra.mxu0 %v5400
    %v5402 = vpop.f32.mrf.mxu0
    %v5403 = vadd.f32 0.0, %v5402
    %v5404 = vand.u32 %v5262, 4294901760
    %v5405 = vsub.f32 %v5262, %v5404
    %v5406 = vand.u32 %v5405, 4294901760
    %v5407 = vsub.f32 %v5405, %v5406
    %v5408 = vand.u32 %v5407, 4294901760
    %5409 = vmatmul.f32.gmra.mxu0 %v5408
    %v5410 = vpop.f32.mrf.mxu0
    %v5411 = vadd.f32 0.0, %v5410
    %v5412 = vand.u32 %v5264, 4294901760
    %v5413 = vsub.f32 %v5264, %v5412
    %v5414 = vand.u32 %v5413, 4294901760
    %v5415 = vsub.f32 %v5413, %v5414
    %v5416 = vand.u32 %v5415, 4294901760
    %5417 = vmatmul.f32.gmra.mxu0 %v5416
    %v5418 = vpop.f32.mrf.mxu0
    %v5419 = vadd.f32 0.0, %v5418
    %v5420 = vand.u32 %v5266, 4294901760
    %v5421 = vsub.f32 %v5266, %v5420
    %v5422 = vand.u32 %v5421, 4294901760
    %v5423 = vsub.f32 %v5421, %v5422
    %v5424 = vand.u32 %v5423, 4294901760
    %5425 = vmatmul.f32.gmra.mxu0 %v5424
    %v5426 = vpop.f32.mrf.mxu0
    %v5427 = vadd.f32 0.0, %v5426
    %v5428 = vand.u32 %v5268, 4294901760
    %v5429 = vsub.f32 %v5268, %v5428
    %v5430 = vand.u32 %v5429, 4294901760
    %v5431 = vsub.f32 %v5429, %v5430
    %v5432 = vand.u32 %v5431, 4294901760
    %5433 = vmatmul.f32.gmra.mxu0 %v5432
    %v5434 = vpop.f32.mrf.mxu0
    %v5435 = vadd.f32 0.0, %v5434
    %v5436 = vand.u32 %v5270, 4294901760
    %v5437 = vsub.f32 %v5270, %v5436
    %v5438 = vand.u32 %v5437, 4294901760
    %v5439 = vsub.f32 %v5437, %v5438
    %v5440 = vand.u32 %v5439, 4294901760
    %5441 = vmatmul.f32.gmra.mxu0 %v5440
    %v5442 = vpop.f32.mrf.mxu0
    %v5443 = vadd.f32 0.0, %v5442
    %v5444 = vand.u32 %v5272, 4294901760
    %v5445 = vsub.f32 %v5272, %v5444
    %v5446 = vand.u32 %v5445, 4294901760
    %v5447 = vsub.f32 %v5445, %v5446
    %v5448 = vand.u32 %v5447, 4294901760
    %5449 = vmatmul.f32.gmra.mxu0 %v5448
    %v5450 = vpop.f32.mrf.mxu0
    %v5451 = vadd.f32 0.0, %v5450
    %v5452 = vand.u32 %v5274, 4294901760
    %v5453 = vsub.f32 %v5274, %v5452
    %v5454 = vand.u32 %v5453, 4294901760
    %v5455 = vsub.f32 %v5453, %v5454
    %v5456 = vand.u32 %v5455, 4294901760
    %5457 = vmatmul.f32.gmra.mxu0 %v5456
    %v5458 = vpop.f32.mrf.mxu0
    %v5459 = vadd.f32 0.0, %v5458
    %v5460 = vand.u32 %v5276, 4294901760
    %v5461 = vsub.f32 %v5276, %v5460
    %v5462 = vand.u32 %v5461, 4294901760
    %v5463 = vsub.f32 %v5461, %v5462
    %v5464 = vand.u32 %v5463, 4294901760
    %5465 = vmatmul.f32.gmra.mxu0 %v5464
    %v5466 = vpop.f32.mrf.mxu0
    %v5467 = vadd.f32 0.0, %v5466
    %v5468 = vand.u32 %v5278, 4294901760
    %v5469 = vsub.f32 %v5278, %v5468
    %v5470 = vand.u32 %v5469, 4294901760
    %v5471 = vsub.f32 %v5469, %v5470
    %v5472 = vand.u32 %v5471, 4294901760
    %5473 = vmatmul.f32.gmra.mxu0 %v5472
    %v5474 = vpop.f32.mrf.mxu0
    %v5475 = vadd.f32 0.0, %v5474
    %v5476 = vand.u32 %v5280, 4294901760
    %v5477 = vsub.f32 %v5280, %v5476
    %v5478 = vand.u32 %v5477, 4294901760
    %v5479 = vsub.f32 %v5477, %v5478
    %v5480 = vand.u32 %v5479, 4294901760
    %5481 = vmatmul.f32.gmra.mxu0 %v5480
    %v5482 = vpop.f32.mrf.mxu0
    %v5483 = vadd.f32 0.0, %v5482
    %v5484 = vand.u32 %v5282, 4294901760
    %v5485 = vsub.f32 %v5282, %v5484
    %v5486 = vand.u32 %v5485, 4294901760
    %v5487 = vsub.f32 %v5485, %v5486
    %v5488 = vand.u32 %v5487, 4294901760
    %5489 = vmatmul.f32.gmra.mxu0 %v5488
    %v5490 = vpop.f32.mrf.mxu0
    %v5491 = vadd.f32 0.0, %v5490
    %5492 = vdwg.mxu0
    %v5493 = vand.u32 %v27, 4294901760
    %v5494 = vsub.f32 %v27, %v5493
    %v5495 = vand.u32 %v5494, 4294901760
    %v5496 = vsub.f32 %v5494, %v5495
    %v5497 = vand.u32 %v5496, 4294901760
    %5498 = vmatpush.msra.mxu0 %v5497
    %v5499 = vand.u32 %v26, 4294901760
    %v5500 = vsub.f32 %v26, %v5499
    %v5501 = vand.u32 %v5500, 4294901760
    %v5502 = vsub.f32 %v5500, %v5501
    %v5503 = vand.u32 %v5502, 4294901760
    %5504 = vmatpush.msra.mxu0 %v5503
    %v5505 = vand.u32 %v25, 4294901760
    %v5506 = vsub.f32 %v25, %v5505
    %v5507 = vand.u32 %v5506, 4294901760
    %v5508 = vsub.f32 %v5506, %v5507
    %v5509 = vand.u32 %v5508, 4294901760
    %5510 = vmatpush.msra.mxu0 %v5509
    %v5511 = vand.u32 %v24, 4294901760
    %v5512 = vsub.f32 %v24, %v5511
    %v5513 = vand.u32 %v5512, 4294901760
    %v5514 = vsub.f32 %v5512, %v5513
    %v5515 = vand.u32 %v5514, 4294901760
    %5516 = vmatpush.msra.mxu0 %v5515
    %v5517 = vand.u32 %v23, 4294901760
    %v5518 = vsub.f32 %v23, %v5517
    %v5519 = vand.u32 %v5518, 4294901760
    %v5520 = vsub.f32 %v5518, %v5519
    %v5521 = vand.u32 %v5520, 4294901760
    %5522 = vmatpush.msra.mxu0 %v5521
    %v5523 = vand.u32 %v22, 4294901760
    %v5524 = vsub.f32 %v22, %v5523
    %v5525 = vand.u32 %v5524, 4294901760
    %v5526 = vsub.f32 %v5524, %v5525
    %v5527 = vand.u32 %v5526, 4294901760
    %5528 = vmatpush.msra.mxu0 %v5527
    %v5529 = vand.u32 %v21, 4294901760
    %v5530 = vsub.f32 %v21, %v5529
    %v5531 = vand.u32 %v5530, 4294901760
    %v5532 = vsub.f32 %v5530, %v5531
    %v5533 = vand.u32 %v5532, 4294901760
    %5534 = vmatpush.msra.mxu0 %v5533
    %v5535 = vand.u32 %v20, 4294901760
    %v5536 = vsub.f32 %v20, %v5535
    %v5537 = vand.u32 %v5536, 4294901760
    %v5538 = vsub.f32 %v5536, %v5537
    %v5539 = vand.u32 %v5538, 4294901760
    %5540 = vmatpush.msra.mxu0 %v5539
    %v5541 = vand.u32 %v19, 4294901760
    %v5542 = vsub.f32 %v19, %v5541
    %v5543 = vand.u32 %v5542, 4294901760
    %v5544 = vsub.f32 %v5542, %v5543
    %v5545 = vand.u32 %v5544, 4294901760
    %5546 = vmatpush.msra.mxu0 %v5545
    %v5547 = vand.u32 %v18, 4294901760
    %v5548 = vsub.f32 %v18, %v5547
    %v5549 = vand.u32 %v5548, 4294901760
    %v5550 = vsub.f32 %v5548, %v5549
    %v5551 = vand.u32 %v5550, 4294901760
    %5552 = vmatpush.msra.mxu0 %v5551
    %v5553 = vand.u32 %v17, 4294901760
    %v5554 = vsub.f32 %v17, %v5553
    %v5555 = vand.u32 %v5554, 4294901760
    %v5556 = vsub.f32 %v5554, %v5555
    %v5557 = vand.u32 %v5556, 4294901760
    %5558 = vmatpush.msra.mxu0 %v5557
    %v5559 = vand.u32 %v16, 4294901760
    %v5560 = vsub.f32 %v16, %v5559
    %v5561 = vand.u32 %v5560, 4294901760
    %v5562 = vsub.f32 %v5560, %v5561
    %v5563 = vand.u32 %v5562, 4294901760
    %5564 = vmatpush.msra.mxu0 %v5563
    %v5565 = vand.u32 %v15, 4294901760
    %v5566 = vsub.f32 %v15, %v5565
    %v5567 = vand.u32 %v5566, 4294901760
    %v5568 = vsub.f32 %v5566, %v5567
    %v5569 = vand.u32 %v5568, 4294901760
    %5570 = vmatpush.msra.mxu0 %v5569
    %v5571 = vand.u32 %v14, 4294901760
    %v5572 = vsub.f32 %v14, %v5571
    %v5573 = vand.u32 %v5572, 4294901760
    %v5574 = vsub.f32 %v5572, %v5573
    %v5575 = vand.u32 %v5574, 4294901760
    %5576 = vmatpush.msra.mxu0 %v5575
    %v5577 = vand.u32 %v13, 4294901760
    %v5578 = vsub.f32 %v13, %v5577
    %v5579 = vand.u32 %v5578, 4294901760
    %v5580 = vsub.f32 %v5578, %v5579
    %v5581 = vand.u32 %v5580, 4294901760
    %5582 = vmatpush.msra.mxu0 %v5581
    %v5583 = vand.u32 %v12, 4294901760
    %v5584 = vsub.f32 %v12, %v5583
    %v5585 = vand.u32 %v5584, 4294901760
    %v5586 = vsub.f32 %v5584, %v5585
    %v5587 = vand.u32 %v5586, 4294901760
    %5588 = vmatpush.msra.mxu0 %v5587
    %v5589 = vand.u32 %v5252, 4294901760
    %5590 = vmatmul.f32.gmra.mxu0 %v5589
    %v5591 = vpop.f32.mrf.mxu0
    %v5592 = vadd.f32 %v5371, %v5591
    %v5593 = vand.u32 %v5254, 4294901760
    %5594 = vmatmul.f32.gmra.mxu0 %v5593
    %v5595 = vpop.f32.mrf.mxu0
    %v5596 = vadd.f32 %v5379, %v5595
    %v5597 = vand.u32 %v5256, 4294901760
    %5598 = vmatmul.f32.gmra.mxu0 %v5597
    %v5599 = vpop.f32.mrf.mxu0
    %v5600 = vadd.f32 %v5387, %v5599
    %v5601 = vand.u32 %v5258, 4294901760
    %5602 = vmatmul.f32.gmra.mxu0 %v5601
    %v5603 = vpop.f32.mrf.mxu0
    %v5604 = vadd.f32 %v5395, %v5603
    %v5605 = vand.u32 %v5260, 4294901760
    %5606 = vmatmul.f32.gmra.mxu0 %v5605
    %v5607 = vpop.f32.mrf.mxu0
    %v5608 = vadd.f32 %v5403, %v5607
    %v5609 = vand.u32 %v5262, 4294901760
    %5610 = vmatmul.f32.gmra.mxu0 %v5609
    %v5611 = vpop.f32.mrf.mxu0
    %v5612 = vadd.f32 %v5411, %v5611
    %v5613 = vand.u32 %v5264, 4294901760
    %5614 = vmatmul.f32.gmra.mxu0 %v5613
    %v5615 = vpop.f32.mrf.mxu0
    %v5616 = vadd.f32 %v5419, %v5615
    %v5617 = vand.u32 %v5266, 4294901760
    %5618 = vmatmul.f32.gmra.mxu0 %v5617
    %v5619 = vpop.f32.mrf.mxu0
    %v5620 = vadd.f32 %v5427, %v5619
    %v5621 = vand.u32 %v5268, 4294901760
    %5622 = vmatmul.f32.gmra.mxu0 %v5621
    %v5623 = vpop.f32.mrf.mxu0
    %v5624 = vadd.f32 %v5435, %v5623
    %v5625 = vand.u32 %v5270, 4294901760
    %5626 = vmatmul.f32.gmra.mxu0 %v5625
    %v5627 = vpop.f32.mrf.mxu0
    %v5628 = vadd.f32 %v5443, %v5627
    %v5629 = vand.u32 %v5272, 4294901760
    %5630 = vmatmul.f32.gmra.mxu0 %v5629
    %v5631 = vpop.f32.mrf.mxu0
    %v5632 = vadd.f32 %v5451, %v5631
    %v5633 = vand.u32 %v5274, 4294901760
    %5634 = vmatmul.f32.gmra.mxu0 %v5633
    %v5635 = vpop.f32.mrf.mxu0
    %v5636 = vadd.f32 %v5459, %v5635
    %v5637 = vand.u32 %v5276, 4294901760
    %5638 = vmatmul.f32.gmra.mxu0 %v5637
    %v5639 = vpop.f32.mrf.mxu0
    %v5640 = vadd.f32 %v5467, %v5639
    %v5641 = vand.u32 %v5278, 4294901760
    %5642 = vmatmul.f32.gmra.mxu0 %v5641
    %v5643 = vpop.f32.mrf.mxu0
    %v5644 = vadd.f32 %v5475, %v5643
    %v5645 = vand.u32 %v5280, 4294901760
    %5646 = vmatmul.f32.gmra.mxu0 %v5645
    %v5647 = vpop.f32.mrf.mxu0
    %v5648 = vadd.f32 %v5483, %v5647
    %v5649 = vand.u32 %v5282, 4294901760
    %5650 = vmatmul.f32.gmra.mxu0 %v5649
    %v5651 = vpop.f32.mrf.mxu0
    %v5652 = vadd.f32 %v5491, %v5651
    %5653 = vdwg.mxu0
    %v5654 = vand.u32 %v27, 4294901760
    %v5655 = vsub.f32 %v27, %v5654
    %5656 = vmatpush.msra.mxu0 %v5655
    %v5657 = vand.u32 %v26, 4294901760
    %v5658 = vsub.f32 %v26, %v5657
    %5659 = vmatpush.msra.mxu0 %v5658
    %v5660 = vand.u32 %v25, 4294901760
    %v5661 = vsub.f32 %v25, %v5660
    %5662 = vmatpush.msra.mxu0 %v5661
    %v5663 = vand.u32 %v24, 4294901760
    %v5664 = vsub.f32 %v24, %v5663
    %5665 = vmatpush.msra.mxu0 %v5664
    %v5666 = vand.u32 %v23, 4294901760
    %v5667 = vsub.f32 %v23, %v5666
    %5668 = vmatpush.msra.mxu0 %v5667
    %v5669 = vand.u32 %v22, 4294901760
    %v5670 = vsub.f32 %v22, %v5669
    %5671 = vmatpush.msra.mxu0 %v5670
    %v5672 = vand.u32 %v21, 4294901760
    %v5673 = vsub.f32 %v21, %v5672
    %5674 = vmatpush.msra.mxu0 %v5673
    %v5675 = vand.u32 %v20, 4294901760
    %v5676 = vsub.f32 %v20, %v5675
    %5677 = vmatpush.msra.mxu0 %v5676
    %v5678 = vand.u32 %v19, 4294901760
    %v5679 = vsub.f32 %v19, %v5678
    %5680 = vmatpush.msra.mxu0 %v5679
    %v5681 = vand.u32 %v18, 4294901760
    %v5682 = vsub.f32 %v18, %v5681
    %5683 = vmatpush.msra.mxu0 %v5682
    %v5684 = vand.u32 %v17, 4294901760
    %v5685 = vsub.f32 %v17, %v5684
    %5686 = vmatpush.msra.mxu0 %v5685
    %v5687 = vand.u32 %v16, 4294901760
    %v5688 = vsub.f32 %v16, %v5687
    %5689 = vmatpush.msra.mxu0 %v5688
    %v5690 = vand.u32 %v15, 4294901760
    %v5691 = vsub.f32 %v15, %v5690
    %5692 = vmatpush.msra.mxu0 %v5691
    %v5693 = vand.u32 %v14, 4294901760
    %v5694 = vsub.f32 %v14, %v5693
    %5695 = vmatpush.msra.mxu0 %v5694
    %v5696 = vand.u32 %v13, 4294901760
    %v5697 = vsub.f32 %v13, %v5696
    %5698 = vmatpush.msra.mxu0 %v5697
    %v5699 = vand.u32 %v12, 4294901760
    %v5700 = vsub.f32 %v12, %v5699
    %5701 = vmatpush.msra.mxu0 %v5700
    %v5702 = vand.u32 %v5252, 4294901760
    %v5703 = vsub.f32 %v5252, %v5702
    %5704 = vmatmul.f32.gmra.mxu0 %v5703
    %v5705 = vpop.f32.mrf.mxu0
    %v5706 = vadd.f32 %v5592, %v5705
    %v5707 = vand.u32 %v5254, 4294901760
    %v5708 = vsub.f32 %v5254, %v5707
    %5709 = vmatmul.f32.gmra.mxu0 %v5708
    %v5710 = vpop.f32.mrf.mxu0
    %v5711 = vadd.f32 %v5596, %v5710
    %v5712 = vand.u32 %v5256, 4294901760
    %v5713 = vsub.f32 %v5256, %v5712
    %5714 = vmatmul.f32.gmra.mxu0 %v5713
    %v5715 = vpop.f32.mrf.mxu0
    %v5716 = vadd.f32 %v5600, %v5715
    %v5717 = vand.u32 %v5258, 4294901760
    %v5718 = vsub.f32 %v5258, %v5717
    %5719 = vmatmul.f32.gmra.mxu0 %v5718
    %v5720 = vpop.f32.mrf.mxu0
    %v5721 = vadd.f32 %v5604, %v5720
    %v5722 = vand.u32 %v5260, 4294901760
    %v5723 = vsub.f32 %v5260, %v5722
    %5724 = vmatmul.f32.gmra.mxu0 %v5723
    %v5725 = vpop.f32.mrf.mxu0
    %v5726 = vadd.f32 %v5608, %v5725
    %v5727 = vand.u32 %v5262, 4294901760
    %v5728 = vsub.f32 %v5262, %v5727
    %5729 = vmatmul.f32.gmra.mxu0 %v5728
    %v5730 = vpop.f32.mrf.mxu0
    %v5731 = vadd.f32 %v5612, %v5730
    %v5732 = vand.u32 %v5264, 4294901760
    %v5733 = vsub.f32 %v5264, %v5732
    %5734 = vmatmul.f32.gmra.mxu0 %v5733
    %v5735 = vpop.f32.mrf.mxu0
    %v5736 = vadd.f32 %v5616, %v5735
    %v5737 = vand.u32 %v5266, 4294901760
    %v5738 = vsub.f32 %v5266, %v5737
    %5739 = vmatmul.f32.gmra.mxu0 %v5738
    %v5740 = vpop.f32.mrf.mxu0
    %v5741 = vadd.f32 %v5620, %v5740
    %v5742 = vand.u32 %v5268, 4294901760
    %v5743 = vsub.f32 %v5268, %v5742
    %5744 = vmatmul.f32.gmra.mxu0 %v5743
    %v5745 = vpop.f32.mrf.mxu0
    %v5746 = vadd.f32 %v5624, %v5745
    %v5747 = vand.u32 %v5270, 4294901760
    %v5748 = vsub.f32 %v5270, %v5747
    %5749 = vmatmul.f32.gmra.mxu0 %v5748
    %v5750 = vpop.f32.mrf.mxu0
    %v5751 = vadd.f32 %v5628, %v5750
    %v5752 = vand.u32 %v5272, 4294901760
    %v5753 = vsub.f32 %v5272, %v5752
    %5754 = vmatmul.f32.gmra.mxu0 %v5753
    %v5755 = vpop.f32.mrf.mxu0
    %v5756 = vadd.f32 %v5632, %v5755
    %v5757 = vand.u32 %v5274, 4294901760
    %v5758 = vsub.f32 %v5274, %v5757
    %5759 = vmatmul.f32.gmra.mxu0 %v5758
    %v5760 = vpop.f32.mrf.mxu0
    %v5761 = vadd.f32 %v5636, %v5760
    %v5762 = vand.u32 %v5276, 4294901760
    %v5763 = vsub.f32 %v5276, %v5762
    %5764 = vmatmul.f32.gmra.mxu0 %v5763
    %v5765 = vpop.f32.mrf.mxu0
    %v5766 = vadd.f32 %v5640, %v5765
    %v5767 = vand.u32 %v5278, 4294901760
    %v5768 = vsub.f32 %v5278, %v5767
    %5769 = vmatmul.f32.gmra.mxu0 %v5768
    %v5770 = vpop.f32.mrf.mxu0
    %v5771 = vadd.f32 %v5644, %v5770
    %v5772 = vand.u32 %v5280, 4294901760
    %v5773 = vsub.f32 %v5280, %v5772
    %5774 = vmatmul.f32.gmra.mxu0 %v5773
    %v5775 = vpop.f32.mrf.mxu0
    %v5776 = vadd.f32 %v5648, %v5775
    %v5777 = vand.u32 %v5282, 4294901760
    %v5778 = vsub.f32 %v5282, %v5777
    %5779 = vmatmul.f32.gmra.mxu0 %v5778
    %v5780 = vpop.f32.mrf.mxu0
    %v5781 = vadd.f32 %v5652, %v5780
    %5782 = vdwg.mxu0
    %v5783 = vand.u32 %v27, 4294901760
    %5784 = vmatpush.msra.mxu0 %v5783
    %v5785 = vand.u32 %v26, 4294901760
    %5786 = vmatpush.msra.mxu0 %v5785
    %v5787 = vand.u32 %v25, 4294901760
    %5788 = vmatpush.msra.mxu0 %v5787
    %v5789 = vand.u32 %v24, 4294901760
    %5790 = vmatpush.msra.mxu0 %v5789
    %v5791 = vand.u32 %v23, 4294901760
    %5792 = vmatpush.msra.mxu0 %v5791
    %v5793 = vand.u32 %v22, 4294901760
    %5794 = vmatpush.msra.mxu0 %v5793
    %v5795 = vand.u32 %v21, 4294901760
    %5796 = vmatpush.msra.mxu0 %v5795
    %v5797 = vand.u32 %v20, 4294901760
    %5798 = vmatpush.msra.mxu0 %v5797
    %v5799 = vand.u32 %v19, 4294901760
    %5800 = vmatpush.msra.mxu0 %v5799
    %v5801 = vand.u32 %v18, 4294901760
    %5802 = vmatpush.msra.mxu0 %v5801
    %v5803 = vand.u32 %v17, 4294901760
    %5804 = vmatpush.msra.mxu0 %v5803
    %v5805 = vand.u32 %v16, 4294901760
    %5806 = vmatpush.msra.mxu0 %v5805
    %v5807 = vand.u32 %v15, 4294901760
    %5808 = vmatpush.msra.mxu0 %v5807
    %v5809 = vand.u32 %v14, 4294901760
    %5810 = vmatpush.msra.mxu0 %v5809
    %v5811 = vand.u32 %v13, 4294901760
    %5812 = vmatpush.msra.mxu0 %v5811
    %v5813 = vand.u32 %v12, 4294901760
    %5814 = vmatpush.msra.mxu0 %v5813
    %v5815 = vand.u32 %v5252, 4294901760
    %v5816 = vsub.f32 %v5252, %v5815
    %v5817 = vand.u32 %v5816, 4294901760
    %5818 = vmatmul.f32.gmra.mxu0 %v5817
    %v5819 = vpop.f32.mrf.mxu0
    %v5820 = vadd.f32 %v5706, %v5819
    %v5821 = vand.u32 %v5254, 4294901760
    %v5822 = vsub.f32 %v5254, %v5821
    %v5823 = vand.u32 %v5822, 4294901760
    %5824 = vmatmul.f32.gmra.mxu0 %v5823
    %v5825 = vpop.f32.mrf.mxu0
    %v5826 = vadd.f32 %v5711, %v5825
    %v5827 = vand.u32 %v5256, 4294901760
    %v5828 = vsub.f32 %v5256, %v5827
    %v5829 = vand.u32 %v5828, 4294901760
    %5830 = vmatmul.f32.gmra.mxu0 %v5829
    %v5831 = vpop.f32.mrf.mxu0
    %v5832 = vadd.f32 %v5716, %v5831
    %v5833 = vand.u32 %v5258, 4294901760
    %v5834 = vsub.f32 %v5258, %v5833
    %v5835 = vand.u32 %v5834, 4294901760
    %5836 = vmatmul.f32.gmra.mxu0 %v5835
    %v5837 = vpop.f32.mrf.mxu0
    %v5838 = vadd.f32 %v5721, %v5837
    %v5839 = vand.u32 %v5260, 4294901760
    %v5840 = vsub.f32 %v5260, %v5839
    %v5841 = vand.u32 %v5840, 4294901760
    %5842 = vmatmul.f32.gmra.mxu0 %v5841
    %v5843 = vpop.f32.mrf.mxu0
    %v5844 = vadd.f32 %v5726, %v5843
    %v5845 = vand.u32 %v5262, 4294901760
    %v5846 = vsub.f32 %v5262, %v5845
    %v5847 = vand.u32 %v5846, 4294901760
    %5848 = vmatmul.f32.gmra.mxu0 %v5847
    %v5849 = vpop.f32.mrf.mxu0
    %v5850 = vadd.f32 %v5731, %v5849
    %v5851 = vand.u32 %v5264, 4294901760
    %v5852 = vsub.f32 %v5264, %v5851
    %v5853 = vand.u32 %v5852, 4294901760
    %5854 = vmatmul.f32.gmra.mxu0 %v5853
    %v5855 = vpop.f32.mrf.mxu0
    %v5856 = vadd.f32 %v5736, %v5855
    %v5857 = vand.u32 %v5266, 4294901760
    %v5858 = vsub.f32 %v5266, %v5857
    %v5859 = vand.u32 %v5858, 4294901760
    %5860 = vmatmul.f32.gmra.mxu0 %v5859
    %v5861 = vpop.f32.mrf.mxu0
    %v5862 = vadd.f32 %v5741, %v5861
    %v5863 = vand.u32 %v5268, 4294901760
    %v5864 = vsub.f32 %v5268, %v5863
    %v5865 = vand.u32 %v5864, 4294901760
    %5866 = vmatmul.f32.gmra.mxu0 %v5865
    %v5867 = vpop.f32.mrf.mxu0
    %v5868 = vadd.f32 %v5746, %v5867
    %v5869 = vand.u32 %v5270, 4294901760
    %v5870 = vsub.f32 %v5270, %v5869
    %v5871 = vand.u32 %v5870, 4294901760
    %5872 = vmatmul.f32.gmra.mxu0 %v5871
    %v5873 = vpop.f32.mrf.mxu0
    %v5874 = vadd.f32 %v5751, %v5873
    %v5875 = vand.u32 %v5272, 4294901760
    %v5876 = vsub.f32 %v5272, %v5875
    %v5877 = vand.u32 %v5876, 4294901760
    %5878 = vmatmul.f32.gmra.mxu0 %v5877
    %v5879 = vpop.f32.mrf.mxu0
    %v5880 = vadd.f32 %v5756, %v5879
    %v5881 = vand.u32 %v5274, 4294901760
    %v5882 = vsub.f32 %v5274, %v5881
    %v5883 = vand.u32 %v5882, 4294901760
    %5884 = vmatmul.f32.gmra.mxu0 %v5883
    %v5885 = vpop.f32.mrf.mxu0
    %v5886 = vadd.f32 %v5761, %v5885
    %v5887 = vand.u32 %v5276, 4294901760
    %v5888 = vsub.f32 %v5276, %v5887
    %v5889 = vand.u32 %v5888, 4294901760
    %5890 = vmatmul.f32.gmra.mxu0 %v5889
    %v5891 = vpop.f32.mrf.mxu0
    %v5892 = vadd.f32 %v5766, %v5891
    %v5893 = vand.u32 %v5278, 4294901760
    %v5894 = vsub.f32 %v5278, %v5893
    %v5895 = vand.u32 %v5894, 4294901760
    %5896 = vmatmul.f32.gmra.mxu0 %v5895
    %v5897 = vpop.f32.mrf.mxu0
    %v5898 = vadd.f32 %v5771, %v5897
    %v5899 = vand.u32 %v5280, 4294901760
    %v5900 = vsub.f32 %v5280, %v5899
    %v5901 = vand.u32 %v5900, 4294901760
    %5902 = vmatmul.f32.gmra.mxu0 %v5901
    %v5903 = vpop.f32.mrf.mxu0
    %v5904 = vadd.f32 %v5776, %v5903
    %v5905 = vand.u32 %v5282, 4294901760
    %v5906 = vsub.f32 %v5282, %v5905
    %v5907 = vand.u32 %v5906, 4294901760
    %5908 = vmatmul.f32.gmra.mxu0 %v5907
    %v5909 = vpop.f32.mrf.mxu0
    %v5910 = vadd.f32 %v5781, %v5909
    %5911 = vdwg.mxu0
    %v5912 = vand.u32 %v27, 4294901760
    %v5913 = vsub.f32 %v27, %v5912
    %v5914 = vand.u32 %v5913, 4294901760
    %5915 = vmatpush.msra.mxu0 %v5914
    %v5916 = vand.u32 %v26, 4294901760
    %v5917 = vsub.f32 %v26, %v5916
    %v5918 = vand.u32 %v5917, 4294901760
    %5919 = vmatpush.msra.mxu0 %v5918
    %v5920 = vand.u32 %v25, 4294901760
    %v5921 = vsub.f32 %v25, %v5920
    %v5922 = vand.u32 %v5921, 4294901760
    %5923 = vmatpush.msra.mxu0 %v5922
    %v5924 = vand.u32 %v24, 4294901760
    %v5925 = vsub.f32 %v24, %v5924
    %v5926 = vand.u32 %v5925, 4294901760
    %5927 = vmatpush.msra.mxu0 %v5926
    %v5928 = vand.u32 %v23, 4294901760
    %v5929 = vsub.f32 %v23, %v5928
    %v5930 = vand.u32 %v5929, 4294901760
    %5931 = vmatpush.msra.mxu0 %v5930
    %v5932 = vand.u32 %v22, 4294901760
    %v5933 = vsub.f32 %v22, %v5932
    %v5934 = vand.u32 %v5933, 4294901760
    %5935 = vmatpush.msra.mxu0 %v5934
    %v5936 = vand.u32 %v21, 4294901760
    %v5937 = vsub.f32 %v21, %v5936
    %v5938 = vand.u32 %v5937, 4294901760
    %5939 = vmatpush.msra.mxu0 %v5938
    %v5940 = vand.u32 %v20, 4294901760
    %v5941 = vsub.f32 %v20, %v5940
    %v5942 = vand.u32 %v5941, 4294901760
    %5943 = vmatpush.msra.mxu0 %v5942
    %v5944 = vand.u32 %v19, 4294901760
    %v5945 = vsub.f32 %v19, %v5944
    %v5946 = vand.u32 %v5945, 4294901760
    %5947 = vmatpush.msra.mxu0 %v5946
    %v5948 = vand.u32 %v18, 4294901760
    %v5949 = vsub.f32 %v18, %v5948
    %v5950 = vand.u32 %v5949, 4294901760
    %5951 = vmatpush.msra.mxu0 %v5950
    %v5952 = vand.u32 %v17, 4294901760
    %v5953 = vsub.f32 %v17, %v5952
    %v5954 = vand.u32 %v5953, 4294901760
    %5955 = vmatpush.msra.mxu0 %v5954
    %v5956 = vand.u32 %v16, 4294901760
    %v5957 = vsub.f32 %v16, %v5956
    %v5958 = vand.u32 %v5957, 4294901760
    %5959 = vmatpush.msra.mxu0 %v5958
    %v5960 = vand.u32 %v15, 4294901760
    %v5961 = vsub.f32 %v15, %v5960
    %v5962 = vand.u32 %v5961, 4294901760
    %5963 = vmatpush.msra.mxu0 %v5962
    %v5964 = vand.u32 %v14, 4294901760
    %v5965 = vsub.f32 %v14, %v5964
    %v5966 = vand.u32 %v5965, 4294901760
    %5967 = vmatpush.msra.mxu0 %v5966
    %v5968 = vand.u32 %v13, 4294901760
    %v5969 = vsub.f32 %v13, %v5968
    %v5970 = vand.u32 %v5969, 4294901760
    %5971 = vmatpush.msra.mxu0 %v5970
    %v5972 = vand.u32 %v12, 4294901760
    %v5973 = vsub.f32 %v12, %v5972
    %v5974 = vand.u32 %v5973, 4294901760
    %5975 = vmatpush.msra.mxu0 %v5974
    %v5976 = vand.u32 %v5252, 4294901760
    %5977 = vmatmul.f32.gmra.mxu0 %v5976
    %v5978 = vpop.f32.mrf.mxu0
    %v5979 = vadd.f32 %v5820, %v5978
    %v5980 = vand.u32 %v5254, 4294901760
    %5981 = vmatmul.f32.gmra.mxu0 %v5980
    %v5982 = vpop.f32.mrf.mxu0
    %v5983 = vadd.f32 %v5826, %v5982
    %v5984 = vand.u32 %v5256, 4294901760
    %5985 = vmatmul.f32.gmra.mxu0 %v5984
    %v5986 = vpop.f32.mrf.mxu0
    %v5987 = vadd.f32 %v5832, %v5986
    %v5988 = vand.u32 %v5258, 4294901760
    %5989 = vmatmul.f32.gmra.mxu0 %v5988
    %v5990 = vpop.f32.mrf.mxu0
    %v5991 = vadd.f32 %v5838, %v5990
    %v5992 = vand.u32 %v5260, 4294901760
    %5993 = vmatmul.f32.gmra.mxu0 %v5992
    %v5994 = vpop.f32.mrf.mxu0
    %v5995 = vadd.f32 %v5844, %v5994
    %v5996 = vand.u32 %v5262, 4294901760
    %5997 = vmatmul.f32.gmra.mxu0 %v5996
    %v5998 = vpop.f32.mrf.mxu0
    %v5999 = vadd.f32 %v5850, %v5998
    %v6000 = vand.u32 %v5264, 4294901760
    %6001 = vmatmul.f32.gmra.mxu0 %v6000
    %v6002 = vpop.f32.mrf.mxu0
    %v6003 = vadd.f32 %v5856, %v6002
    %v6004 = vand.u32 %v5266, 4294901760
    %6005 = vmatmul.f32.gmra.mxu0 %v6004
    %v6006 = vpop.f32.mrf.mxu0
    %v6007 = vadd.f32 %v5862, %v6006
    %v6008 = vand.u32 %v5268, 4294901760
    %6009 = vmatmul.f32.gmra.mxu0 %v6008
    %v6010 = vpop.f32.mrf.mxu0
    %v6011 = vadd.f32 %v5868, %v6010
    %v6012 = vand.u32 %v5270, 4294901760
    %6013 = vmatmul.f32.gmra.mxu0 %v6012
    %v6014 = vpop.f32.mrf.mxu0
    %v6015 = vadd.f32 %v5874, %v6014
    %v6016 = vand.u32 %v5272, 4294901760
    %6017 = vmatmul.f32.gmra.mxu0 %v6016
    %v6018 = vpop.f32.mrf.mxu0
    %v6019 = vadd.f32 %v5880, %v6018
    %v6020 = vand.u32 %v5274, 4294901760
    %6021 = vmatmul.f32.gmra.mxu0 %v6020
    %v6022 = vpop.f32.mrf.mxu0
    %v6023 = vadd.f32 %v5886, %v6022
    %v6024 = vand.u32 %v5276, 4294901760
    %6025 = vmatmul.f32.gmra.mxu0 %v6024
    %v6026 = vpop.f32.mrf.mxu0
    %v6027 = vadd.f32 %v5892, %v6026
    %v6028 = vand.u32 %v5278, 4294901760
    %6029 = vmatmul.f32.gmra.mxu0 %v6028
    %v6030 = vpop.f32.mrf.mxu0
    %v6031 = vadd.f32 %v5898, %v6030
    %v6032 = vand.u32 %v5280, 4294901760
    %6033 = vmatmul.f32.gmra.mxu0 %v6032
    %v6034 = vpop.f32.mrf.mxu0
    %v6035 = vadd.f32 %v5904, %v6034
    %v6036 = vand.u32 %v5282, 4294901760
    %6037 = vmatmul.f32.gmra.mxu0 %v6036
    %v6038 = vpop.f32.mrf.mxu0
    %v6039 = vadd.f32 %v5910, %v6038
    %6040 = vdwg.mxu0
    %v6041 = vand.u32 %v27, 4294901760
    %6042 = vmatpush.msra.mxu0 %v6041
    %v6043 = vand.u32 %v26, 4294901760
    %6044 = vmatpush.msra.mxu0 %v6043
    %v6045 = vand.u32 %v25, 4294901760
    %6046 = vmatpush.msra.mxu0 %v6045
    %v6047 = vand.u32 %v24, 4294901760
    %6048 = vmatpush.msra.mxu0 %v6047
    %v6049 = vand.u32 %v23, 4294901760
    %6050 = vmatpush.msra.mxu0 %v6049
    %v6051 = vand.u32 %v22, 4294901760
    %6052 = vmatpush.msra.mxu0 %v6051
    %v6053 = vand.u32 %v21, 4294901760
    %6054 = vmatpush.msra.mxu0 %v6053
    %v6055 = vand.u32 %v20, 4294901760
    %6056 = vmatpush.msra.mxu0 %v6055
    %v6057 = vand.u32 %v19, 4294901760
    %6058 = vmatpush.msra.mxu0 %v6057
    %v6059 = vand.u32 %v18, 4294901760
    %6060 = vmatpush.msra.mxu0 %v6059
    %v6061 = vand.u32 %v17, 4294901760
    %6062 = vmatpush.msra.mxu0 %v6061
    %v6063 = vand.u32 %v16, 4294901760
    %6064 = vmatpush.msra.mxu0 %v6063
    %v6065 = vand.u32 %v15, 4294901760
    %6066 = vmatpush.msra.mxu0 %v6065
    %v6067 = vand.u32 %v14, 4294901760
    %6068 = vmatpush.msra.mxu0 %v6067
    %v6069 = vand.u32 %v13, 4294901760
    %6070 = vmatpush.msra.mxu0 %v6069
    %v6071 = vand.u32 %v12, 4294901760
    %6072 = vmatpush.msra.mxu0 %v6071
    %v6073 = vand.u32 %v5252, 4294901760
    %6074 = vmatmul.f32.gmra.mxu0 %v6073
    %v6075 = vpop.f32.mrf.mxu0
    %v6076 = vadd.f32 %v5979, %v6075
    %v6077 = vand.u32 %v5254, 4294901760
    %6078 = vmatmul.f32.gmra.mxu0 %v6077
    %v6079 = vpop.f32.mrf.mxu0
    %v6080 = vadd.f32 %v5983, %v6079
    %v6081 = vand.u32 %v5256, 4294901760
    %6082 = vmatmul.f32.gmra.mxu0 %v6081
    %v6083 = vpop.f32.mrf.mxu0
    %v6084 = vadd.f32 %v5987, %v6083
    %v6085 = vand.u32 %v5258, 4294901760
    %6086 = vmatmul.f32.gmra.mxu0 %v6085
    %v6087 = vpop.f32.mrf.mxu0
    %v6088 = vadd.f32 %v5991, %v6087
    %v6089 = vand.u32 %v5260, 4294901760
    %6090 = vmatmul.f32.gmra.mxu0 %v6089
    %v6091 = vpop.f32.mrf.mxu0
    %v6092 = vadd.f32 %v5995, %v6091
    %v6093 = vand.u32 %v5262, 4294901760
    %6094 = vmatmul.f32.gmra.mxu0 %v6093
    %v6095 = vpop.f32.mrf.mxu0
    %v6096 = vadd.f32 %v5999, %v6095
    %v6097 = vand.u32 %v5264, 4294901760
    %6098 = vmatmul.f32.gmra.mxu0 %v6097
    %v6099 = vpop.f32.mrf.mxu0
    %v6100 = vadd.f32 %v6003, %v6099
    %v6101 = vand.u32 %v5266, 4294901760
    %6102 = vmatmul.f32.gmra.mxu0 %v6101
    %v6103 = vpop.f32.mrf.mxu0
    %v6104 = vadd.f32 %v6007, %v6103
    %v6105 = vand.u32 %v5268, 4294901760
    %6106 = vmatmul.f32.gmra.mxu0 %v6105
    %v6107 = vpop.f32.mrf.mxu0
    %v6108 = vadd.f32 %v6011, %v6107
    %v6109 = vand.u32 %v5270, 4294901760
    %6110 = vmatmul.f32.gmra.mxu0 %v6109
    %v6111 = vpop.f32.mrf.mxu0
    %v6112 = vadd.f32 %v6015, %v6111
    %v6113 = vand.u32 %v5272, 4294901760
    %6114 = vmatmul.f32.gmra.mxu0 %v6113
    %v6115 = vpop.f32.mrf.mxu0
    %v6116 = vadd.f32 %v6019, %v6115
    %v6117 = vand.u32 %v5274, 4294901760
    %6118 = vmatmul.f32.gmra.mxu0 %v6117
    %v6119 = vpop.f32.mrf.mxu0
    %v6120 = vadd.f32 %v6023, %v6119
    %v6121 = vand.u32 %v5276, 4294901760
    %6122 = vmatmul.f32.gmra.mxu0 %v6121
    %v6123 = vpop.f32.mrf.mxu0
    %v6124 = vadd.f32 %v6027, %v6123
    %v6125 = vand.u32 %v5278, 4294901760
    %6126 = vmatmul.f32.gmra.mxu0 %v6125
    %v6127 = vpop.f32.mrf.mxu0
    %v6128 = vadd.f32 %v6031, %v6127
    %v6129 = vand.u32 %v5280, 4294901760
    %6130 = vmatmul.f32.gmra.mxu0 %v6129
    %v6131 = vpop.f32.mrf.mxu0
    %v6132 = vadd.f32 %v6035, %v6131
    %v6133 = vand.u32 %v5282, 4294901760
    %6134 = vmatmul.f32.gmra.mxu0 %v6133
    %v6135 = vpop.f32.mrf.mxu0
    %v6136 = vadd.f32 %v6039, %v6135
    %6137 = vdwg.mxu0
    %6138 = vmatpush.msra.mxu0 0.0
    %6139 = vmatpush.msra.mxu0 0.0
    %6140 = vmatpush.msra.mxu0 0.0
    %6141 = vmatpush.msra.mxu0 0.0
    %6142 = vmatpush.msra.mxu0 0.0
    %6143 = vmatpush.msra.mxu0 0.0
    %6144 = vmatpush.msra.mxu0 0.0
    %6145 = vmatpush.msra.mxu0 0.0
    %6146 = vmatpush.msra.mxu0 0.0
    %6147 = vmatpush.msra.mxu0 0.0
    %v6148 = vand.u32 %v33, 4294901760
    %6149 = vmatpush.msra.mxu0 %v6148
    %v6150 = vand.u32 %v32, 4294901760
    %6151 = vmatpush.msra.mxu0 %v6150
    %v6152 = vand.u32 %v31, 4294901760
    %6153 = vmatpush.msra.mxu0 %v6152
    %v6154 = vand.u32 %v30, 4294901760
    %6155 = vmatpush.msra.mxu0 %v6154
    %v6156 = vand.u32 %v29, 4294901760
    %6157 = vmatpush.msra.mxu0 %v6156
    %v6158 = vand.u32 %v28, 4294901760
    %6159 = vmatpush.msra.mxu0 %v6158
    %v6160 = vand.u32 %v5285, 4294901760
    %v6161 = vsub.f32 %v5285, %v6160
    %v6162 = vand.u32 %v6161, 4294901760
    %v6163 = vsub.f32 %v6161, %v6162
    %v6164 = vand.u32 %v6163, 4294901760
    %6165 = vmatmul.f32.gmra.mxu0 %v6164
    %v6166 = vpop.f32.mrf.mxu0
    %v6167 = vadd.f32 %v6076, %v6166
    %v6168 = vand.u32 %v5288, 4294901760
    %v6169 = vsub.f32 %v5288, %v6168
    %v6170 = vand.u32 %v6169, 4294901760
    %v6171 = vsub.f32 %v6169, %v6170
    %v6172 = vand.u32 %v6171, 4294901760
    %6173 = vmatmul.f32.gmra.mxu0 %v6172
    %v6174 = vpop.f32.mrf.mxu0
    %v6175 = vadd.f32 %v6080, %v6174
    %v6176 = vand.u32 %v5291, 4294901760
    %v6177 = vsub.f32 %v5291, %v6176
    %v6178 = vand.u32 %v6177, 4294901760
    %v6179 = vsub.f32 %v6177, %v6178
    %v6180 = vand.u32 %v6179, 4294901760
    %6181 = vmatmul.f32.gmra.mxu0 %v6180
    %v6182 = vpop.f32.mrf.mxu0
    %v6183 = vadd.f32 %v6084, %v6182
    %v6184 = vand.u32 %v5294, 4294901760
    %v6185 = vsub.f32 %v5294, %v6184
    %v6186 = vand.u32 %v6185, 4294901760
    %v6187 = vsub.f32 %v6185, %v6186
    %v6188 = vand.u32 %v6187, 4294901760
    %6189 = vmatmul.f32.gmra.mxu0 %v6188
    %v6190 = vpop.f32.mrf.mxu0
    %v6191 = vadd.f32 %v6088, %v6190
    %v6192 = vand.u32 %v5297, 4294901760
    %v6193 = vsub.f32 %v5297, %v6192
    %v6194 = vand.u32 %v6193, 4294901760
    %v6195 = vsub.f32 %v6193, %v6194
    %v6196 = vand.u32 %v6195, 4294901760
    %6197 = vmatmul.f32.gmra.mxu0 %v6196
    %v6198 = vpop.f32.mrf.mxu0
    %v6199 = vadd.f32 %v6092, %v6198
    %v6200 = vand.u32 %v5300, 4294901760
    %v6201 = vsub.f32 %v5300, %v6200
    %v6202 = vand.u32 %v6201, 4294901760
    %v6203 = vsub.f32 %v6201, %v6202
    %v6204 = vand.u32 %v6203, 4294901760
    %6205 = vmatmul.f32.gmra.mxu0 %v6204
    %v6206 = vpop.f32.mrf.mxu0
    %v6207 = vadd.f32 %v6096, %v6206
    %v6208 = vand.u32 %v5303, 4294901760
    %v6209 = vsub.f32 %v5303, %v6208
    %v6210 = vand.u32 %v6209, 4294901760
    %v6211 = vsub.f32 %v6209, %v6210
    %v6212 = vand.u32 %v6211, 4294901760
    %6213 = vmatmul.f32.gmra.mxu0 %v6212
    %v6214 = vpop.f32.mrf.mxu0
    %v6215 = vadd.f32 %v6100, %v6214
    %v6216 = vand.u32 %v5306, 4294901760
    %v6217 = vsub.f32 %v5306, %v6216
    %v6218 = vand.u32 %v6217, 4294901760
    %v6219 = vsub.f32 %v6217, %v6218
    %v6220 = vand.u32 %v6219, 4294901760
    %6221 = vmatmul.f32.gmra.mxu0 %v6220
    %v6222 = vpop.f32.mrf.mxu0
    %v6223 = vadd.f32 %v6104, %v6222
    %v6224 = vand.u32 %v5309, 4294901760
    %v6225 = vsub.f32 %v5309, %v6224
    %v6226 = vand.u32 %v6225, 4294901760
    %v6227 = vsub.f32 %v6225, %v6226
    %v6228 = vand.u32 %v6227, 4294901760
    %6229 = vmatmul.f32.gmra.mxu0 %v6228
    %v6230 = vpop.f32.mrf.mxu0
    %v6231 = vadd.f32 %v6108, %v6230
    %v6232 = vand.u32 %v5312, 4294901760
    %v6233 = vsub.f32 %v5312, %v6232
    %v6234 = vand.u32 %v6233, 4294901760
    %v6235 = vsub.f32 %v6233, %v6234
    %v6236 = vand.u32 %v6235, 4294901760
    %6237 = vmatmul.f32.gmra.mxu0 %v6236
    %v6238 = vpop.f32.mrf.mxu0
    %v6239 = vadd.f32 %v6112, %v6238
    %v6240 = vand.u32 %v5315, 4294901760
    %v6241 = vsub.f32 %v5315, %v6240
    %v6242 = vand.u32 %v6241, 4294901760
    %v6243 = vsub.f32 %v6241, %v6242
    %v6244 = vand.u32 %v6243, 4294901760
    %6245 = vmatmul.f32.gmra.mxu0 %v6244
    %v6246 = vpop.f32.mrf.mxu0
    %v6247 = vadd.f32 %v6116, %v6246
    %v6248 = vand.u32 %v5318, 4294901760
    %v6249 = vsub.f32 %v5318, %v6248
    %v6250 = vand.u32 %v6249, 4294901760
    %v6251 = vsub.f32 %v6249, %v6250
    %v6252 = vand.u32 %v6251, 4294901760
    %6253 = vmatmul.f32.gmra.mxu0 %v6252
    %v6254 = vpop.f32.mrf.mxu0
    %v6255 = vadd.f32 %v6120, %v6254
    %v6256 = vand.u32 %v5321, 4294901760
    %v6257 = vsub.f32 %v5321, %v6256
    %v6258 = vand.u32 %v6257, 4294901760
    %v6259 = vsub.f32 %v6257, %v6258
    %v6260 = vand.u32 %v6259, 4294901760
    %6261 = vmatmul.f32.gmra.mxu0 %v6260
    %v6262 = vpop.f32.mrf.mxu0
    %v6263 = vadd.f32 %v6124, %v6262
    %v6264 = vand.u32 %v5324, 4294901760
    %v6265 = vsub.f32 %v5324, %v6264
    %v6266 = vand.u32 %v6265, 4294901760
    %v6267 = vsub.f32 %v6265, %v6266
    %v6268 = vand.u32 %v6267, 4294901760
    %6269 = vmatmul.f32.gmra.mxu0 %v6268
    %v6270 = vpop.f32.mrf.mxu0
    %v6271 = vadd.f32 %v6128, %v6270
    %v6272 = vand.u32 %v5327, 4294901760
    %v6273 = vsub.f32 %v5327, %v6272
    %v6274 = vand.u32 %v6273, 4294901760
    %v6275 = vsub.f32 %v6273, %v6274
    %v6276 = vand.u32 %v6275, 4294901760
    %6277 = vmatmul.f32.gmra.mxu0 %v6276
    %v6278 = vpop.f32.mrf.mxu0
    %v6279 = vadd.f32 %v6132, %v6278
    %v6280 = vand.u32 %v5330, 4294901760
    %v6281 = vsub.f32 %v5330, %v6280
    %v6282 = vand.u32 %v6281, 4294901760
    %v6283 = vsub.f32 %v6281, %v6282
    %v6284 = vand.u32 %v6283, 4294901760
    %6285 = vmatmul.f32.gmra.mxu0 %v6284
    %v6286 = vpop.f32.mrf.mxu0
    %v6287 = vadd.f32 %v6136, %v6286
    %6288 = vdwg.mxu0
    %6289 = vmatpush.msra.mxu0 0.0
    %6290 = vmatpush.msra.mxu0 0.0
    %6291 = vmatpush.msra.mxu0 0.0
    %6292 = vmatpush.msra.mxu0 0.0
    %6293 = vmatpush.msra.mxu0 0.0
    %6294 = vmatpush.msra.mxu0 0.0
    %6295 = vmatpush.msra.mxu0 0.0
    %6296 = vmatpush.msra.mxu0 0.0
    %6297 = vmatpush.msra.mxu0 0.0
    %6298 = vmatpush.msra.mxu0 0.0
    %v6299 = vand.u32 %v33, 4294901760
    %v6300 = vsub.f32 %v33, %v6299
    %v6301 = vand.u32 %v6300, 4294901760
    %v6302 = vsub.f32 %v6300, %v6301
    %v6303 = vand.u32 %v6302, 4294901760
    %6304 = vmatpush.msra.mxu0 %v6303
    %v6305 = vand.u32 %v32, 4294901760
    %v6306 = vsub.f32 %v32, %v6305
    %v6307 = vand.u32 %v6306, 4294901760
    %v6308 = vsub.f32 %v6306, %v6307
    %v6309 = vand.u32 %v6308, 4294901760
    %6310 = vmatpush.msra.mxu0 %v6309
    %v6311 = vand.u32 %v31, 4294901760
    %v6312 = vsub.f32 %v31, %v6311
    %v6313 = vand.u32 %v6312, 4294901760
    %v6314 = vsub.f32 %v6312, %v6313
    %v6315 = vand.u32 %v6314, 4294901760
    %6316 = vmatpush.msra.mxu0 %v6315
    %v6317 = vand.u32 %v30, 4294901760
    %v6318 = vsub.f32 %v30, %v6317
    %v6319 = vand.u32 %v6318, 4294901760
    %v6320 = vsub.f32 %v6318, %v6319
    %v6321 = vand.u32 %v6320, 4294901760
    %6322 = vmatpush.msra.mxu0 %v6321
    %v6323 = vand.u32 %v29, 4294901760
    %v6324 = vsub.f32 %v29, %v6323
    %v6325 = vand.u32 %v6324, 4294901760
    %v6326 = vsub.f32 %v6324, %v6325
    %v6327 = vand.u32 %v6326, 4294901760
    %6328 = vmatpush.msra.mxu0 %v6327
    %v6329 = vand.u32 %v28, 4294901760
    %v6330 = vsub.f32 %v28, %v6329
    %v6331 = vand.u32 %v6330, 4294901760
    %v6332 = vsub.f32 %v6330, %v6331
    %v6333 = vand.u32 %v6332, 4294901760
    %6334 = vmatpush.msra.mxu0 %v6333
    %v6335 = vand.u32 %v5285, 4294901760
    %6336 = vmatmul.f32.gmra.mxu0 %v6335
    %v6337 = vpop.f32.mrf.mxu0
    %v6338 = vadd.f32 %v6167, %v6337
    %v6339 = vand.u32 %v5288, 4294901760
    %6340 = vmatmul.f32.gmra.mxu0 %v6339
    %v6341 = vpop.f32.mrf.mxu0
    %v6342 = vadd.f32 %v6175, %v6341
    %v6343 = vand.u32 %v5291, 4294901760
    %6344 = vmatmul.f32.gmra.mxu0 %v6343
    %v6345 = vpop.f32.mrf.mxu0
    %v6346 = vadd.f32 %v6183, %v6345
    %v6347 = vand.u32 %v5294, 4294901760
    %6348 = vmatmul.f32.gmra.mxu0 %v6347
    %v6349 = vpop.f32.mrf.mxu0
    %v6350 = vadd.f32 %v6191, %v6349
    %v6351 = vand.u32 %v5297, 4294901760
    %6352 = vmatmul.f32.gmra.mxu0 %v6351
    %v6353 = vpop.f32.mrf.mxu0
    %v6354 = vadd.f32 %v6199, %v6353
    %v6355 = vand.u32 %v5300, 4294901760
    %6356 = vmatmul.f32.gmra.mxu0 %v6355
    %v6357 = vpop.f32.mrf.mxu0
    %v6358 = vadd.f32 %v6207, %v6357
    %v6359 = vand.u32 %v5303, 4294901760
    %6360 = vmatmul.f32.gmra.mxu0 %v6359
    %v6361 = vpop.f32.mrf.mxu0
    %v6362 = vadd.f32 %v6215, %v6361
    %v6363 = vand.u32 %v5306, 4294901760
    %6364 = vmatmul.f32.gmra.mxu0 %v6363
    %v6365 = vpop.f32.mrf.mxu0
    %v6366 = vadd.f32 %v6223, %v6365
    %v6367 = vand.u32 %v5309, 4294901760
    %6368 = vmatmul.f32.gmra.mxu0 %v6367
    %v6369 = vpop.f32.mrf.mxu0
    %v6370 = vadd.f32 %v6231, %v6369
    %v6371 = vand.u32 %v5312, 4294901760
    %6372 = vmatmul.f32.gmra.mxu0 %v6371
    %v6373 = vpop.f32.mrf.mxu0
    %v6374 = vadd.f32 %v6239, %v6373
    %v6375 = vand.u32 %v5315, 4294901760
    %6376 = vmatmul.f32.gmra.mxu0 %v6375
    %v6377 = vpop.f32.mrf.mxu0
    %v6378 = vadd.f32 %v6247, %v6377
    %v6379 = vand.u32 %v5318, 4294901760
    %6380 = vmatmul.f32.gmra.mxu0 %v6379
    %v6381 = vpop.f32.mrf.mxu0
    %v6382 = vadd.f32 %v6255, %v6381
    %v6383 = vand.u32 %v5321, 4294901760
    %6384 = vmatmul.f32.gmra.mxu0 %v6383
    %v6385 = vpop.f32.mrf.mxu0
    %v6386 = vadd.f32 %v6263, %v6385
    %v6387 = vand.u32 %v5324, 4294901760
    %6388 = vmatmul.f32.gmra.mxu0 %v6387
    %v6389 = vpop.f32.mrf.mxu0
    %v6390 = vadd.f32 %v6271, %v6389
    %v6391 = vand.u32 %v5327, 4294901760
    %6392 = vmatmul.f32.gmra.mxu0 %v6391
    %v6393 = vpop.f32.mrf.mxu0
    %v6394 = vadd.f32 %v6279, %v6393
    %v6395 = vand.u32 %v5330, 4294901760
    %6396 = vmatmul.f32.gmra.mxu0 %v6395
    %v6397 = vpop.f32.mrf.mxu0
    %v6398 = vadd.f32 %v6287, %v6397
    %6399 = vdwg.mxu0
    %6400 = vmatpush.msra.mxu0 0.0
    %6401 = vmatpush.msra.mxu0 0.0
    %6402 = vmatpush.msra.mxu0 0.0
    %6403 = vmatpush.msra.mxu0 0.0
    %6404 = vmatpush.msra.mxu0 0.0
    %6405 = vmatpush.msra.mxu0 0.0
    %6406 = vmatpush.msra.mxu0 0.0
    %6407 = vmatpush.msra.mxu0 0.0
    %6408 = vmatpush.msra.mxu0 0.0
    %6409 = vmatpush.msra.mxu0 0.0
    %v6410 = vand.u32 %v33, 4294901760
    %v6411 = vsub.f32 %v33, %v6410
    %6412 = vmatpush.msra.mxu0 %v6411
    %v6413 = vand.u32 %v32, 4294901760
    %v6414 = vsub.f32 %v32, %v6413
    %6415 = vmatpush.msra.mxu0 %v6414
    %v6416 = vand.u32 %v31, 4294901760
    %v6417 = vsub.f32 %v31, %v6416
    %6418 = vmatpush.msra.mxu0 %v6417
    %v6419 = vand.u32 %v30, 4294901760
    %v6420 = vsub.f32 %v30, %v6419
    %6421 = vmatpush.msra.mxu0 %v6420
    %v6422 = vand.u32 %v29, 4294901760
    %v6423 = vsub.f32 %v29, %v6422
    %6424 = vmatpush.msra.mxu0 %v6423
    %v6425 = vand.u32 %v28, 4294901760
    %v6426 = vsub.f32 %v28, %v6425
    %6427 = vmatpush.msra.mxu0 %v6426
    %v6428 = vand.u32 %v5285, 4294901760
    %v6429 = vsub.f32 %v5285, %v6428
    %6430 = vmatmul.f32.gmra.mxu0 %v6429
    %v6431 = vpop.f32.mrf.mxu0
    %v6432 = vadd.f32 %v6338, %v6431
    %v6433 = vand.u32 %v5288, 4294901760
    %v6434 = vsub.f32 %v5288, %v6433
    %6435 = vmatmul.f32.gmra.mxu0 %v6434
    %v6436 = vpop.f32.mrf.mxu0
    %v6437 = vadd.f32 %v6342, %v6436
    %v6438 = vand.u32 %v5291, 4294901760
    %v6439 = vsub.f32 %v5291, %v6438
    %6440 = vmatmul.f32.gmra.mxu0 %v6439
    %v6441 = vpop.f32.mrf.mxu0
    %v6442 = vadd.f32 %v6346, %v6441
    %v6443 = vand.u32 %v5294, 4294901760
    %v6444 = vsub.f32 %v5294, %v6443
    %6445 = vmatmul.f32.gmra.mxu0 %v6444
    %v6446 = vpop.f32.mrf.mxu0
    %v6447 = vadd.f32 %v6350, %v6446
    %v6448 = vand.u32 %v5297, 4294901760
    %v6449 = vsub.f32 %v5297, %v6448
    %6450 = vmatmul.f32.gmra.mxu0 %v6449
    %v6451 = vpop.f32.mrf.mxu0
    %v6452 = vadd.f32 %v6354, %v6451
    %v6453 = vand.u32 %v5300, 4294901760
    %v6454 = vsub.f32 %v5300, %v6453
    %6455 = vmatmul.f32.gmra.mxu0 %v6454
    %v6456 = vpop.f32.mrf.mxu0
    %v6457 = vadd.f32 %v6358, %v6456
    %v6458 = vand.u32 %v5303, 4294901760
    %v6459 = vsub.f32 %v5303, %v6458
    %6460 = vmatmul.f32.gmra.mxu0 %v6459
    %v6461 = vpop.f32.mrf.mxu0
    %v6462 = vadd.f32 %v6362, %v6461
    %v6463 = vand.u32 %v5306, 4294901760
    %v6464 = vsub.f32 %v5306, %v6463
    %6465 = vmatmul.f32.gmra.mxu0 %v6464
    %v6466 = vpop.f32.mrf.mxu0
    %v6467 = vadd.f32 %v6366, %v6466
    %v6468 = vand.u32 %v5309, 4294901760
    %v6469 = vsub.f32 %v5309, %v6468
    %6470 = vmatmul.f32.gmra.mxu0 %v6469
    %v6471 = vpop.f32.mrf.mxu0
    %v6472 = vadd.f32 %v6370, %v6471
    %v6473 = vand.u32 %v5312, 4294901760
    %v6474 = vsub.f32 %v5312, %v6473
    %6475 = vmatmul.f32.gmra.mxu0 %v6474
    %v6476 = vpop.f32.mrf.mxu0
    %v6477 = vadd.f32 %v6374, %v6476
    %v6478 = vand.u32 %v5315, 4294901760
    %v6479 = vsub.f32 %v5315, %v6478
    %6480 = vmatmul.f32.gmra.mxu0 %v6479
    %v6481 = vpop.f32.mrf.mxu0
    %v6482 = vadd.f32 %v6378, %v6481
    %v6483 = vand.u32 %v5318, 4294901760
    %v6484 = vsub.f32 %v5318, %v6483
    %6485 = vmatmul.f32.gmra.mxu0 %v6484
    %v6486 = vpop.f32.mrf.mxu0
    %v6487 = vadd.f32 %v6382, %v6486
    %v6488 = vand.u32 %v5321, 4294901760
    %v6489 = vsub.f32 %v5321, %v6488
    %6490 = vmatmul.f32.gmra.mxu0 %v6489
    %v6491 = vpop.f32.mrf.mxu0
    %v6492 = vadd.f32 %v6386, %v6491
    %v6493 = vand.u32 %v5324, 4294901760
    %v6494 = vsub.f32 %v5324, %v6493
    %6495 = vmatmul.f32.gmra.mxu0 %v6494
    %v6496 = vpop.f32.mrf.mxu0
    %v6497 = vadd.f32 %v6390, %v6496
    %v6498 = vand.u32 %v5327, 4294901760
    %v6499 = vsub.f32 %v5327, %v6498
    %6500 = vmatmul.f32.gmra.mxu0 %v6499
    %v6501 = vpop.f32.mrf.mxu0
    %v6502 = vadd.f32 %v6394, %v6501
    %v6503 = vand.u32 %v5330, 4294901760
    %v6504 = vsub.f32 %v5330, %v6503
    %6505 = vmatmul.f32.gmra.mxu0 %v6504
    %v6506 = vpop.f32.mrf.mxu0
    %v6507 = vadd.f32 %v6398, %v6506
    %6508 = vdwg.mxu0
    %6509 = vmatpush.msra.mxu0 0.0
    %6510 = vmatpush.msra.mxu0 0.0
    %6511 = vmatpush.msra.mxu0 0.0
    %6512 = vmatpush.msra.mxu0 0.0
    %6513 = vmatpush.msra.mxu0 0.0
    %6514 = vmatpush.msra.mxu0 0.0
    %6515 = vmatpush.msra.mxu0 0.0
    %6516 = vmatpush.msra.mxu0 0.0
    %6517 = vmatpush.msra.mxu0 0.0
    %6518 = vmatpush.msra.mxu0 0.0
    %v6519 = vand.u32 %v33, 4294901760
    %6520 = vmatpush.msra.mxu0 %v6519
    %v6521 = vand.u32 %v32, 4294901760
    %6522 = vmatpush.msra.mxu0 %v6521
    %v6523 = vand.u32 %v31, 4294901760
    %6524 = vmatpush.msra.mxu0 %v6523
    %v6525 = vand.u32 %v30, 4294901760
    %6526 = vmatpush.msra.mxu0 %v6525
    %v6527 = vand.u32 %v29, 4294901760
    %6528 = vmatpush.msra.mxu0 %v6527
    %v6529 = vand.u32 %v28, 4294901760
    %6530 = vmatpush.msra.mxu0 %v6529
    %v6531 = vand.u32 %v5285, 4294901760
    %v6532 = vsub.f32 %v5285, %v6531
    %v6533 = vand.u32 %v6532, 4294901760
    %6534 = vmatmul.f32.gmra.mxu0 %v6533
    %v6535 = vpop.f32.mrf.mxu0
    %v6536 = vadd.f32 %v6432, %v6535
    %v6537 = vand.u32 %v5288, 4294901760
    %v6538 = vsub.f32 %v5288, %v6537
    %v6539 = vand.u32 %v6538, 4294901760
    %6540 = vmatmul.f32.gmra.mxu0 %v6539
    %v6541 = vpop.f32.mrf.mxu0
    %v6542 = vadd.f32 %v6437, %v6541
    %v6543 = vand.u32 %v5291, 4294901760
    %v6544 = vsub.f32 %v5291, %v6543
    %v6545 = vand.u32 %v6544, 4294901760
    %6546 = vmatmul.f32.gmra.mxu0 %v6545
    %v6547 = vpop.f32.mrf.mxu0
    %v6548 = vadd.f32 %v6442, %v6547
    %v6549 = vand.u32 %v5294, 4294901760
    %v6550 = vsub.f32 %v5294, %v6549
    %v6551 = vand.u32 %v6550, 4294901760
    %6552 = vmatmul.f32.gmra.mxu0 %v6551
    %v6553 = vpop.f32.mrf.mxu0
    %v6554 = vadd.f32 %v6447, %v6553
    %v6555 = vand.u32 %v5297, 4294901760
    %v6556 = vsub.f32 %v5297, %v6555
    %v6557 = vand.u32 %v6556, 4294901760
    %6558 = vmatmul.f32.gmra.mxu0 %v6557
    %v6559 = vpop.f32.mrf.mxu0
    %v6560 = vadd.f32 %v6452, %v6559
    %v6561 = vand.u32 %v5300, 4294901760
    %v6562 = vsub.f32 %v5300, %v6561
    %v6563 = vand.u32 %v6562, 4294901760
    %6564 = vmatmul.f32.gmra.mxu0 %v6563
    %v6565 = vpop.f32.mrf.mxu0
    %v6566 = vadd.f32 %v6457, %v6565
    %v6567 = vand.u32 %v5303, 4294901760
    %v6568 = vsub.f32 %v5303, %v6567
    %v6569 = vand.u32 %v6568, 4294901760
    %6570 = vmatmul.f32.gmra.mxu0 %v6569
    %v6571 = vpop.f32.mrf.mxu0
    %v6572 = vadd.f32 %v6462, %v6571
    %v6573 = vand.u32 %v5306, 4294901760
    %v6574 = vsub.f32 %v5306, %v6573
    %v6575 = vand.u32 %v6574, 4294901760
    %6576 = vmatmul.f32.gmra.mxu0 %v6575
    %v6577 = vpop.f32.mrf.mxu0
    %v6578 = vadd.f32 %v6467, %v6577
    %v6579 = vand.u32 %v5309, 4294901760
    %v6580 = vsub.f32 %v5309, %v6579
    %v6581 = vand.u32 %v6580, 4294901760
    %6582 = vmatmul.f32.gmra.mxu0 %v6581
    %v6583 = vpop.f32.mrf.mxu0
    %v6584 = vadd.f32 %v6472, %v6583
    %v6585 = vand.u32 %v5312, 4294901760
    %v6586 = vsub.f32 %v5312, %v6585
    %v6587 = vand.u32 %v6586, 4294901760
    %6588 = vmatmul.f32.gmra.mxu0 %v6587
    %v6589 = vpop.f32.mrf.mxu0
    %v6590 = vadd.f32 %v6477, %v6589
    %v6591 = vand.u32 %v5315, 4294901760
    %v6592 = vsub.f32 %v5315, %v6591
    %v6593 = vand.u32 %v6592, 4294901760
    %6594 = vmatmul.f32.gmra.mxu0 %v6593
    %v6595 = vpop.f32.mrf.mxu0
    %v6596 = vadd.f32 %v6482, %v6595
    %v6597 = vand.u32 %v5318, 4294901760
    %v6598 = vsub.f32 %v5318, %v6597
    %v6599 = vand.u32 %v6598, 4294901760
    %6600 = vmatmul.f32.gmra.mxu0 %v6599
    %v6601 = vpop.f32.mrf.mxu0
    %v6602 = vadd.f32 %v6487, %v6601
    %v6603 = vand.u32 %v5321, 4294901760
    %v6604 = vsub.f32 %v5321, %v6603
    %v6605 = vand.u32 %v6604, 4294901760
    %6606 = vmatmul.f32.gmra.mxu0 %v6605
    %v6607 = vpop.f32.mrf.mxu0
    %v6608 = vadd.f32 %v6492, %v6607
    %v6609 = vand.u32 %v5324, 4294901760
    %v6610 = vsub.f32 %v5324, %v6609
    %v6611 = vand.u32 %v6610, 4294901760
    %6612 = vmatmul.f32.gmra.mxu0 %v6611
    %v6613 = vpop.f32.mrf.mxu0
    %v6614 = vadd.f32 %v6497, %v6613
    %v6615 = vand.u32 %v5327, 4294901760
    %v6616 = vsub.f32 %v5327, %v6615
    %v6617 = vand.u32 %v6616, 4294901760
    %6618 = vmatmul.f32.gmra.mxu0 %v6617
    %v6619 = vpop.f32.mrf.mxu0
    %v6620 = vadd.f32 %v6502, %v6619
    %v6621 = vand.u32 %v5330, 4294901760
    %v6622 = vsub.f32 %v5330, %v6621
    %v6623 = vand.u32 %v6622, 4294901760
    %6624 = vmatmul.f32.gmra.mxu0 %v6623
    %v6625 = vpop.f32.mrf.mxu0
    %v6626 = vadd.f32 %v6507, %v6625
    %6627 = vdwg.mxu0
    %6628 = vmatpush.msra.mxu0 0.0
    %6629 = vmatpush.msra.mxu0 0.0
    %6630 = vmatpush.msra.mxu0 0.0
    %6631 = vmatpush.msra.mxu0 0.0
    %6632 = vmatpush.msra.mxu0 0.0
    %6633 = vmatpush.msra.mxu0 0.0
    %6634 = vmatpush.msra.mxu0 0.0
    %6635 = vmatpush.msra.mxu0 0.0
    %6636 = vmatpush.msra.mxu0 0.0
    %6637 = vmatpush.msra.mxu0 0.0
    %v6638 = vand.u32 %v33, 4294901760
    %v6639 = vsub.f32 %v33, %v6638
    %v6640 = vand.u32 %v6639, 4294901760
    %6641 = vmatpush.msra.mxu0 %v6640
    %v6642 = vand.u32 %v32, 4294901760
    %v6643 = vsub.f32 %v32, %v6642
    %v6644 = vand.u32 %v6643, 4294901760
    %6645 = vmatpush.msra.mxu0 %v6644
    %v6646 = vand.u32 %v31, 4294901760
    %v6647 = vsub.f32 %v31, %v6646
    %v6648 = vand.u32 %v6647, 4294901760
    %6649 = vmatpush.msra.mxu0 %v6648
    %v6650 = vand.u32 %v30, 4294901760
    %v6651 = vsub.f32 %v30, %v6650
    %v6652 = vand.u32 %v6651, 4294901760
    %6653 = vmatpush.msra.mxu0 %v6652
    %v6654 = vand.u32 %v29, 4294901760
    %v6655 = vsub.f32 %v29, %v6654
    %v6656 = vand.u32 %v6655, 4294901760
    %6657 = vmatpush.msra.mxu0 %v6656
    %v6658 = vand.u32 %v28, 4294901760
    %v6659 = vsub.f32 %v28, %v6658
    %v6660 = vand.u32 %v6659, 4294901760
    %6661 = vmatpush.msra.mxu0 %v6660
    %v6662 = vand.u32 %v5285, 4294901760
    %6663 = vmatmul.f32.gmra.mxu0 %v6662
    %v6664 = vpop.f32.mrf.mxu0
    %v6665 = vadd.f32 %v6536, %v6664
    %v6666 = vand.u32 %v5288, 4294901760
    %6667 = vmatmul.f32.gmra.mxu0 %v6666
    %v6668 = vpop.f32.mrf.mxu0
    %v6669 = vadd.f32 %v6542, %v6668
    %v6670 = vand.u32 %v5291, 4294901760
    %6671 = vmatmul.f32.gmra.mxu0 %v6670
    %v6672 = vpop.f32.mrf.mxu0
    %v6673 = vadd.f32 %v6548, %v6672
    %v6674 = vand.u32 %v5294, 4294901760
    %6675 = vmatmul.f32.gmra.mxu0 %v6674
    %v6676 = vpop.f32.mrf.mxu0
    %v6677 = vadd.f32 %v6554, %v6676
    %v6678 = vand.u32 %v5297, 4294901760
    %6679 = vmatmul.f32.gmra.mxu0 %v6678
    %v6680 = vpop.f32.mrf.mxu0
    %v6681 = vadd.f32 %v6560, %v6680
    %v6682 = vand.u32 %v5300, 4294901760
    %6683 = vmatmul.f32.gmra.mxu0 %v6682
    %v6684 = vpop.f32.mrf.mxu0
    %v6685 = vadd.f32 %v6566, %v6684
    %v6686 = vand.u32 %v5303, 4294901760
    %6687 = vmatmul.f32.gmra.mxu0 %v6686
    %v6688 = vpop.f32.mrf.mxu0
    %v6689 = vadd.f32 %v6572, %v6688
    %v6690 = vand.u32 %v5306, 4294901760
    %6691 = vmatmul.f32.gmra.mxu0 %v6690
    %v6692 = vpop.f32.mrf.mxu0
    %v6693 = vadd.f32 %v6578, %v6692
    %v6694 = vand.u32 %v5309, 4294901760
    %6695 = vmatmul.f32.gmra.mxu0 %v6694
    %v6696 = vpop.f32.mrf.mxu0
    %v6697 = vadd.f32 %v6584, %v6696
    %v6698 = vand.u32 %v5312, 4294901760
    %6699 = vmatmul.f32.gmra.mxu0 %v6698
    %v6700 = vpop.f32.mrf.mxu0
    %v6701 = vadd.f32 %v6590, %v6700
    %v6702 = vand.u32 %v5315, 4294901760
    %6703 = vmatmul.f32.gmra.mxu0 %v6702
    %v6704 = vpop.f32.mrf.mxu0
    %v6705 = vadd.f32 %v6596, %v6704
    %v6706 = vand.u32 %v5318, 4294901760
    %6707 = vmatmul.f32.gmra.mxu0 %v6706
    %v6708 = vpop.f32.mrf.mxu0
    %v6709 = vadd.f32 %v6602, %v6708
    %v6710 = vand.u32 %v5321, 4294901760
    %6711 = vmatmul.f32.gmra.mxu0 %v6710
    %v6712 = vpop.f32.mrf.mxu0
    %v6713 = vadd.f32 %v6608, %v6712
    %v6714 = vand.u32 %v5324, 4294901760
    %6715 = vmatmul.f32.gmra.mxu0 %v6714
    %v6716 = vpop.f32.mrf.mxu0
    %v6717 = vadd.f32 %v6614, %v6716
    %v6718 = vand.u32 %v5327, 4294901760
    %6719 = vmatmul.f32.gmra.mxu0 %v6718
    %v6720 = vpop.f32.mrf.mxu0
    %v6721 = vadd.f32 %v6620, %v6720
    %v6722 = vand.u32 %v5330, 4294901760
    %6723 = vmatmul.f32.gmra.mxu0 %v6722
    %v6724 = vpop.f32.mrf.mxu0
    %v6725 = vadd.f32 %v6626, %v6724
    %6726 = vdwg.mxu0
    %6727 = vmatpush.msra.mxu0 0.0
    %6728 = vmatpush.msra.mxu0 0.0
    %6729 = vmatpush.msra.mxu0 0.0
    %6730 = vmatpush.msra.mxu0 0.0
    %6731 = vmatpush.msra.mxu0 0.0
    %6732 = vmatpush.msra.mxu0 0.0
    %6733 = vmatpush.msra.mxu0 0.0
    %6734 = vmatpush.msra.mxu0 0.0
    %6735 = vmatpush.msra.mxu0 0.0
    %6736 = vmatpush.msra.mxu0 0.0
    %v6737 = vand.u32 %v33, 4294901760
    %6738 = vmatpush.msra.mxu0 %v6737
    %v6739 = vand.u32 %v32, 4294901760
    %6740 = vmatpush.msra.mxu0 %v6739
    %v6741 = vand.u32 %v31, 4294901760
    %6742 = vmatpush.msra.mxu0 %v6741
    %v6743 = vand.u32 %v30, 4294901760
    %6744 = vmatpush.msra.mxu0 %v6743
    %v6745 = vand.u32 %v29, 4294901760
    %6746 = vmatpush.msra.mxu0 %v6745
    %v6747 = vand.u32 %v28, 4294901760
    %6748 = vmatpush.msra.mxu0 %v6747
    %v6749 = vand.u32 %v5285, 4294901760
    %6750 = vmatmul.f32.gmra.mxu0 %v6749
    %v6751 = vpop.f32.mrf.mxu0
    %v6752 = vadd.f32 %v6665, %v6751
    %v6753 = vand.u32 %v5288, 4294901760
    %6754 = vmatmul.f32.gmra.mxu0 %v6753
    %v6755 = vpop.f32.mrf.mxu0
    %v6756 = vadd.f32 %v6669, %v6755
    %v6757 = vand.u32 %v5291, 4294901760
    %6758 = vmatmul.f32.gmra.mxu0 %v6757
    %v6759 = vpop.f32.mrf.mxu0
    %v6760 = vadd.f32 %v6673, %v6759
    %v6761 = vand.u32 %v5294, 4294901760
    %6762 = vmatmul.f32.gmra.mxu0 %v6761
    %v6763 = vpop.f32.mrf.mxu0
    %v6764 = vadd.f32 %v6677, %v6763
    %v6765 = vand.u32 %v5297, 4294901760
    %6766 = vmatmul.f32.gmra.mxu0 %v6765
    %v6767 = vpop.f32.mrf.mxu0
    %v6768 = vadd.f32 %v6681, %v6767
    %v6769 = vand.u32 %v5300, 4294901760
    %6770 = vmatmul.f32.gmra.mxu0 %v6769
    %v6771 = vpop.f32.mrf.mxu0
    %v6772 = vadd.f32 %v6685, %v6771
    %v6773 = vand.u32 %v5303, 4294901760
    %6774 = vmatmul.f32.gmra.mxu0 %v6773
    %v6775 = vpop.f32.mrf.mxu0
    %v6776 = vadd.f32 %v6689, %v6775
    %v6777 = vand.u32 %v5306, 4294901760
    %6778 = vmatmul.f32.gmra.mxu0 %v6777
    %v6779 = vpop.f32.mrf.mxu0
    %v6780 = vadd.f32 %v6693, %v6779
    %v6781 = vand.u32 %v5309, 4294901760
    %6782 = vmatmul.f32.gmra.mxu0 %v6781
    %v6783 = vpop.f32.mrf.mxu0
    %v6784 = vadd.f32 %v6697, %v6783
    %v6785 = vand.u32 %v5312, 4294901760
    %6786 = vmatmul.f32.gmra.mxu0 %v6785
    %v6787 = vpop.f32.mrf.mxu0
    %v6788 = vadd.f32 %v6701, %v6787
    %v6789 = vand.u32 %v5315, 4294901760
    %6790 = vmatmul.f32.gmra.mxu0 %v6789
    %v6791 = vpop.f32.mrf.mxu0
    %v6792 = vadd.f32 %v6705, %v6791
    %v6793 = vand.u32 %v5318, 4294901760
    %6794 = vmatmul.f32.gmra.mxu0 %v6793
    %v6795 = vpop.f32.mrf.mxu0
    %v6796 = vadd.f32 %v6709, %v6795
    %v6797 = vand.u32 %v5321, 4294901760
    %6798 = vmatmul.f32.gmra.mxu0 %v6797
    %v6799 = vpop.f32.mrf.mxu0
    %v6800 = vadd.f32 %v6713, %v6799
    %v6801 = vand.u32 %v5324, 4294901760
    %6802 = vmatmul.f32.gmra.mxu0 %v6801
    %v6803 = vpop.f32.mrf.mxu0
    %v6804 = vadd.f32 %v6717, %v6803
    %v6805 = vand.u32 %v5327, 4294901760
    %6806 = vmatmul.f32.gmra.mxu0 %v6805
    %v6807 = vpop.f32.mrf.mxu0
    %v6808 = vadd.f32 %v6721, %v6807
    %v6809 = vand.u32 %v5330, 4294901760
    %6810 = vmatmul.f32.gmra.mxu0 %v6809
    %v6811 = vpop.f32.mrf.mxu0
    %v6812 = vadd.f32 %v6725, %v6811
    %6813 = vdwg.mxu0
    %6830 = vrot.lane.b32.xlu0 %v3404, 32
    %v6831 = vpop.permute.xlu0 %6830
    %6832 = vrot.lane.b32.xlu0 %v3408, 32
    %v6833 = vpop.permute.xlu0 %6832
    %6834 = vrot.lane.b32.xlu0 %v3412, 32
    %v6835 = vpop.permute.xlu0 %6834
    %6836 = vrot.lane.b32.xlu0 %v3416, 32
    %v6837 = vpop.permute.xlu0 %6836
    %6838 = vrot.lane.b32.xlu0 %v3420, 32
    %v6839 = vpop.permute.xlu0 %6838
    %6840 = vrot.lane.b32.xlu0 %v3424, 32
    %v6841 = vpop.permute.xlu0 %6840
    %6842 = vrot.lane.b32.xlu0 %v3428, 32
    %v6843 = vpop.permute.xlu0 %6842
    %6844 = vrot.lane.b32.xlu0 %v3432, 32
    %v6845 = vpop.permute.xlu0 %6844
    %6846 = vrot.lane.b32.xlu0 %v3436, 32
    %v6847 = vpop.permute.xlu0 %6846
    %6848 = vrot.lane.b32.xlu0 %v3440, 32
    %v6849 = vpop.permute.xlu0 %6848
    %6850 = vrot.lane.b32.xlu0 %v3444, 32
    %v6851 = vpop.permute.xlu0 %6850
    %6852 = vrot.lane.b32.xlu0 %v3448, 32
    %v6853 = vpop.permute.xlu0 %6852
    %6854 = vrot.lane.b32.xlu0 %v3452, 32
    %v6855 = vpop.permute.xlu0 %6854
    %6856 = vrot.lane.b32.xlu0 %v3456, 32
    %v6857 = vpop.permute.xlu0 %6856
    %6858 = vrot.lane.b32.xlu0 %v3460, 32
    %v6859 = vpop.permute.xlu0 %6858
    %6860 = vrot.lane.b32.xlu0 %v3464, 32
    %v6861 = vpop.permute.xlu0 %6860
    %6894 = vrot.lane.b32.xlu0 %v5078, 64
    %v6895 = vpop.permute.xlu0 %6894
    %6896 = vrot.lane.b32.xlu0 %v5082, 64
    %v6897 = vpop.permute.xlu0 %6896
    %6898 = vrot.lane.b32.xlu0 %v5086, 64
    %v6899 = vpop.permute.xlu0 %6898
    %6900 = vrot.lane.b32.xlu0 %v5090, 64
    %v6901 = vpop.permute.xlu0 %6900
    %6902 = vrot.lane.b32.xlu0 %v5094, 64
    %v6903 = vpop.permute.xlu0 %6902
    %6904 = vrot.lane.b32.xlu0 %v5098, 64
    %v6905 = vpop.permute.xlu0 %6904
    %6906 = vrot.lane.b32.xlu0 %v5102, 64
    %v6907 = vpop.permute.xlu0 %6906
    %6908 = vrot.lane.b32.xlu0 %v5106, 64
    %v6909 = vpop.permute.xlu0 %6908
    %6910 = vrot.lane.b32.xlu0 %v5110, 64
    %v6911 = vpop.permute.xlu0 %6910
    %6912 = vrot.lane.b32.xlu0 %v5114, 64
    %v6913 = vpop.permute.xlu0 %6912
    %6914 = vrot.lane.b32.xlu0 %v5118, 64
    %v6915 = vpop.permute.xlu0 %6914
    %6916 = vrot.lane.b32.xlu0 %v5122, 64
    %v6917 = vpop.permute.xlu0 %6916
    %6918 = vrot.lane.b32.xlu0 %v5126, 64
    %v6919 = vpop.permute.xlu0 %6918
    %6920 = vrot.lane.b32.xlu0 %v5130, 64
    %v6921 = vpop.permute.xlu0 %6920
    %6922 = vrot.lane.b32.xlu0 %v5134, 64
    %v6923 = vpop.permute.xlu0 %6922
    %6924 = vrot.lane.b32.xlu0 %v5138, 64
    %v6925 = vpop.permute.xlu0 %6924
    %6958 = vrot.lane.b32.xlu0 %v6752, 96
    %v6959 = vpop.permute.xlu0 %6958
    %6960 = vrot.lane.b32.xlu0 %v6756, 96
    %v6961 = vpop.permute.xlu0 %6960
    %6962 = vrot.lane.b32.xlu0 %v6760, 96
    %v6963 = vpop.permute.xlu0 %6962
    %6964 = vrot.lane.b32.xlu0 %v6764, 96
    %v6965 = vpop.permute.xlu0 %6964
    %6966 = vrot.lane.b32.xlu0 %v6768, 96
    %v6967 = vpop.permute.xlu0 %6966
    %6968 = vrot.lane.b32.xlu0 %v6772, 96
    %v6969 = vpop.permute.xlu0 %6968
    %6970 = vrot.lane.b32.xlu0 %v6776, 96
    %v6971 = vpop.permute.xlu0 %6970
    %6972 = vrot.lane.b32.xlu0 %v6780, 96
    %v6973 = vpop.permute.xlu0 %6972
    %6974 = vrot.lane.b32.xlu0 %v6784, 96
    %v6975 = vpop.permute.xlu0 %6974
    %6976 = vrot.lane.b32.xlu0 %v6788, 96
    %v6977 = vpop.permute.xlu0 %6976
    %6978 = vrot.lane.b32.xlu0 %v6792, 96
    %v6979 = vpop.permute.xlu0 %6978
    %6980 = vrot.lane.b32.xlu0 %v6796, 96
    %v6981 = vpop.permute.xlu0 %6980
    %6982 = vrot.lane.b32.xlu0 %v6800, 96
    %v6983 = vpop.permute.xlu0 %6982
    %6984 = vrot.lane.b32.xlu0 %v6804, 96
    %v6985 = vpop.permute.xlu0 %6984
    %6986 = vrot.lane.b32.xlu0 %v6808, 96
    %v6987 = vpop.permute.xlu0 %6986
    %6988 = vrot.lane.b32.xlu0 %v6812, 96
    %v6989 = vpop.permute.xlu0 %6988
    %vm7006 = vcmask 261120
    %v7007 = vsel %vm7006, %v1730, %v6831
    %v7008 = vsel %vm7006, %v1734, %v6833
    %v7009 = vsel %vm7006, %v1738, %v6835
    %v7010 = vsel %vm7006, %v1742, %v6837
    %v7011 = vsel %vm7006, %v1746, %v6839
    %v7012 = vsel %vm7006, %v1750, %v6841
    %v7013 = vsel %vm7006, %v1754, %v6843
    %v7014 = vsel %vm7006, %v1758, %v6845
    %v7015 = vsel %vm7006, %v1762, %v6847
    %v7016 = vsel %vm7006, %v1766, %v6849
    %v7017 = vsel %vm7006, %v1770, %v6851
    %v7018 = vsel %vm7006, %v1774, %v6853
    %v7019 = vsel %vm7006, %v1778, %v6855
    %v7020 = vsel %vm7006, %v1782, %v6857
    %v7021 = vsel %vm7006, %v1786, %v6859
    %v7022 = vsel %vm7006, %v1790, %v6861
    %vm7023 = vcmask 523264
    %v7024 = vsel %vm7023, %v7007, %v6895
    %v7025 = vsel %vm7023, %v7008, %v6897
    %v7026 = vsel %vm7023, %v7009, %v6899
    %v7027 = vsel %vm7023, %v7010, %v6901
    %v7028 = vsel %vm7023, %v7011, %v6903
    %v7029 = vsel %vm7023, %v7012, %v6905
    %v7030 = vsel %vm7023, %v7013, %v6907
    %v7031 = vsel %vm7023, %v7014, %v6909
    %v7032 = vsel %vm7023, %v7015, %v6911
    %v7033 = vsel %vm7023, %v7016, %v6913
    %v7034 = vsel %vm7023, %v7017, %v6915
    %v7035 = vsel %vm7023, %v7018, %v6917
    %v7036 = vsel %vm7023, %v7019, %v6919
    %v7037 = vsel %vm7023, %v7020, %v6921
    %v7038 = vsel %vm7023, %v7021, %v6923
    %v7039 = vsel %vm7023, %v7022, %v6925
    %vm7040 = vcmask 785408
    %v7041 = vsel %vm7040, %v7024, %v6959
    %v7042 = vsel %vm7040, %v7025, %v6961
    %v7043 = vsel %vm7040, %v7026, %v6963
    %v7044 = vsel %vm7040, %v7027, %v6965
    %v7045 = vsel %vm7040, %v7028, %v6967
    %v7046 = vsel %vm7040, %v7029, %v6969
    %v7047 = vsel %vm7040, %v7030, %v6971
    %v7048 = vsel %vm7040, %v7031, %v6973
    %v7049 = vsel %vm7040, %v7032, %v6975
    %v7050 = vsel %vm7040, %v7033, %v6977
    %v7051 = vsel %vm7040, %v7034, %v6979
    %v7052 = vsel %vm7040, %v7035, %v6981
    %v7053 = vsel %vm7040, %v7036, %v6983
    %v7054 = vsel %vm7040, %v7037, %v6985
    %v7055 = vsel %vm7040, %v7038, %v6987
    %v7056 = vsel %vm7040, %v7039, %v6989
    %7057 = vst [vmem:[#allocation2] sm:$0xff] %v7041
    %7058 = vst [vmem:[#allocation2 + $0x8] sm:$0xff] %v7042
    %7059 = vst [vmem:[#allocation2 + $0x10] sm:$0xff] %v7043
    %7060 = vst [vmem:[#allocation2 + $0x18] sm:$0xff] %v7044
    %7061 = vst [vmem:[#allocation2 + $0x20] sm:$0xff] %v7045
    %7062 = vst [vmem:[#allocation2 + $0x28] sm:$0xff] %v7046
    %7063 = vst [vmem:[#allocation2 + $0x30] sm:$0xff] %v7047
    %7064 = vst [vmem:[#allocation2 + $0x38] sm:$0xff] %v7048
    %7065 = vst [vmem:[#allocation2 + $0x40] sm:$0xff] %v7049
    %7066 = vst [vmem:[#allocation2 + $0x48] sm:$0xff] %v7050
    %7067 = vst [vmem:[#allocation2 + $0x50] sm:$0xff] %v7051
    %7068 = vst [vmem:[#allocation2 + $0x58] sm:$0xff] %v7052
    %7069 = vst [vmem:[#allocation2 + $0x60] sm:$0xff] %v7053
    %7070 = vst [vmem:[#allocation2 + $0x68] sm:$0xff] %v7054
    %7071 = vst [vmem:[#allocation2 + $0x70] sm:$0xff] %v7055
    %7072 = vst [vmem:[#allocation2 + $0x78] sm:$0xff] %v7056
    // Predicated region
    $region10: #{tpu_custom_call.1} parent=1 // pred_check
      _
    $region11: #{tpu_custom_call.1} parent=1 // pred_check_branch
      %7074 = sbr.rel (0) target = $region13
    $region12: #{tpu_custom_call.1} parent=1 // pred_region
      %7076 = vsyncadd [#allocation3], 0
      %s7077 = sshll.u32 [#allocation2], 4
      %s7078 = int_to_ptr.vmem [resolvable:$true] %s7077
      %s7079 = sshll.u32 %s2, 4
      %s7080 = int_to_ptr.hbm [resolvable:$true] %s7079
      %7085 = dma.vmem_to_hbm [thread:$0]  %s7078, 2048, %s7080, [#allocation3], 128, 128, 8
    $region13: #{tpu_custom_call.1} parent=1 // pred_fallthru
      _
    // Predicated region
    $region14: #{tpu_custom_call.1} parent=1 // pred_check
      _
    $region15: #{tpu_custom_call.1} parent=1 // pred_check_branch
      %7087 = sbr.rel (0) target = $region17
    $region16: #{tpu_custom_call.1} parent=1 // pred_region
      %7089 = dma.done [#allocation3], 2048
    $region17: #{tpu_custom_call.1} parent=1 // pred_fallthru
      _
    %7090 = vsyncpa [#allocation3], 1

</llo_original>
